<compile_context>
chip_gen: v7x
topology: tpu7x:2x2x1
jax: 0.10.0
libtpu: 0.0.40
codegen_flags: <defaults>
</compile_context>

<pallas_src>
import functools

import jax
import jax.numpy as jnp
from jax.experimental import pallas as pl
from jax.experimental.pallas import tpu as pltpu

DIM = 100        # logical MAC hidden dim
KB_DIM = 74      # logical acoustic feature dim
MAX_STEP = 3     # MAC reasoning steps

DP = 128         # padded MAC dim (100 -> 128)
KBP = 128        # padded acoustic feature dim (74 -> 128)

_VMEM = pl.BlockSpec(memory_space=pltpu.MemorySpace.VMEM)

# ---- packed MAC-head slab row indices ----
(SQ_KB1, SQ_KB2, SQ_CQ_C, SQ_CQ_P, SQ_RM, SQ_RC_M, SQ_RC_K,
 SQ_WC_R, SQ_WC_M, SQ_CLS1M, SQ_CLS2) = range(11)
N_SQ = 11
(W2_PROJ, W2_PA0, W2_PA1, W2_PA2, W2_CLS1Q, W2_CLS1A) = range(6)
N_W2 = 6
(BV_KB1, BV_KB2, BV_PROJ, BV_PA0, BV_PA1, BV_PA2, BV_CQ, BV_RM, BV_RC, BV_WC,
 BV_CLS1, BV_CLS2, BV_MEM0, BV_CTRL0, BV_W_CA, BV_W_RA) = range(16)
N_BV = 16


def _ceil128(n):
    return ((n + 127) // 128) * 128


def _mmb(a, w_bf16):
    """MXU matmul: f32 activations cast to bf16, bf16 weights, f32 accumulation."""
    return jnp.dot(a.astype(jnp.bfloat16), w_bf16, preferred_element_type=jnp.float32)


def _elu(y):
    # TODO(synk): exp(x)-1 (not expm1) loses a bit of precision near 0 but lowers cleanly.
    return jnp.where(y > 0, y, jnp.exp(jnp.minimum(y, 0.0)) - 1.0)


# ----------------------------------------------------------------------------
# Dual BiLSTM kernel. grid=(2,) over {question encoder, answer encoder}.
#   x   : [T*B, FP]   time-major flattened, lane/sublane dense
#   wih : [FP, 8H]    = [Wih_fwd | Wih_bwd], gate order (i, f, o, g), each gate DP wide
#   whh : [2, H, 4H]  fwd / bwd recurrent weights (no zero block-diagonal padding)
#   b   : [1, 8H]     combined b_ih + b_hh
# Outputs: seq [B, T, 2H] (question encoder only), h_final [B, 2H].
# ----------------------------------------------------------------------------
def _bilstm_kernel(x_ref, wih_ref, whh_ref, b_ref, seq_ref, h_ref, *, T, B, H):
    H3, H4 = 3 * H, 4 * H
    # Hoisted input projection for BOTH directions: one [T*B, FP] @ [FP, 8H] matmul.
    gx = _mmb(x_ref[0], wih_ref[0]) + b_ref[0]            # [T*B, 8H] f32
    whh = whh_ref[0]                                       # [2, H, 4H] bf16
    whh_f, whh_b = whh[0], whh[1]

    h_f = jnp.zeros((B, H), jnp.float32)
    c_f = jnp.zeros((B, H), jnp.float32)
    h_b = jnp.zeros((B, H), jnp.float32)
    c_b = jnp.zeros((B, H), jnp.float32)
    hf_steps, hb_steps = [], []

    for s in range(T):                                     # static unrolled time loop
        gf = gx[s * B:(s + 1) * B, :H4] + _mmb(h_f, whh_f)
        gb = gx[(T - 1 - s) * B:(T - s) * B, H4:] + _mmb(h_b, whh_b)
        # gates packed (i, f, o | g): one sigmoid over 3H, one tanh over H per direction
        sf = jax.nn.sigmoid(gf[:, :H3]); tf_ = jnp.tanh(gf[:, H3:])
        sb = jax.nn.sigmoid(gb[:, :H3]); tb_ = jnp.tanh(gb[:, H3:])
        c_f = sf[:, H:2 * H] * c_f + sf[:, :H] * tf_
        c_b = sb[:, H:2 * H] * c_b + sb[:, :H] * tb_
        h_f = sf[:, 2 * H:] * jnp.tanh(c_f)
        h_b = sb[:, 2 * H:] * jnp.tanh(c_b)
        hf_steps.append(h_f)
        hb_steps.append(h_b)

    # Final hidden: fwd state at t=T-1, bwd state at t=0 (last processed reverse step).
    h_ref[0] = jnp.concatenate([h_f, h_b], axis=-1)

    # Contextual word sequence is only consumed for the question encoder (e == 0):
    # one bulk store in tile-dense [B, T, 2H] layout (no per-step masked stores).
    @pl.when(pl.program_id(0) == 0)
    def _():
        seq_f = jnp.stack(hf_steps, axis=1)                # [B, T, H]
        seq_b = jnp.stack(hb_steps[::-1], axis=1)          # reverse to time order
        seq_ref[0] = jnp.concatenate([seq_f, seq_b], axis=-1)


def dual_bilstm(xs, params, *, T, B):
    """xs: [2, T*B, FP] stacked (question, answer) inputs.
    Returns (seq [2, B, T, 2H] -- only [0] is valid, h_final [2, B, 2H])."""
    H = DP
    FP = xs.shape[-1]
    mm = lambda m, k, n: 2 * m * k * n
    flops = 2 * (mm(T * B, FP, 8 * H) + T * 2 * mm(B, H, 4 * H))
    trans = 2 * T * 2 * B * 5 * H
    bytes_acc = ((params["enc_wih"].size + params["enc_whh"].size) * 2
                 + params["enc_b"].size * 4 + xs.size * 4
                 + 2 * B * T * 2 * H * 4 + 2 * B * 2 * H * 4)
    out_shapes = (jax.ShapeDtypeStruct((2, B, T, 2 * H), jnp.float32),
                  jax.ShapeDtypeStruct((2, B, 2 * H), jnp.float32))
    return pl.pallas_call(
        functools.partial(_bilstm_kernel, T=T, B=B, H=H),
        grid=(2,),
        out_shape=out_shapes,
        in_specs=[
            pl.BlockSpec((1, T * B, FP), lambda e: (e, 0, 0)),
            pl.BlockSpec((1, FP, 8 * H), lambda e: (e, 0, 0)),
            pl.BlockSpec((1, 2, H, 4 * H), lambda e: (e, 0, 0, 0)),
            pl.BlockSpec((1, 1, 8 * H), lambda e: (e, 0, 0)),
        ],
        out_specs=(
            pl.BlockSpec((1, B, T, 2 * H), lambda e: (e, 0, 0, 0)),
            pl.BlockSpec((1, B, 2 * H), lambda e: (e, 0, 0)),
        ),
        compiler_params=pltpu.CompilerParams(
            dimension_semantics=("parallel",),
            vmem_limit_bytes=32 * 1024 * 1024),
        cost_estimate=pl.CostEstimate(flops=int(flops), transcendentals=int(trans),
                                      bytes_accessed=int(bytes_acc)),
    )(xs, params["enc_wih"], params["enc_whh"], params["enc_b"])


# ----------------------------------------------------------------------------
# Fused KB-projection + lstm_proj + MAC recurrence + classifier kernel.
# All weights arrive as 3 packed slabs; all activations stay in VMEM.
# ----------------------------------------------------------------------------
def _mac_head_kernel(ac_ref, qseq_ref, hs_ref, wsq_ref, w2d_ref, bv_ref, out_ref,
                     *, max_step):
    ac = ac_ref[...]                          # [B, Tk, KBP] f32
    B, Tk, KBPl = ac.shape
    qseq = qseq_ref[0]                        # [B, Tq, 2D]  (question encoder)
    Tq = qseq.shape[1]
    qh = hs_ref[0]                            # [B, 2D]
    ah = hs_ref[1]                            # [B, 2D]
    bv = bv_ref[...]                          # [16, D] f32
    D = bv.shape[1]

    def row(i):
        return bv[i:i + 1, :]                 # [1, D]

    # --- Knowledge-base projection: 74 -> D -> D with ELU after each ---
    kb1 = _elu(_mmb(ac.reshape(B * Tk, KBPl), wsq_ref[SQ_KB1]) + row(BV_KB1))
    know_flat = _elu(_mmb(kb1, wsq_ref[SQ_KB2]) + row(BV_KB2))        # [B*Tk, D]
    know = know_flat.reshape(B, Tk, D)

    # --- lstm_proj of contextual question words (tile-dense reshape) ---
    ctx = (_mmb(qseq.reshape(B * Tq, 2 * D), w2d_ref[W2_PROJ])
           + row(BV_PROJ)).reshape(B, Tq, D)

    # --- step-invariant half of the read-unit projection (hoisted) ---
    know_proj = _mmb(know_flat, wsq_ref[SQ_RC_K]).reshape(B, Tk, D)

    w_ca = row(BV_W_CA)                       # attention dim->1 weights as lane vectors
    w_ra = row(BV_W_RA)

    control = jnp.broadcast_to(row(BV_CTRL0), (B, D))
    memory = jnp.broadcast_to(row(BV_MEM0), (B, D))

    for step in range(max_step):              # static unrolled reasoning steps
        # ---- Control unit ----
        pa = _mmb(qh, w2d_ref[W2_PA0 + step]) + row(BV_PA0 + step)    # [B, D]
        cq = (_mmb(control, wsq_ref[SQ_CQ_C]) + _mmb(pa, wsq_ref[SQ_CQ_P])
              + row(BV_CQ))
        # width-1 attention projection folded into the query -> VPU/XLU reduction
        aw = jnp.sum((cq * w_ca)[:, None, :] * ctx, axis=-1)          # [B, Tq]
        aw = aw - jnp.max(aw, axis=1, keepdims=True)
        ea = jnp.exp(aw)
        attn = ea / jnp.sum(ea, axis=1, keepdims=True)
        control = jnp.sum(attn[:, :, None] * ctx, axis=1)             # [B, D]

        # ---- Read unit ----
        mem_p = _mmb(memory, wsq_ref[SQ_RM]) + row(BV_RM)             # [B, D]
        mk = mem_p[:, None, :] * know                                 # [B, Tk, D]
        cc = (_mmb(mk.reshape(B * Tk, D), wsq_ref[SQ_RC_M]).reshape(B, Tk, D)
              + know_proj + row(BV_RC))
        rw = jnp.sum(cc * (control * w_ra)[:, None, :], axis=-1)      # [B, Tk]
        rw = rw - jnp.max(rw, axis=1, keepdims=True)
        er = jnp.exp(rw)
        rattn = er / jnp.sum(er, axis=1, keepdims=True)
        read = jnp.sum(rattn[:, :, None] * know, axis=1)              # [B, D]

        # ---- Write unit (self_attention=False, memory_gate=False) ----
        memory = (_mmb(read, wsq_ref[SQ_WC_R]) + _mmb(memory, wsq_ref[SQ_WC_M])
                  + row(BV_WC))

    # ---- Classifier head: cat(memory, q_h, a_h) -> D -> 2 (output lane-padded) ----
    hid = _elu(_mmb(memory, wsq_ref[SQ_CLS1M]) + _mmb(qh, w2d_ref[W2_CLS1Q])
               + _mmb(ah, w2d_ref[W2_CLS1A]) + row(BV_CLS1))
    out_ref[...] = (_mmb(hid, wsq_ref[SQ_CLS2]) + row(BV_CLS2)).astype(out_ref.dtype)


def pallas_mac_head(ac_p, qseq_s, h_s, params):
    B, Tk, _ = ac_p.shape
    Tq = qseq_s.shape[2]
    D = DP
    mm = lambda m, k, n: 2 * m * k * n
    flops = (mm(B * Tk, KBP, D) + mm(B * Tk, D, D) + mm(B * Tq, 2 * D, D)
             + mm(B * Tk, D, D)
             + MAX_STEP * (mm(B, 2 * D, D) + 2 * mm(B, D, D)
                           + mm(B * Tk, D, D) + 2 * mm(B, D, D))
             + mm(B, D, D) + 2 * mm(B, 2 * D, D) + mm(B, D, D))
    trans = 2 * B * Tk * D + B * D + MAX_STEP * (B * Tq + B * Tk)
    bytes_acc = ((params["head_wsq"].size + params["head_w2d"].size) * 2
                 + params["head_bv"].size * 4
                 + ac_p.size * 4 + qseq_s.size * 4 + h_s.size * 4 + B * DP * 4)
    args = (ac_p, qseq_s, h_s, params["head_wsq"], params["head_w2d"], params["head_bv"])
    return pl.pallas_call(
        functools.partial(_mac_head_kernel, max_step=MAX_STEP),
        out_shape=jax.ShapeDtypeStruct((B, DP), jnp.float32),
        in_specs=[_VMEM] * len(args),
        out_specs=_VMEM,
        compiler_params=pltpu.CompilerParams(vmem_limit_bytes=32 * 1024 * 1024),
        cost_estimate=pl.CostEstimate(flops=int(flops), transcendentals=int(trans),
                                      bytes_accessed=int(bytes_acc)),
    )(*args)


# ----------------------------------------------------------------------------
# Parameter init: logical (unpadded) weights drawn deterministically, then
# zero-padded / packed into the lane-aligned bf16 layouts the kernels expect.
# Padded rows/cols are exactly zero => padded lanes stay zero end-to-end.
# ----------------------------------------------------------------------------
def _rnd(key, shape, scale=0.08):
    return jax.random.normal(key, shape, dtype=jnp.float32) * scale


def _pad2(x, rows, cols):
    out = jnp.zeros((rows, cols), jnp.float32)
    return out.at[:x.shape[0], :x.shape[1]].set(x)


def _pad_bihid_rows(w, cols):
    """[2*DIM, N] acting on cat(h_fwd, h_bwd) -> [2*DP, cols] with per-direction blocks."""
    return jnp.concatenate([_pad2(w[:DIM], DP, cols), _pad2(w[DIM:], DP, cols)], axis=0)


def init_params(key, q_feat, a_feat):
    FP = _ceil128(max(q_feat, a_feat))
    D, S = DIM, MAX_STEP
    ks = iter(jax.random.split(key, 80))
    nxt = lambda: next(ks)

    def gates(k, rows_log, rows_pad):
        # gate order (i, f, o, g), each gate DIM->DP padded
        sub = jax.random.split(k, 4)
        return jnp.concatenate(
            [_pad2(_rnd(kk, (rows_log, D)), rows_pad, DP) for kk in sub], axis=1)

    def encoder(k, feat):
        kw_f, ku_f, kb_f, kw_b, ku_b, kb_b = jax.random.split(k, 6)
        wih = jnp.concatenate([gates(kw_f, feat, FP), gates(kw_b, feat, FP)], axis=1)
        whh = jnp.stack([gates(ku_f, D, DP), gates(ku_b, D, DP)], axis=0)   # [2, DP, 4DP]
        b = jnp.concatenate([gates(kb_f, 1, 1), gates(kb_b, 1, 1)], axis=1)  # b_ih + b_hh
        return wih, whh, b

    wih_q, whh_q, b_q = encoder(nxt(), q_feat)
    wih_a, whh_a, b_a = encoder(nxt(), a_feat)
    p = {
        "enc_wih": jnp.stack([wih_q, wih_a]).astype(jnp.bfloat16),   # [2, FP, 8DP]
        "enc_whh": jnp.stack([whh_q, whh_a]).astype(jnp.bfloat16),   # [2, 2, DP, 4DP]
        "enc_b": jnp.stack([b_q, b_a]),                              # [2, 1, 8DP] f32
    }

    # --- square (DP x DP) weight slab ---
    sq = [None] * N_SQ
    sq[SQ_KB1] = _pad2(_rnd(nxt(), (KB_DIM, D)), DP, DP)
    sq[SQ_KB2] = _pad2(_rnd(nxt(), (D, D)), DP, DP)
    w_cq = _rnd(nxt(), (2 * D, D))
    sq[SQ_CQ_C] = _pad2(w_cq[:D], DP, DP)
    sq[SQ_CQ_P] = _pad2(w_cq[D:], DP, DP)
    sq[SQ_RM] = _pad2(_rnd(nxt(), (D, D)), DP, DP)
    w_rc = _rnd(nxt(), (2 * D, D))
    sq[SQ_RC_M] = _pad2(w_rc[:D], DP, DP)
    sq[SQ_RC_K] = _pad2(w_rc[D:], DP, DP)
    w_wc = _rnd(nxt(), (2 * D, D))
    sq[SQ_WC_R] = _pad2(w_wc[:D], DP, DP)
    sq[SQ_WC_M] = _pad2(w_wc[D:], DP, DP)
    w1 = _rnd(nxt(), (5 * D, D))                 # classifier: cat(memory, q_h, a_h) -> D
    sq[SQ_CLS1M] = _pad2(w1[:D], DP, DP)
    sq[SQ_CLS2] = _pad2(_rnd(nxt(), (D, 2)), DP, DP)   # logits lane-padded; slice [:, :2]
    p["head_wsq"] = jnp.stack(sq).astype(jnp.bfloat16)               # [11, DP, DP]

    # --- (2*DP x DP) weight slab (weights acting on cat(h_fwd, h_bwd) inputs) ---
    w2 = [None] * N_W2
    w2[W2_PROJ] = _pad_bihid_rows(_rnd(nxt(), (2 * D, D)), DP)
    for s in range(S):
        w2[W2_PA0 + s] = _pad_bihid_rows(_rnd(nxt(), (2 * D, D)), DP)
    w2[W2_CLS1Q] = _pad_bihid_rows(w1[D:3 * D], DP)
    w2[W2_CLS1A] = _pad_bihid_rows(w1[3 * D:], DP)
    p["head_w2d"] = jnp.stack(w2).astype(jnp.bfloat16)               # [6, 2DP, DP]

    # --- bias / lane-vector slab (f32). Attn biases dropped: softmax shift-invariant.
    bv = [None] * N_BV

    def brow(k, cols=D):
        return _pad2(_rnd(k, (1, cols)), 1, DP)

    bv[BV_KB1] = brow(nxt()); bv[BV_KB2] = brow(nxt()); bv[BV_PROJ] = brow(nxt())
    for s in range(S):
        bv[BV_PA0 + s] = brow(nxt())
    bv[BV_CQ] = brow(nxt()); bv[BV_RM] = brow(nxt())
    bv[BV_RC] = brow(nxt()); bv[BV_WC] = brow(nxt())
    bv[BV_CLS1] = brow(nxt()); bv[BV_CLS2] = brow(nxt(), 2)
    bv[BV_MEM0] = brow(nxt()); bv[BV_CTRL0] = brow(nxt())
    bv[BV_W_CA] = _pad2(_rnd(nxt(), (D, 1)).T, 1, DP)   # dim->1 attn weight as lane vector
    bv[BV_W_RA] = _pad2(_rnd(nxt(), (D, 1)).T, 1, DP)
    p["head_bv"] = jnp.concatenate(bv, axis=0)                        # [16, DP]
    return p


# ----------------------------------------------------------------------------
# Full forward (eval mode: MODE='eval' -> mac_running, no dropout)
# ----------------------------------------------------------------------------
def _pad_last(x, target):
    pad = target - x.shape[-1]
    if pad == 0:
        return x
    return jnp.pad(x, [(0, 0)] * (x.ndim - 1) + [(0, pad)])


def lstm_qaac_mac_forward(params, q, answers, ac):
    B, Tq, _ = q.shape
    Ta = answers.shape[1]
    # TODO(synk): the fused dual-encoder grid assumes equal q/answer sequence lengths.
    assert Tq == Ta, "question and answer sequences must have equal length"

    FP = params["enc_wih"].shape[1]
    # Time-major flatten to lane/sublane-dense [T*B, FP] slabs, stack the two encoders.
    xq = jnp.transpose(_pad_last(q, FP), (1, 0, 2)).reshape(Tq * B, FP)
    xa = jnp.transpose(_pad_last(answers, FP), (1, 0, 2)).reshape(Ta * B, FP)
    xs = jnp.stack([xq, xa], axis=0)                                   # [2, T*B, FP]
    ac_p = _pad_last(ac, KBP)                                          # [B, Tk, KBP]

    # pallas_call 1: both encoders (grid=(2,), parallel), full time loop inside.
    qseq_s, h_s = dual_bilstm(xs, params, T=Tq, B=B)

    # pallas_call 2: KB projection + lstm_proj + MAC recurrence + classifier.
    logits = pallas_mac_head(ac_p, qseq_s, h_s, params)[:, :2]         # [B, 2]

    # LSTM_QAAc_MAC.forward returns (logits[:,0].unsqueeze(-1), logits[:,1].unsqueeze(-1))
    return logits[:, 0:1], logits[:, 1:2]


if __name__ == "__main__":
    B, Tq, Ta, Tk = 2, 8, 8, 16
    q_feat, a_feat = 40, 40

    root = jax.random.PRNGKey(0)
    k_params, k_q, k_a, k_ac = jax.random.split(root, 4)
    params = init_params(k_params, q_feat, a_feat)

    q = jax.random.normal(k_q, (B, Tq, q_feat), dtype=jnp.float32)
    answers = jax.random.normal(k_a, (B, Ta, a_feat), dtype=jnp.float32)
    ac = jax.random.normal(k_ac, (B, Tk, KB_DIM), dtype=jnp.float32)

    out_a, out_b = jax.jit(lstm_qaac_mac_forward)(params, q, answers, ac)
    jax.block_until_ready((out_a, out_b))
    assert out_a.shape == (B, 1) and out_b.shape == (B, 1)
    print("KERNEL_OK")
</pallas_src>

<mosaic_0001>
module attributes {stable_mosaic.version = 11 : i64} {
  func.func @_bilstm_kernel(%arg0: i32, %arg1: memref<1x16x128xf32, #tpu.memory_space<vmem>>, %arg2: memref<1x128x1024xbf16, #tpu.memory_space<vmem>>, %arg3: memref<1x2x128x512xbf16, #tpu.memory_space<vmem>>, %arg4: memref<1x1x1024xf32, #tpu.memory_space<vmem>>, %arg5: memref<1x2x8x256xf32, #tpu.memory_space<vmem>>, %arg6: memref<1x2x256xf32, #tpu.memory_space<vmem>>) attributes {dimension_semantics = [#tpu.dimension_semantics<parallel>], iteration_bounds = array<i64: 2>, scalar_prefetch = 0 : i64, scratch_operands = 0 : i64, tpu.core_type = #tpu.core_type<tc>, window_params = [{transform_indices = @transform_0, window_bounds = array<i64: 1, 16, 128>}, {transform_indices = @transform_1, window_bounds = array<i64: 1, 128, 1024>}, {transform_indices = @transform_2, window_bounds = array<i64: 1, 2, 128, 512>}, {transform_indices = @transform_3, window_bounds = array<i64: 1, 1, 1024>}, {transform_indices = @transform_4, window_bounds = array<i64: 1, 2, 8, 256>}, {transform_indices = @transform_5, window_bounds = array<i64: 1, 2, 256>}]} {
    %c0 = arith.constant 0 : index
    %c0_0 = arith.constant 0 : index
    %c0_1 = arith.constant 0 : index
    %0 = vector.load %arg1[%c0, %c0_0, %c0_1] : memref<1x16x128xf32, #tpu.memory_space<vmem>>, vector<1x16x128xf32>
    %1 = vector.shape_cast %0 : vector<1x16x128xf32> to vector<16x128xf32>
    %c0_2 = arith.constant 0 : index
    %c0_3 = arith.constant 0 : index
    %c0_4 = arith.constant 0 : index
    %2 = vector.load %arg2[%c0_2, %c0_3, %c0_4] : memref<1x128x1024xbf16, #tpu.memory_space<vmem>>, vector<1x128x1024xbf16>
    %3 = vector.shape_cast %2 : vector<1x128x1024xbf16> to vector<128x1024xbf16>
    %4 = arith.truncf %1 : vector<16x128xf32> to vector<16x128xbf16>
    %cst = arith.constant dense<0.000000e+00> : vector<16x1024xf32>
    %5 = tpu.matmul %4, %3, %cst {dimension_numbers = #tpu.dot_dimension_numbers<[1], [0], [0], [1], [0, 0, 1, 1], [], []>} : vector<16x128xbf16>, vector<128x1024xbf16>, vector<16x1024xf32> -> vector<16x1024xf32>
    %c0_5 = arith.constant 0 : index
    %c0_6 = arith.constant 0 : index
    %c0_7 = arith.constant 0 : index
    %6 = vector.load %arg4[%c0_5, %c0_6, %c0_7] : memref<1x1x1024xf32, #tpu.memory_space<vmem>>, vector<1x1x1024xf32>
    %7 = vector.shape_cast %6 : vector<1x1x1024xf32> to vector<1x1024xf32>
    %8 = vector.broadcast %7 : vector<1x1024xf32> to vector<16x1024xf32>
    %9 = arith.addf %5, %8 : vector<16x1024xf32>
    %c0_8 = arith.constant 0 : index
    %c0_9 = arith.constant 0 : index
    %c0_10 = arith.constant 0 : index
    %c0_11 = arith.constant 0 : index
    %10 = vector.load %arg3[%c0_8, %c0_9, %c0_10, %c0_11] : memref<1x2x128x512xbf16, #tpu.memory_space<vmem>>, vector<1x2x128x512xbf16>
    %11 = vector.shape_cast %10 : vector<1x2x128x512xbf16> to vector<2x128x512xbf16>
    %12 = vector.extract_strided_slice %11 {offsets = [0, 0, 0], sizes = [1, 128, 512], strides = [1, 1, 1]} : vector<2x128x512xbf16> to vector<1x128x512xbf16>
    %13 = vector.shape_cast %12 : vector<1x128x512xbf16> to vector<128x512xbf16>
    %14 = vector.extract_strided_slice %11 {offsets = [1, 0, 0], sizes = [1, 128, 512], strides = [1, 1, 1]} : vector<2x128x512xbf16> to vector<1x128x512xbf16>
    %15 = vector.shape_cast %14 : vector<1x128x512xbf16> to vector<128x512xbf16>
    %cst_12 = arith.constant 0.000000e+00 : f32
    %16 = vector.broadcast %cst_12 : f32 to vector<2x128xf32>
    %cst_13 = arith.constant 0.000000e+00 : f32
    %17 = vector.broadcast %cst_13 : f32 to vector<2x128xf32>
    %cst_14 = arith.constant 0.000000e+00 : f32
    %18 = vector.broadcast %cst_14 : f32 to vector<2x128xf32>
    %cst_15 = arith.constant 0.000000e+00 : f32
    %19 = vector.broadcast %cst_15 : f32 to vector<2x128xf32>
    %20 = vector.extract_strided_slice %9 {offsets = [0, 0], sizes = [2, 512], strides = [1, 1]} : vector<16x1024xf32> to vector<2x512xf32>
    %21 = arith.truncf %16 : vector<2x128xf32> to vector<2x128xbf16>
    %cst_16 = arith.constant dense<0.000000e+00> : vector<2x512xf32>
    %22 = tpu.matmul %21, %13, %cst_16 {dimension_numbers = #tpu.dot_dimension_numbers<[1], [0], [0], [1], [0, 0, 1, 1], [], []>} : vector<2x128xbf16>, vector<128x512xbf16>, vector<2x512xf32> -> vector<2x512xf32>
    %23 = arith.addf %20, %22 : vector<2x512xf32>
    %24 = vector.extract_strided_slice %9 {offsets = [14, 512], sizes = [2, 512], strides = [1, 1]} : vector<16x1024xf32> to vector<2x512xf32>
    %25 = arith.truncf %18 : vector<2x128xf32> to vector<2x128xbf16>
    %cst_17 = arith.constant dense<0.000000e+00> : vector<2x512xf32>
    %26 = tpu.matmul %25, %15, %cst_17 {dimension_numbers = #tpu.dot_dimension_numbers<[1], [0], [0], [1], [0, 0, 1, 1], [], []>} : vector<2x128xbf16>, vector<128x512xbf16>, vector<2x512xf32> -> vector<2x512xf32>
    %27 = arith.addf %24, %26 : vector<2x512xf32>
    %28 = vector.extract_strided_slice %23 {offsets = [0, 0], sizes = [2, 384], strides = [1, 1]} : vector<2x512xf32> to vector<2x384xf32>
    %29 = arith.negf %28 : vector<2x384xf32>
    %30 = math.exp %29 : vector<2x384xf32>
    %cst_18 = arith.constant 1.000000e+00 : f32
    %31 = vector.broadcast %cst_18 : f32 to vector<2x384xf32>
    %32 = arith.addf %31, %30 : vector<2x384xf32>
    %33 = arith.divf %31, %32 : vector<2x384xf32>
    %34 = vector.extract_strided_slice %23 {offsets = [0, 384], sizes = [2, 128], strides = [1, 1]} : vector<2x512xf32> to vector<2x128xf32>
    %35 = math.tanh %34 : vector<2x128xf32>
    %36 = vector.extract_strided_slice %27 {offsets = [0, 0], sizes = [2, 384], strides = [1, 1]} : vector<2x512xf32> to vector<2x384xf32>
    %37 = arith.negf %36 : vector<2x384xf32>
    %38 = math.exp %37 : vector<2x384xf32>
    %cst_19 = arith.constant 1.000000e+00 : f32
    %39 = vector.broadcast %cst_19 : f32 to vector<2x384xf32>
    %40 = arith.addf %39, %38 : vector<2x384xf32>
    %41 = arith.divf %39, %40 : vector<2x384xf32>
    %42 = vector.extract_strided_slice %27 {offsets = [0, 384], sizes = [2, 128], strides = [1, 1]} : vector<2x512xf32> to vector<2x128xf32>
    %43 = math.tanh %42 : vector<2x128xf32>
    %44 = vector.extract_strided_slice %33 {offsets = [0, 128], sizes = [2, 128], strides = [1, 1]} : vector<2x384xf32> to vector<2x128xf32>
    %45 = arith.mulf %44, %17 : vector<2x128xf32>
    %46 = vector.extract_strided_slice %33 {offsets = [0, 0], sizes = [2, 128], strides = [1, 1]} : vector<2x384xf32> to vector<2x128xf32>
    %47 = arith.mulf %46, %35 : vector<2x128xf32>
    %48 = arith.addf %45, %47 : vector<2x128xf32>
    %49 = vector.extract_strided_slice %41 {offsets = [0, 128], sizes = [2, 128], strides = [1, 1]} : vector<2x384xf32> to vector<2x128xf32>
    %50 = arith.mulf %49, %19 : vector<2x128xf32>
    %51 = vector.extract_strided_slice %41 {offsets = [0, 0], sizes = [2, 128], strides = [1, 1]} : vector<2x384xf32> to vector<2x128xf32>
    %52 = arith.mulf %51, %43 : vector<2x128xf32>
    %53 = arith.addf %50, %52 : vector<2x128xf32>
    %54 = vector.extract_strided_slice %33 {offsets = [0, 256], sizes = [2, 128], strides = [1, 1]} : vector<2x384xf32> to vector<2x128xf32>
    %55 = math.tanh %48 : vector<2x128xf32>
    %56 = arith.mulf %54, %55 : vector<2x128xf32>
    %57 = vector.extract_strided_slice %41 {offsets = [0, 256], sizes = [2, 128], strides = [1, 1]} : vector<2x384xf32> to vector<2x128xf32>
    %58 = math.tanh %53 : vector<2x128xf32>
    %59 = arith.mulf %57, %58 : vector<2x128xf32>
    %60 = vector.extract_strided_slice %9 {offsets = [2, 0], sizes = [2, 512], strides = [1, 1]} : vector<16x1024xf32> to vector<2x512xf32>
    %61 = arith.truncf %56 : vector<2x128xf32> to vector<2x128xbf16>
    %cst_20 = arith.constant dense<0.000000e+00> : vector<2x512xf32>
    %62 = tpu.matmul %61, %13, %cst_20 {dimension_numbers = #tpu.dot_dimension_numbers<[1], [0], [0], [1], [0, 0, 1, 1], [], []>} : vector<2x128xbf16>, vector<128x512xbf16>, vector<2x512xf32> -> vector<2x512xf32>
    %63 = arith.addf %60, %62 : vector<2x512xf32>
    %64 = vector.extract_strided_slice %9 {offsets = [12, 512], sizes = [2, 512], strides = [1, 1]} : vector<16x1024xf32> to vector<2x512xf32>
    %65 = arith.truncf %59 : vector<2x128xf32> to vector<2x128xbf16>
    %cst_21 = arith.constant dense<0.000000e+00> : vector<2x512xf32>
    %66 = tpu.matmul %65, %15, %cst_21 {dimension_numbers = #tpu.dot_dimension_numbers<[1], [0], [0], [1], [0, 0, 1, 1], [], []>} : vector<2x128xbf16>, vector<128x512xbf16>, vector<2x512xf32> -> vector<2x512xf32>
    %67 = arith.addf %64, %66 : vector<2x512xf32>
    %68 = vector.extract_strided_slice %63 {offsets = [0, 0], sizes = [2, 384], strides = [1, 1]} : vector<2x512xf32> to vector<2x384xf32>
    %69 = arith.negf %68 : vector<2x384xf32>
    %70 = math.exp %69 : vector<2x384xf32>
    %cst_22 = arith.constant 1.000000e+00 : f32
    %71 = vector.broadcast %cst_22 : f32 to vector<2x384xf32>
    %72 = arith.addf %71, %70 : vector<2x384xf32>
    %73 = arith.divf %71, %72 : vector<2x384xf32>
    %74 = vector.extract_strided_slice %63 {offsets = [0, 384], sizes = [2, 128], strides = [1, 1]} : vector<2x512xf32> to vector<2x128xf32>
    %75 = math.tanh %74 : vector<2x128xf32>
    %76 = vector.extract_strided_slice %67 {offsets = [0, 0], sizes = [2, 384], strides = [1, 1]} : vector<2x512xf32> to vector<2x384xf32>
    %77 = arith.negf %76 : vector<2x384xf32>
    %78 = math.exp %77 : vector<2x384xf32>
    %cst_23 = arith.constant 1.000000e+00 : f32
    %79 = vector.broadcast %cst_23 : f32 to vector<2x384xf32>
    %80 = arith.addf %79, %78 : vector<2x384xf32>
    %81 = arith.divf %79, %80 : vector<2x384xf32>
    %82 = vector.extract_strided_slice %67 {offsets = [0, 384], sizes = [2, 128], strides = [1, 1]} : vector<2x512xf32> to vector<2x128xf32>
    %83 = math.tanh %82 : vector<2x128xf32>
    %84 = vector.extract_strided_slice %73 {offsets = [0, 128], sizes = [2, 128], strides = [1, 1]} : vector<2x384xf32> to vector<2x128xf32>
    %85 = arith.mulf %84, %48 : vector<2x128xf32>
    %86 = vector.extract_strided_slice %73 {offsets = [0, 0], sizes = [2, 128], strides = [1, 1]} : vector<2x384xf32> to vector<2x128xf32>
    %87 = arith.mulf %86, %75 : vector<2x128xf32>
    %88 = arith.addf %85, %87 : vector<2x128xf32>
    %89 = vector.extract_strided_slice %81 {offsets = [0, 128], sizes = [2, 128], strides = [1, 1]} : vector<2x384xf32> to vector<2x128xf32>
    %90 = arith.mulf %89, %53 : vector<2x128xf32>
    %91 = vector.extract_strided_slice %81 {offsets = [0, 0], sizes = [2, 128], strides = [1, 1]} : vector<2x384xf32> to vector<2x128xf32>
    %92 = arith.mulf %91, %83 : vector<2x128xf32>
    %93 = arith.addf %90, %92 : vector<2x128xf32>
    %94 = vector.extract_strided_slice %73 {offsets = [0, 256], sizes = [2, 128], strides = [1, 1]} : vector<2x384xf32> to vector<2x128xf32>
    %95 = math.tanh %88 : vector<2x128xf32>
    %96 = arith.mulf %94, %95 : vector<2x128xf32>
    %97 = vector.extract_strided_slice %81 {offsets = [0, 256], sizes = [2, 128], strides = [1, 1]} : vector<2x384xf32> to vector<2x128xf32>
    %98 = math.tanh %93 : vector<2x128xf32>
    %99 = arith.mulf %97, %98 : vector<2x128xf32>
    %100 = vector.extract_strided_slice %9 {offsets = [4, 0], sizes = [2, 512], strides = [1, 1]} : vector<16x1024xf32> to vector<2x512xf32>
    %101 = arith.truncf %96 : vector<2x128xf32> to vector<2x128xbf16>
    %cst_24 = arith.constant dense<0.000000e+00> : vector<2x512xf32>
    %102 = tpu.matmul %101, %13, %cst_24 {dimension_numbers = #tpu.dot_dimension_numbers<[1], [0], [0], [1], [0, 0, 1, 1], [], []>} : vector<2x128xbf16>, vector<128x512xbf16>, vector<2x512xf32> -> vector<2x512xf32>
    %103 = arith.addf %100, %102 : vector<2x512xf32>
    %104 = vector.extract_strided_slice %9 {offsets = [10, 512], sizes = [2, 512], strides = [1, 1]} : vector<16x1024xf32> to vector<2x512xf32>
    %105 = arith.truncf %99 : vector<2x128xf32> to vector<2x128xbf16>
    %cst_25 = arith.constant dense<0.000000e+00> : vector<2x512xf32>
    %106 = tpu.matmul %105, %15, %cst_25 {dimension_numbers = #tpu.dot_dimension_numbers<[1], [0], [0], [1], [0, 0, 1, 1], [], []>} : vector<2x128xbf16>, vector<128x512xbf16>, vector<2x512xf32> -> vector<2x512xf32>
    %107 = arith.addf %104, %106 : vector<2x512xf32>
    %108 = vector.extract_strided_slice %103 {offsets = [0, 0], sizes = [2, 384], strides = [1, 1]} : vector<2x512xf32> to vector<2x384xf32>
    %109 = arith.negf %108 : vector<2x384xf32>
    %110 = math.exp %109 : vector<2x384xf32>
    %cst_26 = arith.constant 1.000000e+00 : f32
    %111 = vector.broadcast %cst_26 : f32 to vector<2x384xf32>
    %112 = arith.addf %111, %110 : vector<2x384xf32>
    %113 = arith.divf %111, %112 : vector<2x384xf32>
    %114 = vector.extract_strided_slice %103 {offsets = [0, 384], sizes = [2, 128], strides = [1, 1]} : vector<2x512xf32> to vector<2x128xf32>
    %115 = math.tanh %114 : vector<2x128xf32>
    %116 = vector.extract_strided_slice %107 {offsets = [0, 0], sizes = [2, 384], strides = [1, 1]} : vector<2x512xf32> to vector<2x384xf32>
    %117 = arith.negf %116 : vector<2x384xf32>
    %118 = math.exp %117 : vector<2x384xf32>
    %cst_27 = arith.constant 1.000000e+00 : f32
    %119 = vector.broadcast %cst_27 : f32 to vector<2x384xf32>
    %120 = arith.addf %119, %118 : vector<2x384xf32>
    %121 = arith.divf %119, %120 : vector<2x384xf32>
    %122 = vector.extract_strided_slice %107 {offsets = [0, 384], sizes = [2, 128], strides = [1, 1]} : vector<2x512xf32> to vector<2x128xf32>
    %123 = math.tanh %122 : vector<2x128xf32>
    %124 = vector.extract_strided_slice %113 {offsets = [0, 128], sizes = [2, 128], strides = [1, 1]} : vector<2x384xf32> to vector<2x128xf32>
    %125 = arith.mulf %124, %88 : vector<2x128xf32>
    %126 = vector.extract_strided_slice %113 {offsets = [0, 0], sizes = [2, 128], strides = [1, 1]} : vector<2x384xf32> to vector<2x128xf32>
    %127 = arith.mulf %126, %115 : vector<2x128xf32>
    %128 = arith.addf %125, %127 : vector<2x128xf32>
    %129 = vector.extract_strided_slice %121 {offsets = [0, 128], sizes = [2, 128], strides = [1, 1]} : vector<2x384xf32> to vector<2x128xf32>
    %130 = arith.mulf %129, %93 : vector<2x128xf32>
    %131 = vector.extract_strided_slice %121 {offsets = [0, 0], sizes = [2, 128], strides = [1, 1]} : vector<2x384xf32> to vector<2x128xf32>
    %132 = arith.mulf %131, %123 : vector<2x128xf32>
    %133 = arith.addf %130, %132 : vector<2x128xf32>
    %134 = vector.extract_strided_slice %113 {offsets = [0, 256], sizes = [2, 128], strides = [1, 1]} : vector<2x384xf32> to vector<2x128xf32>
    %135 = math.tanh %128 : vector<2x128xf32>
    %136 = arith.mulf %134, %135 : vector<2x128xf32>
    %137 = vector.extract_strided_slice %121 {offsets = [0, 256], sizes = [2, 128], strides = [1, 1]} : vector<2x384xf32> to vector<2x128xf32>
    %138 = math.tanh %133 : vector<2x128xf32>
    %139 = arith.mulf %137, %138 : vector<2x128xf32>
    %140 = vector.extract_strided_slice %9 {offsets = [6, 0], sizes = [2, 512], strides = [1, 1]} : vector<16x1024xf32> to vector<2x512xf32>
    %141 = arith.truncf %136 : vector<2x128xf32> to vector<2x128xbf16>
    %cst_28 = arith.constant dense<0.000000e+00> : vector<2x512xf32>
    %142 = tpu.matmul %141, %13, %cst_28 {dimension_numbers = #tpu.dot_dimension_numbers<[1], [0], [0], [1], [0, 0, 1, 1], [], []>} : vector<2x128xbf16>, vector<128x512xbf16>, vector<2x512xf32> -> vector<2x512xf32>
    %143 = arith.addf %140, %142 : vector<2x512xf32>
    %144 = vector.extract_strided_slice %9 {offsets = [8, 512], sizes = [2, 512], strides = [1, 1]} : vector<16x1024xf32> to vector<2x512xf32>
    %145 = arith.truncf %139 : vector<2x128xf32> to vector<2x128xbf16>
    %cst_29 = arith.constant dense<0.000000e+00> : vector<2x512xf32>
    %146 = tpu.matmul %145, %15, %cst_29 {dimension_numbers = #tpu.dot_dimension_numbers<[1], [0], [0], [1], [0, 0, 1, 1], [], []>} : vector<2x128xbf16>, vector<128x512xbf16>, vector<2x512xf32> -> vector<2x512xf32>
    %147 = arith.addf %144, %146 : vector<2x512xf32>
    %148 = vector.extract_strided_slice %143 {offsets = [0, 0], sizes = [2, 384], strides = [1, 1]} : vector<2x512xf32> to vector<2x384xf32>
    %149 = arith.negf %148 : vector<2x384xf32>
    %150 = math.exp %149 : vector<2x384xf32>
    %cst_30 = arith.constant 1.000000e+00 : f32
    %151 = vector.broadcast %cst_30 : f32 to vector<2x384xf32>
    %152 = arith.addf %151, %150 : vector<2x384xf32>
    %153 = arith.divf %151, %152 : vector<2x384xf32>
    %154 = vector.extract_strided_slice %143 {offsets = [0, 384], sizes = [2, 128], strides = [1, 1]} : vector<2x512xf32> to vector<2x128xf32>
    %155 = math.tanh %154 : vector<2x128xf32>
    %156 = vector.extract_strided_slice %147 {offsets = [0, 0], sizes = [2, 384], strides = [1, 1]} : vector<2x512xf32> to vector<2x384xf32>
    %157 = arith.negf %156 : vector<2x384xf32>
    %158 = math.exp %157 : vector<2x384xf32>
    %cst_31 = arith.constant 1.000000e+00 : f32
    %159 = vector.broadcast %cst_31 : f32 to vector<2x384xf32>
    %160 = arith.addf %159, %158 : vector<2x384xf32>
    %161 = arith.divf %159, %160 : vector<2x384xf32>
    %162 = vector.extract_strided_slice %147 {offsets = [0, 384], sizes = [2, 128], strides = [1, 1]} : vector<2x512xf32> to vector<2x128xf32>
    %163 = math.tanh %162 : vector<2x128xf32>
    %164 = vector.extract_strided_slice %153 {offsets = [0, 128], sizes = [2, 128], strides = [1, 1]} : vector<2x384xf32> to vector<2x128xf32>
    %165 = arith.mulf %164, %128 : vector<2x128xf32>
    %166 = vector.extract_strided_slice %153 {offsets = [0, 0], sizes = [2, 128], strides = [1, 1]} : vector<2x384xf32> to vector<2x128xf32>
    %167 = arith.mulf %166, %155 : vector<2x128xf32>
    %168 = arith.addf %165, %167 : vector<2x128xf32>
    %169 = vector.extract_strided_slice %161 {offsets = [0, 128], sizes = [2, 128], strides = [1, 1]} : vector<2x384xf32> to vector<2x128xf32>
    %170 = arith.mulf %169, %133 : vector<2x128xf32>
    %171 = vector.extract_strided_slice %161 {offsets = [0, 0], sizes = [2, 128], strides = [1, 1]} : vector<2x384xf32> to vector<2x128xf32>
    %172 = arith.mulf %171, %163 : vector<2x128xf32>
    %173 = arith.addf %170, %172 : vector<2x128xf32>
    %174 = vector.extract_strided_slice %153 {offsets = [0, 256], sizes = [2, 128], strides = [1, 1]} : vector<2x384xf32> to vector<2x128xf32>
    %175 = math.tanh %168 : vector<2x128xf32>
    %176 = arith.mulf %174, %175 : vector<2x128xf32>
    %177 = vector.extract_strided_slice %161 {offsets = [0, 256], sizes = [2, 128], strides = [1, 1]} : vector<2x384xf32> to vector<2x128xf32>
    %178 = math.tanh %173 : vector<2x128xf32>
    %179 = arith.mulf %177, %178 : vector<2x128xf32>
    %180 = vector.extract_strided_slice %9 {offsets = [8, 0], sizes = [2, 512], strides = [1, 1]} : vector<16x1024xf32> to vector<2x512xf32>
    %181 = arith.truncf %176 : vector<2x128xf32> to vector<2x128xbf16>
    %cst_32 = arith.constant dense<0.000000e+00> : vector<2x512xf32>
    %182 = tpu.matmul %181, %13, %cst_32 {dimension_numbers = #tpu.dot_dimension_numbers<[1], [0], [0], [1], [0, 0, 1, 1], [], []>} : vector<2x128xbf16>, vector<128x512xbf16>, vector<2x512xf32> -> vector<2x512xf32>
    %183 = arith.addf %180, %182 : vector<2x512xf32>
    %184 = vector.extract_strided_slice %9 {offsets = [6, 512], sizes = [2, 512], strides = [1, 1]} : vector<16x1024xf32> to vector<2x512xf32>
    %185 = arith.truncf %179 : vector<2x128xf32> to vector<2x128xbf16>
    %cst_33 = arith.constant dense<0.000000e+00> : vector<2x512xf32>
    %186 = tpu.matmul %185, %15, %cst_33 {dimension_numbers = #tpu.dot_dimension_numbers<[1], [0], [0], [1], [0, 0, 1, 1], [], []>} : vector<2x128xbf16>, vector<128x512xbf16>, vector<2x512xf32> -> vector<2x512xf32>
    %187 = arith.addf %184, %186 : vector<2x512xf32>
    %188 = vector.extract_strided_slice %183 {offsets = [0, 0], sizes = [2, 384], strides = [1, 1]} : vector<2x512xf32> to vector<2x384xf32>
    %189 = arith.negf %188 : vector<2x384xf32>
    %190 = math.exp %189 : vector<2x384xf32>
    %cst_34 = arith.constant 1.000000e+00 : f32
    %191 = vector.broadcast %cst_34 : f32 to vector<2x384xf32>
    %192 = arith.addf %191, %190 : vector<2x384xf32>
    %193 = arith.divf %191, %192 : vector<2x384xf32>
    %194 = vector.extract_strided_slice %183 {offsets = [0, 384], sizes = [2, 128], strides = [1, 1]} : vector<2x512xf32> to vector<2x128xf32>
    %195 = math.tanh %194 : vector<2x128xf32>
    %196 = vector.extract_strided_slice %187 {offsets = [0, 0], sizes = [2, 384], strides = [1, 1]} : vector<2x512xf32> to vector<2x384xf32>
    %197 = arith.negf %196 : vector<2x384xf32>
    %198 = math.exp %197 : vector<2x384xf32>
    %cst_35 = arith.constant 1.000000e+00 : f32
    %199 = vector.broadcast %cst_35 : f32 to vector<2x384xf32>
    %200 = arith.addf %199, %198 : vector<2x384xf32>
    %201 = arith.divf %199, %200 : vector<2x384xf32>
    %202 = vector.extract_strided_slice %187 {offsets = [0, 384], sizes = [2, 128], strides = [1, 1]} : vector<2x512xf32> to vector<2x128xf32>
    %203 = math.tanh %202 : vector<2x128xf32>
    %204 = vector.extract_strided_slice %193 {offsets = [0, 128], sizes = [2, 128], strides = [1, 1]} : vector<2x384xf32> to vector<2x128xf32>
    %205 = arith.mulf %204, %168 : vector<2x128xf32>
    %206 = vector.extract_strided_slice %193 {offsets = [0, 0], sizes = [2, 128], strides = [1, 1]} : vector<2x384xf32> to vector<2x128xf32>
    %207 = arith.mulf %206, %195 : vector<2x128xf32>
    %208 = arith.addf %205, %207 : vector<2x128xf32>
    %209 = vector.extract_strided_slice %201 {offsets = [0, 128], sizes = [2, 128], strides = [1, 1]} : vector<2x384xf32> to vector<2x128xf32>
    %210 = arith.mulf %209, %173 : vector<2x128xf32>
    %211 = vector.extract_strided_slice %201 {offsets = [0, 0], sizes = [2, 128], strides = [1, 1]} : vector<2x384xf32> to vector<2x128xf32>
    %212 = arith.mulf %211, %203 : vector<2x128xf32>
    %213 = arith.addf %210, %212 : vector<2x128xf32>
    %214 = vector.extract_strided_slice %193 {offsets = [0, 256], sizes = [2, 128], strides = [1, 1]} : vector<2x384xf32> to vector<2x128xf32>
    %215 = math.tanh %208 : vector<2x128xf32>
    %216 = arith.mulf %214, %215 : vector<2x128xf32>
    %217 = vector.extract_strided_slice %201 {offsets = [0, 256], sizes = [2, 128], strides = [1, 1]} : vector<2x384xf32> to vector<2x128xf32>
    %218 = math.tanh %213 : vector<2x128xf32>
    %219 = arith.mulf %217, %218 : vector<2x128xf32>
    %220 = vector.extract_strided_slice %9 {offsets = [10, 0], sizes = [2, 512], strides = [1, 1]} : vector<16x1024xf32> to vector<2x512xf32>
    %221 = arith.truncf %216 : vector<2x128xf32> to vector<2x128xbf16>
    %cst_36 = arith.constant dense<0.000000e+00> : vector<2x512xf32>
    %222 = tpu.matmul %221, %13, %cst_36 {dimension_numbers = #tpu.dot_dimension_numbers<[1], [0], [0], [1], [0, 0, 1, 1], [], []>} : vector<2x128xbf16>, vector<128x512xbf16>, vector<2x512xf32> -> vector<2x512xf32>
    %223 = arith.addf %220, %222 : vector<2x512xf32>
    %224 = vector.extract_strided_slice %9 {offsets = [4, 512], sizes = [2, 512], strides = [1, 1]} : vector<16x1024xf32> to vector<2x512xf32>
    %225 = arith.truncf %219 : vector<2x128xf32> to vector<2x128xbf16>
    %cst_37 = arith.constant dense<0.000000e+00> : vector<2x512xf32>
    %226 = tpu.matmul %225, %15, %cst_37 {dimension_numbers = #tpu.dot_dimension_numbers<[1], [0], [0], [1], [0, 0, 1, 1], [], []>} : vector<2x128xbf16>, vector<128x512xbf16>, vector<2x512xf32> -> vector<2x512xf32>
    %227 = arith.addf %224, %226 : vector<2x512xf32>
    %228 = vector.extract_strided_slice %223 {offsets = [0, 0], sizes = [2, 384], strides = [1, 1]} : vector<2x512xf32> to vector<2x384xf32>
    %229 = arith.negf %228 : vector<2x384xf32>
    %230 = math.exp %229 : vector<2x384xf32>
    %cst_38 = arith.constant 1.000000e+00 : f32
    %231 = vector.broadcast %cst_38 : f32 to vector<2x384xf32>
    %232 = arith.addf %231, %230 : vector<2x384xf32>
    %233 = arith.divf %231, %232 : vector<2x384xf32>
    %234 = vector.extract_strided_slice %223 {offsets = [0, 384], sizes = [2, 128], strides = [1, 1]} : vector<2x512xf32> to vector<2x128xf32>
    %235 = math.tanh %234 : vector<2x128xf32>
    %236 = vector.extract_strided_slice %227 {offsets = [0, 0], sizes = [2, 384], strides = [1, 1]} : vector<2x512xf32> to vector<2x384xf32>
    %237 = arith.negf %236 : vector<2x384xf32>
    %238 = math.exp %237 : vector<2x384xf32>
    %cst_39 = arith.constant 1.000000e+00 : f32
    %239 = vector.broadcast %cst_39 : f32 to vector<2x384xf32>
    %240 = arith.addf %239, %238 : vector<2x384xf32>
    %241 = arith.divf %239, %240 : vector<2x384xf32>
    %242 = vector.extract_strided_slice %227 {offsets = [0, 384], sizes = [2, 128], strides = [1, 1]} : vector<2x512xf32> to vector<2x128xf32>
    %243 = math.tanh %242 : vector<2x128xf32>
    %244 = vector.extract_strided_slice %233 {offsets = [0, 128], sizes = [2, 128], strides = [1, 1]} : vector<2x384xf32> to vector<2x128xf32>
    %245 = arith.mulf %244, %208 : vector<2x128xf32>
    %246 = vector.extract_strided_slice %233 {offsets = [0, 0], sizes = [2, 128], strides = [1, 1]} : vector<2x384xf32> to vector<2x128xf32>
    %247 = arith.mulf %246, %235 : vector<2x128xf32>
    %248 = arith.addf %245, %247 : vector<2x128xf32>
    %249 = vector.extract_strided_slice %241 {offsets = [0, 128], sizes = [2, 128], strides = [1, 1]} : vector<2x384xf32> to vector<2x128xf32>
    %250 = arith.mulf %249, %213 : vector<2x128xf32>
    %251 = vector.extract_strided_slice %241 {offsets = [0, 0], sizes = [2, 128], strides = [1, 1]} : vector<2x384xf32> to vector<2x128xf32>
    %252 = arith.mulf %251, %243 : vector<2x128xf32>
    %253 = arith.addf %250, %252 : vector<2x128xf32>
    %254 = vector.extract_strided_slice %233 {offsets = [0, 256], sizes = [2, 128], strides = [1, 1]} : vector<2x384xf32> to vector<2x128xf32>
    %255 = math.tanh %248 : vector<2x128xf32>
    %256 = arith.mulf %254, %255 : vector<2x128xf32>
    %257 = vector.extract_strided_slice %241 {offsets = [0, 256], sizes = [2, 128], strides = [1, 1]} : vector<2x384xf32> to vector<2x128xf32>
    %258 = math.tanh %253 : vector<2x128xf32>
    %259 = arith.mulf %257, %258 : vector<2x128xf32>
    %260 = vector.extract_strided_slice %9 {offsets = [12, 0], sizes = [2, 512], strides = [1, 1]} : vector<16x1024xf32> to vector<2x512xf32>
    %261 = arith.truncf %256 : vector<2x128xf32> to vector<2x128xbf16>
    %cst_40 = arith.constant dense<0.000000e+00> : vector<2x512xf32>
    %262 = tpu.matmul %261, %13, %cst_40 {dimension_numbers = #tpu.dot_dimension_numbers<[1], [0], [0], [1], [0, 0, 1, 1], [], []>} : vector<2x128xbf16>, vector<128x512xbf16>, vector<2x512xf32> -> vector<2x512xf32>
    %263 = arith.addf %260, %262 : vector<2x512xf32>
    %264 = vector.extract_strided_slice %9 {offsets = [2, 512], sizes = [2, 512], strides = [1, 1]} : vector<16x1024xf32> to vector<2x512xf32>
    %265 = arith.truncf %259 : vector<2x128xf32> to vector<2x128xbf16>
    %cst_41 = arith.constant dense<0.000000e+00> : vector<2x512xf32>
    %266 = tpu.matmul %265, %15, %cst_41 {dimension_numbers = #tpu.dot_dimension_numbers<[1], [0], [0], [1], [0, 0, 1, 1], [], []>} : vector<2x128xbf16>, vector<128x512xbf16>, vector<2x512xf32> -> vector<2x512xf32>
    %267 = arith.addf %264, %266 : vector<2x512xf32>
    %268 = vector.extract_strided_slice %263 {offsets = [0, 0], sizes = [2, 384], strides = [1, 1]} : vector<2x512xf32> to vector<2x384xf32>
    %269 = arith.negf %268 : vector<2x384xf32>
    %270 = math.exp %269 : vector<2x384xf32>
    %cst_42 = arith.constant 1.000000e+00 : f32
    %271 = vector.broadcast %cst_42 : f32 to vector<2x384xf32>
    %272 = arith.addf %271, %270 : vector<2x384xf32>
    %273 = arith.divf %271, %272 : vector<2x384xf32>
    %274 = vector.extract_strided_slice %263 {offsets = [0, 384], sizes = [2, 128], strides = [1, 1]} : vector<2x512xf32> to vector<2x128xf32>
    %275 = math.tanh %274 : vector<2x128xf32>
    %276 = vector.extract_strided_slice %267 {offsets = [0, 0], sizes = [2, 384], strides = [1, 1]} : vector<2x512xf32> to vector<2x384xf32>
    %277 = arith.negf %276 : vector<2x384xf32>
    %278 = math.exp %277 : vector<2x384xf32>
    %cst_43 = arith.constant 1.000000e+00 : f32
    %279 = vector.broadcast %cst_43 : f32 to vector<2x384xf32>
    %280 = arith.addf %279, %278 : vector<2x384xf32>
    %281 = arith.divf %279, %280 : vector<2x384xf32>
    %282 = vector.extract_strided_slice %267 {offsets = [0, 384], sizes = [2, 128], strides = [1, 1]} : vector<2x512xf32> to vector<2x128xf32>
    %283 = math.tanh %282 : vector<2x128xf32>
    %284 = vector.extract_strided_slice %273 {offsets = [0, 128], sizes = [2, 128], strides = [1, 1]} : vector<2x384xf32> to vector<2x128xf32>
    %285 = arith.mulf %284, %248 : vector<2x128xf32>
    %286 = vector.extract_strided_slice %273 {offsets = [0, 0], sizes = [2, 128], strides = [1, 1]} : vector<2x384xf32> to vector<2x128xf32>
    %287 = arith.mulf %286, %275 : vector<2x128xf32>
    %288 = arith.addf %285, %287 : vector<2x128xf32>
    %289 = vector.extract_strided_slice %281 {offsets = [0, 128], sizes = [2, 128], strides = [1, 1]} : vector<2x384xf32> to vector<2x128xf32>
    %290 = arith.mulf %289, %253 : vector<2x128xf32>
    %291 = vector.extract_strided_slice %281 {offsets = [0, 0], sizes = [2, 128], strides = [1, 1]} : vector<2x384xf32> to vector<2x128xf32>
    %292 = arith.mulf %291, %283 : vector<2x128xf32>
    %293 = arith.addf %290, %292 : vector<2x128xf32>
    %294 = vector.extract_strided_slice %273 {offsets = [0, 256], sizes = [2, 128], strides = [1, 1]} : vector<2x384xf32> to vector<2x128xf32>
    %295 = math.tanh %288 : vector<2x128xf32>
    %296 = arith.mulf %294, %295 : vector<2x128xf32>
    %297 = vector.extract_strided_slice %281 {offsets = [0, 256], sizes = [2, 128], strides = [1, 1]} : vector<2x384xf32> to vector<2x128xf32>
    %298 = math.tanh %293 : vector<2x128xf32>
    %299 = arith.mulf %297, %298 : vector<2x128xf32>
    %300 = vector.extract_strided_slice %9 {offsets = [14, 0], sizes = [2, 512], strides = [1, 1]} : vector<16x1024xf32> to vector<2x512xf32>
    %301 = arith.truncf %296 : vector<2x128xf32> to vector<2x128xbf16>
    %cst_44 = arith.constant dense<0.000000e+00> : vector<2x512xf32>
    %302 = tpu.matmul %301, %13, %cst_44 {dimension_numbers = #tpu.dot_dimension_numbers<[1], [0], [0], [1], [0, 0, 1, 1], [], []>} : vector<2x128xbf16>, vector<128x512xbf16>, vector<2x512xf32> -> vector<2x512xf32>
    %303 = arith.addf %300, %302 : vector<2x512xf32>
    %304 = vector.extract_strided_slice %9 {offsets = [0, 512], sizes = [2, 512], strides = [1, 1]} : vector<16x1024xf32> to vector<2x512xf32>
    %305 = arith.truncf %299 : vector<2x128xf32> to vector<2x128xbf16>
    %cst_45 = arith.constant dense<0.000000e+00> : vector<2x512xf32>
    %306 = tpu.matmul %305, %15, %cst_45 {dimension_numbers = #tpu.dot_dimension_numbers<[1], [0], [0], [1], [0, 0, 1, 1], [], []>} : vector<2x128xbf16>, vector<128x512xbf16>, vector<2x512xf32> -> vector<2x512xf32>
    %307 = arith.addf %304, %306 : vector<2x512xf32>
    %308 = vector.extract_strided_slice %303 {offsets = [0, 0], sizes = [2, 384], strides = [1, 1]} : vector<2x512xf32> to vector<2x384xf32>
    %309 = arith.negf %308 : vector<2x384xf32>
    %310 = math.exp %309 : vector<2x384xf32>
    %cst_46 = arith.constant 1.000000e+00 : f32
    %311 = vector.broadcast %cst_46 : f32 to vector<2x384xf32>
    %312 = arith.addf %311, %310 : vector<2x384xf32>
    %313 = arith.divf %311, %312 : vector<2x384xf32>
    %314 = vector.extract_strided_slice %303 {offsets = [0, 384], sizes = [2, 128], strides = [1, 1]} : vector<2x512xf32> to vector<2x128xf32>
    %315 = math.tanh %314 : vector<2x128xf32>
    %316 = vector.extract_strided_slice %307 {offsets = [0, 0], sizes = [2, 384], strides = [1, 1]} : vector<2x512xf32> to vector<2x384xf32>
    %317 = arith.negf %316 : vector<2x384xf32>
    %318 = math.exp %317 : vector<2x384xf32>
    %cst_47 = arith.constant 1.000000e+00 : f32
    %319 = vector.broadcast %cst_47 : f32 to vector<2x384xf32>
    %320 = arith.addf %319, %318 : vector<2x384xf32>
    %321 = arith.divf %319, %320 : vector<2x384xf32>
    %322 = vector.extract_strided_slice %307 {offsets = [0, 384], sizes = [2, 128], strides = [1, 1]} : vector<2x512xf32> to vector<2x128xf32>
    %323 = math.tanh %322 : vector<2x128xf32>
    %324 = vector.extract_strided_slice %313 {offsets = [0, 128], sizes = [2, 128], strides = [1, 1]} : vector<2x384xf32> to vector<2x128xf32>
    %325 = arith.mulf %324, %288 : vector<2x128xf32>
    %326 = vector.extract_strided_slice %313 {offsets = [0, 0], sizes = [2, 128], strides = [1, 1]} : vector<2x384xf32> to vector<2x128xf32>
    %327 = arith.mulf %326, %315 : vector<2x128xf32>
    %328 = arith.addf %325, %327 : vector<2x128xf32>
    %329 = vector.extract_strided_slice %321 {offsets = [0, 128], sizes = [2, 128], strides = [1, 1]} : vector<2x384xf32> to vector<2x128xf32>
    %330 = arith.mulf %329, %293 : vector<2x128xf32>
    %331 = vector.extract_strided_slice %321 {offsets = [0, 0], sizes = [2, 128], strides = [1, 1]} : vector<2x384xf32> to vector<2x128xf32>
    %332 = arith.mulf %331, %323 : vector<2x128xf32>
    %333 = arith.addf %330, %332 : vector<2x128xf32>
    %334 = vector.extract_strided_slice %313 {offsets = [0, 256], sizes = [2, 128], strides = [1, 1]} : vector<2x384xf32> to vector<2x128xf32>
    %335 = math.tanh %328 : vector<2x128xf32>
    %336 = arith.mulf %334, %335 : vector<2x128xf32>
    %337 = vector.extract_strided_slice %321 {offsets = [0, 256], sizes = [2, 128], strides = [1, 1]} : vector<2x384xf32> to vector<2x128xf32>
    %338 = math.tanh %333 : vector<2x128xf32>
    %339 = arith.mulf %337, %338 : vector<2x128xf32>
    %340 = tpu.concatenate %336, %339 in 1 : vector<2x128xf32>, vector<2x128xf32> -> vector<2x256xf32>
    %c0_48 = arith.constant 0 : index
    %c0_49 = arith.constant 0 : index
    %c0_50 = arith.constant 0 : index
    %341 = vector.load %arg6[%c0_48, %c0_49, %c0_50] : memref<1x2x256xf32, #tpu.memory_space<vmem>>, vector<1x2x256xf32>
    %342 = vector.shape_cast %341 : vector<1x2x256xf32> to vector<2x256xf32>
    %343 = vector.shape_cast %340 : vector<2x256xf32> to vector<1x2x256xf32>
    tpu.vector_store %arg6[%c0_48, %c0_49, %c0_50], %343 {strides = array<i32>} : memref<1x2x256xf32, #tpu.memory_space<vmem>>, vector<1x2x256xf32>,
    %c0_i32 = arith.constant 0 : i32
    %344 = arith.cmpi eq, %arg0, %c0_i32 : i32
    %345 = arith.extui %344 : i1 to i32
    %c0_i32_51 = arith.constant 0 : i32
    %346 = arith.cmpi ne, %345, %c0_i32_51 : i32
    scf.if %346 {
      %347 = vector.shape_cast %56 : vector<2x128xf32> to vector<2x1x128xf32>
      %348 = vector.shape_cast %96 : vector<2x128xf32> to vector<2x1x128xf32>
      %349 = vector.shape_cast %136 : vector<2x128xf32> to vector<2x1x128xf32>
      %350 = vector.shape_cast %176 : vector<2x128xf32> to vector<2x1x128xf32>
      %351 = vector.shape_cast %216 : vector<2x128xf32> to vector<2x1x128xf32>
      %352 = vector.shape_cast %256 : vector<2x128xf32> to vector<2x1x128xf32>
      %353 = vector.shape_cast %296 : vector<2x128xf32> to vector<2x1x128xf32>
      %354 = vector.shape_cast %336 : vector<2x128xf32> to vector<2x1x128xf32>
      %355 = tpu.concatenate %347, %348, %349, %350, %351, %352, %353, %354 in 1 : vector<2x1x128xf32>, vector<2x1x128xf32>, vector<2x1x128xf32>, vector<2x1x128xf32>, vector<2x1x128xf32>, vector<2x1x128xf32>, vector<2x1x128xf32>, vector<2x1x128xf32> -> vector<2x8x128xf32>
      %356 = vector.shape_cast %339 : vector<2x128xf32> to vector<2x1x128xf32>
      %357 = vector.shape_cast %299 : vector<2x128xf32> to vector<2x1x128xf32>
      %358 = vector.shape_cast %259 : vector<2x128xf32> to vector<2x1x128xf32>
      %359 = vector.shape_cast %219 : vector<2x128xf32> to vector<2x1x128xf32>
      %360 = vector.shape_cast %179 : vector<2x128xf32> to vector<2x1x128xf32>
      %361 = vector.shape_cast %139 : vector<2x128xf32> to vector<2x1x128xf32>
      %362 = vector.shape_cast %99 : vector<2x128xf32> to vector<2x1x128xf32>
      %363 = vector.shape_cast %59 : vector<2x128xf32> to vector<2x1x128xf32>
      %364 = tpu.concatenate %356, %357, %358, %359, %360, %361, %362, %363 in 1 : vector<2x1x128xf32>, vector<2x1x128xf32>, vector<2x1x128xf32>, vector<2x1x128xf32>, vector<2x1x128xf32>, vector<2x1x128xf32>, vector<2x1x128xf32>, vector<2x1x128xf32> -> vector<2x8x128xf32>
      %365 = tpu.concatenate %355, %364 in 2 : vector<2x8x128xf32>, vector<2x8x128xf32> -> vector<2x8x256xf32>
      %c0_52 = arith.constant 0 : index
      %c0_53 = arith.constant 0 : index
      %c0_54 = arith.constant 0 : index
      %c0_55 = arith.constant 0 : index
      %366 = vector.load %arg5[%c0_52, %c0_53, %c0_54, %c0_55] : memref<1x2x8x256xf32, #tpu.memory_space<vmem>>, vector<1x2x8x256xf32>
      %367 = vector.shape_cast %366 : vector<1x2x8x256xf32> to vector<2x8x256xf32>
      %368 = vector.shape_cast %365 : vector<2x8x256xf32> to vector<1x2x8x256xf32>
      tpu.vector_store %arg5[%c0_52, %c0_53, %c0_54, %c0_55], %368 {strides = array<i32>} : memref<1x2x8x256xf32, #tpu.memory_space<vmem>>, vector<1x2x8x256xf32>,
    } else {
    }
    return
  }
  func.func @transform_0(%arg0: i32) -> (i32, i32, i32) {
    %c0_i32 = arith.constant 0 : i32
    %c0_i32_0 = arith.constant 0 : i32
    %c0_i32_1 = arith.constant 0 : i32
    return %arg0, %c0_i32, %c0_i32_0 : i32, i32, i32
  }
  func.func @transform_1(%arg0: i32) -> (i32, i32, i32) {
    %c0_i32 = arith.constant 0 : i32
    %c0_i32_0 = arith.constant 0 : i32
    %c0_i32_1 = arith.constant 0 : i32
    return %arg0, %c0_i32, %c0_i32_0 : i32, i32, i32
  }
  func.func @transform_2(%arg0: i32) -> (i32, i32, i32, i32) {
    %c0_i32 = arith.constant 0 : i32
    %c0_i32_0 = arith.constant 0 : i32
    %c0_i32_1 = arith.constant 0 : i32
    %c0_i32_2 = arith.constant 0 : i32
    return %arg0, %c0_i32, %c0_i32_0, %c0_i32_1 : i32, i32, i32, i32
  }
  func.func @transform_3(%arg0: i32) -> (i32, i32, i32) {
    %c0_i32 = arith.constant 0 : i32
    %c0_i32_0 = arith.constant 0 : i32
    %c0_i32_1 = arith.constant 0 : i32
    return %arg0, %c0_i32, %c0_i32_0 : i32, i32, i32
  }
  func.func @transform_4(%arg0: i32) -> (i32, i32, i32, i32) {
    %c0_i32 = arith.constant 0 : i32
    %c0_i32_0 = arith.constant 0 : i32
    %c0_i32_1 = arith.constant 0 : i32
    %c0_i32_2 = arith.constant 0 : i32
    return %arg0, %c0_i32, %c0_i32_0, %c0_i32_1 : i32, i32, i32, i32
  }
  func.func @transform_5(%arg0: i32) -> (i32, i32, i32) {
    %c0_i32 = arith.constant 0 : i32
    %c0_i32_0 = arith.constant 0 : i32
    %c0_i32_1 = arith.constant 0 : i32
    return %arg0, %c0_i32, %c0_i32_0 : i32, i32, i32
  }
}

module attributes {stable_mosaic.version = 11 : i64} {
  func.func @_mac_head_kernel(%arg0: memref<2x16x128xf32, #tpu.memory_space<vmem>>, %arg1: memref<2x2x8x256xf32, #tpu.memory_space<vmem>>, %arg2: memref<2x2x256xf32, #tpu.memory_space<vmem>>, %arg3: memref<11x128x128xbf16, #tpu.memory_space<vmem>>, %arg4: memref<6x256x128xbf16, #tpu.memory_space<vmem>>, %arg5: memref<16x128xf32, #tpu.memory_space<vmem>>, %arg6: memref<2x128xf32, #tpu.memory_space<vmem>>) attributes {dimension_semantics = [], scalar_prefetch = 0 : i64, scratch_operands = 0 : i64, tpu.core_type = #tpu.core_type<tc>} {
    %c0 = arith.constant 0 : index
    %c0_0 = arith.constant 0 : index
    %c0_1 = arith.constant 0 : index
    %0 = vector.load %arg0[%c0, %c0_0, %c0_1] : memref<2x16x128xf32, #tpu.memory_space<vmem>>, vector<2x16x128xf32>
    %c0_2 = arith.constant 0 : index
    %c0_3 = arith.constant 0 : index
    %c0_4 = arith.constant 0 : index
    %c0_5 = arith.constant 0 : index
    %1 = vector.load %arg1[%c0_2, %c0_3, %c0_4, %c0_5] : memref<2x2x8x256xf32, #tpu.memory_space<vmem>>, vector<1x2x8x256xf32>
    %2 = vector.shape_cast %1 : vector<1x2x8x256xf32> to vector<2x8x256xf32>
    %c0_6 = arith.constant 0 : index
    %c0_7 = arith.constant 0 : index
    %c0_8 = arith.constant 0 : index
    %3 = vector.load %arg2[%c0_6, %c0_7, %c0_8] : memref<2x2x256xf32, #tpu.memory_space<vmem>>, vector<1x2x256xf32>
    %4 = vector.shape_cast %3 : vector<1x2x256xf32> to vector<2x256xf32>
    %c1 = arith.constant 1 : index
    %c0_9 = arith.constant 0 : index
    %c0_10 = arith.constant 0 : index
    %5 = vector.load %arg2[%c1, %c0_9, %c0_10] : memref<2x2x256xf32, #tpu.memory_space<vmem>>, vector<1x2x256xf32>
    %6 = vector.shape_cast %5 : vector<1x2x256xf32> to vector<2x256xf32>
    %c0_11 = arith.constant 0 : index
    %c0_12 = arith.constant 0 : index
    %7 = vector.load %arg5[%c0_11, %c0_12] : memref<16x128xf32, #tpu.memory_space<vmem>>, vector<16x128xf32>
    %8 = vector.shape_cast %0 : vector<2x16x128xf32> to vector<32x128xf32>
    %c0_13 = arith.constant 0 : index
    %c0_14 = arith.constant 0 : index
    %c0_15 = arith.constant 0 : index
    %9 = vector.load %arg3[%c0_13, %c0_14, %c0_15] : memref<11x128x128xbf16, #tpu.memory_space<vmem>>, vector<1x128x128xbf16>
    %10 = vector.shape_cast %9 : vector<1x128x128xbf16> to vector<128x128xbf16>
    %11 = arith.truncf %8 : vector<32x128xf32> to vector<32x128xbf16>
    %cst = arith.constant dense<0.000000e+00> : vector<32x128xf32>
    %12 = tpu.matmul %11, %10, %cst {dimension_numbers = #tpu.dot_dimension_numbers<[1], [0], [0], [1], [0, 0, 1, 1], [], []>} : vector<32x128xbf16>, vector<128x128xbf16>, vector<32x128xf32> -> vector<32x128xf32>
    %13 = vector.extract_strided_slice %7 {offsets = [0, 0], sizes = [1, 128], strides = [1, 1]} : vector<16x128xf32> to vector<1x128xf32>
    %14 = vector.broadcast %13 : vector<1x128xf32> to vector<32x128xf32>
    %15 = arith.addf %12, %14 : vector<32x128xf32>
    %cst_16 = arith.constant 0.000000e+00 : f32
    %16 = vector.broadcast %cst_16 : f32 to vector<32x128xf32>
    %17 = arith.cmpf ogt, %15, %16 : vector<32x128xf32>
    %cst_17 = arith.constant 0.000000e+00 : f32
    %18 = vector.broadcast %cst_17 : f32 to vector<32x128xf32>
    %19 = arith.minimumf %15, %18 : vector<32x128xf32>
    %20 = math.exp %19 : vector<32x128xf32>
    %cst_18 = arith.constant 1.000000e+00 : f32
    %21 = vector.broadcast %cst_18 : f32 to vector<32x128xf32>
    %22 = arith.subf %20, %21 : vector<32x128xf32>
    %23 = arith.select %17, %15, %22 : vector<32x128xi1>, vector<32x128xf32>
    %c1_19 = arith.constant 1 : index
    %c0_20 = arith.constant 0 : index
    %c0_21 = arith.constant 0 : index
    %24 = vector.load %arg3[%c1_19, %c0_20, %c0_21] : memref<11x128x128xbf16, #tpu.memory_space<vmem>>, vector<1x128x128xbf16>
    %25 = vector.shape_cast %24 : vector<1x128x128xbf16> to vector<128x128xbf16>
    %26 = arith.truncf %23 : vector<32x128xf32> to vector<32x128xbf16>
    %cst_22 = arith.constant dense<0.000000e+00> : vector<32x128xf32>
    %27 = tpu.matmul %26, %25, %cst_22 {dimension_numbers = #tpu.dot_dimension_numbers<[1], [0], [0], [1], [0, 0, 1, 1], [], []>} : vector<32x128xbf16>, vector<128x128xbf16>, vector<32x128xf32> -> vector<32x128xf32>
    %28 = vector.extract_strided_slice %7 {offsets = [1, 0], sizes = [1, 128], strides = [1, 1]} : vector<16x128xf32> to vector<1x128xf32>
    %29 = vector.broadcast %28 : vector<1x128xf32> to vector<32x128xf32>
    %30 = arith.addf %27, %29 : vector<32x128xf32>
    %cst_23 = arith.constant 0.000000e+00 : f32
    %31 = vector.broadcast %cst_23 : f32 to vector<32x128xf32>
    %32 = arith.cmpf ogt, %30, %31 : vector<32x128xf32>
    %cst_24 = arith.constant 0.000000e+00 : f32
    %33 = vector.broadcast %cst_24 : f32 to vector<32x128xf32>
    %34 = arith.minimumf %30, %33 : vector<32x128xf32>
    %35 = math.exp %34 : vector<32x128xf32>
    %cst_25 = arith.constant 1.000000e+00 : f32
    %36 = vector.broadcast %cst_25 : f32 to vector<32x128xf32>
    %37 = arith.subf %35, %36 : vector<32x128xf32>
    %38 = arith.select %32, %30, %37 : vector<32x128xi1>, vector<32x128xf32>
    %39 = vector.shape_cast %38 : vector<32x128xf32> to vector<2x16x128xf32>
    %40 = vector.shape_cast %2 : vector<2x8x256xf32> to vector<16x256xf32>
    %c0_26 = arith.constant 0 : index
    %c0_27 = arith.constant 0 : index
    %c0_28 = arith.constant 0 : index
    %41 = vector.load %arg4[%c0_26, %c0_27, %c0_28] : memref<6x256x128xbf16, #tpu.memory_space<vmem>>, vector<1x256x128xbf16>
    %42 = vector.shape_cast %41 : vector<1x256x128xbf16> to vector<256x128xbf16>
    %43 = arith.truncf %40 : vector<16x256xf32> to vector<16x256xbf16>
    %cst_29 = arith.constant dense<0.000000e+00> : vector<16x128xf32>
    %44 = tpu.matmul %43, %42, %cst_29 {dimension_numbers = #tpu.dot_dimension_numbers<[1], [0], [0], [1], [0, 0, 1, 1], [], []>} : vector<16x256xbf16>, vector<256x128xbf16>, vector<16x128xf32> -> vector<16x128xf32>
    %45 = vector.extract_strided_slice %7 {offsets = [2, 0], sizes = [1, 128], strides = [1, 1]} : vector<16x128xf32> to vector<1x128xf32>
    %46 = vector.broadcast %45 : vector<1x128xf32> to vector<16x128xf32>
    %47 = arith.addf %44, %46 : vector<16x128xf32>
    %48 = vector.shape_cast %47 : vector<16x128xf32> to vector<2x8x128xf32>
    %c6 = arith.constant 6 : index
    %c0_30 = arith.constant 0 : index
    %c0_31 = arith.constant 0 : index
    %49 = vector.load %arg3[%c6, %c0_30, %c0_31] : memref<11x128x128xbf16, #tpu.memory_space<vmem>>, vector<1x128x128xbf16>
    %50 = vector.shape_cast %49 : vector<1x128x128xbf16> to vector<128x128xbf16>
    %51 = arith.truncf %38 : vector<32x128xf32> to vector<32x128xbf16>
    %cst_32 = arith.constant dense<0.000000e+00> : vector<32x128xf32>
    %52 = tpu.matmul %51, %50, %cst_32 {dimension_numbers = #tpu.dot_dimension_numbers<[1], [0], [0], [1], [0, 0, 1, 1], [], []>} : vector<32x128xbf16>, vector<128x128xbf16>, vector<32x128xf32> -> vector<32x128xf32>
    %53 = vector.shape_cast %52 : vector<32x128xf32> to vector<2x16x128xf32>
    %54 = vector.extract_strided_slice %7 {offsets = [14, 0], sizes = [1, 128], strides = [1, 1]} : vector<16x128xf32> to vector<1x128xf32>
    %55 = vector.extract_strided_slice %7 {offsets = [15, 0], sizes = [1, 128], strides = [1, 1]} : vector<16x128xf32> to vector<1x128xf32>
    %56 = vector.extract_strided_slice %7 {offsets = [13, 0], sizes = [1, 128], strides = [1, 1]} : vector<16x128xf32> to vector<1x128xf32>
    %57 = vector.shape_cast %56 : vector<1x128xf32> to vector<1x128xf32>
    %58 = vector.broadcast %57 : vector<1x128xf32> to vector<2x128xf32>
    %59 = vector.extract_strided_slice %7 {offsets = [12, 0], sizes = [1, 128], strides = [1, 1]} : vector<16x128xf32> to vector<1x128xf32>
    %60 = vector.shape_cast %59 : vector<1x128xf32> to vector<1x128xf32>
    %61 = vector.broadcast %60 : vector<1x128xf32> to vector<2x128xf32>
    %c1_33 = arith.constant 1 : index
    %c0_34 = arith.constant 0 : index
    %c0_35 = arith.constant 0 : index
    %62 = vector.load %arg4[%c1_33, %c0_34, %c0_35] : memref<6x256x128xbf16, #tpu.memory_space<vmem>>, vector<1x256x128xbf16>
    %63 = vector.shape_cast %62 : vector<1x256x128xbf16> to vector<256x128xbf16>
    %64 = arith.truncf %4 : vector<2x256xf32> to vector<2x256xbf16>
    %cst_36 = arith.constant dense<0.000000e+00> : vector<2x128xf32>
    %65 = tpu.matmul %64, %63, %cst_36 {dimension_numbers = #tpu.dot_dimension_numbers<[1], [0], [0], [1], [0, 0, 1, 1], [], []>} : vector<2x256xbf16>, vector<256x128xbf16>, vector<2x128xf32> -> vector<2x128xf32>
    %66 = vector.extract_strided_slice %7 {offsets = [3, 0], sizes = [1, 128], strides = [1, 1]} : vector<16x128xf32> to vector<1x128xf32>
    %67 = vector.broadcast %66 : vector<1x128xf32> to vector<2x128xf32>
    %68 = arith.addf %65, %67 : vector<2x128xf32>
    %c2 = arith.constant 2 : index
    %c0_37 = arith.constant 0 : index
    %c0_38 = arith.constant 0 : index
    %69 = vector.load %arg3[%c2, %c0_37, %c0_38] : memref<11x128x128xbf16, #tpu.memory_space<vmem>>, vector<1x128x128xbf16>
    %70 = vector.shape_cast %69 : vector<1x128x128xbf16> to vector<128x128xbf16>
    %71 = arith.truncf %58 : vector<2x128xf32> to vector<2x128xbf16>
    %cst_39 = arith.constant dense<0.000000e+00> : vector<2x128xf32>
    %72 = tpu.matmul %71, %70, %cst_39 {dimension_numbers = #tpu.dot_dimension_numbers<[1], [0], [0], [1], [0, 0, 1, 1], [], []>} : vector<2x128xbf16>, vector<128x128xbf16>, vector<2x128xf32> -> vector<2x128xf32>
    %c3 = arith.constant 3 : index
    %c0_40 = arith.constant 0 : index
    %c0_41 = arith.constant 0 : index
    %73 = vector.load %arg3[%c3, %c0_40, %c0_41] : memref<11x128x128xbf16, #tpu.memory_space<vmem>>, vector<1x128x128xbf16>
    %74 = vector.shape_cast %73 : vector<1x128x128xbf16> to vector<128x128xbf16>
    %75 = arith.truncf %68 : vector<2x128xf32> to vector<2x128xbf16>
    %cst_42 = arith.constant dense<0.000000e+00> : vector<2x128xf32>
    %76 = tpu.matmul %75, %74, %cst_42 {dimension_numbers = #tpu.dot_dimension_numbers<[1], [0], [0], [1], [0, 0, 1, 1], [], []>} : vector<2x128xbf16>, vector<128x128xbf16>, vector<2x128xf32> -> vector<2x128xf32>
    %77 = arith.addf %72, %76 : vector<2x128xf32>
    %78 = vector.extract_strided_slice %7 {offsets = [6, 0], sizes = [1, 128], strides = [1, 1]} : vector<16x128xf32> to vector<1x128xf32>
    %79 = vector.broadcast %78 : vector<1x128xf32> to vector<2x128xf32>
    %80 = arith.addf %77, %79 : vector<2x128xf32>
    %81 = vector.broadcast %54 : vector<1x128xf32> to vector<2x128xf32>
    %82 = arith.mulf %80, %81 : vector<2x128xf32>
    %83 = vector.shape_cast %82 : vector<2x128xf32> to vector<2x1x128xf32>
    %84 = vector.broadcast %83 : vector<2x1x128xf32> to vector<2x8x128xf32>
    %85 = arith.mulf %84, %48 : vector<2x8x128xf32>
    %cst_43 = arith.constant dense<0.000000e+00> : vector<2x8xf32>
    %86 = vector.multi_reduction <add>, %85, %cst_43 [2] : vector<2x8x128xf32> to vector<2x8xf32>
    %cst_44 = arith.constant dense<0xFF800000> : vector<2xf32>
    %87 = vector.multi_reduction <maximumf>, %86, %cst_44 [1] : vector<2x8xf32> to vector<2xf32>
    %88 = vector.shape_cast %87 : vector<2xf32> to vector<2x1xf32>
    %89 = vector.broadcast %88 : vector<2x1xf32> to vector<2x8xf32>
    %90 = arith.subf %86, %89 : vector<2x8xf32>
    %91 = math.exp %90 : vector<2x8xf32>
    %cst_45 = arith.constant dense<0.000000e+00> : vector<2xf32>
    %92 = vector.multi_reduction <add>, %91, %cst_45 [1] : vector<2x8xf32> to vector<2xf32>
    %93 = vector.shape_cast %92 : vector<2xf32> to vector<2x1xf32>
    %94 = vector.broadcast %93 : vector<2x1xf32> to vector<2x8xf32>
    %95 = arith.divf %91, %94 : vector<2x8xf32>
    %96 = vector.shape_cast %95 : vector<2x8xf32> to vector<2x8x1xf32>
    %97 = vector.broadcast %96 : vector<2x8x1xf32> to vector<2x8x128xf32>
    %98 = arith.mulf %97, %48 : vector<2x8x128xf32>
    %cst_46 = arith.constant dense<0.000000e+00> : vector<2x128xf32>
    %99 = vector.multi_reduction <add>, %98, %cst_46 [1] : vector<2x8x128xf32> to vector<2x128xf32>
    %c4 = arith.constant 4 : index
    %c0_47 = arith.constant 0 : index
    %c0_48 = arith.constant 0 : index
    %100 = vector.load %arg3[%c4, %c0_47, %c0_48] : memref<11x128x128xbf16, #tpu.memory_space<vmem>>, vector<1x128x128xbf16>
    %101 = vector.shape_cast %100 : vector<1x128x128xbf16> to vector<128x128xbf16>
    %102 = arith.truncf %61 : vector<2x128xf32> to vector<2x128xbf16>
    %cst_49 = arith.constant dense<0.000000e+00> : vector<2x128xf32>
    %103 = tpu.matmul %102, %101, %cst_49 {dimension_numbers = #tpu.dot_dimension_numbers<[1], [0], [0], [1], [0, 0, 1, 1], [], []>} : vector<2x128xbf16>, vector<128x128xbf16>, vector<2x128xf32> -> vector<2x128xf32>
    %104 = vector.extract_strided_slice %7 {offsets = [7, 0], sizes = [1, 128], strides = [1, 1]} : vector<16x128xf32> to vector<1x128xf32>
    %105 = vector.broadcast %104 : vector<1x128xf32> to vector<2x128xf32>
    %106 = arith.addf %103, %105 : vector<2x128xf32>
    %107 = vector.shape_cast %106 : vector<2x128xf32> to vector<2x1x128xf32>
    %108 = vector.broadcast %107 : vector<2x1x128xf32> to vector<2x16x128xf32>
    %109 = arith.mulf %108, %39 : vector<2x16x128xf32>
    %110 = vector.shape_cast %109 : vector<2x16x128xf32> to vector<32x128xf32>
    %c5 = arith.constant 5 : index
    %c0_50 = arith.constant 0 : index
    %c0_51 = arith.constant 0 : index
    %111 = vector.load %arg3[%c5, %c0_50, %c0_51] : memref<11x128x128xbf16, #tpu.memory_space<vmem>>, vector<1x128x128xbf16>
    %112 = vector.shape_cast %111 : vector<1x128x128xbf16> to vector<128x128xbf16>
    %113 = arith.truncf %110 : vector<32x128xf32> to vector<32x128xbf16>
    %cst_52 = arith.constant dense<0.000000e+00> : vector<32x128xf32>
    %114 = tpu.matmul %113, %112, %cst_52 {dimension_numbers = #tpu.dot_dimension_numbers<[1], [0], [0], [1], [0, 0, 1, 1], [], []>} : vector<32x128xbf16>, vector<128x128xbf16>, vector<32x128xf32> -> vector<32x128xf32>
    %115 = vector.shape_cast %114 : vector<32x128xf32> to vector<2x16x128xf32>
    %116 = arith.addf %115, %53 : vector<2x16x128xf32>
    %117 = vector.extract_strided_slice %7 {offsets = [8, 0], sizes = [1, 128], strides = [1, 1]} : vector<16x128xf32> to vector<1x128xf32>
    %118 = vector.shape_cast %117 : vector<1x128xf32> to vector<1x1x128xf32>
    %119 = vector.broadcast %118 : vector<1x1x128xf32> to vector<2x16x128xf32>
    %120 = arith.addf %116, %119 : vector<2x16x128xf32>
    %121 = vector.broadcast %55 : vector<1x128xf32> to vector<2x128xf32>
    %122 = arith.mulf %99, %121 : vector<2x128xf32>
    %123 = vector.shape_cast %122 : vector<2x128xf32> to vector<2x1x128xf32>
    %124 = vector.broadcast %123 : vector<2x1x128xf32> to vector<2x16x128xf32>
    %125 = arith.mulf %120, %124 : vector<2x16x128xf32>
    %cst_53 = arith.constant dense<0.000000e+00> : vector<2x16xf32>
    %126 = vector.multi_reduction <add>, %125, %cst_53 [2] : vector<2x16x128xf32> to vector<2x16xf32>
    %cst_54 = arith.constant dense<0xFF800000> : vector<2xf32>
    %127 = vector.multi_reduction <maximumf>, %126, %cst_54 [1] : vector<2x16xf32> to vector<2xf32>
    %128 = vector.shape_cast %127 : vector<2xf32> to vector<2x1xf32>
    %129 = vector.broadcast %128 : vector<2x1xf32> to vector<2x16xf32>
    %130 = arith.subf %126, %129 : vector<2x16xf32>
    %131 = math.exp %130 : vector<2x16xf32>
    %cst_55 = arith.constant dense<0.000000e+00> : vector<2xf32>
    %132 = vector.multi_reduction <add>, %131, %cst_55 [1] : vector<2x16xf32> to vector<2xf32>
    %133 = vector.shape_cast %132 : vector<2xf32> to vector<2x1xf32>
    %134 = vector.broadcast %133 : vector<2x1xf32> to vector<2x16xf32>
    %135 = arith.divf %131, %134 : vector<2x16xf32>
    %136 = vector.shape_cast %135 : vector<2x16xf32> to vector<2x16x1xf32>
    %137 = vector.broadcast %136 : vector<2x16x1xf32> to vector<2x16x128xf32>
    %138 = arith.mulf %137, %39 : vector<2x16x128xf32>
    %cst_56 = arith.constant dense<0.000000e+00> : vector<2x128xf32>
    %139 = vector.multi_reduction <add>, %138, %cst_56 [1] : vector<2x16x128xf32> to vector<2x128xf32>
    %c7 = arith.constant 7 : index
    %c0_57 = arith.constant 0 : index
    %c0_58 = arith.constant 0 : index
    %140 = vector.load %arg3[%c7, %c0_57, %c0_58] : memref<11x128x128xbf16, #tpu.memory_space<vmem>>, vector<1x128x128xbf16>
    %141 = vector.shape_cast %140 : vector<1x128x128xbf16> to vector<128x128xbf16>
    %142 = arith.truncf %139 : vector<2x128xf32> to vector<2x128xbf16>
    %cst_59 = arith.constant dense<0.000000e+00> : vector<2x128xf32>
    %143 = tpu.matmul %142, %141, %cst_59 {dimension_numbers = #tpu.dot_dimension_numbers<[1], [0], [0], [1], [0, 0, 1, 1], [], []>} : vector<2x128xbf16>, vector<128x128xbf16>, vector<2x128xf32> -> vector<2x128xf32>
    %c8 = arith.constant 8 : index
    %c0_60 = arith.constant 0 : index
    %c0_61 = arith.constant 0 : index
    %144 = vector.load %arg3[%c8, %c0_60, %c0_61] : memref<11x128x128xbf16, #tpu.memory_space<vmem>>, vector<1x128x128xbf16>
    %145 = vector.shape_cast %144 : vector<1x128x128xbf16> to vector<128x128xbf16>
    %146 = arith.truncf %61 : vector<2x128xf32> to vector<2x128xbf16>
    %cst_62 = arith.constant dense<0.000000e+00> : vector<2x128xf32>
    %147 = tpu.matmul %146, %145, %cst_62 {dimension_numbers = #tpu.dot_dimension_numbers<[1], [0], [0], [1], [0, 0, 1, 1], [], []>} : vector<2x128xbf16>, vector<128x128xbf16>, vector<2x128xf32> -> vector<2x128xf32>
    %148 = arith.addf %143, %147 : vector<2x128xf32>
    %149 = vector.extract_strided_slice %7 {offsets = [9, 0], sizes = [1, 128], strides = [1, 1]} : vector<16x128xf32> to vector<1x128xf32>
    %150 = vector.broadcast %149 : vector<1x128xf32> to vector<2x128xf32>
    %151 = arith.addf %148, %150 : vector<2x128xf32>
    %c2_63 = arith.constant 2 : index
    %c0_64 = arith.constant 0 : index
    %c0_65 = arith.constant 0 : index
    %152 = vector.load %arg4[%c2_63, %c0_64, %c0_65] : memref<6x256x128xbf16, #tpu.memory_space<vmem>>, vector<1x256x128xbf16>
    %153 = vector.shape_cast %152 : vector<1x256x128xbf16> to vector<256x128xbf16>
    %154 = arith.truncf %4 : vector<2x256xf32> to vector<2x256xbf16>
    %cst_66 = arith.constant dense<0.000000e+00> : vector<2x128xf32>
    %155 = tpu.matmul %154, %153, %cst_66 {dimension_numbers = #tpu.dot_dimension_numbers<[1], [0], [0], [1], [0, 0, 1, 1], [], []>} : vector<2x256xbf16>, vector<256x128xbf16>, vector<2x128xf32> -> vector<2x128xf32>
    %156 = vector.extract_strided_slice %7 {offsets = [4, 0], sizes = [1, 128], strides = [1, 1]} : vector<16x128xf32> to vector<1x128xf32>
    %157 = vector.broadcast %156 : vector<1x128xf32> to vector<2x128xf32>
    %158 = arith.addf %155, %157 : vector<2x128xf32>
    %c2_67 = arith.constant 2 : index
    %c0_68 = arith.constant 0 : index
    %c0_69 = arith.constant 0 : index
    %159 = vector.load %arg3[%c2_67, %c0_68, %c0_69] : memref<11x128x128xbf16, #tpu.memory_space<vmem>>, vector<1x128x128xbf16>
    %160 = vector.shape_cast %159 : vector<1x128x128xbf16> to vector<128x128xbf16>
    %161 = arith.truncf %99 : vector<2x128xf32> to vector<2x128xbf16>
    %cst_70 = arith.constant dense<0.000000e+00> : vector<2x128xf32>
    %162 = tpu.matmul %161, %160, %cst_70 {dimension_numbers = #tpu.dot_dimension_numbers<[1], [0], [0], [1], [0, 0, 1, 1], [], []>} : vector<2x128xbf16>, vector<128x128xbf16>, vector<2x128xf32> -> vector<2x128xf32>
    %c3_71 = arith.constant 3 : index
    %c0_72 = arith.constant 0 : index
    %c0_73 = arith.constant 0 : index
    %163 = vector.load %arg3[%c3_71, %c0_72, %c0_73] : memref<11x128x128xbf16, #tpu.memory_space<vmem>>, vector<1x128x128xbf16>
    %164 = vector.shape_cast %163 : vector<1x128x128xbf16> to vector<128x128xbf16>
    %165 = arith.truncf %158 : vector<2x128xf32> to vector<2x128xbf16>
    %cst_74 = arith.constant dense<0.000000e+00> : vector<2x128xf32>
    %166 = tpu.matmul %165, %164, %cst_74 {dimension_numbers = #tpu.dot_dimension_numbers<[1], [0], [0], [1], [0, 0, 1, 1], [], []>} : vector<2x128xbf16>, vector<128x128xbf16>, vector<2x128xf32> -> vector<2x128xf32>
    %167 = arith.addf %162, %166 : vector<2x128xf32>
    %168 = vector.extract_strided_slice %7 {offsets = [6, 0], sizes = [1, 128], strides = [1, 1]} : vector<16x128xf32> to vector<1x128xf32>
    %169 = vector.broadcast %168 : vector<1x128xf32> to vector<2x128xf32>
    %170 = arith.addf %167, %169 : vector<2x128xf32>
    %171 = vector.broadcast %54 : vector<1x128xf32> to vector<2x128xf32>
    %172 = arith.mulf %170, %171 : vector<2x128xf32>
    %173 = vector.shape_cast %172 : vector<2x128xf32> to vector<2x1x128xf32>
    %174 = vector.broadcast %173 : vector<2x1x128xf32> to vector<2x8x128xf32>
    %175 = arith.mulf %174, %48 : vector<2x8x128xf32>
    %cst_75 = arith.constant dense<0.000000e+00> : vector<2x8xf32>
    %176 = vector.multi_reduction <add>, %175, %cst_75 [2] : vector<2x8x128xf32> to vector<2x8xf32>
    %cst_76 = arith.constant dense<0xFF800000> : vector<2xf32>
    %177 = vector.multi_reduction <maximumf>, %176, %cst_76 [1] : vector<2x8xf32> to vector<2xf32>
    %178 = vector.shape_cast %177 : vector<2xf32> to vector<2x1xf32>
    %179 = vector.broadcast %178 : vector<2x1xf32> to vector<2x8xf32>
    %180 = arith.subf %176, %179 : vector<2x8xf32>
    %181 = math.exp %180 : vector<2x8xf32>
    %cst_77 = arith.constant dense<0.000000e+00> : vector<2xf32>
    %182 = vector.multi_reduction <add>, %181, %cst_77 [1] : vector<2x8xf32> to vector<2xf32>
    %183 = vector.shape_cast %182 : vector<2xf32> to vector<2x1xf32>
    %184 = vector.broadcast %183 : vector<2x1xf32> to vector<2x8xf32>
    %185 = arith.divf %181, %184 : vector<2x8xf32>
    %186 = vector.shape_cast %185 : vector<2x8xf32> to vector<2x8x1xf32>
    %187 = vector.broadcast %186 : vector<2x8x1xf32> to vector<2x8x128xf32>
    %188 = arith.mulf %187, %48 : vector<2x8x128xf32>
    %cst_78 = arith.constant dense<0.000000e+00> : vector<2x128xf32>
    %189 = vector.multi_reduction <add>, %188, %cst_78 [1] : vector<2x8x128xf32> to vector<2x128xf32>
    %c4_79 = arith.constant 4 : index
    %c0_80 = arith.constant 0 : index
    %c0_81 = arith.constant 0 : index
    %190 = vector.load %arg3[%c4_79, %c0_80, %c0_81] : memref<11x128x128xbf16, #tpu.memory_space<vmem>>, vector<1x128x128xbf16>
    %191 = vector.shape_cast %190 : vector<1x128x128xbf16> to vector<128x128xbf16>
    %192 = arith.truncf %151 : vector<2x128xf32> to vector<2x128xbf16>
    %cst_82 = arith.constant dense<0.000000e+00> : vector<2x128xf32>
    %193 = tpu.matmul %192, %191, %cst_82 {dimension_numbers = #tpu.dot_dimension_numbers<[1], [0], [0], [1], [0, 0, 1, 1], [], []>} : vector<2x128xbf16>, vector<128x128xbf16>, vector<2x128xf32> -> vector<2x128xf32>
    %194 = vector.extract_strided_slice %7 {offsets = [7, 0], sizes = [1, 128], strides = [1, 1]} : vector<16x128xf32> to vector<1x128xf32>
    %195 = vector.broadcast %194 : vector<1x128xf32> to vector<2x128xf32>
    %196 = arith.addf %193, %195 : vector<2x128xf32>
    %197 = vector.shape_cast %196 : vector<2x128xf32> to vector<2x1x128xf32>
    %198 = vector.broadcast %197 : vector<2x1x128xf32> to vector<2x16x128xf32>
    %199 = arith.mulf %198, %39 : vector<2x16x128xf32>
    %200 = vector.shape_cast %199 : vector<2x16x128xf32> to vector<32x128xf32>
    %c5_83 = arith.constant 5 : index
    %c0_84 = arith.constant 0 : index
    %c0_85 = arith.constant 0 : index
    %201 = vector.load %arg3[%c5_83, %c0_84, %c0_85] : memref<11x128x128xbf16, #tpu.memory_space<vmem>>, vector<1x128x128xbf16>
    %202 = vector.shape_cast %201 : vector<1x128x128xbf16> to vector<128x128xbf16>
    %203 = arith.truncf %200 : vector<32x128xf32> to vector<32x128xbf16>
    %cst_86 = arith.constant dense<0.000000e+00> : vector<32x128xf32>
    %204 = tpu.matmul %203, %202, %cst_86 {dimension_numbers = #tpu.dot_dimension_numbers<[1], [0], [0], [1], [0, 0, 1, 1], [], []>} : vector<32x128xbf16>, vector<128x128xbf16>, vector<32x128xf32> -> vector<32x128xf32>
    %205 = vector.shape_cast %204 : vector<32x128xf32> to vector<2x16x128xf32>
    %206 = arith.addf %205, %53 : vector<2x16x128xf32>
    %207 = vector.extract_strided_slice %7 {offsets = [8, 0], sizes = [1, 128], strides = [1, 1]} : vector<16x128xf32> to vector<1x128xf32>
    %208 = vector.shape_cast %207 : vector<1x128xf32> to vector<1x1x128xf32>
    %209 = vector.broadcast %208 : vector<1x1x128xf32> to vector<2x16x128xf32>
    %210 = arith.addf %206, %209 : vector<2x16x128xf32>
    %211 = vector.broadcast %55 : vector<1x128xf32> to vector<2x128xf32>
    %212 = arith.mulf %189, %211 : vector<2x128xf32>
    %213 = vector.shape_cast %212 : vector<2x128xf32> to vector<2x1x128xf32>
    %214 = vector.broadcast %213 : vector<2x1x128xf32> to vector<2x16x128xf32>
    %215 = arith.mulf %210, %214 : vector<2x16x128xf32>
    %cst_87 = arith.constant dense<0.000000e+00> : vector<2x16xf32>
    %216 = vector.multi_reduction <add>, %215, %cst_87 [2] : vector<2x16x128xf32> to vector<2x16xf32>
    %cst_88 = arith.constant dense<0xFF800000> : vector<2xf32>
    %217 = vector.multi_reduction <maximumf>, %216, %cst_88 [1] : vector<2x16xf32> to vector<2xf32>
    %218 = vector.shape_cast %217 : vector<2xf32> to vector<2x1xf32>
    %219 = vector.broadcast %218 : vector<2x1xf32> to vector<2x16xf32>
    %220 = arith.subf %216, %219 : vector<2x16xf32>
    %221 = math.exp %220 : vector<2x16xf32>
    %cst_89 = arith.constant dense<0.000000e+00> : vector<2xf32>
    %222 = vector.multi_reduction <add>, %221, %cst_89 [1] : vector<2x16xf32> to vector<2xf32>
    %223 = vector.shape_cast %222 : vector<2xf32> to vector<2x1xf32>
    %224 = vector.broadcast %223 : vector<2x1xf32> to vector<2x16xf32>
    %225 = arith.divf %221, %224 : vector<2x16xf32>
    %226 = vector.shape_cast %225 : vector<2x16xf32> to vector<2x16x1xf32>
    %227 = vector.broadcast %226 : vector<2x16x1xf32> to vector<2x16x128xf32>
    %228 = arith.mulf %227, %39 : vector<2x16x128xf32>
    %cst_90 = arith.constant dense<0.000000e+00> : vector<2x128xf32>
    %229 = vector.multi_reduction <add>, %228, %cst_90 [1] : vector<2x16x128xf32> to vector<2x128xf32>
    %c7_91 = arith.constant 7 : index
    %c0_92 = arith.constant 0 : index
    %c0_93 = arith.constant 0 : index
    %230 = vector.load %arg3[%c7_91, %c0_92, %c0_93] : memref<11x128x128xbf16, #tpu.memory_space<vmem>>, vector<1x128x128xbf16>
    %231 = vector.shape_cast %230 : vector<1x128x128xbf16> to vector<128x128xbf16>
    %232 = arith.truncf %229 : vector<2x128xf32> to vector<2x128xbf16>
    %cst_94 = arith.constant dense<0.000000e+00> : vector<2x128xf32>
    %233 = tpu.matmul %232, %231, %cst_94 {dimension_numbers = #tpu.dot_dimension_numbers<[1], [0], [0], [1], [0, 0, 1, 1], [], []>} : vector<2x128xbf16>, vector<128x128xbf16>, vector<2x128xf32> -> vector<2x128xf32>
    %c8_95 = arith.constant 8 : index
    %c0_96 = arith.constant 0 : index
    %c0_97 = arith.constant 0 : index
    %234 = vector.load %arg3[%c8_95, %c0_96, %c0_97] : memref<11x128x128xbf16, #tpu.memory_space<vmem>>, vector<1x128x128xbf16>
    %235 = vector.shape_cast %234 : vector<1x128x128xbf16> to vector<128x128xbf16>
    %236 = arith.truncf %151 : vector<2x128xf32> to vector<2x128xbf16>
    %cst_98 = arith.constant dense<0.000000e+00> : vector<2x128xf32>
    %237 = tpu.matmul %236, %235, %cst_98 {dimension_numbers = #tpu.dot_dimension_numbers<[1], [0], [0], [1], [0, 0, 1, 1], [], []>} : vector<2x128xbf16>, vector<128x128xbf16>, vector<2x128xf32> -> vector<2x128xf32>
    %238 = arith.addf %233, %237 : vector<2x128xf32>
    %239 = vector.extract_strided_slice %7 {offsets = [9, 0], sizes = [1, 128], strides = [1, 1]} : vector<16x128xf32> to vector<1x128xf32>
    %240 = vector.broadcast %239 : vector<1x128xf32> to vector<2x128xf32>
    %241 = arith.addf %238, %240 : vector<2x128xf32>
    %c3_99 = arith.constant 3 : index
    %c0_100 = arith.constant 0 : index
    %c0_101 = arith.constant 0 : index
    %242 = vector.load %arg4[%c3_99, %c0_100, %c0_101] : memref<6x256x128xbf16, #tpu.memory_space<vmem>>, vector<1x256x128xbf16>
    %243 = vector.shape_cast %242 : vector<1x256x128xbf16> to vector<256x128xbf16>
    %244 = arith.truncf %4 : vector<2x256xf32> to vector<2x256xbf16>
    %cst_102 = arith.constant dense<0.000000e+00> : vector<2x128xf32>
    %245 = tpu.matmul %244, %243, %cst_102 {dimension_numbers = #tpu.dot_dimension_numbers<[1], [0], [0], [1], [0, 0, 1, 1], [], []>} : vector<2x256xbf16>, vector<256x128xbf16>, vector<2x128xf32> -> vector<2x128xf32>
    %246 = vector.extract_strided_slice %7 {offsets = [5, 0], sizes = [1, 128], strides = [1, 1]} : vector<16x128xf32> to vector<1x128xf32>
    %247 = vector.broadcast %246 : vector<1x128xf32> to vector<2x128xf32>
    %248 = arith.addf %245, %247 : vector<2x128xf32>
    %c2_103 = arith.constant 2 : index
    %c0_104 = arith.constant 0 : index
    %c0_105 = arith.constant 0 : index
    %249 = vector.load %arg3[%c2_103, %c0_104, %c0_105] : memref<11x128x128xbf16, #tpu.memory_space<vmem>>, vector<1x128x128xbf16>
    %250 = vector.shape_cast %249 : vector<1x128x128xbf16> to vector<128x128xbf16>
    %251 = arith.truncf %189 : vector<2x128xf32> to vector<2x128xbf16>
    %cst_106 = arith.constant dense<0.000000e+00> : vector<2x128xf32>
    %252 = tpu.matmul %251, %250, %cst_106 {dimension_numbers = #tpu.dot_dimension_numbers<[1], [0], [0], [1], [0, 0, 1, 1], [], []>} : vector<2x128xbf16>, vector<128x128xbf16>, vector<2x128xf32> -> vector<2x128xf32>
    %c3_107 = arith.constant 3 : index
    %c0_108 = arith.constant 0 : index
    %c0_109 = arith.constant 0 : index
    %253 = vector.load %arg3[%c3_107, %c0_108, %c0_109] : memref<11x128x128xbf16, #tpu.memory_space<vmem>>, vector<1x128x128xbf16>
    %254 = vector.shape_cast %253 : vector<1x128x128xbf16> to vector<128x128xbf16>
    %255 = arith.truncf %248 : vector<2x128xf32> to vector<2x128xbf16>
    %cst_110 = arith.constant dense<0.000000e+00> : vector<2x128xf32>
    %256 = tpu.matmul %255, %254, %cst_110 {dimension_numbers = #tpu.dot_dimension_numbers<[1], [0], [0], [1], [0, 0, 1, 1], [], []>} : vector<2x128xbf16>, vector<128x128xbf16>, vector<2x128xf32> -> vector<2x128xf32>
    %257 = arith.addf %252, %256 : vector<2x128xf32>
    %258 = vector.extract_strided_slice %7 {offsets = [6, 0], sizes = [1, 128], strides = [1, 1]} : vector<16x128xf32> to vector<1x128xf32>
    %259 = vector.broadcast %258 : vector<1x128xf32> to vector<2x128xf32>
    %260 = arith.addf %257, %259 : vector<2x128xf32>
    %261 = vector.broadcast %54 : vector<1x128xf32> to vector<2x128xf32>
    %262 = arith.mulf %260, %261 : vector<2x128xf32>
    %263 = vector.shape_cast %262 : vector<2x128xf32> to vector<2x1x128xf32>
    %264 = vector.broadcast %263 : vector<2x1x128xf32> to vector<2x8x128xf32>
    %265 = arith.mulf %264, %48 : vector<2x8x128xf32>
    %cst_111 = arith.constant dense<0.000000e+00> : vector<2x8xf32>
    %266 = vector.multi_reduction <add>, %265, %cst_111 [2] : vector<2x8x128xf32> to vector<2x8xf32>
    %cst_112 = arith.constant dense<0xFF800000> : vector<2xf32>
    %267 = vector.multi_reduction <maximumf>, %266, %cst_112 [1] : vector<2x8xf32> to vector<2xf32>
    %268 = vector.shape_cast %267 : vector<2xf32> to vector<2x1xf32>
    %269 = vector.broadcast %268 : vector<2x1xf32> to vector<2x8xf32>
    %270 = arith.subf %266, %269 : vector<2x8xf32>
    %271 = math.exp %270 : vector<2x8xf32>
    %cst_113 = arith.constant dense<0.000000e+00> : vector<2xf32>
    %272 = vector.multi_reduction <add>, %271, %cst_113 [1] : vector<2x8xf32> to vector<2xf32>
    %273 = vector.shape_cast %272 : vector<2xf32> to vector<2x1xf32>
    %274 = vector.broadcast %273 : vector<2x1xf32> to vector<2x8xf32>
    %275 = arith.divf %271, %274 : vector<2x8xf32>
    %276 = vector.shape_cast %275 : vector<2x8xf32> to vector<2x8x1xf32>
    %277 = vector.broadcast %276 : vector<2x8x1xf32> to vector<2x8x128xf32>
    %278 = arith.mulf %277, %48 : vector<2x8x128xf32>
    %cst_114 = arith.constant dense<0.000000e+00> : vector<2x128xf32>
    %279 = vector.multi_reduction <add>, %278, %cst_114 [1] : vector<2x8x128xf32> to vector<2x128xf32>
    %c4_115 = arith.constant 4 : index
    %c0_116 = arith.constant 0 : index
    %c0_117 = arith.constant 0 : index
    %280 = vector.load %arg3[%c4_115, %c0_116, %c0_117] : memref<11x128x128xbf16, #tpu.memory_space<vmem>>, vector<1x128x128xbf16>
    %281 = vector.shape_cast %280 : vector<1x128x128xbf16> to vector<128x128xbf16>
    %282 = arith.truncf %241 : vector<2x128xf32> to vector<2x128xbf16>
    %cst_118 = arith.constant dense<0.000000e+00> : vector<2x128xf32>
    %283 = tpu.matmul %282, %281, %cst_118 {dimension_numbers = #tpu.dot_dimension_numbers<[1], [0], [0], [1], [0, 0, 1, 1], [], []>} : vector<2x128xbf16>, vector<128x128xbf16>, vector<2x128xf32> -> vector<2x128xf32>
    %284 = vector.extract_strided_slice %7 {offsets = [7, 0], sizes = [1, 128], strides = [1, 1]} : vector<16x128xf32> to vector<1x128xf32>
    %285 = vector.broadcast %284 : vector<1x128xf32> to vector<2x128xf32>
    %286 = arith.addf %283, %285 : vector<2x128xf32>
    %287 = vector.shape_cast %286 : vector<2x128xf32> to vector<2x1x128xf32>
    %288 = vector.broadcast %287 : vector<2x1x128xf32> to vector<2x16x128xf32>
    %289 = arith.mulf %288, %39 : vector<2x16x128xf32>
    %290 = vector.shape_cast %289 : vector<2x16x128xf32> to vector<32x128xf32>
    %c5_119 = arith.constant 5 : index
    %c0_120 = arith.constant 0 : index
    %c0_121 = arith.constant 0 : index
    %291 = vector.load %arg3[%c5_119, %c0_120, %c0_121] : memref<11x128x128xbf16, #tpu.memory_space<vmem>>, vector<1x128x128xbf16>
    %292 = vector.shape_cast %291 : vector<1x128x128xbf16> to vector<128x128xbf16>
    %293 = arith.truncf %290 : vector<32x128xf32> to vector<32x128xbf16>
    %cst_122 = arith.constant dense<0.000000e+00> : vector<32x128xf32>
    %294 = tpu.matmul %293, %292, %cst_122 {dimension_numbers = #tpu.dot_dimension_numbers<[1], [0], [0], [1], [0, 0, 1, 1], [], []>} : vector<32x128xbf16>, vector<128x128xbf16>, vector<32x128xf32> -> vector<32x128xf32>
    %295 = vector.shape_cast %294 : vector<32x128xf32> to vector<2x16x128xf32>
    %296 = arith.addf %295, %53 : vector<2x16x128xf32>
    %297 = vector.extract_strided_slice %7 {offsets = [8, 0], sizes = [1, 128], strides = [1, 1]} : vector<16x128xf32> to vector<1x128xf32>
    %298 = vector.shape_cast %297 : vector<1x128xf32> to vector<1x1x128xf32>
    %299 = vector.broadcast %298 : vector<1x1x128xf32> to vector<2x16x128xf32>
    %300 = arith.addf %296, %299 : vector<2x16x128xf32>
    %301 = vector.broadcast %55 : vector<1x128xf32> to vector<2x128xf32>
    %302 = arith.mulf %279, %301 : vector<2x128xf32>
    %303 = vector.shape_cast %302 : vector<2x128xf32> to vector<2x1x128xf32>
    %304 = vector.broadcast %303 : vector<2x1x128xf32> to vector<2x16x128xf32>
    %305 = arith.mulf %300, %304 : vector<2x16x128xf32>
    %cst_123 = arith.constant dense<0.000000e+00> : vector<2x16xf32>
    %306 = vector.multi_reduction <add>, %305, %cst_123 [2] : vector<2x16x128xf32> to vector<2x16xf32>
    %cst_124 = arith.constant dense<0xFF800000> : vector<2xf32>
    %307 = vector.multi_reduction <maximumf>, %306, %cst_124 [1] : vector<2x16xf32> to vector<2xf32>
    %308 = vector.shape_cast %307 : vector<2xf32> to vector<2x1xf32>
    %309 = vector.broadcast %308 : vector<2x1xf32> to vector<2x16xf32>
    %310 = arith.subf %306, %309 : vector<2x16xf32>
    %311 = math.exp %310 : vector<2x16xf32>
    %cst_125 = arith.constant dense<0.000000e+00> : vector<2xf32>
    %312 = vector.multi_reduction <add>, %311, %cst_125 [1] : vector<2x16xf32> to vector<2xf32>
    %313 = vector.shape_cast %312 : vector<2xf32> to vector<2x1xf32>
    %314 = vector.broadcast %313 : vector<2x1xf32> to vector<2x16xf32>
    %315 = arith.divf %311, %314 : vector<2x16xf32>
    %316 = vector.shape_cast %315 : vector<2x16xf32> to vector<2x16x1xf32>
    %317 = vector.broadcast %316 : vector<2x16x1xf32> to vector<2x16x128xf32>
    %318 = arith.mulf %317, %39 : vector<2x16x128xf32>
    %cst_126 = arith.constant dense<0.000000e+00> : vector<2x128xf32>
    %319 = vector.multi_reduction <add>, %318, %cst_126 [1] : vector<2x16x128xf32> to vector<2x128xf32>
    %c7_127 = arith.constant 7 : index
    %c0_128 = arith.constant 0 : index
    %c0_129 = arith.constant 0 : index
    %320 = vector.load %arg3[%c7_127, %c0_128, %c0_129] : memref<11x128x128xbf16, #tpu.memory_space<vmem>>, vector<1x128x128xbf16>
    %321 = vector.shape_cast %320 : vector<1x128x128xbf16> to vector<128x128xbf16>
    %322 = arith.truncf %319 : vector<2x128xf32> to vector<2x128xbf16>
    %cst_130 = arith.constant dense<0.000000e+00> : vector<2x128xf32>
    %323 = tpu.matmul %322, %321, %cst_130 {dimension_numbers = #tpu.dot_dimension_numbers<[1], [0], [0], [1], [0, 0, 1, 1], [], []>} : vector<2x128xbf16>, vector<128x128xbf16>, vector<2x128xf32> -> vector<2x128xf32>
    %c8_131 = arith.constant 8 : index
    %c0_132 = arith.constant 0 : index
    %c0_133 = arith.constant 0 : index
    %324 = vector.load %arg3[%c8_131, %c0_132, %c0_133] : memref<11x128x128xbf16, #tpu.memory_space<vmem>>, vector<1x128x128xbf16>
    %325 = vector.shape_cast %324 : vector<1x128x128xbf16> to vector<128x128xbf16>
    %326 = arith.truncf %241 : vector<2x128xf32> to vector<2x128xbf16>
    %cst_134 = arith.constant dense<0.000000e+00> : vector<2x128xf32>
    %327 = tpu.matmul %326, %325, %cst_134 {dimension_numbers = #tpu.dot_dimension_numbers<[1], [0], [0], [1], [0, 0, 1, 1], [], []>} : vector<2x128xbf16>, vector<128x128xbf16>, vector<2x128xf32> -> vector<2x128xf32>
    %328 = arith.addf %323, %327 : vector<2x128xf32>
    %329 = vector.extract_strided_slice %7 {offsets = [9, 0], sizes = [1, 128], strides = [1, 1]} : vector<16x128xf32> to vector<1x128xf32>
    %330 = vector.broadcast %329 : vector<1x128xf32> to vector<2x128xf32>
    %331 = arith.addf %328, %330 : vector<2x128xf32>
    %c9 = arith.constant 9 : index
    %c0_135 = arith.constant 0 : index
    %c0_136 = arith.constant 0 : index
    %332 = vector.load %arg3[%c9, %c0_135, %c0_136] : memref<11x128x128xbf16, #tpu.memory_space<vmem>>, vector<1x128x128xbf16>
    %333 = vector.shape_cast %332 : vector<1x128x128xbf16> to vector<128x128xbf16>
    %334 = arith.truncf %331 : vector<2x128xf32> to vector<2x128xbf16>
    %cst_137 = arith.constant dense<0.000000e+00> : vector<2x128xf32>
    %335 = tpu.matmul %334, %333, %cst_137 {dimension_numbers = #tpu.dot_dimension_numbers<[1], [0], [0], [1], [0, 0, 1, 1], [], []>} : vector<2x128xbf16>, vector<128x128xbf16>, vector<2x128xf32> -> vector<2x128xf32>
    %c4_138 = arith.constant 4 : index
    %c0_139 = arith.constant 0 : index
    %c0_140 = arith.constant 0 : index
    %336 = vector.load %arg4[%c4_138, %c0_139, %c0_140] : memref<6x256x128xbf16, #tpu.memory_space<vmem>>, vector<1x256x128xbf16>
    %337 = vector.shape_cast %336 : vector<1x256x128xbf16> to vector<256x128xbf16>
    %338 = arith.truncf %4 : vector<2x256xf32> to vector<2x256xbf16>
    %cst_141 = arith.constant dense<0.000000e+00> : vector<2x128xf32>
    %339 = tpu.matmul %338, %337, %cst_141 {dimension_numbers = #tpu.dot_dimension_numbers<[1], [0], [0], [1], [0, 0, 1, 1], [], []>} : vector<2x256xbf16>, vector<256x128xbf16>, vector<2x128xf32> -> vector<2x128xf32>
    %340 = arith.addf %335, %339 : vector<2x128xf32>
    %c5_142 = arith.constant 5 : index
    %c0_143 = arith.constant 0 : index
    %c0_144 = arith.constant 0 : index
    %341 = vector.load %arg4[%c5_142, %c0_143, %c0_144] : memref<6x256x128xbf16, #tpu.memory_space<vmem>>, vector<1x256x128xbf16>
    %342 = vector.shape_cast %341 : vector<1x256x128xbf16> to vector<256x128xbf16>
    %343 = arith.truncf %6 : vector<2x256xf32> to vector<2x256xbf16>
    %cst_145 = arith.constant dense<0.000000e+00> : vector<2x128xf32>
    %344 = tpu.matmul %343, %342, %cst_145 {dimension_numbers = #tpu.dot_dimension_numbers<[1], [0], [0], [1], [0, 0, 1, 1], [], []>} : vector<2x256xbf16>, vector<256x128xbf16>, vector<2x128xf32> -> vector<2x128xf32>
    %345 = arith.addf %340, %344 : vector<2x128xf32>
    %346 = vector.extract_strided_slice %7 {offsets = [10, 0], sizes = [1, 128], strides = [1, 1]} : vector<16x128xf32> to vector<1x128xf32>
    %347 = vector.broadcast %346 : vector<1x128xf32> to vector<2x128xf32>
    %348 = arith.addf %345, %347 : vector<2x128xf32>
    %cst_146 = arith.constant 0.000000e+00 : f32
    %349 = vector.broadcast %cst_146 : f32 to vector<2x128xf32>
    %350 = arith.cmpf ogt, %348, %349 : vector<2x128xf32>
    %cst_147 = arith.constant 0.000000e+00 : f32
    %351 = vector.broadcast %cst_147 : f32 to vector<2x128xf32>
    %352 = arith.minimumf %348, %351 : vector<2x128xf32>
    %353 = math.exp %352 : vector<2x128xf32>
    %cst_148 = arith.constant 1.000000e+00 : f32
    %354 = vector.broadcast %cst_148 : f32 to vector<2x128xf32>
    %355 = arith.subf %353, %354 : vector<2x128xf32>
    %356 = arith.select %350, %348, %355 : vector<2x128xi1>, vector<2x128xf32>
    %c10 = arith.constant 10 : index
    %c0_149 = arith.constant 0 : index
    %c0_150 = arith.constant 0 : index
    %357 = vector.load %arg3[%c10, %c0_149, %c0_150] : memref<11x128x128xbf16, #tpu.memory_space<vmem>>, vector<1x128x128xbf16>
    %358 = vector.shape_cast %357 : vector<1x128x128xbf16> to vector<128x128xbf16>
    %359 = arith.truncf %356 : vector<2x128xf32> to vector<2x128xbf16>
    %cst_151 = arith.constant dense<0.000000e+00> : vector<2x128xf32>
    %360 = tpu.matmul %359, %358, %cst_151 {dimension_numbers = #tpu.dot_dimension_numbers<[1], [0], [0], [1], [0, 0, 1, 1], [], []>} : vector<2x128xbf16>, vector<128x128xbf16>, vector<2x128xf32> -> vector<2x128xf32>
    %361 = vector.extract_strided_slice %7 {offsets = [11, 0], sizes = [1, 128], strides = [1, 1]} : vector<16x128xf32> to vector<1x128xf32>
    %362 = vector.broadcast %361 : vector<1x128xf32> to vector<2x128xf32>
    %363 = arith.addf %360, %362 : vector<2x128xf32>
    %c0_152 = arith.constant 0 : index
    %c0_153 = arith.constant 0 : index
    %364 = vector.load %arg6[%c0_152, %c0_153] : memref<2x128xf32, #tpu.memory_space<vmem>>, vector<2x128xf32>
    tpu.vector_store %arg6[%c0_152, %c0_153], %363 {strides = array<i32>} : memref<2x128xf32, #tpu.memory_space<vmem>>, vector<2x128xf32>,
    return
  }
}

</mosaic_0001>

<llo_original>
// kernel: lstm_qaac_mac_forward.2
$region0: #{lstm_qaac_mac_forward.2}
  #allocation0 [shape = 'u32[]', space=smem, size = 0x4, offset = 0x4, fixed_abs, tag = 'smem constant byte address 0x4 - core index']
  #allocation1 [shape = 'u32[144,128]{1,0:T(1,128)}', space=vmem, size = 0x12000, scoped, tag = 'internal scratch']
  %s0 = inlined_call_operand.vmem [shape: f32[2,16,128], index: 0, kind: input, shape index: {}]
  %s1 = inlined_call_operand.hbm [shape: bf16[2,128,1024], index: 1, kind: input, shape index: {}]
  %s2 = inlined_call_operand.hbm [shape: bf16[2,2,128,512], index: 2, kind: input, shape index: {}]
  %s3 = inlined_call_operand.vmem [shape: f32[2,1,1024], index: 3, kind: input, shape index: {}]
  %s4 = inlined_call_operand.vmem [shape: f32[2,2,8,256], index: 4, kind: output, shape index: {0}]
  %s5 = inlined_call_operand.vmem [shape: f32[2,2,256], index: 5, kind: output, shape index: {1}]
  %6 = xla_tuple %s4, %s5
  %s7 = sld [smem:[#allocation0]]
  $region69: #{lstm_qaac_mac_forward.2} parent=0
    _
  %s9 = ssub.s32 1, %s7
  %s10 = scalar_select 0, %s9, %s7
  $region1: #{lstm_qaac_mac_forward.2} parent=0
    #allocation2 [shape = 'u8[524288]{0}', space=vmem, size = 0x80000, scoped, tag = 'input window, operand 1']
    #allocation3 [shape = 's32[2]{0}', space=sflag, size = 0x8, scoped, tag = 'scoped memory for lstm_qaac_mac_forward.2']
    #allocation4 [shape = 'u8[524288]{0}', space=vmem, size = 0x80000, scoped, tag = 'input window, operand 2']
    #allocation5 [shape = 's32[2]{0}', space=sflag, size = 0x8, scoped, tag = 'scoped memory for lstm_qaac_mac_forward.2']
    %11 = vsyncpa [#allocation3], 0
    %s12 = scalar_lea.sflag [#allocation3], 1
    %13 = vsyncpa %s12, 0
    %14 = vsyncpa [#allocation5], 0
    %s15 = scalar_lea.sflag [#allocation5], 1
    %16 = vsyncpa %s15, 0
    loop: start=0, step=1, limit=4
    $region2: #{lstm_qaac_mac_forward.2} parent=1 // loop_pre_header
      _
    $region3: #{lstm_qaac_mac_forward.2} parent=1 // loop_header
      %s18 = sphi 0, %s22
      %p19 = scmp.ge.s32.totalorder %s18, 4
      %s28 = sphi 0, %s30
      %s31 = sphi 0, %s28
      %s32 = sphi 0, %s31
      %s48 = sphi 0, %s32
      %s54 = sphi 0, %s56
      %s57 = sphi 0, %s54
      %s58 = sphi 0, %s57
      %s74 = sphi 0, %s58
      %s80 = sphi 0, %s82
      %s83 = sphi 0, %s80
      %s84 = sphi 0, %s83
      %s100 = sphi 0, %s84
      %s106 = sphi 0, %s108
      %s109 = sphi 0, %s106
      %s110 = sphi 0, %s109
      %s126 = sphi 0, %s110
      %s132 = sphi 0, %s134
      %s135 = sphi 0, %s132
      %s136 = sphi 0, %s135
      %s152 = sphi 0, %s136
      %s158 = sphi 0, %s160
      %s161 = sphi 0, %s158
      %s162 = sphi 0, %s161
      %s178 = sphi 0, %s162
    $region4: #{lstm_qaac_mac_forward.2} parent=1 // loop_header_branch
      %21 = sbr.rel (%p19) target = $region8
    $region5: #{lstm_qaac_mac_forward.2} parent=1 // loop_body
      %s23 = ssub.s32 %s18, 1
      %s24 = ssub.s32 %s18, 2
      %s25 = sadd.s32 %s18, 1
      %s26 = ssub.s32 %s18, %s25
      %p27 = scmp.eq.s32.totalorder %s26, 0
      %s29 = sadd.s32 %s28, 1
      %s30 = scalar_select %p27, %s28, %s29
      %p33 = pneg %p27
      %p34 = scmp.eq.s32.totalorder %s18, 1
      %p35 = por %p33, %p34
      %p36 = scmp.ne.s32.totalorder %s28, %s31
      %p37 = scmp.eq.s32.totalorder %s18, 0
      %p38 = por %p36, %p37
      %p39 = scmp.ne.s32.totalorder %s28, %s31
      %p40 = scmp.eq.s32.totalorder %s23, 1
      %p41 = por %p39, %p40
      %p42 = scmp.ne.s32.totalorder %s31, %s32
      %p43 = scmp.eq.s32.totalorder %s23, 0
      %p44 = por %p42, %p43
      %p45 = scmp.ne.s32.totalorder %s31, %s32
      %p46 = scmp.eq.s32.totalorder %s24, 1
      %p47 = por %p45, %p46
      %p49 = scmp.ne.s32.totalorder %s32, %s48
      %p50 = scmp.eq.s32.totalorder %s24, 0
      %p51 = por %p49, %p50
      %s52 = ssub.s32 %s18, %s25
      %p53 = scmp.eq.s32.totalorder %s52, 0
      %s55 = sadd.s32 %s54, 1
      %s56 = scalar_select %p53, %s54, %s55
      %p59 = pneg %p53
      %p60 = scmp.eq.s32.totalorder %s18, 1
      %p61 = por %p59, %p60
      %p62 = scmp.ne.s32.totalorder %s54, %s57
      %p63 = scmp.eq.s32.totalorder %s18, 0
      %p64 = por %p62, %p63
      %p65 = scmp.ne.s32.totalorder %s54, %s57
      %p66 = scmp.eq.s32.totalorder %s23, 1
      %p67 = por %p65, %p66
      %p68 = scmp.ne.s32.totalorder %s57, %s58
      %p69 = scmp.eq.s32.totalorder %s23, 0
      %p70 = por %p68, %p69
      %p71 = scmp.ne.s32.totalorder %s57, %s58
      %p72 = scmp.eq.s32.totalorder %s24, 1
      %p73 = por %p71, %p72
      %p75 = scmp.ne.s32.totalorder %s58, %s74
      %p76 = scmp.eq.s32.totalorder %s24, 0
      %p77 = por %p75, %p76
      %s78 = ssub.s32 %s18, %s25
      %p79 = scmp.eq.s32.totalorder %s78, 0
      %s81 = sadd.s32 %s80, 1
      %s82 = scalar_select %p79, %s80, %s81
      %p85 = pneg %p79
      %p86 = scmp.eq.s32.totalorder %s18, 1
      %p87 = por %p85, %p86
      %p88 = scmp.ne.s32.totalorder %s80, %s83
      %p89 = scmp.eq.s32.totalorder %s18, 0
      %p90 = por %p88, %p89
      %p91 = scmp.ne.s32.totalorder %s80, %s83
      %p92 = scmp.eq.s32.totalorder %s23, 1
      %p93 = por %p91, %p92
      %p94 = scmp.ne.s32.totalorder %s83, %s84
      %p95 = scmp.eq.s32.totalorder %s23, 0
      %p96 = por %p94, %p95
      %p97 = scmp.ne.s32.totalorder %s83, %s84
      %p98 = scmp.eq.s32.totalorder %s24, 1
      %p99 = por %p97, %p98
      %p101 = scmp.ne.s32.totalorder %s84, %s100
      %p102 = scmp.eq.s32.totalorder %s24, 0
      %p103 = por %p101, %p102
      %s104 = ssub.s32 %s18, %s25
      %p105 = scmp.eq.s32.totalorder %s104, 0
      %s107 = sadd.s32 %s106, 1
      %s108 = scalar_select %p105, %s106, %s107
      %p111 = pneg %p105
      %p112 = scmp.eq.s32.totalorder %s18, 1
      %p113 = por %p111, %p112
      %p114 = scmp.ne.s32.totalorder %s106, %s109
      %p115 = scmp.eq.s32.totalorder %s18, 0
      %p116 = por %p114, %p115
      %p117 = scmp.ne.s32.totalorder %s106, %s109
      %p118 = scmp.eq.s32.totalorder %s23, 1
      %p119 = por %p117, %p118
      %p120 = scmp.ne.s32.totalorder %s109, %s110
      %p121 = scmp.eq.s32.totalorder %s23, 0
      %p122 = por %p120, %p121
      %p123 = scmp.ne.s32.totalorder %s109, %s110
      %p124 = scmp.eq.s32.totalorder %s24, 1
      %p125 = por %p123, %p124
      %p127 = scmp.ne.s32.totalorder %s110, %s126
      %p128 = scmp.eq.s32.totalorder %s24, 0
      %p129 = por %p127, %p128
      %s130 = ssub.s32 %s18, %s25
      %p131 = scmp.eq.s32.totalorder %s130, 0
      %s133 = sadd.s32 %s132, 1
      %s134 = scalar_select %p131, %s132, %s133
      %p137 = pneg %p131
      %p138 = scmp.eq.s32.totalorder %s18, 1
      %p139 = por %p137, %p138
      %p140 = scmp.ne.s32.totalorder %s132, %s135
      %p141 = scmp.eq.s32.totalorder %s18, 0
      %p142 = por %p140, %p141
      %p143 = scmp.ne.s32.totalorder %s132, %s135
      %p144 = scmp.eq.s32.totalorder %s23, 1
      %p145 = por %p143, %p144
      %p146 = scmp.ne.s32.totalorder %s135, %s136
      %p147 = scmp.eq.s32.totalorder %s23, 0
      %p148 = por %p146, %p147
      %p149 = scmp.ne.s32.totalorder %s135, %s136
      %p150 = scmp.eq.s32.totalorder %s24, 1
      %p151 = por %p149, %p150
      %p153 = scmp.ne.s32.totalorder %s136, %s152
      %p154 = scmp.eq.s32.totalorder %s24, 0
      %p155 = por %p153, %p154
      %s156 = ssub.s32 %s18, %s25
      %p157 = scmp.eq.s32.totalorder %s156, 0
      %s159 = sadd.s32 %s158, 1
      %s160 = scalar_select %p157, %s158, %s159
      %p163 = pneg %p157
      %p164 = scmp.eq.s32.totalorder %s18, 1
      %p165 = por %p163, %p164
      %p166 = scmp.ne.s32.totalorder %s158, %s161
      %p167 = scmp.eq.s32.totalorder %s18, 0
      %p168 = por %p166, %p167
      %p169 = scmp.ne.s32.totalorder %s158, %s161
      %p170 = scmp.eq.s32.totalorder %s23, 1
      %p171 = por %p169, %p170
      %p172 = scmp.ne.s32.totalorder %s161, %s162
      %p173 = scmp.eq.s32.totalorder %s23, 0
      %p174 = por %p172, %p173
      %p175 = scmp.ne.s32.totalorder %s161, %s162
      %p176 = scmp.eq.s32.totalorder %s24, 1
      %p177 = por %p175, %p176
      %p179 = scmp.ne.s32.totalorder %s162, %s178
      %p180 = scmp.eq.s32.totalorder %s24, 0
      %p181 = por %p179, %p180
      %p182 = scmp.le.s32.totalorder 1, %s18
      %p183 = scmp.lt.s32.totalorder %s18, 3
      %p184 = pnand %p182, %p183
      %p185 = pneg %p184
      // Predicated region
      $region9: #{lstm_qaac_mac_forward.2} parent=5 // pred_check
        _
      $region10: #{lstm_qaac_mac_forward.2} parent=5 // pred_check_branch
        %187 = sbr.rel (%p184) target = $region12
      $region11: #{lstm_qaac_mac_forward.2} parent=5 // pred_region
        %s188 = ssub.s32 %s18, 1
      $region12: #{lstm_qaac_mac_forward.2} parent=5 // pred_fallthru
        _
      %p189 = scmp.lt.s32.totalorder %s18, 2
      // Predicated region
      $region13: #{lstm_qaac_mac_forward.2} parent=5 // pred_check
        %p190 = pneg %p189
      $region14: #{lstm_qaac_mac_forward.2} parent=5 // pred_check_branch
        %192 = sbr.rel (%p190) target = $region16
      $region15: #{lstm_qaac_mac_forward.2} parent=5 // pred_region
        // Predicated region
        $region17: #{lstm_qaac_mac_forward.2} parent=15 // pred_check
          %p193 = pneg %p38
        $region18: #{lstm_qaac_mac_forward.2} parent=15 // pred_check_branch
          %195 = sbr.rel (%p193) target = $region20
        $region19: #{lstm_qaac_mac_forward.2} parent=15 // pred_region
          %p196 = scmp.lt.s32.totalorder %s18, 1
          %s197 = scalar_select %p196, %s18, 1
          %s198 = smul.addr %s197, 2
          %s199 = smul.addr %s198, 8
          %s200 = scalar_lea.vmem %s0, %s199
        $region20: #{lstm_qaac_mac_forward.2} parent=15 // pred_fallthru
          _
        // Predicated region
        $region21: #{lstm_qaac_mac_forward.2} parent=15 // pred_check
          %p201 = pneg %p64
        $region22: #{lstm_qaac_mac_forward.2} parent=15 // pred_check_branch
          %203 = sbr.rel (%p201) target = $region24
        $region23: #{lstm_qaac_mac_forward.2} parent=15 // pred_region
          %s204 = sand.u32 %s54, 1
          %s205 = scalar_lea.sflag [#allocation3], %s204
          %s206 = sand.u32 %s54, 1
          %s207 = smul.addr %s206, 512
          %s208 = scalar_lea.vmem [#allocation2], %s207
          %s210 = ssub.s32 8192, 8192
          %211 = vsyncadd %s205, %s210
          %s212 = smul.addr %s18, 128
          %s213 = smul.addr %s212, 64
          %s214 = scalar_lea.hbm %s1, %s213
          %s215 = sshll.u32 %s208, 4
          %s216 = int_to_ptr.vmem [resolvable:$true] %s215
          %221 = dma.hbm_to_vmem [thread:$0]  %s214, 8192, %s216, %s205, 512, 512, 32
        $region24: #{lstm_qaac_mac_forward.2} parent=15 // pred_fallthru
          _
        // Predicated region
        $region25: #{lstm_qaac_mac_forward.2} parent=15 // pred_check
          %p222 = pneg %p90
        $region26: #{lstm_qaac_mac_forward.2} parent=15 // pred_check_branch
          %224 = sbr.rel (%p222) target = $region28
        $region27: #{lstm_qaac_mac_forward.2} parent=15 // pred_region
          %s225 = sand.u32 %s80, 1
          %s226 = scalar_lea.sflag [#allocation5], %s225
          %s227 = sand.u32 %s80, 1
          %s228 = smul.addr %s227, 512
          %s229 = scalar_lea.vmem [#allocation4], %s228
          %s231 = ssub.s32 8192, 8192
          %232 = vsyncadd %s226, %s231
          %s233 = smul.addr %s18, 128
          %s234 = smul.addr %s233, 64
          %s235 = scalar_lea.hbm %s2, %s234
          %s236 = sshll.u32 %s229, 4
          %s237 = int_to_ptr.vmem [resolvable:$true] %s236
          %242 = dma.hbm_to_vmem [thread:$0]  %s235, 8192, %s237, %s226, 256, 256, 16
        $region28: #{lstm_qaac_mac_forward.2} parent=15 // pred_fallthru
          _
        // Predicated region
        $region29: #{lstm_qaac_mac_forward.2} parent=15 // pred_check
          %p243 = pneg %p116
        $region30: #{lstm_qaac_mac_forward.2} parent=15 // pred_check_branch
          %245 = sbr.rel (%p243) target = $region32
        $region31: #{lstm_qaac_mac_forward.2} parent=15 // pred_region
          %p246 = scmp.lt.s32.totalorder %s18, 1
          %s247 = scalar_select %p246, %s18, 1
          %s248 = smul.addr %s247, 8
          %s249 = scalar_lea.vmem %s3, %s248
        $region32: #{lstm_qaac_mac_forward.2} parent=15 // pred_fallthru
          _
      $region16: #{lstm_qaac_mac_forward.2} parent=5 // pred_fallthru
        _
      %p250 = scmp.le.s32.totalorder 1, %s18
      %p251 = scmp.lt.s32.totalorder %s18, 3
      %p252 = pnand %p250, %p251
      %p253 = pneg %p252
      // Predicated region
      $region33: #{lstm_qaac_mac_forward.2} parent=5 // pred_check
        _
      $region34: #{lstm_qaac_mac_forward.2} parent=5 // pred_check_branch
        %255 = sbr.rel (%p252) target = $region36
      $region35: #{lstm_qaac_mac_forward.2} parent=5 // pred_region
        %s256 = ssub.s32 %s18, 1
        %s257 = sand.u32 %s57, 1
        %s258 = scalar_lea.sflag [#allocation3], %s257
        %s259 = sand.u32 %s57, 1
        %s260 = smul.addr %s259, 512
        %s261 = scalar_lea.vmem [#allocation2], %s260
        // Predicated region
        $region37: #{lstm_qaac_mac_forward.2} parent=35 // pred_check
          %p262 = pneg %p70
        $region38: #{lstm_qaac_mac_forward.2} parent=35 // pred_check_branch
          %264 = sbr.rel (%p262) target = $region40
        $region39: #{lstm_qaac_mac_forward.2} parent=35 // pred_region
          %265 = dma.done %s258, 8192
        $region40: #{lstm_qaac_mac_forward.2} parent=35 // pred_fallthru
          _
        %s266 = sand.u32 %s83, 1
        %s267 = scalar_lea.sflag [#allocation5], %s266
        %s268 = sand.u32 %s83, 1
        %s269 = smul.addr %s268, 512
        %s270 = scalar_lea.vmem [#allocation4], %s269
        // Predicated region
        $region41: #{lstm_qaac_mac_forward.2} parent=35 // pred_check
          %p271 = pneg %p96
        $region42: #{lstm_qaac_mac_forward.2} parent=35 // pred_check_branch
          %273 = sbr.rel (%p271) target = $region44
        $region43: #{lstm_qaac_mac_forward.2} parent=35 // pred_region
          %274 = dma.done %s267, 8192
        $region44: #{lstm_qaac_mac_forward.2} parent=35 // pred_fallthru
          _
        %p275 = scmp.lt.s32.totalorder %s23, 1
        %s276 = scalar_select %p275, %s23, 1
        %s277 = smul.addr %s276, 2
        %s278 = smul.addr %s277, 8
        %s279 = scalar_lea.vmem %s0, %s278
        %p280 = pneg %p44
        %p281 = pneg %p41
        %s282 = sand.u32 %s57, 1
        %s283 = scalar_lea.sflag [#allocation3], %s282
        %s284 = sand.u32 %s57, 1
        %s285 = smul.addr %s284, 512
        %s286 = scalar_lea.vmem [#allocation2], %s285
        %p287 = pneg %p70
        %p288 = pneg %p67
        %s289 = sand.u32 %s83, 1
        %s290 = scalar_lea.sflag [#allocation5], %s289
        %s291 = sand.u32 %s83, 1
        %s292 = smul.addr %s291, 512
        %s293 = scalar_lea.vmem [#allocation4], %s292
        %p294 = pneg %p96
        %p295 = pneg %p93
        %p296 = scmp.lt.s32.totalorder %s23, 1
        %s297 = scalar_select %p296, %s23, 1
        %s298 = smul.addr %s297, 8
        %s299 = scalar_lea.vmem %s3, %s298
        %p300 = pneg %p122
        %p301 = pneg %p119
        %p302 = pneg %p148
        %p303 = pneg %p145
        %p304 = scmp.lt.s32.totalorder %s23, 1
        %s305 = scalar_select %p304, %s23, 1
        %s306 = smul.addr %s305, 4
        %s307 = smul.addr %s306, 8
        %s308 = scalar_lea.vmem %s4, %s307
        %p309 = pneg %p174
        %p310 = pneg %p171
        %p311 = scmp.lt.s32.totalorder %s23, 1
        %s312 = scalar_select %p311, %s23, 1
        %s313 = smul.addr %s312, 2
        %s314 = smul.addr %s313, 2
        %s315 = scalar_lea.vmem %s5, %s314
        %p316 = scmp.lt.s32.totalorder %s23, 1
        %s317 = scalar_select %p316, %s23, 1
        %s318 = smul.addr %s317, 2
        %s319 = smul.addr %s318, 8
        %s320 = scalar_lea.vmem %s0, %s319
        %p321 = scmp.lt.s32.totalorder %s23, 1
        %s322 = scalar_select %p321, %s23, 1
        %s323 = smul.addr %s322, 8
        %s324 = scalar_lea.vmem %s3, %s323
        %p325 = scmp.lt.s32.totalorder %s23, 1
        %s326 = scalar_select %p325, %s23, 1
        %s327 = smul.addr %s326, 4
        %s328 = smul.addr %s327, 8
        %s329 = scalar_lea.vmem %s4, %s328
        %p330 = scmp.lt.s32.totalorder %s23, 1
        %s331 = scalar_select %p330, %s23, 1
        %s332 = smul.addr %s331, 2
        %s333 = smul.addr %s332, 2
        %s334 = scalar_lea.vmem %s5, %s333
        %v336 = vld [vmem:[%s320] sm:$0xff]
        %v337 = vld [vmem:[%s320 + $0x8] sm:$0xff]
        %v338 = vld [vmem:[%s261] sm:$0xff]
        %v339 = vld [vmem:[%s261 + $0x8] sm:$0xff]
        %v340 = vld [vmem:[%s261 + $0x10] sm:$0xff]
        %v341 = vld [vmem:[%s261 + $0x18] sm:$0xff]
        %v342 = vld [vmem:[%s261 + $0x20] sm:$0xff]
        %v343 = vld [vmem:[%s261 + $0x28] sm:$0xff]
        %v344 = vld [vmem:[%s261 + $0x30] sm:$0xff]
        %v345 = vld [vmem:[%s261 + $0x38] sm:$0xff]
        %v346 = vld [vmem:[%s261 + $0x40] sm:$0xff]
        %v347 = vld [vmem:[%s261 + $0x48] sm:$0xff]
        %v348 = vld [vmem:[%s261 + $0x50] sm:$0xff]
        %v349 = vld [vmem:[%s261 + $0x58] sm:$0xff]
        %v350 = vld [vmem:[%s261 + $0x60] sm:$0xff]
        %v351 = vld [vmem:[%s261 + $0x68] sm:$0xff]
        %v352 = vld [vmem:[%s261 + $0x70] sm:$0xff]
        %v353 = vld [vmem:[%s261 + $0x78] sm:$0xff]
        %v354 = vld [vmem:[%s261 + $0x80] sm:$0xff]
        %v355 = vld [vmem:[%s261 + $0x88] sm:$0xff]
        %v356 = vld [vmem:[%s261 + $0x90] sm:$0xff]
        %v357 = vld [vmem:[%s261 + $0x98] sm:$0xff]
        %v358 = vld [vmem:[%s261 + $0xa0] sm:$0xff]
        %v359 = vld [vmem:[%s261 + $0xa8] sm:$0xff]
        %v360 = vld [vmem:[%s261 + $0xb0] sm:$0xff]
        %v361 = vld [vmem:[%s261 + $0xb8] sm:$0xff]
        %v362 = vld [vmem:[%s261 + $0xc0] sm:$0xff]
        %v363 = vld [vmem:[%s261 + $0xc8] sm:$0xff]
        %v364 = vld [vmem:[%s261 + $0xd0] sm:$0xff]
        %v365 = vld [vmem:[%s261 + $0xd8] sm:$0xff]
        %v366 = vld [vmem:[%s261 + $0xe0] sm:$0xff]
        %v367 = vld [vmem:[%s261 + $0xe8] sm:$0xff]
        %v368 = vld [vmem:[%s261 + $0xf0] sm:$0xff]
        %v369 = vld [vmem:[%s261 + $0xf8] sm:$0xff]
        %v370 = vld [vmem:[%s261 + $0x100] sm:$0xff]
        %v371 = vld [vmem:[%s261 + $0x108] sm:$0xff]
        %v372 = vld [vmem:[%s261 + $0x110] sm:$0xff]
        %v373 = vld [vmem:[%s261 + $0x118] sm:$0xff]
        %v374 = vld [vmem:[%s261 + $0x120] sm:$0xff]
        %v375 = vld [vmem:[%s261 + $0x128] sm:$0xff]
        %v376 = vld [vmem:[%s261 + $0x130] sm:$0xff]
        %v377 = vld [vmem:[%s261 + $0x138] sm:$0xff]
        %v378 = vld [vmem:[%s261 + $0x140] sm:$0xff]
        %v379 = vld [vmem:[%s261 + $0x148] sm:$0xff]
        %v380 = vld [vmem:[%s261 + $0x150] sm:$0xff]
        %v381 = vld [vmem:[%s261 + $0x158] sm:$0xff]
        %v382 = vld [vmem:[%s261 + $0x160] sm:$0xff]
        %v383 = vld [vmem:[%s261 + $0x168] sm:$0xff]
        %v384 = vld [vmem:[%s261 + $0x170] sm:$0xff]
        %v385 = vld [vmem:[%s261 + $0x178] sm:$0xff]
        %v386 = vld [vmem:[%s261 + $0x180] sm:$0xff]
        %v387 = vld [vmem:[%s261 + $0x188] sm:$0xff]
        %v388 = vld [vmem:[%s261 + $0x190] sm:$0xff]
        %v389 = vld [vmem:[%s261 + $0x198] sm:$0xff]
        %v390 = vld [vmem:[%s261 + $0x1a0] sm:$0xff]
        %v391 = vld [vmem:[%s261 + $0x1a8] sm:$0xff]
        %v392 = vld [vmem:[%s261 + $0x1b0] sm:$0xff]
        %v393 = vld [vmem:[%s261 + $0x1b8] sm:$0xff]
        %v394 = vld [vmem:[%s261 + $0x1c0] sm:$0xff]
        %v395 = vld [vmem:[%s261 + $0x1c8] sm:$0xff]
        %v396 = vld [vmem:[%s261 + $0x1d0] sm:$0xff]
        %v397 = vld [vmem:[%s261 + $0x1d8] sm:$0xff]
        %v398 = vld [vmem:[%s261 + $0x1e0] sm:$0xff]
        %v399 = vld [vmem:[%s261 + $0x1e8] sm:$0xff]
        %v400 = vld [vmem:[%s261 + $0x1f0] sm:$0xff]
        %v401 = vld [vmem:[%s261 + $0x1f8] sm:$0xff]
        %v402 = vpack.c.bf16 %v337, %v336
        %v403 = vld [vmem:[%s324] sm:$0xff]
        %v405 = vlaneseq
        %v406 = vshrl.u32 %v405, 7
        %v407 = vsub.s32 0, %v406
        %v408 = vrot.slane %v403, %v407
        %v409 = vlaneseq
        %v410 = vshrl.u32 %v409, 7
        %v411 = vsub.s32 1, %v410
        %v412 = vrot.slane %v403, %v411
        %v413 = vlaneseq
        %v414 = vshrl.u32 %v413, 7
        %v415 = vsub.s32 2, %v414
        %v416 = vrot.slane %v403, %v415
        %v417 = vlaneseq
        %v418 = vshrl.u32 %v417, 7
        %v419 = vsub.s32 3, %v418
        %v420 = vrot.slane %v403, %v419
        %v421 = vlaneseq
        %v422 = vshrl.u32 %v421, 7
        %v423 = vsub.s32 4, %v422
        %v424 = vrot.slane %v403, %v423
        %v425 = vlaneseq
        %v426 = vshrl.u32 %v425, 7
        %v427 = vsub.s32 5, %v426
        %v428 = vrot.slane %v403, %v427
        %v429 = vlaneseq
        %v430 = vshrl.u32 %v429, 7
        %v431 = vsub.s32 6, %v430
        %v432 = vrot.slane %v403, %v431
        %v433 = vlaneseq
        %v434 = vshrl.u32 %v433, 7
        %v435 = vsub.s32 7, %v434
        %v436 = vrot.slane %v403, %v435
        %v509 = vunpack.c.l.b16 %v338
        %v510 = vunpack.c.h.b16 %v338
        %v511 = vunpack.c.l.b16 %v339
        %v512 = vunpack.c.h.b16 %v339
        %v513 = vunpack.c.l.b16 %v340
        %v514 = vunpack.c.h.b16 %v340
        %v515 = vunpack.c.l.b16 %v341
        %v516 = vunpack.c.h.b16 %v341
        %v517 = vunpack.c.l.b16 %v342
        %v518 = vunpack.c.h.b16 %v342
        %v519 = vunpack.c.l.b16 %v343
        %v520 = vunpack.c.h.b16 %v343
        %v521 = vunpack.c.l.b16 %v344
        %v522 = vunpack.c.h.b16 %v344
        %v523 = vunpack.c.l.b16 %v345
        %v524 = vunpack.c.h.b16 %v345
        %v525 = vunpack.c.l.b16 %v346
        %v526 = vunpack.c.h.b16 %v346
        %v527 = vunpack.c.l.b16 %v347
        %v528 = vunpack.c.h.b16 %v347
        %v529 = vunpack.c.l.b16 %v348
        %v530 = vunpack.c.h.b16 %v348
        %v531 = vunpack.c.l.b16 %v349
        %v532 = vunpack.c.h.b16 %v349
        %v533 = vunpack.c.l.b16 %v350
        %v534 = vunpack.c.h.b16 %v350
        %v535 = vunpack.c.l.b16 %v351
        %v536 = vunpack.c.h.b16 %v351
        %v537 = vunpack.c.l.b16 %v352
        %v538 = vunpack.c.h.b16 %v352
        %v539 = vunpack.c.l.b16 %v353
        %v540 = vunpack.c.h.b16 %v353
        %v541 = vunpack.c.l.b16 %v354
        %v542 = vunpack.c.h.b16 %v354
        %v543 = vunpack.c.l.b16 %v355
        %v544 = vunpack.c.h.b16 %v355
        %v545 = vunpack.c.l.b16 %v356
        %v546 = vunpack.c.h.b16 %v356
        %v547 = vunpack.c.l.b16 %v357
        %v548 = vunpack.c.h.b16 %v357
        %v549 = vunpack.c.l.b16 %v358
        %v550 = vunpack.c.h.b16 %v358
        %v551 = vunpack.c.l.b16 %v359
        %v552 = vunpack.c.h.b16 %v359
        %v553 = vunpack.c.l.b16 %v360
        %v554 = vunpack.c.h.b16 %v360
        %v555 = vunpack.c.l.b16 %v361
        %v556 = vunpack.c.h.b16 %v361
        %v557 = vunpack.c.l.b16 %v362
        %v558 = vunpack.c.h.b16 %v362
        %v559 = vunpack.c.l.b16 %v363
        %v560 = vunpack.c.h.b16 %v363
        %v561 = vunpack.c.l.b16 %v364
        %v562 = vunpack.c.h.b16 %v364
        %v563 = vunpack.c.l.b16 %v365
        %v564 = vunpack.c.h.b16 %v365
        %v565 = vunpack.c.l.b16 %v366
        %v566 = vunpack.c.h.b16 %v366
        %v567 = vunpack.c.l.b16 %v367
        %v568 = vunpack.c.h.b16 %v367
        %v569 = vunpack.c.l.b16 %v368
        %v570 = vunpack.c.h.b16 %v368
        %v571 = vunpack.c.l.b16 %v369
        %v572 = vunpack.c.h.b16 %v369
        %v573 = vunpack.c.l.b16 %v370
        %v574 = vunpack.c.h.b16 %v370
        %v575 = vunpack.c.l.b16 %v371
        %v576 = vunpack.c.h.b16 %v371
        %v577 = vunpack.c.l.b16 %v372
        %v578 = vunpack.c.h.b16 %v372
        %v579 = vunpack.c.l.b16 %v373
        %v580 = vunpack.c.h.b16 %v373
        %v581 = vunpack.c.l.b16 %v374
        %v582 = vunpack.c.h.b16 %v374
        %v583 = vunpack.c.l.b16 %v375
        %v584 = vunpack.c.h.b16 %v375
        %v585 = vunpack.c.l.b16 %v376
        %v586 = vunpack.c.h.b16 %v376
        %v587 = vunpack.c.l.b16 %v377
        %v588 = vunpack.c.h.b16 %v377
        %v589 = vunpack.c.l.b16 %v378
        %v590 = vunpack.c.h.b16 %v378
        %v591 = vunpack.c.l.b16 %v379
        %v592 = vunpack.c.h.b16 %v379
        %v593 = vunpack.c.l.b16 %v380
        %v594 = vunpack.c.h.b16 %v380
        %v595 = vunpack.c.l.b16 %v381
        %v596 = vunpack.c.h.b16 %v381
        %v597 = vunpack.c.l.b16 %v382
        %v598 = vunpack.c.h.b16 %v382
        %v599 = vunpack.c.l.b16 %v383
        %v600 = vunpack.c.h.b16 %v383
        %v601 = vunpack.c.l.b16 %v384
        %v602 = vunpack.c.h.b16 %v384
        %v603 = vunpack.c.l.b16 %v385
        %v604 = vunpack.c.h.b16 %v385
        %v605 = vunpack.c.l.b16 %v386
        %v606 = vunpack.c.h.b16 %v386
        %v607 = vunpack.c.l.b16 %v387
        %v608 = vunpack.c.h.b16 %v387
        %v609 = vunpack.c.l.b16 %v388
        %v610 = vunpack.c.h.b16 %v388
        %v611 = vunpack.c.l.b16 %v389
        %v612 = vunpack.c.h.b16 %v389
        %v613 = vunpack.c.l.b16 %v390
        %v614 = vunpack.c.h.b16 %v390
        %v615 = vunpack.c.l.b16 %v391
        %v616 = vunpack.c.h.b16 %v391
        %v617 = vunpack.c.l.b16 %v392
        %v618 = vunpack.c.h.b16 %v392
        %v619 = vunpack.c.l.b16 %v393
        %v620 = vunpack.c.h.b16 %v393
        %v621 = vunpack.c.l.b16 %v394
        %v622 = vunpack.c.h.b16 %v394
        %v623 = vunpack.c.l.b16 %v395
        %v624 = vunpack.c.h.b16 %v395
        %v625 = vunpack.c.l.b16 %v396
        %v626 = vunpack.c.h.b16 %v396
        %v627 = vunpack.c.l.b16 %v397
        %v628 = vunpack.c.h.b16 %v397
        %v629 = vunpack.c.l.b16 %v398
        %v630 = vunpack.c.h.b16 %v398
        %v631 = vunpack.c.l.b16 %v399
        %v632 = vunpack.c.h.b16 %v399
        %v633 = vunpack.c.l.b16 %v400
        %v634 = vunpack.c.h.b16 %v400
        %v635 = vunpack.c.l.b16 %v401
        %v636 = vunpack.c.h.b16 %v401
        %v637 = vpack.c.b16 %v517, %v509
        %v638 = vpack.c.b16 %v518, %v510
        %v639 = vpack.c.b16 %v519, %v511
        %v640 = vpack.c.b16 %v520, %v512
        %v641 = vpack.c.b16 %v521, %v513
        %v642 = vpack.c.b16 %v522, %v514
        %v643 = vpack.c.b16 %v523, %v515
        %v644 = vpack.c.b16 %v524, %v516
        %v645 = vpack.c.b16 %v533, %v525
        %v646 = vpack.c.b16 %v534, %v526
        %v647 = vpack.c.b16 %v535, %v527
        %v648 = vpack.c.b16 %v536, %v528
        %v649 = vpack.c.b16 %v537, %v529
        %v650 = vpack.c.b16 %v538, %v530
        %v651 = vpack.c.b16 %v539, %v531
        %v652 = vpack.c.b16 %v540, %v532
        %v653 = vpack.c.b16 %v549, %v541
        %v654 = vpack.c.b16 %v550, %v542
        %v655 = vpack.c.b16 %v551, %v543
        %v656 = vpack.c.b16 %v552, %v544
        %v657 = vpack.c.b16 %v553, %v545
        %v658 = vpack.c.b16 %v554, %v546
        %v659 = vpack.c.b16 %v555, %v547
        %v660 = vpack.c.b16 %v556, %v548
        %v661 = vpack.c.b16 %v565, %v557
        %v662 = vpack.c.b16 %v566, %v558
        %v663 = vpack.c.b16 %v567, %v559
        %v664 = vpack.c.b16 %v568, %v560
        %v665 = vpack.c.b16 %v569, %v561
        %v666 = vpack.c.b16 %v570, %v562
        %v667 = vpack.c.b16 %v571, %v563
        %v668 = vpack.c.b16 %v572, %v564
        %v669 = vpack.c.b16 %v581, %v573
        %v670 = vpack.c.b16 %v582, %v574
        %v671 = vpack.c.b16 %v583, %v575
        %v672 = vpack.c.b16 %v584, %v576
        %v673 = vpack.c.b16 %v585, %v577
        %v674 = vpack.c.b16 %v586, %v578
        %v675 = vpack.c.b16 %v587, %v579
        %v676 = vpack.c.b16 %v588, %v580
        %v677 = vpack.c.b16 %v597, %v589
        %v678 = vpack.c.b16 %v598, %v590
        %v679 = vpack.c.b16 %v599, %v591
        %v680 = vpack.c.b16 %v600, %v592
        %v681 = vpack.c.b16 %v601, %v593
        %v682 = vpack.c.b16 %v602, %v594
        %v683 = vpack.c.b16 %v603, %v595
        %v684 = vpack.c.b16 %v604, %v596
        %v685 = vpack.c.b16 %v613, %v605
        %v686 = vpack.c.b16 %v614, %v606
        %v687 = vpack.c.b16 %v615, %v607
        %v688 = vpack.c.b16 %v616, %v608
        %v689 = vpack.c.b16 %v617, %v609
        %v690 = vpack.c.b16 %v618, %v610
        %v691 = vpack.c.b16 %v619, %v611
        %v692 = vpack.c.b16 %v620, %v612
        %v693 = vpack.c.b16 %v629, %v621
        %v694 = vpack.c.b16 %v630, %v622
        %v695 = vpack.c.b16 %v631, %v623
        %v696 = vpack.c.b16 %v632, %v624
        %v697 = vpack.c.b16 %v633, %v625
        %v698 = vpack.c.b16 %v634, %v626
        %v699 = vpack.c.b16 %v635, %v627
        %v700 = vpack.c.b16 %v636, %v628
        %765 = vmatprep.subr.bf16.mxu0 %v638
        %766 = vmatpush1.bf16.msra.mxu0 %v637
        %767 = vmatprep.subr.bf16.mxu0 %v646
        %768 = vmatpush1.bf16.msra.mxu0 %v645
        %769 = vmatprep.subr.bf16.mxu0 %v654
        %770 = vmatpush1.bf16.msra.mxu0 %v653
        %771 = vmatprep.subr.bf16.mxu0 %v662
        %772 = vmatpush1.bf16.msra.mxu0 %v661
        %773 = vmatprep.subr.bf16.mxu0 %v670
        %774 = vmatpush1.bf16.msra.mxu0 %v669
        %775 = vmatprep.subr.bf16.mxu0 %v678
        %776 = vmatpush1.bf16.msra.mxu0 %v677
        %777 = vmatprep.subr.bf16.mxu0 %v686
        %778 = vmatpush1.bf16.msra.mxu0 %v685
        %779 = vmatprep.subr.bf16.mxu0 %v694
        %780 = vmatpush1.bf16.msra.mxu0 %v693
        %781 = vmatprep.subr.bf16.mxu0 0
        %782 = vmatpush1.bf16.msra.mxu0 0
        %783 = vmatprep.subr.bf16.mxu0 0
        %784 = vmatpush1.bf16.msra.mxu0 0
        %785 = vmatprep.subr.bf16.mxu0 0
        %786 = vmatpush1.bf16.msra.mxu0 0
        %787 = vmatprep.subr.bf16.mxu0 0
        %788 = vmatpush1.bf16.msra.mxu0 0
        %789 = vmatprep.subr.bf16.mxu0 0
        %790 = vmatpush1.bf16.msra.mxu0 0
        %791 = vmatprep.subr.bf16.mxu0 0
        %792 = vmatpush1.bf16.msra.mxu0 0
        %793 = vmatprep.subr.bf16.mxu0 0
        %794 = vmatpush1.bf16.msra.mxu0 0
        %795 = vmatprep.subr.bf16.mxu0 0
        %796 = vmatpush1.bf16.msra.mxu0 0
        %797 = vmatprep.mubr.bf16.mxu0 0
        %798 = vmatmul.mubr.bf16.gmra.mrb[0].mxu0 %v402
        %v799 = vpop.f32.mrb[0].mxu0
        %v800 = vadd.f32 %v408, %v799
        %v801 = vpop.f32.mrb[0].mxu0
        %v802 = vadd.f32 %v412, %v801
        %v803 = vpop.f32.mrb[0].mxu0
        %v804 = vadd.f32 %v408, %v803
        %v805 = vpop.f32.mrb[0].mxu0
        %v806 = vadd.f32 %v412, %v805
        %807 = vdwg.mxu0
        %808 = vmatprep.subr.bf16.mxu0 %v640
        %809 = vmatpush1.bf16.msra.mxu0 %v639
        %810 = vmatprep.subr.bf16.mxu0 %v648
        %811 = vmatpush1.bf16.msra.mxu0 %v647
        %812 = vmatprep.subr.bf16.mxu0 %v656
        %813 = vmatpush1.bf16.msra.mxu0 %v655
        %814 = vmatprep.subr.bf16.mxu0 %v664
        %815 = vmatpush1.bf16.msra.mxu0 %v663
        %816 = vmatprep.subr.bf16.mxu0 %v672
        %817 = vmatpush1.bf16.msra.mxu0 %v671
        %818 = vmatprep.subr.bf16.mxu0 %v680
        %819 = vmatpush1.bf16.msra.mxu0 %v679
        %820 = vmatprep.subr.bf16.mxu0 %v688
        %821 = vmatpush1.bf16.msra.mxu0 %v687
        %822 = vmatprep.subr.bf16.mxu0 %v696
        %823 = vmatpush1.bf16.msra.mxu0 %v695
        %824 = vmatprep.subr.bf16.mxu0 0
        %825 = vmatpush1.bf16.msra.mxu0 0
        %826 = vmatprep.subr.bf16.mxu0 0
        %827 = vmatpush1.bf16.msra.mxu0 0
        %828 = vmatprep.subr.bf16.mxu0 0
        %829 = vmatpush1.bf16.msra.mxu0 0
        %830 = vmatprep.subr.bf16.mxu0 0
        %831 = vmatpush1.bf16.msra.mxu0 0
        %832 = vmatprep.subr.bf16.mxu0 0
        %833 = vmatpush1.bf16.msra.mxu0 0
        %834 = vmatprep.subr.bf16.mxu0 0
        %835 = vmatpush1.bf16.msra.mxu0 0
        %836 = vmatprep.subr.bf16.mxu0 0
        %837 = vmatpush1.bf16.msra.mxu0 0
        %838 = vmatprep.subr.bf16.mxu0 0
        %839 = vmatpush1.bf16.msra.mxu0 0
        %840 = vmatprep.mubr.bf16.mxu0 0
        %841 = vmatmul.mubr.bf16.gmra.mrb[0].mxu0 %v402
        %v842 = vpop.f32.mrb[0].mxu0
        %v843 = vadd.f32 %v416, %v842
        %v844 = vpop.f32.mrb[0].mxu0
        %v845 = vadd.f32 %v420, %v844
        %v846 = vpop.f32.mrb[0].mxu0
        %v847 = vadd.f32 %v416, %v846
        %v848 = vpop.f32.mrb[0].mxu0
        %v849 = vadd.f32 %v420, %v848
        %850 = vdwg.mxu0
        %851 = vmatprep.subr.bf16.mxu0 %v642
        %852 = vmatpush1.bf16.msra.mxu0 %v641
        %853 = vmatprep.subr.bf16.mxu0 %v650
        %854 = vmatpush1.bf16.msra.mxu0 %v649
        %855 = vmatprep.subr.bf16.mxu0 %v658
        %856 = vmatpush1.bf16.msra.mxu0 %v657
        %857 = vmatprep.subr.bf16.mxu0 %v666
        %858 = vmatpush1.bf16.msra.mxu0 %v665
        %859 = vmatprep.subr.bf16.mxu0 %v674
        %860 = vmatpush1.bf16.msra.mxu0 %v673
        %861 = vmatprep.subr.bf16.mxu0 %v682
        %862 = vmatpush1.bf16.msra.mxu0 %v681
        %863 = vmatprep.subr.bf16.mxu0 %v690
        %864 = vmatpush1.bf16.msra.mxu0 %v689
        %865 = vmatprep.subr.bf16.mxu0 %v698
        %866 = vmatpush1.bf16.msra.mxu0 %v697
        %867 = vmatprep.subr.bf16.mxu0 0
        %868 = vmatpush1.bf16.msra.mxu0 0
        %869 = vmatprep.subr.bf16.mxu0 0
        %870 = vmatpush1.bf16.msra.mxu0 0
        %871 = vmatprep.subr.bf16.mxu0 0
        %872 = vmatpush1.bf16.msra.mxu0 0
        %873 = vmatprep.subr.bf16.mxu0 0
        %874 = vmatpush1.bf16.msra.mxu0 0
        %875 = vmatprep.subr.bf16.mxu0 0
        %876 = vmatpush1.bf16.msra.mxu0 0
        %877 = vmatprep.subr.bf16.mxu0 0
        %878 = vmatpush1.bf16.msra.mxu0 0
        %879 = vmatprep.subr.bf16.mxu0 0
        %880 = vmatpush1.bf16.msra.mxu0 0
        %881 = vmatprep.subr.bf16.mxu0 0
        %882 = vmatpush1.bf16.msra.mxu0 0
        %883 = vmatprep.mubr.bf16.mxu0 0
        %884 = vmatmul.mubr.bf16.gmra.mrb[0].mxu0 %v402
        %v885 = vpop.f32.mrb[0].mxu0
        %v886 = vadd.f32 %v424, %v885
        %v887 = vpop.f32.mrb[0].mxu0
        %v888 = vadd.f32 %v428, %v887
        %v889 = vpop.f32.mrb[0].mxu0
        %v890 = vadd.f32 %v424, %v889
        %v891 = vpop.f32.mrb[0].mxu0
        %v892 = vadd.f32 %v428, %v891
        %893 = vdwg.mxu0
        %894 = vmatprep.subr.bf16.mxu0 %v644
        %895 = vmatpush1.bf16.msra.mxu0 %v643
        %896 = vmatprep.subr.bf16.mxu0 %v652
        %897 = vmatpush1.bf16.msra.mxu0 %v651
        %898 = vmatprep.subr.bf16.mxu0 %v660
        %899 = vmatpush1.bf16.msra.mxu0 %v659
        %900 = vmatprep.subr.bf16.mxu0 %v668
        %901 = vmatpush1.bf16.msra.mxu0 %v667
        %902 = vmatprep.subr.bf16.mxu0 %v676
        %903 = vmatpush1.bf16.msra.mxu0 %v675
        %904 = vmatprep.subr.bf16.mxu0 %v684
        %905 = vmatpush1.bf16.msra.mxu0 %v683
        %906 = vmatprep.subr.bf16.mxu0 %v692
        %907 = vmatpush1.bf16.msra.mxu0 %v691
        %908 = vmatprep.subr.bf16.mxu0 %v700
        %909 = vmatpush1.bf16.msra.mxu0 %v699
        %910 = vmatprep.subr.bf16.mxu0 0
        %911 = vmatpush1.bf16.msra.mxu0 0
        %912 = vmatprep.subr.bf16.mxu0 0
        %913 = vmatpush1.bf16.msra.mxu0 0
        %914 = vmatprep.subr.bf16.mxu0 0
        %915 = vmatpush1.bf16.msra.mxu0 0
        %916 = vmatprep.subr.bf16.mxu0 0
        %917 = vmatpush1.bf16.msra.mxu0 0
        %918 = vmatprep.subr.bf16.mxu0 0
        %919 = vmatpush1.bf16.msra.mxu0 0
        %920 = vmatprep.subr.bf16.mxu0 0
        %921 = vmatpush1.bf16.msra.mxu0 0
        %922 = vmatprep.subr.bf16.mxu0 0
        %923 = vmatpush1.bf16.msra.mxu0 0
        %924 = vmatprep.subr.bf16.mxu0 0
        %925 = vmatpush1.bf16.msra.mxu0 0
        %926 = vmatprep.mubr.bf16.mxu0 0
        %927 = vmatmul.mubr.bf16.gmra.mrb[0].mxu0 %v402
        %v928 = vpop.f32.mrb[0].mxu0
        %v929 = vadd.f32 %v432, %v928
        %v930 = vpop.f32.mrb[0].mxu0
        %v931 = vadd.f32 %v436, %v930
        %v932 = vpop.f32.mrb[0].mxu0
        %v933 = vadd.f32 %v432, %v932
        %v934 = vpop.f32.mrb[0].mxu0
        %v935 = vadd.f32 %v436, %v934
        %936 = vdwg.mxu0
        %v937 = vld [vmem:[%s270] sm:$0xff]
        %v938 = vld [vmem:[%s270 + $0x8] sm:$0xff]
        %v939 = vld [vmem:[%s270 + $0x10] sm:$0xff]
        %v940 = vld [vmem:[%s270 + $0x18] sm:$0xff]
        %v941 = vld [vmem:[%s270 + $0x20] sm:$0xff]
        %v942 = vld [vmem:[%s270 + $0x28] sm:$0xff]
        %v943 = vld [vmem:[%s270 + $0x30] sm:$0xff]
        %v944 = vld [vmem:[%s270 + $0x38] sm:$0xff]
        %v945 = vld [vmem:[%s270 + $0x40] sm:$0xff]
        %v946 = vld [vmem:[%s270 + $0x48] sm:$0xff]
        %v947 = vld [vmem:[%s270 + $0x50] sm:$0xff]
        %v948 = vld [vmem:[%s270 + $0x58] sm:$0xff]
        %v949 = vld [vmem:[%s270 + $0x60] sm:$0xff]
        %v950 = vld [vmem:[%s270 + $0x68] sm:$0xff]
        %v951 = vld [vmem:[%s270 + $0x70] sm:$0xff]
        %v952 = vld [vmem:[%s270 + $0x78] sm:$0xff]
        %v953 = vld [vmem:[%s270 + $0x80] sm:$0xff]
        %v954 = vld [vmem:[%s270 + $0x88] sm:$0xff]
        %v955 = vld [vmem:[%s270 + $0x90] sm:$0xff]
        %v956 = vld [vmem:[%s270 + $0x98] sm:$0xff]
        %v957 = vld [vmem:[%s270 + $0xa0] sm:$0xff]
        %v958 = vld [vmem:[%s270 + $0xa8] sm:$0xff]
        %v959 = vld [vmem:[%s270 + $0xb0] sm:$0xff]
        %v960 = vld [vmem:[%s270 + $0xb8] sm:$0xff]
        %v961 = vld [vmem:[%s270 + $0xc0] sm:$0xff]
        %v962 = vld [vmem:[%s270 + $0xc8] sm:$0xff]
        %v963 = vld [vmem:[%s270 + $0xd0] sm:$0xff]
        %v964 = vld [vmem:[%s270 + $0xd8] sm:$0xff]
        %v965 = vld [vmem:[%s270 + $0xe0] sm:$0xff]
        %v966 = vld [vmem:[%s270 + $0xe8] sm:$0xff]
        %v967 = vld [vmem:[%s270 + $0xf0] sm:$0xff]
        %v968 = vld [vmem:[%s270 + $0xf8] sm:$0xff]
        %v969 = vld [vmem:[%s270 + $0x100] sm:$0xff]
        %v970 = vld [vmem:[%s270 + $0x108] sm:$0xff]
        %v971 = vld [vmem:[%s270 + $0x110] sm:$0xff]
        %v972 = vld [vmem:[%s270 + $0x118] sm:$0xff]
        %v973 = vld [vmem:[%s270 + $0x120] sm:$0xff]
        %v974 = vld [vmem:[%s270 + $0x128] sm:$0xff]
        %v975 = vld [vmem:[%s270 + $0x130] sm:$0xff]
        %v976 = vld [vmem:[%s270 + $0x138] sm:$0xff]
        %v977 = vld [vmem:[%s270 + $0x140] sm:$0xff]
        %v978 = vld [vmem:[%s270 + $0x148] sm:$0xff]
        %v979 = vld [vmem:[%s270 + $0x150] sm:$0xff]
        %v980 = vld [vmem:[%s270 + $0x158] sm:$0xff]
        %v981 = vld [vmem:[%s270 + $0x160] sm:$0xff]
        %v982 = vld [vmem:[%s270 + $0x168] sm:$0xff]
        %v983 = vld [vmem:[%s270 + $0x170] sm:$0xff]
        %v984 = vld [vmem:[%s270 + $0x178] sm:$0xff]
        %v985 = vld [vmem:[%s270 + $0x180] sm:$0xff]
        %v986 = vld [vmem:[%s270 + $0x188] sm:$0xff]
        %v987 = vld [vmem:[%s270 + $0x190] sm:$0xff]
        %v988 = vld [vmem:[%s270 + $0x198] sm:$0xff]
        %v989 = vld [vmem:[%s270 + $0x1a0] sm:$0xff]
        %v990 = vld [vmem:[%s270 + $0x1a8] sm:$0xff]
        %v991 = vld [vmem:[%s270 + $0x1b0] sm:$0xff]
        %v992 = vld [vmem:[%s270 + $0x1b8] sm:$0xff]
        %v993 = vld [vmem:[%s270 + $0x1c0] sm:$0xff]
        %v994 = vld [vmem:[%s270 + $0x1c8] sm:$0xff]
        %v995 = vld [vmem:[%s270 + $0x1d0] sm:$0xff]
        %v996 = vld [vmem:[%s270 + $0x1d8] sm:$0xff]
        %v997 = vld [vmem:[%s270 + $0x1e0] sm:$0xff]
        %v998 = vld [vmem:[%s270 + $0x1e8] sm:$0xff]
        %v999 = vld [vmem:[%s270 + $0x1f0] sm:$0xff]
        %v1000 = vld [vmem:[%s270 + $0x1f8] sm:$0xff]
        %v1033 = vunpack.c.l.b16 %v937
        %v1034 = vunpack.c.h.b16 %v937
        %v1035 = vunpack.c.l.b16 %v938
        %v1036 = vunpack.c.h.b16 %v938
        %v1037 = vunpack.c.l.b16 %v939
        %v1038 = vunpack.c.h.b16 %v939
        %v1039 = vunpack.c.l.b16 %v940
        %v1040 = vunpack.c.h.b16 %v940
        %v1041 = vunpack.c.l.b16 %v941
        %v1042 = vunpack.c.h.b16 %v941
        %v1043 = vunpack.c.l.b16 %v942
        %v1044 = vunpack.c.h.b16 %v942
        %v1045 = vunpack.c.l.b16 %v943
        %v1046 = vunpack.c.h.b16 %v943
        %v1047 = vunpack.c.l.b16 %v944
        %v1048 = vunpack.c.h.b16 %v944
        %v1049 = vunpack.c.l.b16 %v945
        %v1050 = vunpack.c.h.b16 %v945
        %v1051 = vunpack.c.l.b16 %v946
        %v1052 = vunpack.c.h.b16 %v946
        %v1053 = vunpack.c.l.b16 %v947
        %v1054 = vunpack.c.h.b16 %v947
        %v1055 = vunpack.c.l.b16 %v948
        %v1056 = vunpack.c.h.b16 %v948
        %v1057 = vunpack.c.l.b16 %v949
        %v1058 = vunpack.c.h.b16 %v949
        %v1059 = vunpack.c.l.b16 %v950
        %v1060 = vunpack.c.h.b16 %v950
        %v1061 = vunpack.c.l.b16 %v951
        %v1062 = vunpack.c.h.b16 %v951
        %v1063 = vunpack.c.l.b16 %v952
        %v1064 = vunpack.c.h.b16 %v952
        %v1065 = vunpack.c.l.b16 %v953
        %v1066 = vunpack.c.h.b16 %v953
        %v1067 = vunpack.c.l.b16 %v954
        %v1068 = vunpack.c.h.b16 %v954
        %v1069 = vunpack.c.l.b16 %v955
        %v1070 = vunpack.c.h.b16 %v955
        %v1071 = vunpack.c.l.b16 %v956
        %v1072 = vunpack.c.h.b16 %v956
        %v1073 = vunpack.c.l.b16 %v957
        %v1074 = vunpack.c.h.b16 %v957
        %v1075 = vunpack.c.l.b16 %v958
        %v1076 = vunpack.c.h.b16 %v958
        %v1077 = vunpack.c.l.b16 %v959
        %v1078 = vunpack.c.h.b16 %v959
        %v1079 = vunpack.c.l.b16 %v960
        %v1080 = vunpack.c.h.b16 %v960
        %v1081 = vunpack.c.l.b16 %v961
        %v1082 = vunpack.c.h.b16 %v961
        %v1083 = vunpack.c.l.b16 %v962
        %v1084 = vunpack.c.h.b16 %v962
        %v1085 = vunpack.c.l.b16 %v963
        %v1086 = vunpack.c.h.b16 %v963
        %v1087 = vunpack.c.l.b16 %v964
        %v1088 = vunpack.c.h.b16 %v964
        %v1089 = vunpack.c.l.b16 %v965
        %v1090 = vunpack.c.h.b16 %v965
        %v1091 = vunpack.c.l.b16 %v966
        %v1092 = vunpack.c.h.b16 %v966
        %v1093 = vunpack.c.l.b16 %v967
        %v1094 = vunpack.c.h.b16 %v967
        %v1095 = vunpack.c.l.b16 %v968
        %v1096 = vunpack.c.h.b16 %v968
        %v1097 = vpack.c.b16 %v1037, %v1033
        %v1098 = vpack.c.b16 %v1038, %v1034
        %v1099 = vpack.c.b16 %v1039, %v1035
        %v1100 = vpack.c.b16 %v1040, %v1036
        %v1101 = vpack.c.b16 %v1045, %v1041
        %v1102 = vpack.c.b16 %v1046, %v1042
        %v1103 = vpack.c.b16 %v1047, %v1043
        %v1104 = vpack.c.b16 %v1048, %v1044
        %v1105 = vpack.c.b16 %v1053, %v1049
        %v1106 = vpack.c.b16 %v1054, %v1050
        %v1107 = vpack.c.b16 %v1055, %v1051
        %v1108 = vpack.c.b16 %v1056, %v1052
        %v1109 = vpack.c.b16 %v1061, %v1057
        %v1110 = vpack.c.b16 %v1062, %v1058
        %v1111 = vpack.c.b16 %v1063, %v1059
        %v1112 = vpack.c.b16 %v1064, %v1060
        %v1113 = vpack.c.b16 %v1069, %v1065
        %v1114 = vpack.c.b16 %v1070, %v1066
        %v1115 = vpack.c.b16 %v1071, %v1067
        %v1116 = vpack.c.b16 %v1072, %v1068
        %v1117 = vpack.c.b16 %v1077, %v1073
        %v1118 = vpack.c.b16 %v1078, %v1074
        %v1119 = vpack.c.b16 %v1079, %v1075
        %v1120 = vpack.c.b16 %v1080, %v1076
        %v1121 = vpack.c.b16 %v1085, %v1081
        %v1122 = vpack.c.b16 %v1086, %v1082
        %v1123 = vpack.c.b16 %v1087, %v1083
        %v1124 = vpack.c.b16 %v1088, %v1084
        %v1125 = vpack.c.b16 %v1093, %v1089
        %v1126 = vpack.c.b16 %v1094, %v1090
        %v1127 = vpack.c.b16 %v1095, %v1091
        %v1128 = vpack.c.b16 %v1096, %v1092
        %1161 = vmatprep.subr.bf16.mxu0 %v1098
        %1162 = vmatpush1.bf16.msra.mxu0 %v1097
        %1163 = vmatprep.subr.bf16.mxu0 %v1102
        %1164 = vmatpush1.bf16.msra.mxu0 %v1101
        %1165 = vmatprep.subr.bf16.mxu0 %v1106
        %1166 = vmatpush1.bf16.msra.mxu0 %v1105
        %1167 = vmatprep.subr.bf16.mxu0 %v1110
        %1168 = vmatpush1.bf16.msra.mxu0 %v1109
        %1169 = vmatprep.subr.bf16.mxu0 %v1114
        %1170 = vmatpush1.bf16.msra.mxu0 %v1113
        %1171 = vmatprep.subr.bf16.mxu0 %v1118
        %1172 = vmatpush1.bf16.msra.mxu0 %v1117
        %1173 = vmatprep.subr.bf16.mxu0 %v1122
        %1174 = vmatpush1.bf16.msra.mxu0 %v1121
        %1175 = vmatprep.subr.bf16.mxu0 %v1126
        %1176 = vmatpush1.bf16.msra.mxu0 %v1125
        %1177 = vmatprep.subr.bf16.mxu0 0
        %1178 = vmatpush1.bf16.msra.mxu0 0
        %1179 = vmatprep.subr.bf16.mxu0 0
        %1180 = vmatpush1.bf16.msra.mxu0 0
        %1181 = vmatprep.subr.bf16.mxu0 0
        %1182 = vmatpush1.bf16.msra.mxu0 0
        %1183 = vmatprep.subr.bf16.mxu0 0
        %1184 = vmatpush1.bf16.msra.mxu0 0
        %1185 = vmatprep.subr.bf16.mxu0 0
        %1186 = vmatpush1.bf16.msra.mxu0 0
        %1187 = vmatprep.subr.bf16.mxu0 0
        %1188 = vmatpush1.bf16.msra.mxu0 0
        %1189 = vmatprep.subr.bf16.mxu0 0
        %1190 = vmatpush1.bf16.msra.mxu0 0
        %1191 = vmatprep.subr.bf16.mxu0 0
        %1192 = vmatpush1.bf16.msra.mxu0 0
        %1193 = vmatprep.mubr.bf16.mxu0 0
        %1194 = vmatmul.mubr.bf16.gmra.mrb[0].mxu0 0
        %v1195 = vpop.f32.mrb[0].mxu0
        %v1196 = vadd.f32 0.0, %v1195
        %v1197 = vpop.f32.mrb[0].mxu0
        %v1198 = vadd.f32 0.0, %v1197
        %v1199 = vpop.f32.mrb[0].mxu0
        %v1200 = vpop.f32.mrb[0].mxu0
        %1201 = vdwg.mxu0
        %1202 = vmatprep.subr.bf16.mxu0 %v1100
        %1203 = vmatpush1.bf16.msra.mxu0 %v1099
        %1204 = vmatprep.subr.bf16.mxu0 %v1104
        %1205 = vmatpush1.bf16.msra.mxu0 %v1103
        %1206 = vmatprep.subr.bf16.mxu0 %v1108
        %1207 = vmatpush1.bf16.msra.mxu0 %v1107
        %1208 = vmatprep.subr.bf16.mxu0 %v1112
        %1209 = vmatpush1.bf16.msra.mxu0 %v1111
        %1210 = vmatprep.subr.bf16.mxu0 %v1116
        %1211 = vmatpush1.bf16.msra.mxu0 %v1115
        %1212 = vmatprep.subr.bf16.mxu0 %v1120
        %1213 = vmatpush1.bf16.msra.mxu0 %v1119
        %1214 = vmatprep.subr.bf16.mxu0 %v1124
        %1215 = vmatpush1.bf16.msra.mxu0 %v1123
        %1216 = vmatprep.subr.bf16.mxu0 %v1128
        %1217 = vmatpush1.bf16.msra.mxu0 %v1127
        %1218 = vmatprep.subr.bf16.mxu0 0
        %1219 = vmatpush1.bf16.msra.mxu0 0
        %1220 = vmatprep.subr.bf16.mxu0 0
        %1221 = vmatpush1.bf16.msra.mxu0 0
        %1222 = vmatprep.subr.bf16.mxu0 0
        %1223 = vmatpush1.bf16.msra.mxu0 0
        %1224 = vmatprep.subr.bf16.mxu0 0
        %1225 = vmatpush1.bf16.msra.mxu0 0
        %1226 = vmatprep.subr.bf16.mxu0 0
        %1227 = vmatpush1.bf16.msra.mxu0 0
        %1228 = vmatprep.subr.bf16.mxu0 0
        %1229 = vmatpush1.bf16.msra.mxu0 0
        %1230 = vmatprep.subr.bf16.mxu0 0
        %1231 = vmatpush1.bf16.msra.mxu0 0
        %1232 = vmatprep.subr.bf16.mxu0 0
        %1233 = vmatpush1.bf16.msra.mxu0 0
        %1234 = vmatprep.mubr.bf16.mxu0 0
        %1235 = vmatmul.mubr.bf16.gmra.mrb[0].mxu0 0
        %v1236 = vpop.f32.mrb[0].mxu0
        %v1237 = vadd.f32 0.0, %v1236
        %v1238 = vpop.f32.mrb[0].mxu0
        %v1239 = vadd.f32 0.0, %v1238
        %v1240 = vpop.f32.mrb[0].mxu0
        %v1241 = vpop.f32.mrb[0].mxu0
        %1242 = vdwg.mxu0
        %v1243 = vadd.f32 %v800, %v1196
        %v1244 = vadd.f32 %v802, %v1198
        %v1245 = vadd.f32 %v843, %v1237
        %v1246 = vadd.f32 %v845, %v1239
        %v1279 = vunpack.c.l.b16 %v969
        %v1280 = vunpack.c.h.b16 %v969
        %v1281 = vunpack.c.l.b16 %v970
        %v1282 = vunpack.c.h.b16 %v970
        %v1283 = vunpack.c.l.b16 %v971
        %v1284 = vunpack.c.h.b16 %v971
        %v1285 = vunpack.c.l.b16 %v972
        %v1286 = vunpack.c.h.b16 %v972
        %v1287 = vunpack.c.l.b16 %v973
        %v1288 = vunpack.c.h.b16 %v973
        %v1289 = vunpack.c.l.b16 %v974
        %v1290 = vunpack.c.h.b16 %v974
        %v1291 = vunpack.c.l.b16 %v975
        %v1292 = vunpack.c.h.b16 %v975
        %v1293 = vunpack.c.l.b16 %v976
        %v1294 = vunpack.c.h.b16 %v976
        %v1295 = vunpack.c.l.b16 %v977
        %v1296 = vunpack.c.h.b16 %v977
        %v1297 = vunpack.c.l.b16 %v978
        %v1298 = vunpack.c.h.b16 %v978
        %v1299 = vunpack.c.l.b16 %v979
        %v1300 = vunpack.c.h.b16 %v979
        %v1301 = vunpack.c.l.b16 %v980
        %v1302 = vunpack.c.h.b16 %v980
        %v1303 = vunpack.c.l.b16 %v981
        %v1304 = vunpack.c.h.b16 %v981
        %v1305 = vunpack.c.l.b16 %v982
        %v1306 = vunpack.c.h.b16 %v982
        %v1307 = vunpack.c.l.b16 %v983
        %v1308 = vunpack.c.h.b16 %v983
        %v1309 = vunpack.c.l.b16 %v984
        %v1310 = vunpack.c.h.b16 %v984
        %v1311 = vunpack.c.l.b16 %v985
        %v1312 = vunpack.c.h.b16 %v985
        %v1313 = vunpack.c.l.b16 %v986
        %v1314 = vunpack.c.h.b16 %v986
        %v1315 = vunpack.c.l.b16 %v987
        %v1316 = vunpack.c.h.b16 %v987
        %v1317 = vunpack.c.l.b16 %v988
        %v1318 = vunpack.c.h.b16 %v988
        %v1319 = vunpack.c.l.b16 %v989
        %v1320 = vunpack.c.h.b16 %v989
        %v1321 = vunpack.c.l.b16 %v990
        %v1322 = vunpack.c.h.b16 %v990
        %v1323 = vunpack.c.l.b16 %v991
        %v1324 = vunpack.c.h.b16 %v991
        %v1325 = vunpack.c.l.b16 %v992
        %v1326 = vunpack.c.h.b16 %v992
        %v1327 = vunpack.c.l.b16 %v993
        %v1328 = vunpack.c.h.b16 %v993
        %v1329 = vunpack.c.l.b16 %v994
        %v1330 = vunpack.c.h.b16 %v994
        %v1331 = vunpack.c.l.b16 %v995
        %v1332 = vunpack.c.h.b16 %v995
        %v1333 = vunpack.c.l.b16 %v996
        %v1334 = vunpack.c.h.b16 %v996
        %v1335 = vunpack.c.l.b16 %v997
        %v1336 = vunpack.c.h.b16 %v997
        %v1337 = vunpack.c.l.b16 %v998
        %v1338 = vunpack.c.h.b16 %v998
        %v1339 = vunpack.c.l.b16 %v999
        %v1340 = vunpack.c.h.b16 %v999
        %v1341 = vunpack.c.l.b16 %v1000
        %v1342 = vunpack.c.h.b16 %v1000
        %v1343 = vpack.c.b16 %v1283, %v1279
        %v1344 = vpack.c.b16 %v1284, %v1280
        %v1345 = vpack.c.b16 %v1285, %v1281
        %v1346 = vpack.c.b16 %v1286, %v1282
        %v1347 = vpack.c.b16 %v1291, %v1287
        %v1348 = vpack.c.b16 %v1292, %v1288
        %v1349 = vpack.c.b16 %v1293, %v1289
        %v1350 = vpack.c.b16 %v1294, %v1290
        %v1351 = vpack.c.b16 %v1299, %v1295
        %v1352 = vpack.c.b16 %v1300, %v1296
        %v1353 = vpack.c.b16 %v1301, %v1297
        %v1354 = vpack.c.b16 %v1302, %v1298
        %v1355 = vpack.c.b16 %v1307, %v1303
        %v1356 = vpack.c.b16 %v1308, %v1304
        %v1357 = vpack.c.b16 %v1309, %v1305
        %v1358 = vpack.c.b16 %v1310, %v1306
        %v1359 = vpack.c.b16 %v1315, %v1311
        %v1360 = vpack.c.b16 %v1316, %v1312
        %v1361 = vpack.c.b16 %v1317, %v1313
        %v1362 = vpack.c.b16 %v1318, %v1314
        %v1363 = vpack.c.b16 %v1323, %v1319
        %v1364 = vpack.c.b16 %v1324, %v1320
        %v1365 = vpack.c.b16 %v1325, %v1321
        %v1366 = vpack.c.b16 %v1326, %v1322
        %v1367 = vpack.c.b16 %v1331, %v1327
        %v1368 = vpack.c.b16 %v1332, %v1328
        %v1369 = vpack.c.b16 %v1333, %v1329
        %v1370 = vpack.c.b16 %v1334, %v1330
        %v1371 = vpack.c.b16 %v1339, %v1335
        %v1372 = vpack.c.b16 %v1340, %v1336
        %v1373 = vpack.c.b16 %v1341, %v1337
        %v1374 = vpack.c.b16 %v1342, %v1338
        %1407 = vmatprep.subr.bf16.mxu0 %v1344
        %1408 = vmatpush1.bf16.msra.mxu0 %v1343
        %1409 = vmatprep.subr.bf16.mxu0 %v1348
        %1410 = vmatpush1.bf16.msra.mxu0 %v1347
        %1411 = vmatprep.subr.bf16.mxu0 %v1352
        %1412 = vmatpush1.bf16.msra.mxu0 %v1351
        %1413 = vmatprep.subr.bf16.mxu0 %v1356
        %1414 = vmatpush1.bf16.msra.mxu0 %v1355
        %1415 = vmatprep.subr.bf16.mxu0 %v1360
        %1416 = vmatpush1.bf16.msra.mxu0 %v1359
        %1417 = vmatprep.subr.bf16.mxu0 %v1364
        %1418 = vmatpush1.bf16.msra.mxu0 %v1363
        %1419 = vmatprep.subr.bf16.mxu0 %v1368
        %1420 = vmatpush1.bf16.msra.mxu0 %v1367
        %1421 = vmatprep.subr.bf16.mxu0 %v1372
        %1422 = vmatpush1.bf16.msra.mxu0 %v1371
        %1423 = vmatprep.subr.bf16.mxu0 0
        %1424 = vmatpush1.bf16.msra.mxu0 0
        %1425 = vmatprep.subr.bf16.mxu0 0
        %1426 = vmatpush1.bf16.msra.mxu0 0
        %1427 = vmatprep.subr.bf16.mxu0 0
        %1428 = vmatpush1.bf16.msra.mxu0 0
        %1429 = vmatprep.subr.bf16.mxu0 0
        %1430 = vmatpush1.bf16.msra.mxu0 0
        %1431 = vmatprep.subr.bf16.mxu0 0
        %1432 = vmatpush1.bf16.msra.mxu0 0
        %1433 = vmatprep.subr.bf16.mxu0 0
        %1434 = vmatpush1.bf16.msra.mxu0 0
        %1435 = vmatprep.subr.bf16.mxu0 0
        %1436 = vmatpush1.bf16.msra.mxu0 0
        %1437 = vmatprep.subr.bf16.mxu0 0
        %1438 = vmatpush1.bf16.msra.mxu0 0
        %1439 = vmatprep.mubr.bf16.mxu0 0
        %1440 = vmatmul.mubr.bf16.gmra.mrb[0].mxu0 0
        %v1441 = vpop.f32.mrb[0].mxu0
        %v1442 = vadd.f32 0.0, %v1441
        %v1443 = vpop.f32.mrb[0].mxu0
        %v1444 = vadd.f32 0.0, %v1443
        %v1445 = vpop.f32.mrb[0].mxu0
        %v1446 = vpop.f32.mrb[0].mxu0
        %1447 = vdwg.mxu0
        %1448 = vmatprep.subr.bf16.mxu0 %v1346
        %1449 = vmatpush1.bf16.msra.mxu0 %v1345
        %1450 = vmatprep.subr.bf16.mxu0 %v1350
        %1451 = vmatpush1.bf16.msra.mxu0 %v1349
        %1452 = vmatprep.subr.bf16.mxu0 %v1354
        %1453 = vmatpush1.bf16.msra.mxu0 %v1353
        %1454 = vmatprep.subr.bf16.mxu0 %v1358
        %1455 = vmatpush1.bf16.msra.mxu0 %v1357
        %1456 = vmatprep.subr.bf16.mxu0 %v1362
        %1457 = vmatpush1.bf16.msra.mxu0 %v1361
        %1458 = vmatprep.subr.bf16.mxu0 %v1366
        %1459 = vmatpush1.bf16.msra.mxu0 %v1365
        %1460 = vmatprep.subr.bf16.mxu0 %v1370
        %1461 = vmatpush1.bf16.msra.mxu0 %v1369
        %1462 = vmatprep.subr.bf16.mxu0 %v1374
        %1463 = vmatpush1.bf16.msra.mxu0 %v1373
        %1464 = vmatprep.subr.bf16.mxu0 0
        %1465 = vmatpush1.bf16.msra.mxu0 0
        %1466 = vmatprep.subr.bf16.mxu0 0
        %1467 = vmatpush1.bf16.msra.mxu0 0
        %1468 = vmatprep.subr.bf16.mxu0 0
        %1469 = vmatpush1.bf16.msra.mxu0 0
        %1470 = vmatprep.subr.bf16.mxu0 0
        %1471 = vmatpush1.bf16.msra.mxu0 0
        %1472 = vmatprep.subr.bf16.mxu0 0
        %1473 = vmatpush1.bf16.msra.mxu0 0
        %1474 = vmatprep.subr.bf16.mxu0 0
        %1475 = vmatpush1.bf16.msra.mxu0 0
        %1476 = vmatprep.subr.bf16.mxu0 0
        %1477 = vmatpush1.bf16.msra.mxu0 0
        %1478 = vmatprep.subr.bf16.mxu0 0
        %1479 = vmatpush1.bf16.msra.mxu0 0
        %1480 = vmatprep.mubr.bf16.mxu0 0
        %1481 = vmatmul.mubr.bf16.gmra.mrb[0].mxu0 0
        %v1482 = vpop.f32.mrb[0].mxu0
        %v1483 = vadd.f32 0.0, %v1482
        %v1484 = vpop.f32.mrb[0].mxu0
        %v1485 = vadd.f32 0.0, %v1484
        %v1486 = vpop.f32.mrb[0].mxu0
        %v1487 = vpop.f32.mrb[0].mxu0
        %1488 = vdwg.mxu0
        %v1493 = vrot.slane %v1442, 2
        %v1494 = vrot.slane %v1444, 2
        %v1495 = vrot.slane %v1483, 2
        %v1496 = vrot.slane %v1485, 2
        %v1501 = vadd.f32 %v890, %v1493
        %v1502 = vadd.f32 %v892, %v1494
        %v1503 = vadd.f32 %v933, %v1495
        %v1504 = vadd.f32 %v935, %v1496
        %v1505 = vxor.u32 %v1243, 2147483648
        %v1506 = vxor.u32 %v1244, 2147483648
        %v1507 = vxor.u32 %v1245, 2147483648
        %v1508 = vmul.f32 %v1505, 1.442695
        %v1509 = vpow.pop %v1508
        %v1510 = vmul.f32 %v1506, 1.442695
        %v1511 = vpow.pop %v1510
        %v1512 = vmul.f32 %v1507, 1.442695
        %v1513 = vpow.pop %v1512
        %v1514 = vadd.f32 %v1509, 1.0
        %v1515 = vadd.f32 %v1511, 1.0
        %v1516 = vadd.f32 %v1513, 1.0
        %v1517 = vrcp.pop %v1514
        %v1518 = vmul.f32 1.0, %v1517
        %v1519 = vrcp.pop %v1515
        %v1520 = vmul.f32 1.0, %v1519
        %v1521 = vrcp.pop %v1516
        %v1522 = vmul.f32 1.0, %v1521
        %v1523 = vtanh.pop %v1246
        %v1524 = vxor.u32 %v1501, 2147483648
        %v1525 = vxor.u32 %v1502, 2147483648
        %v1526 = vxor.u32 %v1503, 2147483648
        %v1527 = vmul.f32 %v1524, 1.442695
        %v1528 = vpow.pop %v1527
        %v1529 = vmul.f32 %v1525, 1.442695
        %v1530 = vpow.pop %v1529
        %v1531 = vmul.f32 %v1526, 1.442695
        %v1532 = vpow.pop %v1531
        %v1533 = vadd.f32 %v1528, 1.0
        %v1534 = vadd.f32 %v1530, 1.0
        %v1535 = vadd.f32 %v1532, 1.0
        %v1536 = vrcp.pop %v1533
        %v1537 = vmul.f32 1.0, %v1536
        %v1538 = vrcp.pop %v1534
        %v1539 = vmul.f32 1.0, %v1538
        %v1540 = vrcp.pop %v1535
        %v1541 = vmul.f32 1.0, %v1540
        %v1542 = vtanh.pop %v1504
        %v1543 = vmul.f32 %v1520, 0.0
        %v1544 = vmul.f32 %v1518, %v1523
        %v1545 = vadd.f32 %v1543, %v1544
        %v1546 = vmul.f32 %v1539, 0.0
        %v1547 = vmul.f32 %v1537, %v1542
        %v1548 = vadd.f32 %v1546, %v1547
        %v1549 = vtanh.pop %v1545
        %v1550 = vmul.f32 %v1522, %v1549
        %v1551 = vtanh.pop %v1548
        %v1552 = vmul.f32 %v1541, %v1551
        %v1553 = vpack.c.bf16 %v1550, %v1550
        %1554 = vmatprep.subr.bf16.mxu0 %v1098
        %1555 = vmatpush1.bf16.msra.mxu0 %v1097
        %1556 = vmatprep.subr.bf16.mxu0 %v1102
        %1557 = vmatpush1.bf16.msra.mxu0 %v1101
        %1558 = vmatprep.subr.bf16.mxu0 %v1106
        %1559 = vmatpush1.bf16.msra.mxu0 %v1105
        %1560 = vmatprep.subr.bf16.mxu0 %v1110
        %1561 = vmatpush1.bf16.msra.mxu0 %v1109
        %1562 = vmatprep.subr.bf16.mxu0 %v1114
        %1563 = vmatpush1.bf16.msra.mxu0 %v1113
        %1564 = vmatprep.subr.bf16.mxu0 %v1118
        %1565 = vmatpush1.bf16.msra.mxu0 %v1117
        %1566 = vmatprep.subr.bf16.mxu0 %v1122
        %1567 = vmatpush1.bf16.msra.mxu0 %v1121
        %1568 = vmatprep.subr.bf16.mxu0 %v1126
        %1569 = vmatpush1.bf16.msra.mxu0 %v1125
        %1570 = vmatprep.subr.bf16.mxu0 0
        %1571 = vmatpush1.bf16.msra.mxu0 0
        %1572 = vmatprep.subr.bf16.mxu0 0
        %1573 = vmatpush1.bf16.msra.mxu0 0
        %1574 = vmatprep.subr.bf16.mxu0 0
        %1575 = vmatpush1.bf16.msra.mxu0 0
        %1576 = vmatprep.subr.bf16.mxu0 0
        %1577 = vmatpush1.bf16.msra.mxu0 0
        %1578 = vmatprep.subr.bf16.mxu0 0
        %1579 = vmatpush1.bf16.msra.mxu0 0
        %1580 = vmatprep.subr.bf16.mxu0 0
        %1581 = vmatpush1.bf16.msra.mxu0 0
        %1582 = vmatprep.subr.bf16.mxu0 0
        %1583 = vmatpush1.bf16.msra.mxu0 0
        %1584 = vmatprep.subr.bf16.mxu0 0
        %1585 = vmatpush1.bf16.msra.mxu0 0
        %1586 = vmatprep.mubr.bf16.mxu0 0
        %1587 = vmatmul.mubr.bf16.gmra.mrb[0].mxu0 %v1553
        %v1588 = vpop.f32.mrb[0].mxu0
        %v1589 = vadd.f32 0.0, %v1588
        %v1590 = vpop.f32.mrb[0].mxu0
        %v1591 = vadd.f32 0.0, %v1590
        %v1592 = vpop.f32.mrb[0].mxu0
        %v1593 = vpop.f32.mrb[0].mxu0
        %1594 = vdwg.mxu0
        %1595 = vmatprep.subr.bf16.mxu0 %v1100
        %1596 = vmatpush1.bf16.msra.mxu0 %v1099
        %1597 = vmatprep.subr.bf16.mxu0 %v1104
        %1598 = vmatpush1.bf16.msra.mxu0 %v1103
        %1599 = vmatprep.subr.bf16.mxu0 %v1108
        %1600 = vmatpush1.bf16.msra.mxu0 %v1107
        %1601 = vmatprep.subr.bf16.mxu0 %v1112
        %1602 = vmatpush1.bf16.msra.mxu0 %v1111
        %1603 = vmatprep.subr.bf16.mxu0 %v1116
        %1604 = vmatpush1.bf16.msra.mxu0 %v1115
        %1605 = vmatprep.subr.bf16.mxu0 %v1120
        %1606 = vmatpush1.bf16.msra.mxu0 %v1119
        %1607 = vmatprep.subr.bf16.mxu0 %v1124
        %1608 = vmatpush1.bf16.msra.mxu0 %v1123
        %1609 = vmatprep.subr.bf16.mxu0 %v1128
        %1610 = vmatpush1.bf16.msra.mxu0 %v1127
        %1611 = vmatprep.subr.bf16.mxu0 0
        %1612 = vmatpush1.bf16.msra.mxu0 0
        %1613 = vmatprep.subr.bf16.mxu0 0
        %1614 = vmatpush1.bf16.msra.mxu0 0
        %1615 = vmatprep.subr.bf16.mxu0 0
        %1616 = vmatpush1.bf16.msra.mxu0 0
        %1617 = vmatprep.subr.bf16.mxu0 0
        %1618 = vmatpush1.bf16.msra.mxu0 0
        %1619 = vmatprep.subr.bf16.mxu0 0
        %1620 = vmatpush1.bf16.msra.mxu0 0
        %1621 = vmatprep.subr.bf16.mxu0 0
        %1622 = vmatpush1.bf16.msra.mxu0 0
        %1623 = vmatprep.subr.bf16.mxu0 0
        %1624 = vmatpush1.bf16.msra.mxu0 0
        %1625 = vmatprep.subr.bf16.mxu0 0
        %1626 = vmatpush1.bf16.msra.mxu0 0
        %1627 = vmatprep.mubr.bf16.mxu0 0
        %1628 = vmatmul.mubr.bf16.gmra.mrb[0].mxu0 %v1553
        %v1629 = vpop.f32.mrb[0].mxu0
        %v1630 = vadd.f32 0.0, %v1629
        %v1631 = vpop.f32.mrb[0].mxu0
        %v1632 = vadd.f32 0.0, %v1631
        %v1633 = vpop.f32.mrb[0].mxu0
        %v1634 = vpop.f32.mrb[0].mxu0
        %1635 = vdwg.mxu0
        %v1640 = vrot.slane %v1589, 6
        %v1641 = vrot.slane %v1591, 6
        %v1642 = vrot.slane %v1630, 6
        %v1643 = vrot.slane %v1632, 6
        %v1648 = vadd.f32 %v800, %v1640
        %v1649 = vadd.f32 %v802, %v1641
        %v1650 = vadd.f32 %v843, %v1642
        %v1651 = vadd.f32 %v845, %v1643
        %v1652 = vpack.c.bf16 %v1552, %v1552
        %v1654 = vrot.slane %v1652, 3
        %1656 = vmatprep.subr.bf16.mxu0 %v1344
        %1657 = vmatpush1.bf16.msra.mxu0 %v1343
        %1658 = vmatprep.subr.bf16.mxu0 %v1348
        %1659 = vmatpush1.bf16.msra.mxu0 %v1347
        %1660 = vmatprep.subr.bf16.mxu0 %v1352
        %1661 = vmatpush1.bf16.msra.mxu0 %v1351
        %1662 = vmatprep.subr.bf16.mxu0 %v1356
        %1663 = vmatpush1.bf16.msra.mxu0 %v1355
        %1664 = vmatprep.subr.bf16.mxu0 %v1360
        %1665 = vmatpush1.bf16.msra.mxu0 %v1359
        %1666 = vmatprep.subr.bf16.mxu0 %v1364
        %1667 = vmatpush1.bf16.msra.mxu0 %v1363
        %1668 = vmatprep.subr.bf16.mxu0 %v1368
        %1669 = vmatpush1.bf16.msra.mxu0 %v1367
        %1670 = vmatprep.subr.bf16.mxu0 %v1372
        %1671 = vmatpush1.bf16.msra.mxu0 %v1371
        %1672 = vmatprep.subr.bf16.mxu0 0
        %1673 = vmatpush1.bf16.msra.mxu0 0
        %1674 = vmatprep.subr.bf16.mxu0 0
        %1675 = vmatpush1.bf16.msra.mxu0 0
        %1676 = vmatprep.subr.bf16.mxu0 0
        %1677 = vmatpush1.bf16.msra.mxu0 0
        %1678 = vmatprep.subr.bf16.mxu0 0
        %1679 = vmatpush1.bf16.msra.mxu0 0
        %1680 = vmatprep.subr.bf16.mxu0 0
        %1681 = vmatpush1.bf16.msra.mxu0 0
        %1682 = vmatprep.subr.bf16.mxu0 0
        %1683 = vmatpush1.bf16.msra.mxu0 0
        %1684 = vmatprep.subr.bf16.mxu0 0
        %1685 = vmatpush1.bf16.msra.mxu0 0
        %1686 = vmatprep.subr.bf16.mxu0 0
        %1687 = vmatpush1.bf16.msra.mxu0 0
        %1688 = vmatprep.mubr.bf16.mxu0 0
        %1689 = vmatmul.mubr.bf16.gmra.mrb[0].mxu0 %v1654
        %v1690 = vpop.f32.mrb[0].mxu0
        %v1691 = vadd.f32 0.0, %v1690
        %v1692 = vpop.f32.mrb[0].mxu0
        %v1693 = vadd.f32 0.0, %v1692
        %v1694 = vpop.f32.mrb[0].mxu0
        %v1695 = vpop.f32.mrb[0].mxu0
        %1696 = vdwg.mxu0
        %1697 = vmatprep.subr.bf16.mxu0 %v1346
        %1698 = vmatpush1.bf16.msra.mxu0 %v1345
        %1699 = vmatprep.subr.bf16.mxu0 %v1350
        %1700 = vmatpush1.bf16.msra.mxu0 %v1349
        %1701 = vmatprep.subr.bf16.mxu0 %v1354
        %1702 = vmatpush1.bf16.msra.mxu0 %v1353
        %1703 = vmatprep.subr.bf16.mxu0 %v1358
        %1704 = vmatpush1.bf16.msra.mxu0 %v1357
        %1705 = vmatprep.subr.bf16.mxu0 %v1362
        %1706 = vmatpush1.bf16.msra.mxu0 %v1361
        %1707 = vmatprep.subr.bf16.mxu0 %v1366
        %1708 = vmatpush1.bf16.msra.mxu0 %v1365
        %1709 = vmatprep.subr.bf16.mxu0 %v1370
        %1710 = vmatpush1.bf16.msra.mxu0 %v1369
        %1711 = vmatprep.subr.bf16.mxu0 %v1374
        %1712 = vmatpush1.bf16.msra.mxu0 %v1373
        %1713 = vmatprep.subr.bf16.mxu0 0
        %1714 = vmatpush1.bf16.msra.mxu0 0
        %1715 = vmatprep.subr.bf16.mxu0 0
        %1716 = vmatpush1.bf16.msra.mxu0 0
        %1717 = vmatprep.subr.bf16.mxu0 0
        %1718 = vmatpush1.bf16.msra.mxu0 0
        %1719 = vmatprep.subr.bf16.mxu0 0
        %1720 = vmatpush1.bf16.msra.mxu0 0
        %1721 = vmatprep.subr.bf16.mxu0 0
        %1722 = vmatpush1.bf16.msra.mxu0 0
        %1723 = vmatprep.subr.bf16.mxu0 0
        %1724 = vmatpush1.bf16.msra.mxu0 0
        %1725 = vmatprep.subr.bf16.mxu0 0
        %1726 = vmatpush1.bf16.msra.mxu0 0
        %1727 = vmatprep.subr.bf16.mxu0 0
        %1728 = vmatpush1.bf16.msra.mxu0 0
        %1729 = vmatprep.mubr.bf16.mxu0 0
        %1730 = vmatmul.mubr.bf16.gmra.mrb[0].mxu0 %v1654
        %v1731 = vpop.f32.mrb[0].mxu0
        %v1732 = vadd.f32 0.0, %v1731
        %v1733 = vpop.f32.mrb[0].mxu0
        %v1734 = vadd.f32 0.0, %v1733
        %v1735 = vpop.f32.mrb[0].mxu0
        %v1736 = vpop.f32.mrb[0].mxu0
        %1737 = vdwg.mxu0
        %v1742 = vrot.slane %v1691, 4
        %v1743 = vrot.slane %v1693, 4
        %v1744 = vrot.slane %v1732, 4
        %v1745 = vrot.slane %v1734, 4
        %v1750 = vadd.f32 %v890, %v1742
        %v1751 = vadd.f32 %v892, %v1743
        %v1752 = vadd.f32 %v933, %v1744
        %v1753 = vadd.f32 %v935, %v1745
        %v1754 = vxor.u32 %v1648, 2147483648
        %v1755 = vxor.u32 %v1649, 2147483648
        %v1756 = vxor.u32 %v1650, 2147483648
        %v1757 = vmul.f32 %v1754, 1.442695
        %v1758 = vpow.pop %v1757
        %v1759 = vmul.f32 %v1755, 1.442695
        %v1760 = vpow.pop %v1759
        %v1761 = vmul.f32 %v1756, 1.442695
        %v1762 = vpow.pop %v1761
        %v1763 = vadd.f32 %v1758, 1.0
        %v1764 = vadd.f32 %v1760, 1.0
        %v1765 = vadd.f32 %v1762, 1.0
        %v1766 = vrcp.pop %v1763
        %v1767 = vmul.f32 1.0, %v1766
        %v1768 = vrcp.pop %v1764
        %v1769 = vmul.f32 1.0, %v1768
        %v1770 = vrcp.pop %v1765
        %v1771 = vmul.f32 1.0, %v1770
        %v1772 = vtanh.pop %v1651
        %v1773 = vxor.u32 %v1750, 2147483648
        %v1774 = vxor.u32 %v1751, 2147483648
        %v1775 = vxor.u32 %v1752, 2147483648
        %v1776 = vmul.f32 %v1773, 1.442695
        %v1777 = vpow.pop %v1776
        %v1778 = vmul.f32 %v1774, 1.442695
        %v1779 = vpow.pop %v1778
        %v1780 = vmul.f32 %v1775, 1.442695
        %v1781 = vpow.pop %v1780
        %v1782 = vadd.f32 %v1777, 1.0
        %v1783 = vadd.f32 %v1779, 1.0
        %v1784 = vadd.f32 %v1781, 1.0
        %v1785 = vrcp.pop %v1782
        %v1786 = vmul.f32 1.0, %v1785
        %v1787 = vrcp.pop %v1783
        %v1788 = vmul.f32 1.0, %v1787
        %v1789 = vrcp.pop %v1784
        %v1790 = vmul.f32 1.0, %v1789
        %v1791 = vtanh.pop %v1753
        %v1793 = vrot.slane %v1545, 6
        %v1795 = vmul.f32 %v1769, %v1793
        %v1796 = vmul.f32 %v1767, %v1772
        %v1797 = vadd.f32 %v1795, %v1796
        %v1799 = vrot.slane %v1548, 2
        %v1801 = vmul.f32 %v1788, %v1799
        %v1802 = vmul.f32 %v1786, %v1791
        %v1803 = vadd.f32 %v1801, %v1802
        %v1804 = vtanh.pop %v1797
        %v1805 = vmul.f32 %v1771, %v1804
        %v1806 = vtanh.pop %v1803
        %v1807 = vmul.f32 %v1790, %v1806
        %v1808 = vpack.c.bf16 %v1805, %v1805
        %v1810 = vrot.slane %v1808, 1
        %1812 = vmatprep.subr.bf16.mxu0 %v1098
        %1813 = vmatpush1.bf16.msra.mxu0 %v1097
        %1814 = vmatprep.subr.bf16.mxu0 %v1102
        %1815 = vmatpush1.bf16.msra.mxu0 %v1101
        %1816 = vmatprep.subr.bf16.mxu0 %v1106
        %1817 = vmatpush1.bf16.msra.mxu0 %v1105
        %1818 = vmatprep.subr.bf16.mxu0 %v1110
        %1819 = vmatpush1.bf16.msra.mxu0 %v1109
        %1820 = vmatprep.subr.bf16.mxu0 %v1114
        %1821 = vmatpush1.bf16.msra.mxu0 %v1113
        %1822 = vmatprep.subr.bf16.mxu0 %v1118
        %1823 = vmatpush1.bf16.msra.mxu0 %v1117
        %1824 = vmatprep.subr.bf16.mxu0 %v1122
        %1825 = vmatpush1.bf16.msra.mxu0 %v1121
        %1826 = vmatprep.subr.bf16.mxu0 %v1126
        %1827 = vmatpush1.bf16.msra.mxu0 %v1125
        %1828 = vmatprep.subr.bf16.mxu0 0
        %1829 = vmatpush1.bf16.msra.mxu0 0
        %1830 = vmatprep.subr.bf16.mxu0 0
        %1831 = vmatpush1.bf16.msra.mxu0 0
        %1832 = vmatprep.subr.bf16.mxu0 0
        %1833 = vmatpush1.bf16.msra.mxu0 0
        %1834 = vmatprep.subr.bf16.mxu0 0
        %1835 = vmatpush1.bf16.msra.mxu0 0
        %1836 = vmatprep.subr.bf16.mxu0 0
        %1837 = vmatpush1.bf16.msra.mxu0 0
        %1838 = vmatprep.subr.bf16.mxu0 0
        %1839 = vmatpush1.bf16.msra.mxu0 0
        %1840 = vmatprep.subr.bf16.mxu0 0
        %1841 = vmatpush1.bf16.msra.mxu0 0
        %1842 = vmatprep.subr.bf16.mxu0 0
        %1843 = vmatpush1.bf16.msra.mxu0 0
        %1844 = vmatprep.mubr.bf16.mxu0 0
        %1845 = vmatmul.mubr.bf16.gmra.mrb[0].mxu0 %v1810
        %v1846 = vpop.f32.mrb[0].mxu0
        %v1847 = vadd.f32 0.0, %v1846
        %v1848 = vpop.f32.mrb[0].mxu0
        %v1849 = vadd.f32 0.0, %v1848
        %v1850 = vpop.f32.mrb[0].mxu0
        %v1851 = vpop.f32.mrb[0].mxu0
        %1852 = vdwg.mxu0
        %1853 = vmatprep.subr.bf16.mxu0 %v1100
        %1854 = vmatpush1.bf16.msra.mxu0 %v1099
        %1855 = vmatprep.subr.bf16.mxu0 %v1104
        %1856 = vmatpush1.bf16.msra.mxu0 %v1103
        %1857 = vmatprep.subr.bf16.mxu0 %v1108
        %1858 = vmatpush1.bf16.msra.mxu0 %v1107
        %1859 = vmatprep.subr.bf16.mxu0 %v1112
        %1860 = vmatpush1.bf16.msra.mxu0 %v1111
        %1861 = vmatprep.subr.bf16.mxu0 %v1116
        %1862 = vmatpush1.bf16.msra.mxu0 %v1115
        %1863 = vmatprep.subr.bf16.mxu0 %v1120
        %1864 = vmatpush1.bf16.msra.mxu0 %v1119
        %1865 = vmatprep.subr.bf16.mxu0 %v1124
        %1866 = vmatpush1.bf16.msra.mxu0 %v1123
        %1867 = vmatprep.subr.bf16.mxu0 %v1128
        %1868 = vmatpush1.bf16.msra.mxu0 %v1127
        %1869 = vmatprep.subr.bf16.mxu0 0
        %1870 = vmatpush1.bf16.msra.mxu0 0
        %1871 = vmatprep.subr.bf16.mxu0 0
        %1872 = vmatpush1.bf16.msra.mxu0 0
        %1873 = vmatprep.subr.bf16.mxu0 0
        %1874 = vmatpush1.bf16.msra.mxu0 0
        %1875 = vmatprep.subr.bf16.mxu0 0
        %1876 = vmatpush1.bf16.msra.mxu0 0
        %1877 = vmatprep.subr.bf16.mxu0 0
        %1878 = vmatpush1.bf16.msra.mxu0 0
        %1879 = vmatprep.subr.bf16.mxu0 0
        %1880 = vmatpush1.bf16.msra.mxu0 0
        %1881 = vmatprep.subr.bf16.mxu0 0
        %1882 = vmatpush1.bf16.msra.mxu0 0
        %1883 = vmatprep.subr.bf16.mxu0 0
        %1884 = vmatpush1.bf16.msra.mxu0 0
        %1885 = vmatprep.mubr.bf16.mxu0 0
        %1886 = vmatmul.mubr.bf16.gmra.mrb[0].mxu0 %v1810
        %v1887 = vpop.f32.mrb[0].mxu0
        %v1888 = vadd.f32 0.0, %v1887
        %v1889 = vpop.f32.mrb[0].mxu0
        %v1890 = vadd.f32 0.0, %v1889
        %v1891 = vpop.f32.mrb[0].mxu0
        %v1892 = vpop.f32.mrb[0].mxu0
        %1893 = vdwg.mxu0
        %v1898 = vrot.slane %v1847, 4
        %v1899 = vrot.slane %v1849, 4
        %v1900 = vrot.slane %v1888, 4
        %v1901 = vrot.slane %v1890, 4
        %v1906 = vadd.f32 %v800, %v1898
        %v1907 = vadd.f32 %v802, %v1899
        %v1908 = vadd.f32 %v843, %v1900
        %v1909 = vadd.f32 %v845, %v1901
        %v1910 = vpack.c.bf16 %v1807, %v1807
        %v1912 = vrot.slane %v1910, 2
        %1914 = vmatprep.subr.bf16.mxu0 %v1344
        %1915 = vmatpush1.bf16.msra.mxu0 %v1343
        %1916 = vmatprep.subr.bf16.mxu0 %v1348
        %1917 = vmatpush1.bf16.msra.mxu0 %v1347
        %1918 = vmatprep.subr.bf16.mxu0 %v1352
        %1919 = vmatpush1.bf16.msra.mxu0 %v1351
        %1920 = vmatprep.subr.bf16.mxu0 %v1356
        %1921 = vmatpush1.bf16.msra.mxu0 %v1355
        %1922 = vmatprep.subr.bf16.mxu0 %v1360
        %1923 = vmatpush1.bf16.msra.mxu0 %v1359
        %1924 = vmatprep.subr.bf16.mxu0 %v1364
        %1925 = vmatpush1.bf16.msra.mxu0 %v1363
        %1926 = vmatprep.subr.bf16.mxu0 %v1368
        %1927 = vmatpush1.bf16.msra.mxu0 %v1367
        %1928 = vmatprep.subr.bf16.mxu0 %v1372
        %1929 = vmatpush1.bf16.msra.mxu0 %v1371
        %1930 = vmatprep.subr.bf16.mxu0 0
        %1931 = vmatpush1.bf16.msra.mxu0 0
        %1932 = vmatprep.subr.bf16.mxu0 0
        %1933 = vmatpush1.bf16.msra.mxu0 0
        %1934 = vmatprep.subr.bf16.mxu0 0
        %1935 = vmatpush1.bf16.msra.mxu0 0
        %1936 = vmatprep.subr.bf16.mxu0 0
        %1937 = vmatpush1.bf16.msra.mxu0 0
        %1938 = vmatprep.subr.bf16.mxu0 0
        %1939 = vmatpush1.bf16.msra.mxu0 0
        %1940 = vmatprep.subr.bf16.mxu0 0
        %1941 = vmatpush1.bf16.msra.mxu0 0
        %1942 = vmatprep.subr.bf16.mxu0 0
        %1943 = vmatpush1.bf16.msra.mxu0 0
        %1944 = vmatprep.subr.bf16.mxu0 0
        %1945 = vmatpush1.bf16.msra.mxu0 0
        %1946 = vmatprep.mubr.bf16.mxu0 0
        %1947 = vmatmul.mubr.bf16.gmra.mrb[0].mxu0 %v1912
        %v1948 = vpop.f32.mrb[0].mxu0
        %v1949 = vadd.f32 0.0, %v1948
        %v1950 = vpop.f32.mrb[0].mxu0
        %v1951 = vadd.f32 0.0, %v1950
        %v1952 = vpop.f32.mrb[0].mxu0
        %v1953 = vpop.f32.mrb[0].mxu0
        %1954 = vdwg.mxu0
        %1955 = vmatprep.subr.bf16.mxu0 %v1346
        %1956 = vmatpush1.bf16.msra.mxu0 %v1345
        %1957 = vmatprep.subr.bf16.mxu0 %v1350
        %1958 = vmatpush1.bf16.msra.mxu0 %v1349
        %1959 = vmatprep.subr.bf16.mxu0 %v1354
        %1960 = vmatpush1.bf16.msra.mxu0 %v1353
        %1961 = vmatprep.subr.bf16.mxu0 %v1358
        %1962 = vmatpush1.bf16.msra.mxu0 %v1357
        %1963 = vmatprep.subr.bf16.mxu0 %v1362
        %1964 = vmatpush1.bf16.msra.mxu0 %v1361
        %1965 = vmatprep.subr.bf16.mxu0 %v1366
        %1966 = vmatpush1.bf16.msra.mxu0 %v1365
        %1967 = vmatprep.subr.bf16.mxu0 %v1370
        %1968 = vmatpush1.bf16.msra.mxu0 %v1369
        %1969 = vmatprep.subr.bf16.mxu0 %v1374
        %1970 = vmatpush1.bf16.msra.mxu0 %v1373
        %1971 = vmatprep.subr.bf16.mxu0 0
        %1972 = vmatpush1.bf16.msra.mxu0 0
        %1973 = vmatprep.subr.bf16.mxu0 0
        %1974 = vmatpush1.bf16.msra.mxu0 0
        %1975 = vmatprep.subr.bf16.mxu0 0
        %1976 = vmatpush1.bf16.msra.mxu0 0
        %1977 = vmatprep.subr.bf16.mxu0 0
        %1978 = vmatpush1.bf16.msra.mxu0 0
        %1979 = vmatprep.subr.bf16.mxu0 0
        %1980 = vmatpush1.bf16.msra.mxu0 0
        %1981 = vmatprep.subr.bf16.mxu0 0
        %1982 = vmatpush1.bf16.msra.mxu0 0
        %1983 = vmatprep.subr.bf16.mxu0 0
        %1984 = vmatpush1.bf16.msra.mxu0 0
        %1985 = vmatprep.subr.bf16.mxu0 0
        %1986 = vmatpush1.bf16.msra.mxu0 0
        %1987 = vmatprep.mubr.bf16.mxu0 0
        %1988 = vmatmul.mubr.bf16.gmra.mrb[0].mxu0 %v1912
        %v1989 = vpop.f32.mrb[0].mxu0
        %v1990 = vadd.f32 0.0, %v1989
        %v1991 = vpop.f32.mrb[0].mxu0
        %v1992 = vadd.f32 0.0, %v1991
        %v1993 = vpop.f32.mrb[0].mxu0
        %v1994 = vpop.f32.mrb[0].mxu0
        %1995 = vdwg.mxu0
        %v2000 = vrot.slane %v1949, 6
        %v2001 = vrot.slane %v1951, 6
        %v2002 = vrot.slane %v1990, 6
        %v2003 = vrot.slane %v1992, 6
        %v2008 = vadd.f32 %v890, %v2000
        %v2009 = vadd.f32 %v892, %v2001
        %v2010 = vadd.f32 %v933, %v2002
        %v2011 = vadd.f32 %v935, %v2003
        %v2012 = vxor.u32 %v1906, 2147483648
        %v2013 = vxor.u32 %v1907, 2147483648
        %v2014 = vxor.u32 %v1908, 2147483648
        %v2015 = vmul.f32 %v2012, 1.442695
        %v2016 = vpow.pop %v2015
        %v2017 = vmul.f32 %v2013, 1.442695
        %v2018 = vpow.pop %v2017
        %v2019 = vmul.f32 %v2014, 1.442695
        %v2020 = vpow.pop %v2019
        %v2021 = vadd.f32 %v2016, 1.0
        %v2022 = vadd.f32 %v2018, 1.0
        %v2023 = vadd.f32 %v2020, 1.0
        %v2024 = vrcp.pop %v2021
        %v2025 = vmul.f32 1.0, %v2024
        %v2026 = vrcp.pop %v2022
        %v2027 = vmul.f32 1.0, %v2026
        %v2028 = vrcp.pop %v2023
        %v2029 = vmul.f32 1.0, %v2028
        %v2030 = vtanh.pop %v1909
        %v2031 = vxor.u32 %v2008, 2147483648
        %v2032 = vxor.u32 %v2009, 2147483648
        %v2033 = vxor.u32 %v2010, 2147483648
        %v2034 = vmul.f32 %v2031, 1.442695
        %v2035 = vpow.pop %v2034
        %v2036 = vmul.f32 %v2032, 1.442695
        %v2037 = vpow.pop %v2036
        %v2038 = vmul.f32 %v2033, 1.442695
        %v2039 = vpow.pop %v2038
        %v2040 = vadd.f32 %v2035, 1.0
        %v2041 = vadd.f32 %v2037, 1.0
        %v2042 = vadd.f32 %v2039, 1.0
        %v2043 = vrcp.pop %v2040
        %v2044 = vmul.f32 1.0, %v2043
        %v2045 = vrcp.pop %v2041
        %v2046 = vmul.f32 1.0, %v2045
        %v2047 = vrcp.pop %v2042
        %v2048 = vmul.f32 1.0, %v2047
        %v2049 = vtanh.pop %v2011
        %v2051 = vrot.slane %v1797, 6
        %v2053 = vmul.f32 %v2027, %v2051
        %v2054 = vmul.f32 %v2025, %v2030
        %v2055 = vadd.f32 %v2053, %v2054
        %v2057 = vrot.slane %v1803, 2
        %v2059 = vmul.f32 %v2046, %v2057
        %v2060 = vmul.f32 %v2044, %v2049
        %v2061 = vadd.f32 %v2059, %v2060
        %v2062 = vtanh.pop %v2055
        %v2063 = vmul.f32 %v2029, %v2062
        %v2064 = vtanh.pop %v2061
        %v2065 = vmul.f32 %v2048, %v2064
        %v2066 = vpack.c.bf16 %v2063, %v2063
        %v2068 = vrot.slane %v2066, 2
        %2070 = vmatprep.subr.bf16.mxu0 %v1098
        %2071 = vmatpush1.bf16.msra.mxu0 %v1097
        %2072 = vmatprep.subr.bf16.mxu0 %v1102
        %2073 = vmatpush1.bf16.msra.mxu0 %v1101
        %2074 = vmatprep.subr.bf16.mxu0 %v1106
        %2075 = vmatpush1.bf16.msra.mxu0 %v1105
        %2076 = vmatprep.subr.bf16.mxu0 %v1110
        %2077 = vmatpush1.bf16.msra.mxu0 %v1109
        %2078 = vmatprep.subr.bf16.mxu0 %v1114
        %2079 = vmatpush1.bf16.msra.mxu0 %v1113
        %2080 = vmatprep.subr.bf16.mxu0 %v1118
        %2081 = vmatpush1.bf16.msra.mxu0 %v1117
        %2082 = vmatprep.subr.bf16.mxu0 %v1122
        %2083 = vmatpush1.bf16.msra.mxu0 %v1121
        %2084 = vmatprep.subr.bf16.mxu0 %v1126
        %2085 = vmatpush1.bf16.msra.mxu0 %v1125
        %2086 = vmatprep.subr.bf16.mxu0 0
        %2087 = vmatpush1.bf16.msra.mxu0 0
        %2088 = vmatprep.subr.bf16.mxu0 0
        %2089 = vmatpush1.bf16.msra.mxu0 0
        %2090 = vmatprep.subr.bf16.mxu0 0
        %2091 = vmatpush1.bf16.msra.mxu0 0
        %2092 = vmatprep.subr.bf16.mxu0 0
        %2093 = vmatpush1.bf16.msra.mxu0 0
        %2094 = vmatprep.subr.bf16.mxu0 0
        %2095 = vmatpush1.bf16.msra.mxu0 0
        %2096 = vmatprep.subr.bf16.mxu0 0
        %2097 = vmatpush1.bf16.msra.mxu0 0
        %2098 = vmatprep.subr.bf16.mxu0 0
        %2099 = vmatpush1.bf16.msra.mxu0 0
        %2100 = vmatprep.subr.bf16.mxu0 0
        %2101 = vmatpush1.bf16.msra.mxu0 0
        %2102 = vmatprep.mubr.bf16.mxu0 0
        %2103 = vmatmul.mubr.bf16.gmra.mrb[0].mxu0 %v2068
        %v2104 = vpop.f32.mrb[0].mxu0
        %v2105 = vadd.f32 0.0, %v2104
        %v2106 = vpop.f32.mrb[0].mxu0
        %v2107 = vadd.f32 0.0, %v2106
        %v2108 = vpop.f32.mrb[0].mxu0
        %v2109 = vpop.f32.mrb[0].mxu0
        %2110 = vdwg.mxu0
        %2111 = vmatprep.subr.bf16.mxu0 %v1100
        %2112 = vmatpush1.bf16.msra.mxu0 %v1099
        %2113 = vmatprep.subr.bf16.mxu0 %v1104
        %2114 = vmatpush1.bf16.msra.mxu0 %v1103
        %2115 = vmatprep.subr.bf16.mxu0 %v1108
        %2116 = vmatpush1.bf16.msra.mxu0 %v1107
        %2117 = vmatprep.subr.bf16.mxu0 %v1112
        %2118 = vmatpush1.bf16.msra.mxu0 %v1111
        %2119 = vmatprep.subr.bf16.mxu0 %v1116
        %2120 = vmatpush1.bf16.msra.mxu0 %v1115
        %2121 = vmatprep.subr.bf16.mxu0 %v1120
        %2122 = vmatpush1.bf16.msra.mxu0 %v1119
        %2123 = vmatprep.subr.bf16.mxu0 %v1124
        %2124 = vmatpush1.bf16.msra.mxu0 %v1123
        %2125 = vmatprep.subr.bf16.mxu0 %v1128
        %2126 = vmatpush1.bf16.msra.mxu0 %v1127
        %2127 = vmatprep.subr.bf16.mxu0 0
        %2128 = vmatpush1.bf16.msra.mxu0 0
        %2129 = vmatprep.subr.bf16.mxu0 0
        %2130 = vmatpush1.bf16.msra.mxu0 0
        %2131 = vmatprep.subr.bf16.mxu0 0
        %2132 = vmatpush1.bf16.msra.mxu0 0
        %2133 = vmatprep.subr.bf16.mxu0 0
        %2134 = vmatpush1.bf16.msra.mxu0 0
        %2135 = vmatprep.subr.bf16.mxu0 0
        %2136 = vmatpush1.bf16.msra.mxu0 0
        %2137 = vmatprep.subr.bf16.mxu0 0
        %2138 = vmatpush1.bf16.msra.mxu0 0
        %2139 = vmatprep.subr.bf16.mxu0 0
        %2140 = vmatpush1.bf16.msra.mxu0 0
        %2141 = vmatprep.subr.bf16.mxu0 0
        %2142 = vmatpush1.bf16.msra.mxu0 0
        %2143 = vmatprep.mubr.bf16.mxu0 0
        %2144 = vmatmul.mubr.bf16.gmra.mrb[0].mxu0 %v2068
        %v2145 = vpop.f32.mrb[0].mxu0
        %v2146 = vadd.f32 0.0, %v2145
        %v2147 = vpop.f32.mrb[0].mxu0
        %v2148 = vadd.f32 0.0, %v2147
        %v2149 = vpop.f32.mrb[0].mxu0
        %v2150 = vpop.f32.mrb[0].mxu0
        %2151 = vdwg.mxu0
        %v2156 = vrot.slane %v2105, 2
        %v2157 = vrot.slane %v2107, 2
        %v2158 = vrot.slane %v2146, 2
        %v2159 = vrot.slane %v2148, 2
        %v2164 = vadd.f32 %v800, %v2156
        %v2165 = vadd.f32 %v802, %v2157
        %v2166 = vadd.f32 %v843, %v2158
        %v2167 = vadd.f32 %v845, %v2159
        %v2168 = vpack.c.bf16 %v2065, %v2065
        %v2170 = vrot.slane %v2168, 1
        %2172 = vmatprep.subr.bf16.mxu0 %v1344
        %2173 = vmatpush1.bf16.msra.mxu0 %v1343
        %2174 = vmatprep.subr.bf16.mxu0 %v1348
        %2175 = vmatpush1.bf16.msra.mxu0 %v1347
        %2176 = vmatprep.subr.bf16.mxu0 %v1352
        %2177 = vmatpush1.bf16.msra.mxu0 %v1351
        %2178 = vmatprep.subr.bf16.mxu0 %v1356
        %2179 = vmatpush1.bf16.msra.mxu0 %v1355
        %2180 = vmatprep.subr.bf16.mxu0 %v1360
        %2181 = vmatpush1.bf16.msra.mxu0 %v1359
        %2182 = vmatprep.subr.bf16.mxu0 %v1364
        %2183 = vmatpush1.bf16.msra.mxu0 %v1363
        %2184 = vmatprep.subr.bf16.mxu0 %v1368
        %2185 = vmatpush1.bf16.msra.mxu0 %v1367
        %2186 = vmatprep.subr.bf16.mxu0 %v1372
        %2187 = vmatpush1.bf16.msra.mxu0 %v1371
        %2188 = vmatprep.subr.bf16.mxu0 0
        %2189 = vmatpush1.bf16.msra.mxu0 0
        %2190 = vmatprep.subr.bf16.mxu0 0
        %2191 = vmatpush1.bf16.msra.mxu0 0
        %2192 = vmatprep.subr.bf16.mxu0 0
        %2193 = vmatpush1.bf16.msra.mxu0 0
        %2194 = vmatprep.subr.bf16.mxu0 0
        %2195 = vmatpush1.bf16.msra.mxu0 0
        %2196 = vmatprep.subr.bf16.mxu0 0
        %2197 = vmatpush1.bf16.msra.mxu0 0
        %2198 = vmatprep.subr.bf16.mxu0 0
        %2199 = vmatpush1.bf16.msra.mxu0 0
        %2200 = vmatprep.subr.bf16.mxu0 0
        %2201 = vmatpush1.bf16.msra.mxu0 0
        %2202 = vmatprep.subr.bf16.mxu0 0
        %2203 = vmatpush1.bf16.msra.mxu0 0
        %2204 = vmatprep.mubr.bf16.mxu0 0
        %2205 = vmatmul.mubr.bf16.gmra.mrb[0].mxu0 %v2170
        %v2206 = vpop.f32.mrb[0].mxu0
        %v2207 = vadd.f32 0.0, %v2206
        %v2208 = vpop.f32.mrb[0].mxu0
        %v2209 = vadd.f32 0.0, %v2208
        %v2210 = vpop.f32.mrb[0].mxu0
        %v2211 = vpop.f32.mrb[0].mxu0
        %2212 = vdwg.mxu0
        %2213 = vmatprep.subr.bf16.mxu0 %v1346
        %2214 = vmatpush1.bf16.msra.mxu0 %v1345
        %2215 = vmatprep.subr.bf16.mxu0 %v1350
        %2216 = vmatpush1.bf16.msra.mxu0 %v1349
        %2217 = vmatprep.subr.bf16.mxu0 %v1354
        %2218 = vmatpush1.bf16.msra.mxu0 %v1353
        %2219 = vmatprep.subr.bf16.mxu0 %v1358
        %2220 = vmatpush1.bf16.msra.mxu0 %v1357
        %2221 = vmatprep.subr.bf16.mxu0 %v1362
        %2222 = vmatpush1.bf16.msra.mxu0 %v1361
        %2223 = vmatprep.subr.bf16.mxu0 %v1366
        %2224 = vmatpush1.bf16.msra.mxu0 %v1365
        %2225 = vmatprep.subr.bf16.mxu0 %v1370
        %2226 = vmatpush1.bf16.msra.mxu0 %v1369
        %2227 = vmatprep.subr.bf16.mxu0 %v1374
        %2228 = vmatpush1.bf16.msra.mxu0 %v1373
        %2229 = vmatprep.subr.bf16.mxu0 0
        %2230 = vmatpush1.bf16.msra.mxu0 0
        %2231 = vmatprep.subr.bf16.mxu0 0
        %2232 = vmatpush1.bf16.msra.mxu0 0
        %2233 = vmatprep.subr.bf16.mxu0 0
        %2234 = vmatpush1.bf16.msra.mxu0 0
        %2235 = vmatprep.subr.bf16.mxu0 0
        %2236 = vmatpush1.bf16.msra.mxu0 0
        %2237 = vmatprep.subr.bf16.mxu0 0
        %2238 = vmatpush1.bf16.msra.mxu0 0
        %2239 = vmatprep.subr.bf16.mxu0 0
        %2240 = vmatpush1.bf16.msra.mxu0 0
        %2241 = vmatprep.subr.bf16.mxu0 0
        %2242 = vmatpush1.bf16.msra.mxu0 0
        %2243 = vmatprep.subr.bf16.mxu0 0
        %2244 = vmatpush1.bf16.msra.mxu0 0
        %2245 = vmatprep.mubr.bf16.mxu0 0
        %2246 = vmatmul.mubr.bf16.gmra.mrb[0].mxu0 %v2170
        %v2247 = vpop.f32.mrb[0].mxu0
        %v2248 = vadd.f32 0.0, %v2247
        %v2249 = vpop.f32.mrb[0].mxu0
        %v2250 = vadd.f32 0.0, %v2249
        %v2251 = vpop.f32.mrb[0].mxu0
        %v2252 = vpop.f32.mrb[0].mxu0
        %2253 = vdwg.mxu0
        %v2254 = vadd.f32 %v890, %v2207
        %v2255 = vadd.f32 %v892, %v2209
        %v2256 = vadd.f32 %v933, %v2248
        %v2257 = vadd.f32 %v935, %v2250
        %v2258 = vxor.u32 %v2164, 2147483648
        %v2259 = vxor.u32 %v2165, 2147483648
        %v2260 = vxor.u32 %v2166, 2147483648
        %v2261 = vmul.f32 %v2258, 1.442695
        %v2262 = vpow.pop %v2261
        %v2263 = vmul.f32 %v2259, 1.442695
        %v2264 = vpow.pop %v2263
        %v2265 = vmul.f32 %v2260, 1.442695
        %v2266 = vpow.pop %v2265
        %v2267 = vadd.f32 %v2262, 1.0
        %v2268 = vadd.f32 %v2264, 1.0
        %v2269 = vadd.f32 %v2266, 1.0
        %v2270 = vrcp.pop %v2267
        %v2271 = vmul.f32 1.0, %v2270
        %v2272 = vrcp.pop %v2268
        %v2273 = vmul.f32 1.0, %v2272
        %v2274 = vrcp.pop %v2269
        %v2275 = vmul.f32 1.0, %v2274
        %v2276 = vtanh.pop %v2167
        %v2277 = vxor.u32 %v2254, 2147483648
        %v2278 = vxor.u32 %v2255, 2147483648
        %v2279 = vxor.u32 %v2256, 2147483648
        %v2280 = vmul.f32 %v2277, 1.442695
        %v2281 = vpow.pop %v2280
        %v2282 = vmul.f32 %v2278, 1.442695
        %v2283 = vpow.pop %v2282
        %v2284 = vmul.f32 %v2279, 1.442695
        %v2285 = vpow.pop %v2284
        %v2286 = vadd.f32 %v2281, 1.0
        %v2287 = vadd.f32 %v2283, 1.0
        %v2288 = vadd.f32 %v2285, 1.0
        %v2289 = vrcp.pop %v2286
        %v2290 = vmul.f32 1.0, %v2289
        %v2291 = vrcp.pop %v2287
        %v2292 = vmul.f32 1.0, %v2291
        %v2293 = vrcp.pop %v2288
        %v2294 = vmul.f32 1.0, %v2293
        %v2295 = vtanh.pop %v2257
        %v2297 = vrot.slane %v2055, 6
        %v2299 = vmul.f32 %v2273, %v2297
        %v2300 = vmul.f32 %v2271, %v2276
        %v2301 = vadd.f32 %v2299, %v2300
        %v2303 = vrot.slane %v2061, 2
        %v2305 = vmul.f32 %v2292, %v2303
        %v2306 = vmul.f32 %v2290, %v2295
        %v2307 = vadd.f32 %v2305, %v2306
        %v2308 = vtanh.pop %v2301
        %v2309 = vmul.f32 %v2275, %v2308
        %v2310 = vtanh.pop %v2307
        %v2311 = vmul.f32 %v2294, %v2310
        %v2312 = vpack.c.bf16 %v2309, %v2309
        %v2314 = vrot.slane %v2312, 3
        %2316 = vmatprep.subr.bf16.mxu0 %v1098
        %2317 = vmatpush1.bf16.msra.mxu0 %v1097
        %2318 = vmatprep.subr.bf16.mxu0 %v1102
        %2319 = vmatpush1.bf16.msra.mxu0 %v1101
        %2320 = vmatprep.subr.bf16.mxu0 %v1106
        %2321 = vmatpush1.bf16.msra.mxu0 %v1105
        %2322 = vmatprep.subr.bf16.mxu0 %v1110
        %2323 = vmatpush1.bf16.msra.mxu0 %v1109
        %2324 = vmatprep.subr.bf16.mxu0 %v1114
        %2325 = vmatpush1.bf16.msra.mxu0 %v1113
        %2326 = vmatprep.subr.bf16.mxu0 %v1118
        %2327 = vmatpush1.bf16.msra.mxu0 %v1117
        %2328 = vmatprep.subr.bf16.mxu0 %v1122
        %2329 = vmatpush1.bf16.msra.mxu0 %v1121
        %2330 = vmatprep.subr.bf16.mxu0 %v1126
        %2331 = vmatpush1.bf16.msra.mxu0 %v1125
        %2332 = vmatprep.subr.bf16.mxu0 0
        %2333 = vmatpush1.bf16.msra.mxu0 0
        %2334 = vmatprep.subr.bf16.mxu0 0
        %2335 = vmatpush1.bf16.msra.mxu0 0
        %2336 = vmatprep.subr.bf16.mxu0 0
        %2337 = vmatpush1.bf16.msra.mxu0 0
        %2338 = vmatprep.subr.bf16.mxu0 0
        %2339 = vmatpush1.bf16.msra.mxu0 0
        %2340 = vmatprep.subr.bf16.mxu0 0
        %2341 = vmatpush1.bf16.msra.mxu0 0
        %2342 = vmatprep.subr.bf16.mxu0 0
        %2343 = vmatpush1.bf16.msra.mxu0 0
        %2344 = vmatprep.subr.bf16.mxu0 0
        %2345 = vmatpush1.bf16.msra.mxu0 0
        %2346 = vmatprep.subr.bf16.mxu0 0
        %2347 = vmatpush1.bf16.msra.mxu0 0
        %2348 = vmatprep.mubr.bf16.mxu0 0
        %2349 = vmatmul.mubr.bf16.gmra.mrb[0].mxu0 %v2314
        %v2350 = vpop.f32.mrb[0].mxu0
        %v2351 = vadd.f32 0.0, %v2350
        %v2352 = vpop.f32.mrb[0].mxu0
        %v2353 = vadd.f32 0.0, %v2352
        %v2354 = vpop.f32.mrb[0].mxu0
        %v2355 = vpop.f32.mrb[0].mxu0
        %2356 = vdwg.mxu0
        %2357 = vmatprep.subr.bf16.mxu0 %v1100
        %2358 = vmatpush1.bf16.msra.mxu0 %v1099
        %2359 = vmatprep.subr.bf16.mxu0 %v1104
        %2360 = vmatpush1.bf16.msra.mxu0 %v1103
        %2361 = vmatprep.subr.bf16.mxu0 %v1108
        %2362 = vmatpush1.bf16.msra.mxu0 %v1107
        %2363 = vmatprep.subr.bf16.mxu0 %v1112
        %2364 = vmatpush1.bf16.msra.mxu0 %v1111
        %2365 = vmatprep.subr.bf16.mxu0 %v1116
        %2366 = vmatpush1.bf16.msra.mxu0 %v1115
        %2367 = vmatprep.subr.bf16.mxu0 %v1120
        %2368 = vmatpush1.bf16.msra.mxu0 %v1119
        %2369 = vmatprep.subr.bf16.mxu0 %v1124
        %2370 = vmatpush1.bf16.msra.mxu0 %v1123
        %2371 = vmatprep.subr.bf16.mxu0 %v1128
        %2372 = vmatpush1.bf16.msra.mxu0 %v1127
        %2373 = vmatprep.subr.bf16.mxu0 0
        %2374 = vmatpush1.bf16.msra.mxu0 0
        %2375 = vmatprep.subr.bf16.mxu0 0
        %2376 = vmatpush1.bf16.msra.mxu0 0
        %2377 = vmatprep.subr.bf16.mxu0 0
        %2378 = vmatpush1.bf16.msra.mxu0 0
        %2379 = vmatprep.subr.bf16.mxu0 0
        %2380 = vmatpush1.bf16.msra.mxu0 0
        %2381 = vmatprep.subr.bf16.mxu0 0
        %2382 = vmatpush1.bf16.msra.mxu0 0
        %2383 = vmatprep.subr.bf16.mxu0 0
        %2384 = vmatpush1.bf16.msra.mxu0 0
        %2385 = vmatprep.subr.bf16.mxu0 0
        %2386 = vmatpush1.bf16.msra.mxu0 0
        %2387 = vmatprep.subr.bf16.mxu0 0
        %2388 = vmatpush1.bf16.msra.mxu0 0
        %2389 = vmatprep.mubr.bf16.mxu0 0
        %2390 = vmatmul.mubr.bf16.gmra.mrb[0].mxu0 %v2314
        %v2391 = vpop.f32.mrb[0].mxu0
        %v2392 = vadd.f32 0.0, %v2391
        %v2393 = vpop.f32.mrb[0].mxu0
        %v2394 = vadd.f32 0.0, %v2393
        %v2395 = vpop.f32.mrb[0].mxu0
        %v2396 = vpop.f32.mrb[0].mxu0
        %2397 = vdwg.mxu0
        %v2398 = vadd.f32 %v804, %v2351
        %v2399 = vadd.f32 %v806, %v2353
        %v2400 = vadd.f32 %v847, %v2392
        %v2401 = vadd.f32 %v849, %v2394
        %v2402 = vpack.c.bf16 %v2311, %v2311
        %2403 = vmatprep.subr.bf16.mxu0 %v1344
        %2404 = vmatpush1.bf16.msra.mxu0 %v1343
        %2405 = vmatprep.subr.bf16.mxu0 %v1348
        %2406 = vmatpush1.bf16.msra.mxu0 %v1347
        %2407 = vmatprep.subr.bf16.mxu0 %v1352
        %2408 = vmatpush1.bf16.msra.mxu0 %v1351
        %2409 = vmatprep.subr.bf16.mxu0 %v1356
        %2410 = vmatpush1.bf16.msra.mxu0 %v1355
        %2411 = vmatprep.subr.bf16.mxu0 %v1360
        %2412 = vmatpush1.bf16.msra.mxu0 %v1359
        %2413 = vmatprep.subr.bf16.mxu0 %v1364
        %2414 = vmatpush1.bf16.msra.mxu0 %v1363
        %2415 = vmatprep.subr.bf16.mxu0 %v1368
        %2416 = vmatpush1.bf16.msra.mxu0 %v1367
        %2417 = vmatprep.subr.bf16.mxu0 %v1372
        %2418 = vmatpush1.bf16.msra.mxu0 %v1371
        %2419 = vmatprep.subr.bf16.mxu0 0
        %2420 = vmatpush1.bf16.msra.mxu0 0
        %2421 = vmatprep.subr.bf16.mxu0 0
        %2422 = vmatpush1.bf16.msra.mxu0 0
        %2423 = vmatprep.subr.bf16.mxu0 0
        %2424 = vmatpush1.bf16.msra.mxu0 0
        %2425 = vmatprep.subr.bf16.mxu0 0
        %2426 = vmatpush1.bf16.msra.mxu0 0
        %2427 = vmatprep.subr.bf16.mxu0 0
        %2428 = vmatpush1.bf16.msra.mxu0 0
        %2429 = vmatprep.subr.bf16.mxu0 0
        %2430 = vmatpush1.bf16.msra.mxu0 0
        %2431 = vmatprep.subr.bf16.mxu0 0
        %2432 = vmatpush1.bf16.msra.mxu0 0
        %2433 = vmatprep.subr.bf16.mxu0 0
        %2434 = vmatpush1.bf16.msra.mxu0 0
        %2435 = vmatprep.mubr.bf16.mxu0 0
        %2436 = vmatmul.mubr.bf16.gmra.mrb[0].mxu0 %v2402
        %v2437 = vpop.f32.mrb[0].mxu0
        %v2438 = vadd.f32 0.0, %v2437
        %v2439 = vpop.f32.mrb[0].mxu0
        %v2440 = vadd.f32 0.0, %v2439
        %v2441 = vpop.f32.mrb[0].mxu0
        %v2442 = vpop.f32.mrb[0].mxu0
        %2443 = vdwg.mxu0
        %2444 = vmatprep.subr.bf16.mxu0 %v1346
        %2445 = vmatpush1.bf16.msra.mxu0 %v1345
        %2446 = vmatprep.subr.bf16.mxu0 %v1350
        %2447 = vmatpush1.bf16.msra.mxu0 %v1349
        %2448 = vmatprep.subr.bf16.mxu0 %v1354
        %2449 = vmatpush1.bf16.msra.mxu0 %v1353
        %2450 = vmatprep.subr.bf16.mxu0 %v1358
        %2451 = vmatpush1.bf16.msra.mxu0 %v1357
        %2452 = vmatprep.subr.bf16.mxu0 %v1362
        %2453 = vmatpush1.bf16.msra.mxu0 %v1361
        %2454 = vmatprep.subr.bf16.mxu0 %v1366
        %2455 = vmatpush1.bf16.msra.mxu0 %v1365
        %2456 = vmatprep.subr.bf16.mxu0 %v1370
        %2457 = vmatpush1.bf16.msra.mxu0 %v1369
        %2458 = vmatprep.subr.bf16.mxu0 %v1374
        %2459 = vmatpush1.bf16.msra.mxu0 %v1373
        %2460 = vmatprep.subr.bf16.mxu0 0
        %2461 = vmatpush1.bf16.msra.mxu0 0
        %2462 = vmatprep.subr.bf16.mxu0 0
        %2463 = vmatpush1.bf16.msra.mxu0 0
        %2464 = vmatprep.subr.bf16.mxu0 0
        %2465 = vmatpush1.bf16.msra.mxu0 0
        %2466 = vmatprep.subr.bf16.mxu0 0
        %2467 = vmatpush1.bf16.msra.mxu0 0
        %2468 = vmatprep.subr.bf16.mxu0 0
        %2469 = vmatpush1.bf16.msra.mxu0 0
        %2470 = vmatprep.subr.bf16.mxu0 0
        %2471 = vmatpush1.bf16.msra.mxu0 0
        %2472 = vmatprep.subr.bf16.mxu0 0
        %2473 = vmatpush1.bf16.msra.mxu0 0
        %2474 = vmatprep.subr.bf16.mxu0 0
        %2475 = vmatpush1.bf16.msra.mxu0 0
        %2476 = vmatprep.mubr.bf16.mxu0 0
        %2477 = vmatmul.mubr.bf16.gmra.mrb[0].mxu0 %v2402
        %v2478 = vpop.f32.mrb[0].mxu0
        %v2479 = vadd.f32 0.0, %v2478
        %v2480 = vpop.f32.mrb[0].mxu0
        %v2481 = vadd.f32 0.0, %v2480
        %v2482 = vpop.f32.mrb[0].mxu0
        %v2483 = vpop.f32.mrb[0].mxu0
        %2484 = vdwg.mxu0
        %v2489 = vrot.slane %v2438, 2
        %v2490 = vrot.slane %v2440, 2
        %v2491 = vrot.slane %v2479, 2
        %v2492 = vrot.slane %v2481, 2
        %v2497 = vadd.f32 %v886, %v2489
        %v2498 = vadd.f32 %v888, %v2490
        %v2499 = vadd.f32 %v929, %v2491
        %v2500 = vadd.f32 %v931, %v2492
        %v2501 = vxor.u32 %v2398, 2147483648
        %v2502 = vxor.u32 %v2399, 2147483648
        %v2503 = vxor.u32 %v2400, 2147483648
        %v2504 = vmul.f32 %v2501, 1.442695
        %v2505 = vpow.pop %v2504
        %v2506 = vmul.f32 %v2502, 1.442695
        %v2507 = vpow.pop %v2506
        %v2508 = vmul.f32 %v2503, 1.442695
        %v2509 = vpow.pop %v2508
        %v2510 = vadd.f32 %v2505, 1.0
        %v2511 = vadd.f32 %v2507, 1.0
        %v2512 = vadd.f32 %v2509, 1.0
        %v2513 = vrcp.pop %v2510
        %v2514 = vmul.f32 1.0, %v2513
        %v2515 = vrcp.pop %v2511
        %v2516 = vmul.f32 1.0, %v2515
        %v2517 = vrcp.pop %v2512
        %v2518 = vmul.f32 1.0, %v2517
        %v2519 = vtanh.pop %v2401
        %v2520 = vxor.u32 %v2497, 2147483648
        %v2521 = vxor.u32 %v2498, 2147483648
        %v2522 = vxor.u32 %v2499, 2147483648
        %v2523 = vmul.f32 %v2520, 1.442695
        %v2524 = vpow.pop %v2523
        %v2525 = vmul.f32 %v2521, 1.442695
        %v2526 = vpow.pop %v2525
        %v2527 = vmul.f32 %v2522, 1.442695
        %v2528 = vpow.pop %v2527
        %v2529 = vadd.f32 %v2524, 1.0
        %v2530 = vadd.f32 %v2526, 1.0
        %v2531 = vadd.f32 %v2528, 1.0
        %v2532 = vrcp.pop %v2529
        %v2533 = vmul.f32 1.0, %v2532
        %v2534 = vrcp.pop %v2530
        %v2535 = vmul.f32 1.0, %v2534
        %v2536 = vrcp.pop %v2531
        %v2537 = vmul.f32 1.0, %v2536
        %v2538 = vtanh.pop %v2500
        %v2540 = vrot.slane %v2301, 6
        %v2542 = vmul.f32 %v2516, %v2540
        %v2543 = vmul.f32 %v2514, %v2519
        %v2544 = vadd.f32 %v2542, %v2543
        %v2546 = vrot.slane %v2307, 2
        %v2548 = vmul.f32 %v2535, %v2546
        %v2549 = vmul.f32 %v2533, %v2538
        %v2550 = vadd.f32 %v2548, %v2549
        %v2551 = vtanh.pop %v2544
        %v2552 = vmul.f32 %v2518, %v2551
        %v2553 = vtanh.pop %v2550
        %v2554 = vmul.f32 %v2537, %v2553
        %v2555 = vpack.c.bf16 %v2552, %v2552
        %2556 = vmatprep.subr.bf16.mxu0 %v1098
        %2557 = vmatpush1.bf16.msra.mxu0 %v1097
        %2558 = vmatprep.subr.bf16.mxu0 %v1102
        %2559 = vmatpush1.bf16.msra.mxu0 %v1101
        %2560 = vmatprep.subr.bf16.mxu0 %v1106
        %2561 = vmatpush1.bf16.msra.mxu0 %v1105
        %2562 = vmatprep.subr.bf16.mxu0 %v1110
        %2563 = vmatpush1.bf16.msra.mxu0 %v1109
        %2564 = vmatprep.subr.bf16.mxu0 %v1114
        %2565 = vmatpush1.bf16.msra.mxu0 %v1113
        %2566 = vmatprep.subr.bf16.mxu0 %v1118
        %2567 = vmatpush1.bf16.msra.mxu0 %v1117
        %2568 = vmatprep.subr.bf16.mxu0 %v1122
        %2569 = vmatpush1.bf16.msra.mxu0 %v1121
        %2570 = vmatprep.subr.bf16.mxu0 %v1126
        %2571 = vmatpush1.bf16.msra.mxu0 %v1125
        %2572 = vmatprep.subr.bf16.mxu0 0
        %2573 = vmatpush1.bf16.msra.mxu0 0
        %2574 = vmatprep.subr.bf16.mxu0 0
        %2575 = vmatpush1.bf16.msra.mxu0 0
        %2576 = vmatprep.subr.bf16.mxu0 0
        %2577 = vmatpush1.bf16.msra.mxu0 0
        %2578 = vmatprep.subr.bf16.mxu0 0
        %2579 = vmatpush1.bf16.msra.mxu0 0
        %2580 = vmatprep.subr.bf16.mxu0 0
        %2581 = vmatpush1.bf16.msra.mxu0 0
        %2582 = vmatprep.subr.bf16.mxu0 0
        %2583 = vmatpush1.bf16.msra.mxu0 0
        %2584 = vmatprep.subr.bf16.mxu0 0
        %2585 = vmatpush1.bf16.msra.mxu0 0
        %2586 = vmatprep.subr.bf16.mxu0 0
        %2587 = vmatpush1.bf16.msra.mxu0 0
        %2588 = vmatprep.mubr.bf16.mxu0 0
        %2589 = vmatmul.mubr.bf16.gmra.mrb[0].mxu0 %v2555
        %v2590 = vpop.f32.mrb[0].mxu0
        %v2591 = vadd.f32 0.0, %v2590
        %v2592 = vpop.f32.mrb[0].mxu0
        %v2593 = vadd.f32 0.0, %v2592
        %v2594 = vpop.f32.mrb[0].mxu0
        %v2595 = vpop.f32.mrb[0].mxu0
        %2596 = vdwg.mxu0
        %2597 = vmatprep.subr.bf16.mxu0 %v1100
        %2598 = vmatpush1.bf16.msra.mxu0 %v1099
        %2599 = vmatprep.subr.bf16.mxu0 %v1104
        %2600 = vmatpush1.bf16.msra.mxu0 %v1103
        %2601 = vmatprep.subr.bf16.mxu0 %v1108
        %2602 = vmatpush1.bf16.msra.mxu0 %v1107
        %2603 = vmatprep.subr.bf16.mxu0 %v1112
        %2604 = vmatpush1.bf16.msra.mxu0 %v1111
        %2605 = vmatprep.subr.bf16.mxu0 %v1116
        %2606 = vmatpush1.bf16.msra.mxu0 %v1115
        %2607 = vmatprep.subr.bf16.mxu0 %v1120
        %2608 = vmatpush1.bf16.msra.mxu0 %v1119
        %2609 = vmatprep.subr.bf16.mxu0 %v1124
        %2610 = vmatpush1.bf16.msra.mxu0 %v1123
        %2611 = vmatprep.subr.bf16.mxu0 %v1128
        %2612 = vmatpush1.bf16.msra.mxu0 %v1127
        %2613 = vmatprep.subr.bf16.mxu0 0
        %2614 = vmatpush1.bf16.msra.mxu0 0
        %2615 = vmatprep.subr.bf16.mxu0 0
        %2616 = vmatpush1.bf16.msra.mxu0 0
        %2617 = vmatprep.subr.bf16.mxu0 0
        %2618 = vmatpush1.bf16.msra.mxu0 0
        %2619 = vmatprep.subr.bf16.mxu0 0
        %2620 = vmatpush1.bf16.msra.mxu0 0
        %2621 = vmatprep.subr.bf16.mxu0 0
        %2622 = vmatpush1.bf16.msra.mxu0 0
        %2623 = vmatprep.subr.bf16.mxu0 0
        %2624 = vmatpush1.bf16.msra.mxu0 0
        %2625 = vmatprep.subr.bf16.mxu0 0
        %2626 = vmatpush1.bf16.msra.mxu0 0
        %2627 = vmatprep.subr.bf16.mxu0 0
        %2628 = vmatpush1.bf16.msra.mxu0 0
        %2629 = vmatprep.mubr.bf16.mxu0 0
        %2630 = vmatmul.mubr.bf16.gmra.mrb[0].mxu0 %v2555
        %v2631 = vpop.f32.mrb[0].mxu0
        %v2632 = vadd.f32 0.0, %v2631
        %v2633 = vpop.f32.mrb[0].mxu0
        %v2634 = vadd.f32 0.0, %v2633
        %v2635 = vpop.f32.mrb[0].mxu0
        %v2636 = vpop.f32.mrb[0].mxu0
        %2637 = vdwg.mxu0
        %v2642 = vrot.slane %v2591, 6
        %v2643 = vrot.slane %v2593, 6
        %v2644 = vrot.slane %v2632, 6
        %v2645 = vrot.slane %v2634, 6
        %v2650 = vadd.f32 %v804, %v2642
        %v2651 = vadd.f32 %v806, %v2643
        %v2652 = vadd.f32 %v847, %v2644
        %v2653 = vadd.f32 %v849, %v2645
        %v2654 = vpack.c.bf16 %v2554, %v2554
        %v2656 = vrot.slane %v2654, 3
        %2658 = vmatprep.subr.bf16.mxu0 %v1344
        %2659 = vmatpush1.bf16.msra.mxu0 %v1343
        %2660 = vmatprep.subr.bf16.mxu0 %v1348
        %2661 = vmatpush1.bf16.msra.mxu0 %v1347
        %2662 = vmatprep.subr.bf16.mxu0 %v1352
        %2663 = vmatpush1.bf16.msra.mxu0 %v1351
        %2664 = vmatprep.subr.bf16.mxu0 %v1356
        %2665 = vmatpush1.bf16.msra.mxu0 %v1355
        %2666 = vmatprep.subr.bf16.mxu0 %v1360
        %2667 = vmatpush1.bf16.msra.mxu0 %v1359
        %2668 = vmatprep.subr.bf16.mxu0 %v1364
        %2669 = vmatpush1.bf16.msra.mxu0 %v1363
        %2670 = vmatprep.subr.bf16.mxu0 %v1368
        %2671 = vmatpush1.bf16.msra.mxu0 %v1367
        %2672 = vmatprep.subr.bf16.mxu0 %v1372
        %2673 = vmatpush1.bf16.msra.mxu0 %v1371
        %2674 = vmatprep.subr.bf16.mxu0 0
        %2675 = vmatpush1.bf16.msra.mxu0 0
        %2676 = vmatprep.subr.bf16.mxu0 0
        %2677 = vmatpush1.bf16.msra.mxu0 0
        %2678 = vmatprep.subr.bf16.mxu0 0
        %2679 = vmatpush1.bf16.msra.mxu0 0
        %2680 = vmatprep.subr.bf16.mxu0 0
        %2681 = vmatpush1.bf16.msra.mxu0 0
        %2682 = vmatprep.subr.bf16.mxu0 0
        %2683 = vmatpush1.bf16.msra.mxu0 0
        %2684 = vmatprep.subr.bf16.mxu0 0
        %2685 = vmatpush1.bf16.msra.mxu0 0
        %2686 = vmatprep.subr.bf16.mxu0 0
        %2687 = vmatpush1.bf16.msra.mxu0 0
        %2688 = vmatprep.subr.bf16.mxu0 0
        %2689 = vmatpush1.bf16.msra.mxu0 0
        %2690 = vmatprep.mubr.bf16.mxu0 0
        %2691 = vmatmul.mubr.bf16.gmra.mrb[0].mxu0 %v2656
        %v2692 = vpop.f32.mrb[0].mxu0
        %v2693 = vadd.f32 0.0, %v2692
        %v2694 = vpop.f32.mrb[0].mxu0
        %v2695 = vadd.f32 0.0, %v2694
        %v2696 = vpop.f32.mrb[0].mxu0
        %v2697 = vpop.f32.mrb[0].mxu0
        %2698 = vdwg.mxu0
        %2699 = vmatprep.subr.bf16.mxu0 %v1346
        %2700 = vmatpush1.bf16.msra.mxu0 %v1345
        %2701 = vmatprep.subr.bf16.mxu0 %v1350
        %2702 = vmatpush1.bf16.msra.mxu0 %v1349
        %2703 = vmatprep.subr.bf16.mxu0 %v1354
        %2704 = vmatpush1.bf16.msra.mxu0 %v1353
        %2705 = vmatprep.subr.bf16.mxu0 %v1358
        %2706 = vmatpush1.bf16.msra.mxu0 %v1357
        %2707 = vmatprep.subr.bf16.mxu0 %v1362
        %2708 = vmatpush1.bf16.msra.mxu0 %v1361
        %2709 = vmatprep.subr.bf16.mxu0 %v1366
        %2710 = vmatpush1.bf16.msra.mxu0 %v1365
        %2711 = vmatprep.subr.bf16.mxu0 %v1370
        %2712 = vmatpush1.bf16.msra.mxu0 %v1369
        %2713 = vmatprep.subr.bf16.mxu0 %v1374
        %2714 = vmatpush1.bf16.msra.mxu0 %v1373
        %2715 = vmatprep.subr.bf16.mxu0 0
        %2716 = vmatpush1.bf16.msra.mxu0 0
        %2717 = vmatprep.subr.bf16.mxu0 0
        %2718 = vmatpush1.bf16.msra.mxu0 0
        %2719 = vmatprep.subr.bf16.mxu0 0
        %2720 = vmatpush1.bf16.msra.mxu0 0
        %2721 = vmatprep.subr.bf16.mxu0 0
        %2722 = vmatpush1.bf16.msra.mxu0 0
        %2723 = vmatprep.subr.bf16.mxu0 0
        %2724 = vmatpush1.bf16.msra.mxu0 0
        %2725 = vmatprep.subr.bf16.mxu0 0
        %2726 = vmatpush1.bf16.msra.mxu0 0
        %2727 = vmatprep.subr.bf16.mxu0 0
        %2728 = vmatpush1.bf16.msra.mxu0 0
        %2729 = vmatprep.subr.bf16.mxu0 0
        %2730 = vmatpush1.bf16.msra.mxu0 0
        %2731 = vmatprep.mubr.bf16.mxu0 0
        %2732 = vmatmul.mubr.bf16.gmra.mrb[0].mxu0 %v2656
        %v2733 = vpop.f32.mrb[0].mxu0
        %v2734 = vadd.f32 0.0, %v2733
        %v2735 = vpop.f32.mrb[0].mxu0
        %v2736 = vadd.f32 0.0, %v2735
        %v2737 = vpop.f32.mrb[0].mxu0
        %v2738 = vpop.f32.mrb[0].mxu0
        %2739 = vdwg.mxu0
        %v2744 = vrot.slane %v2693, 4
        %v2745 = vrot.slane %v2695, 4
        %v2746 = vrot.slane %v2734, 4
        %v2747 = vrot.slane %v2736, 4
        %v2752 = vadd.f32 %v886, %v2744
        %v2753 = vadd.f32 %v888, %v2745
        %v2754 = vadd.f32 %v929, %v2746
        %v2755 = vadd.f32 %v931, %v2747
        %v2756 = vxor.u32 %v2650, 2147483648
        %v2757 = vxor.u32 %v2651, 2147483648
        %v2758 = vxor.u32 %v2652, 2147483648
        %v2759 = vmul.f32 %v2756, 1.442695
        %v2760 = vpow.pop %v2759
        %v2761 = vmul.f32 %v2757, 1.442695
        %v2762 = vpow.pop %v2761
        %v2763 = vmul.f32 %v2758, 1.442695
        %v2764 = vpow.pop %v2763
        %v2765 = vadd.f32 %v2760, 1.0
        %v2766 = vadd.f32 %v2762, 1.0
        %v2767 = vadd.f32 %v2764, 1.0
        %v2768 = vrcp.pop %v2765
        %v2769 = vmul.f32 1.0, %v2768
        %v2770 = vrcp.pop %v2766
        %v2771 = vmul.f32 1.0, %v2770
        %v2772 = vrcp.pop %v2767
        %v2773 = vmul.f32 1.0, %v2772
        %v2774 = vtanh.pop %v2653
        %v2775 = vxor.u32 %v2752, 2147483648
        %v2776 = vxor.u32 %v2753, 2147483648
        %v2777 = vxor.u32 %v2754, 2147483648
        %v2778 = vmul.f32 %v2775, 1.442695
        %v2779 = vpow.pop %v2778
        %v2780 = vmul.f32 %v2776, 1.442695
        %v2781 = vpow.pop %v2780
        %v2782 = vmul.f32 %v2777, 1.442695
        %v2783 = vpow.pop %v2782
        %v2784 = vadd.f32 %v2779, 1.0
        %v2785 = vadd.f32 %v2781, 1.0
        %v2786 = vadd.f32 %v2783, 1.0
        %v2787 = vrcp.pop %v2784
        %v2788 = vmul.f32 1.0, %v2787
        %v2789 = vrcp.pop %v2785
        %v2790 = vmul.f32 1.0, %v2789
        %v2791 = vrcp.pop %v2786
        %v2792 = vmul.f32 1.0, %v2791
        %v2793 = vtanh.pop %v2755
        %v2795 = vrot.slane %v2544, 6
        %v2797 = vmul.f32 %v2771, %v2795
        %v2798 = vmul.f32 %v2769, %v2774
        %v2799 = vadd.f32 %v2797, %v2798
        %v2801 = vrot.slane %v2550, 2
        %v2803 = vmul.f32 %v2790, %v2801
        %v2804 = vmul.f32 %v2788, %v2793
        %v2805 = vadd.f32 %v2803, %v2804
        %v2806 = vtanh.pop %v2799
        %v2807 = vmul.f32 %v2773, %v2806
        %v2808 = vtanh.pop %v2805
        %v2809 = vmul.f32 %v2792, %v2808
        %v2810 = vpack.c.bf16 %v2807, %v2807
        %v2812 = vrot.slane %v2810, 1
        %2814 = vmatprep.subr.bf16.mxu0 %v1098
        %2815 = vmatpush1.bf16.msra.mxu0 %v1097
        %2816 = vmatprep.subr.bf16.mxu0 %v1102
        %2817 = vmatpush1.bf16.msra.mxu0 %v1101
        %2818 = vmatprep.subr.bf16.mxu0 %v1106
        %2819 = vmatpush1.bf16.msra.mxu0 %v1105
        %2820 = vmatprep.subr.bf16.mxu0 %v1110
        %2821 = vmatpush1.bf16.msra.mxu0 %v1109
        %2822 = vmatprep.subr.bf16.mxu0 %v1114
        %2823 = vmatpush1.bf16.msra.mxu0 %v1113
        %2824 = vmatprep.subr.bf16.mxu0 %v1118
        %2825 = vmatpush1.bf16.msra.mxu0 %v1117
        %2826 = vmatprep.subr.bf16.mxu0 %v1122
        %2827 = vmatpush1.bf16.msra.mxu0 %v1121
        %2828 = vmatprep.subr.bf16.mxu0 %v1126
        %2829 = vmatpush1.bf16.msra.mxu0 %v1125
        %2830 = vmatprep.subr.bf16.mxu0 0
        %2831 = vmatpush1.bf16.msra.mxu0 0
        %2832 = vmatprep.subr.bf16.mxu0 0
        %2833 = vmatpush1.bf16.msra.mxu0 0
        %2834 = vmatprep.subr.bf16.mxu0 0
        %2835 = vmatpush1.bf16.msra.mxu0 0
        %2836 = vmatprep.subr.bf16.mxu0 0
        %2837 = vmatpush1.bf16.msra.mxu0 0
        %2838 = vmatprep.subr.bf16.mxu0 0
        %2839 = vmatpush1.bf16.msra.mxu0 0
        %2840 = vmatprep.subr.bf16.mxu0 0
        %2841 = vmatpush1.bf16.msra.mxu0 0
        %2842 = vmatprep.subr.bf16.mxu0 0
        %2843 = vmatpush1.bf16.msra.mxu0 0
        %2844 = vmatprep.subr.bf16.mxu0 0
        %2845 = vmatpush1.bf16.msra.mxu0 0
        %2846 = vmatprep.mubr.bf16.mxu0 0
        %2847 = vmatmul.mubr.bf16.gmra.mrb[0].mxu0 %v2812
        %v2848 = vpop.f32.mrb[0].mxu0
        %v2849 = vadd.f32 0.0, %v2848
        %v2850 = vpop.f32.mrb[0].mxu0
        %v2851 = vadd.f32 0.0, %v2850
        %v2852 = vpop.f32.mrb[0].mxu0
        %v2853 = vpop.f32.mrb[0].mxu0
        %2854 = vdwg.mxu0
        %2855 = vmatprep.subr.bf16.mxu0 %v1100
        %2856 = vmatpush1.bf16.msra.mxu0 %v1099
        %2857 = vmatprep.subr.bf16.mxu0 %v1104
        %2858 = vmatpush1.bf16.msra.mxu0 %v1103
        %2859 = vmatprep.subr.bf16.mxu0 %v1108
        %2860 = vmatpush1.bf16.msra.mxu0 %v1107
        %2861 = vmatprep.subr.bf16.mxu0 %v1112
        %2862 = vmatpush1.bf16.msra.mxu0 %v1111
        %2863 = vmatprep.subr.bf16.mxu0 %v1116
        %2864 = vmatpush1.bf16.msra.mxu0 %v1115
        %2865 = vmatprep.subr.bf16.mxu0 %v1120
        %2866 = vmatpush1.bf16.msra.mxu0 %v1119
        %2867 = vmatprep.subr.bf16.mxu0 %v1124
        %2868 = vmatpush1.bf16.msra.mxu0 %v1123
        %2869 = vmatprep.subr.bf16.mxu0 %v1128
        %2870 = vmatpush1.bf16.msra.mxu0 %v1127
        %2871 = vmatprep.subr.bf16.mxu0 0
        %2872 = vmatpush1.bf16.msra.mxu0 0
        %2873 = vmatprep.subr.bf16.mxu0 0
        %2874 = vmatpush1.bf16.msra.mxu0 0
        %2875 = vmatprep.subr.bf16.mxu0 0
        %2876 = vmatpush1.bf16.msra.mxu0 0
        %2877 = vmatprep.subr.bf16.mxu0 0
        %2878 = vmatpush1.bf16.msra.mxu0 0
        %2879 = vmatprep.subr.bf16.mxu0 0
        %2880 = vmatpush1.bf16.msra.mxu0 0
        %2881 = vmatprep.subr.bf16.mxu0 0
        %2882 = vmatpush1.bf16.msra.mxu0 0
        %2883 = vmatprep.subr.bf16.mxu0 0
        %2884 = vmatpush1.bf16.msra.mxu0 0
        %2885 = vmatprep.subr.bf16.mxu0 0
        %2886 = vmatpush1.bf16.msra.mxu0 0
        %2887 = vmatprep.mubr.bf16.mxu0 0
        %2888 = vmatmul.mubr.bf16.gmra.mrb[0].mxu0 %v2812
        %v2889 = vpop.f32.mrb[0].mxu0
        %v2890 = vadd.f32 0.0, %v2889
        %v2891 = vpop.f32.mrb[0].mxu0
        %v2892 = vadd.f32 0.0, %v2891
        %v2893 = vpop.f32.mrb[0].mxu0
        %v2894 = vpop.f32.mrb[0].mxu0
        %2895 = vdwg.mxu0
        %v2900 = vrot.slane %v2849, 4
        %v2901 = vrot.slane %v2851, 4
        %v2902 = vrot.slane %v2890, 4
        %v2903 = vrot.slane %v2892, 4
        %v2908 = vadd.f32 %v804, %v2900
        %v2909 = vadd.f32 %v806, %v2901
        %v2910 = vadd.f32 %v847, %v2902
        %v2911 = vadd.f32 %v849, %v2903
        %v2912 = vpack.c.bf16 %v2809, %v2809
        %v2914 = vrot.slane %v2912, 2
        %2916 = vmatprep.subr.bf16.mxu0 %v1344
        %2917 = vmatpush1.bf16.msra.mxu0 %v1343
        %2918 = vmatprep.subr.bf16.mxu0 %v1348
        %2919 = vmatpush1.bf16.msra.mxu0 %v1347
        %2920 = vmatprep.subr.bf16.mxu0 %v1352
        %2921 = vmatpush1.bf16.msra.mxu0 %v1351
        %2922 = vmatprep.subr.bf16.mxu0 %v1356
        %2923 = vmatpush1.bf16.msra.mxu0 %v1355
        %2924 = vmatprep.subr.bf16.mxu0 %v1360
        %2925 = vmatpush1.bf16.msra.mxu0 %v1359
        %2926 = vmatprep.subr.bf16.mxu0 %v1364
        %2927 = vmatpush1.bf16.msra.mxu0 %v1363
        %2928 = vmatprep.subr.bf16.mxu0 %v1368
        %2929 = vmatpush1.bf16.msra.mxu0 %v1367
        %2930 = vmatprep.subr.bf16.mxu0 %v1372
        %2931 = vmatpush1.bf16.msra.mxu0 %v1371
        %2932 = vmatprep.subr.bf16.mxu0 0
        %2933 = vmatpush1.bf16.msra.mxu0 0
        %2934 = vmatprep.subr.bf16.mxu0 0
        %2935 = vmatpush1.bf16.msra.mxu0 0
        %2936 = vmatprep.subr.bf16.mxu0 0
        %2937 = vmatpush1.bf16.msra.mxu0 0
        %2938 = vmatprep.subr.bf16.mxu0 0
        %2939 = vmatpush1.bf16.msra.mxu0 0
        %2940 = vmatprep.subr.bf16.mxu0 0
        %2941 = vmatpush1.bf16.msra.mxu0 0
        %2942 = vmatprep.subr.bf16.mxu0 0
        %2943 = vmatpush1.bf16.msra.mxu0 0
        %2944 = vmatprep.subr.bf16.mxu0 0
        %2945 = vmatpush1.bf16.msra.mxu0 0
        %2946 = vmatprep.subr.bf16.mxu0 0
        %2947 = vmatpush1.bf16.msra.mxu0 0
        %2948 = vmatprep.mubr.bf16.mxu0 0
        %2949 = vmatmul.mubr.bf16.gmra.mrb[0].mxu0 %v2914
        %v2950 = vpop.f32.mrb[0].mxu0
        %v2951 = vadd.f32 0.0, %v2950
        %v2952 = vpop.f32.mrb[0].mxu0
        %v2953 = vadd.f32 0.0, %v2952
        %v2954 = vpop.f32.mrb[0].mxu0
        %v2955 = vpop.f32.mrb[0].mxu0
        %2956 = vdwg.mxu0
        %2957 = vmatprep.subr.bf16.mxu0 %v1346
        %2958 = vmatpush1.bf16.msra.mxu0 %v1345
        %2959 = vmatprep.subr.bf16.mxu0 %v1350
        %2960 = vmatpush1.bf16.msra.mxu0 %v1349
        %2961 = vmatprep.subr.bf16.mxu0 %v1354
        %2962 = vmatpush1.bf16.msra.mxu0 %v1353
        %2963 = vmatprep.subr.bf16.mxu0 %v1358
        %2964 = vmatpush1.bf16.msra.mxu0 %v1357
        %2965 = vmatprep.subr.bf16.mxu0 %v1362
        %2966 = vmatpush1.bf16.msra.mxu0 %v1361
        %2967 = vmatprep.subr.bf16.mxu0 %v1366
        %2968 = vmatpush1.bf16.msra.mxu0 %v1365
        %2969 = vmatprep.subr.bf16.mxu0 %v1370
        %2970 = vmatpush1.bf16.msra.mxu0 %v1369
        %2971 = vmatprep.subr.bf16.mxu0 %v1374
        %2972 = vmatpush1.bf16.msra.mxu0 %v1373
        %2973 = vmatprep.subr.bf16.mxu0 0
        %2974 = vmatpush1.bf16.msra.mxu0 0
        %2975 = vmatprep.subr.bf16.mxu0 0
        %2976 = vmatpush1.bf16.msra.mxu0 0
        %2977 = vmatprep.subr.bf16.mxu0 0
        %2978 = vmatpush1.bf16.msra.mxu0 0
        %2979 = vmatprep.subr.bf16.mxu0 0
        %2980 = vmatpush1.bf16.msra.mxu0 0
        %2981 = vmatprep.subr.bf16.mxu0 0
        %2982 = vmatpush1.bf16.msra.mxu0 0
        %2983 = vmatprep.subr.bf16.mxu0 0
        %2984 = vmatpush1.bf16.msra.mxu0 0
        %2985 = vmatprep.subr.bf16.mxu0 0
        %2986 = vmatpush1.bf16.msra.mxu0 0
        %2987 = vmatprep.subr.bf16.mxu0 0
        %2988 = vmatpush1.bf16.msra.mxu0 0
        %2989 = vmatprep.mubr.bf16.mxu0 0
        %2990 = vmatmul.mubr.bf16.gmra.mrb[0].mxu0 %v2914
        %v2991 = vpop.f32.mrb[0].mxu0
        %v2992 = vadd.f32 0.0, %v2991
        %v2993 = vpop.f32.mrb[0].mxu0
        %v2994 = vadd.f32 0.0, %v2993
        %v2995 = vpop.f32.mrb[0].mxu0
        %v2996 = vpop.f32.mrb[0].mxu0
        %2997 = vdwg.mxu0
        %v3002 = vrot.slane %v2951, 6
        %v3003 = vrot.slane %v2953, 6
        %v3004 = vrot.slane %v2992, 6
        %v3005 = vrot.slane %v2994, 6
        %v3010 = vadd.f32 %v886, %v3002
        %v3011 = vadd.f32 %v888, %v3003
        %v3012 = vadd.f32 %v929, %v3004
        %v3013 = vadd.f32 %v931, %v3005
        %v3014 = vxor.u32 %v2908, 2147483648
        %v3015 = vxor.u32 %v2909, 2147483648
        %v3016 = vxor.u32 %v2910, 2147483648
        %v3017 = vmul.f32 %v3014, 1.442695
        %v3018 = vpow.pop %v3017
        %v3019 = vmul.f32 %v3015, 1.442695
        %v3020 = vpow.pop %v3019
        %v3021 = vmul.f32 %v3016, 1.442695
        %v3022 = vpow.pop %v3021
        %v3023 = vadd.f32 %v3018, 1.0
        %v3024 = vadd.f32 %v3020, 1.0
        %v3025 = vadd.f32 %v3022, 1.0
        %v3026 = vrcp.pop %v3023
        %v3027 = vmul.f32 1.0, %v3026
        %v3028 = vrcp.pop %v3024
        %v3029 = vmul.f32 1.0, %v3028
        %v3030 = vrcp.pop %v3025
        %v3031 = vmul.f32 1.0, %v3030
        %v3032 = vtanh.pop %v2911
        %v3033 = vxor.u32 %v3010, 2147483648
        %v3034 = vxor.u32 %v3011, 2147483648
        %v3035 = vxor.u32 %v3012, 2147483648
        %v3036 = vmul.f32 %v3033, 1.442695
        %v3037 = vpow.pop %v3036
        %v3038 = vmul.f32 %v3034, 1.442695
        %v3039 = vpow.pop %v3038
        %v3040 = vmul.f32 %v3035, 1.442695
        %v3041 = vpow.pop %v3040
        %v3042 = vadd.f32 %v3037, 1.0
        %v3043 = vadd.f32 %v3039, 1.0
        %v3044 = vadd.f32 %v3041, 1.0
        %v3045 = vrcp.pop %v3042
        %v3046 = vmul.f32 1.0, %v3045
        %v3047 = vrcp.pop %v3043
        %v3048 = vmul.f32 1.0, %v3047
        %v3049 = vrcp.pop %v3044
        %v3050 = vmul.f32 1.0, %v3049
        %v3051 = vtanh.pop %v3013
        %v3053 = vrot.slane %v2799, 6
        %v3055 = vmul.f32 %v3029, %v3053
        %v3056 = vmul.f32 %v3027, %v3032
        %v3057 = vadd.f32 %v3055, %v3056
        %v3059 = vrot.slane %v2805, 2
        %v3061 = vmul.f32 %v3048, %v3059
        %v3062 = vmul.f32 %v3046, %v3051
        %v3063 = vadd.f32 %v3061, %v3062
        %v3064 = vtanh.pop %v3057
        %v3065 = vmul.f32 %v3031, %v3064
        %v3066 = vtanh.pop %v3063
        %v3067 = vmul.f32 %v3050, %v3066
        %v3068 = vpack.c.bf16 %v3065, %v3065
        %v3070 = vrot.slane %v3068, 2
        %3072 = vmatprep.subr.bf16.mxu0 %v1098
        %3073 = vmatpush1.bf16.msra.mxu0 %v1097
        %3074 = vmatprep.subr.bf16.mxu0 %v1102
        %3075 = vmatpush1.bf16.msra.mxu0 %v1101
        %3076 = vmatprep.subr.bf16.mxu0 %v1106
        %3077 = vmatpush1.bf16.msra.mxu0 %v1105
        %3078 = vmatprep.subr.bf16.mxu0 %v1110
        %3079 = vmatpush1.bf16.msra.mxu0 %v1109
        %3080 = vmatprep.subr.bf16.mxu0 %v1114
        %3081 = vmatpush1.bf16.msra.mxu0 %v1113
        %3082 = vmatprep.subr.bf16.mxu0 %v1118
        %3083 = vmatpush1.bf16.msra.mxu0 %v1117
        %3084 = vmatprep.subr.bf16.mxu0 %v1122
        %3085 = vmatpush1.bf16.msra.mxu0 %v1121
        %3086 = vmatprep.subr.bf16.mxu0 %v1126
        %3087 = vmatpush1.bf16.msra.mxu0 %v1125
        %3088 = vmatprep.subr.bf16.mxu0 0
        %3089 = vmatpush1.bf16.msra.mxu0 0
        %3090 = vmatprep.subr.bf16.mxu0 0
        %3091 = vmatpush1.bf16.msra.mxu0 0
        %3092 = vmatprep.subr.bf16.mxu0 0
        %3093 = vmatpush1.bf16.msra.mxu0 0
        %3094 = vmatprep.subr.bf16.mxu0 0
        %3095 = vmatpush1.bf16.msra.mxu0 0
        %3096 = vmatprep.subr.bf16.mxu0 0
        %3097 = vmatpush1.bf16.msra.mxu0 0
        %3098 = vmatprep.subr.bf16.mxu0 0
        %3099 = vmatpush1.bf16.msra.mxu0 0
        %3100 = vmatprep.subr.bf16.mxu0 0
        %3101 = vmatpush1.bf16.msra.mxu0 0
        %3102 = vmatprep.subr.bf16.mxu0 0
        %3103 = vmatpush1.bf16.msra.mxu0 0
        %3104 = vmatprep.mubr.bf16.mxu0 0
        %3105 = vmatmul.mubr.bf16.gmra.mrb[0].mxu0 %v3070
        %v3106 = vpop.f32.mrb[0].mxu0
        %v3107 = vadd.f32 0.0, %v3106
        %v3108 = vpop.f32.mrb[0].mxu0
        %v3109 = vadd.f32 0.0, %v3108
        %v3110 = vpop.f32.mrb[0].mxu0
        %v3111 = vpop.f32.mrb[0].mxu0
        %3112 = vdwg.mxu0
        %3113 = vmatprep.subr.bf16.mxu0 %v1100
        %3114 = vmatpush1.bf16.msra.mxu0 %v1099
        %3115 = vmatprep.subr.bf16.mxu0 %v1104
        %3116 = vmatpush1.bf16.msra.mxu0 %v1103
        %3117 = vmatprep.subr.bf16.mxu0 %v1108
        %3118 = vmatpush1.bf16.msra.mxu0 %v1107
        %3119 = vmatprep.subr.bf16.mxu0 %v1112
        %3120 = vmatpush1.bf16.msra.mxu0 %v1111
        %3121 = vmatprep.subr.bf16.mxu0 %v1116
        %3122 = vmatpush1.bf16.msra.mxu0 %v1115
        %3123 = vmatprep.subr.bf16.mxu0 %v1120
        %3124 = vmatpush1.bf16.msra.mxu0 %v1119
        %3125 = vmatprep.subr.bf16.mxu0 %v1124
        %3126 = vmatpush1.bf16.msra.mxu0 %v1123
        %3127 = vmatprep.subr.bf16.mxu0 %v1128
        %3128 = vmatpush1.bf16.msra.mxu0 %v1127
        %3129 = vmatprep.subr.bf16.mxu0 0
        %3130 = vmatpush1.bf16.msra.mxu0 0
        %3131 = vmatprep.subr.bf16.mxu0 0
        %3132 = vmatpush1.bf16.msra.mxu0 0
        %3133 = vmatprep.subr.bf16.mxu0 0
        %3134 = vmatpush1.bf16.msra.mxu0 0
        %3135 = vmatprep.subr.bf16.mxu0 0
        %3136 = vmatpush1.bf16.msra.mxu0 0
        %3137 = vmatprep.subr.bf16.mxu0 0
        %3138 = vmatpush1.bf16.msra.mxu0 0
        %3139 = vmatprep.subr.bf16.mxu0 0
        %3140 = vmatpush1.bf16.msra.mxu0 0
        %3141 = vmatprep.subr.bf16.mxu0 0
        %3142 = vmatpush1.bf16.msra.mxu0 0
        %3143 = vmatprep.subr.bf16.mxu0 0
        %3144 = vmatpush1.bf16.msra.mxu0 0
        %3145 = vmatprep.mubr.bf16.mxu0 0
        %3146 = vmatmul.mubr.bf16.gmra.mrb[0].mxu0 %v3070
        %v3147 = vpop.f32.mrb[0].mxu0
        %v3148 = vadd.f32 0.0, %v3147
        %v3149 = vpop.f32.mrb[0].mxu0
        %v3150 = vadd.f32 0.0, %v3149
        %v3151 = vpop.f32.mrb[0].mxu0
        %v3152 = vpop.f32.mrb[0].mxu0
        %3153 = vdwg.mxu0
        %v3158 = vrot.slane %v3107, 2
        %v3159 = vrot.slane %v3109, 2
        %v3160 = vrot.slane %v3148, 2
        %v3161 = vrot.slane %v3150, 2
        %v3166 = vadd.f32 %v804, %v3158
        %v3167 = vadd.f32 %v806, %v3159
        %v3168 = vadd.f32 %v847, %v3160
        %v3169 = vadd.f32 %v849, %v3161
        %v3170 = vpack.c.bf16 %v3067, %v3067
        %v3172 = vrot.slane %v3170, 1
        %3174 = vmatprep.subr.bf16.mxu0 %v1344
        %3175 = vmatpush1.bf16.msra.mxu0 %v1343
        %3176 = vmatprep.subr.bf16.mxu0 %v1348
        %3177 = vmatpush1.bf16.msra.mxu0 %v1347
        %3178 = vmatprep.subr.bf16.mxu0 %v1352
        %3179 = vmatpush1.bf16.msra.mxu0 %v1351
        %3180 = vmatprep.subr.bf16.mxu0 %v1356
        %3181 = vmatpush1.bf16.msra.mxu0 %v1355
        %3182 = vmatprep.subr.bf16.mxu0 %v1360
        %3183 = vmatpush1.bf16.msra.mxu0 %v1359
        %3184 = vmatprep.subr.bf16.mxu0 %v1364
        %3185 = vmatpush1.bf16.msra.mxu0 %v1363
        %3186 = vmatprep.subr.bf16.mxu0 %v1368
        %3187 = vmatpush1.bf16.msra.mxu0 %v1367
        %3188 = vmatprep.subr.bf16.mxu0 %v1372
        %3189 = vmatpush1.bf16.msra.mxu0 %v1371
        %3190 = vmatprep.subr.bf16.mxu0 0
        %3191 = vmatpush1.bf16.msra.mxu0 0
        %3192 = vmatprep.subr.bf16.mxu0 0
        %3193 = vmatpush1.bf16.msra.mxu0 0
        %3194 = vmatprep.subr.bf16.mxu0 0
        %3195 = vmatpush1.bf16.msra.mxu0 0
        %3196 = vmatprep.subr.bf16.mxu0 0
        %3197 = vmatpush1.bf16.msra.mxu0 0
        %3198 = vmatprep.subr.bf16.mxu0 0
        %3199 = vmatpush1.bf16.msra.mxu0 0
        %3200 = vmatprep.subr.bf16.mxu0 0
        %3201 = vmatpush1.bf16.msra.mxu0 0
        %3202 = vmatprep.subr.bf16.mxu0 0
        %3203 = vmatpush1.bf16.msra.mxu0 0
        %3204 = vmatprep.subr.bf16.mxu0 0
        %3205 = vmatpush1.bf16.msra.mxu0 0
        %3206 = vmatprep.mubr.bf16.mxu0 0
        %3207 = vmatmul.mubr.bf16.gmra.mrb[0].mxu0 %v3172
        %v3208 = vpop.f32.mrb[0].mxu0
        %v3209 = vadd.f32 0.0, %v3208
        %v3210 = vpop.f32.mrb[0].mxu0
        %v3211 = vadd.f32 0.0, %v3210
        %v3212 = vpop.f32.mrb[0].mxu0
        %v3213 = vpop.f32.mrb[0].mxu0
        %3214 = vdwg.mxu0
        %3215 = vmatprep.subr.bf16.mxu0 %v1346
        %3216 = vmatpush1.bf16.msra.mxu0 %v1345
        %3217 = vmatprep.subr.bf16.mxu0 %v1350
        %3218 = vmatpush1.bf16.msra.mxu0 %v1349
        %3219 = vmatprep.subr.bf16.mxu0 %v1354
        %3220 = vmatpush1.bf16.msra.mxu0 %v1353
        %3221 = vmatprep.subr.bf16.mxu0 %v1358
        %3222 = vmatpush1.bf16.msra.mxu0 %v1357
        %3223 = vmatprep.subr.bf16.mxu0 %v1362
        %3224 = vmatpush1.bf16.msra.mxu0 %v1361
        %3225 = vmatprep.subr.bf16.mxu0 %v1366
        %3226 = vmatpush1.bf16.msra.mxu0 %v1365
        %3227 = vmatprep.subr.bf16.mxu0 %v1370
        %3228 = vmatpush1.bf16.msra.mxu0 %v1369
        %3229 = vmatprep.subr.bf16.mxu0 %v1374
        %3230 = vmatpush1.bf16.msra.mxu0 %v1373
        %3231 = vmatprep.subr.bf16.mxu0 0
        %3232 = vmatpush1.bf16.msra.mxu0 0
        %3233 = vmatprep.subr.bf16.mxu0 0
        %3234 = vmatpush1.bf16.msra.mxu0 0
        %3235 = vmatprep.subr.bf16.mxu0 0
        %3236 = vmatpush1.bf16.msra.mxu0 0
        %3237 = vmatprep.subr.bf16.mxu0 0
        %3238 = vmatpush1.bf16.msra.mxu0 0
        %3239 = vmatprep.subr.bf16.mxu0 0
        %3240 = vmatpush1.bf16.msra.mxu0 0
        %3241 = vmatprep.subr.bf16.mxu0 0
        %3242 = vmatpush1.bf16.msra.mxu0 0
        %3243 = vmatprep.subr.bf16.mxu0 0
        %3244 = vmatpush1.bf16.msra.mxu0 0
        %3245 = vmatprep.subr.bf16.mxu0 0
        %3246 = vmatpush1.bf16.msra.mxu0 0
        %3247 = vmatprep.mubr.bf16.mxu0 0
        %3248 = vmatmul.mubr.bf16.gmra.mrb[0].mxu0 %v3172
        %v3249 = vpop.f32.mrb[0].mxu0
        %v3250 = vadd.f32 0.0, %v3249
        %v3251 = vpop.f32.mrb[0].mxu0
        %v3252 = vadd.f32 0.0, %v3251
        %v3253 = vpop.f32.mrb[0].mxu0
        %v3254 = vpop.f32.mrb[0].mxu0
        %3255 = vdwg.mxu0
        %v3256 = vadd.f32 %v886, %v3209
        %v3257 = vadd.f32 %v888, %v3211
        %v3258 = vadd.f32 %v929, %v3250
        %v3259 = vadd.f32 %v931, %v3252
        %v3260 = vxor.u32 %v3166, 2147483648
        %v3261 = vxor.u32 %v3167, 2147483648
        %v3262 = vxor.u32 %v3168, 2147483648
        %v3263 = vmul.f32 %v3260, 1.442695
        %v3264 = vpow.pop %v3263
        %v3265 = vmul.f32 %v3261, 1.442695
        %v3266 = vpow.pop %v3265
        %v3267 = vmul.f32 %v3262, 1.442695
        %v3268 = vpow.pop %v3267
        %v3269 = vadd.f32 %v3264, 1.0
        %v3270 = vadd.f32 %v3266, 1.0
        %v3271 = vadd.f32 %v3268, 1.0
        %v3272 = vrcp.pop %v3269
        %v3273 = vmul.f32 1.0, %v3272
        %v3274 = vrcp.pop %v3270
        %v3275 = vmul.f32 1.0, %v3274
        %v3276 = vrcp.pop %v3271
        %v3277 = vmul.f32 1.0, %v3276
        %v3278 = vtanh.pop %v3169
        %v3279 = vxor.u32 %v3256, 2147483648
        %v3280 = vxor.u32 %v3257, 2147483648
        %v3281 = vxor.u32 %v3258, 2147483648
        %v3282 = vmul.f32 %v3279, 1.442695
        %v3283 = vpow.pop %v3282
        %v3284 = vmul.f32 %v3280, 1.442695
        %v3285 = vpow.pop %v3284
        %v3286 = vmul.f32 %v3281, 1.442695
        %v3287 = vpow.pop %v3286
        %v3288 = vadd.f32 %v3283, 1.0
        %v3289 = vadd.f32 %v3285, 1.0
        %v3290 = vadd.f32 %v3287, 1.0
        %v3291 = vrcp.pop %v3288
        %v3292 = vmul.f32 1.0, %v3291
        %v3293 = vrcp.pop %v3289
        %v3294 = vmul.f32 1.0, %v3293
        %v3295 = vrcp.pop %v3290
        %v3296 = vmul.f32 1.0, %v3295
        %v3297 = vtanh.pop %v3259
        %v3299 = vrot.slane %v3057, 6
        %v3301 = vmul.f32 %v3275, %v3299
        %v3302 = vmul.f32 %v3273, %v3278
        %v3303 = vadd.f32 %v3301, %v3302
        %v3305 = vrot.slane %v3063, 2
        %v3307 = vmul.f32 %v3294, %v3305
        %v3308 = vmul.f32 %v3292, %v3297
        %v3309 = vadd.f32 %v3307, %v3308
        %v3310 = vtanh.pop %v3303
        %v3311 = vmul.f32 %v3277, %v3310
        %v3312 = vtanh.pop %v3309
        %v3313 = vmul.f32 %v3296, %v3312
        %v3315 = vrot.slane %v3313, 2
        %v3317 = vcombine.high %v3311, %v3315
        %v3319 = vunpack.c.l.s4 1983009808
        %v3320 = vunpack.c.0.s8 %v3319
        %v3321 = vlaneseq
        %v3322 = vshrl.u32 %v3321, 7
        %v3323 = vsub.s32 %v3320, %v3322
        %v3324 = vrot.slane %v3317, %v3323
        %v3325 = vcombine.high %v3324, %v3324
        %3327 = vst [vmem:[%s334] sm:$0xf] %v3325
        %p3328 = scmp.eq.s32.totalorder %s23, 0
        // Predicated region
        $region45: #{lstm_qaac_mac_forward.2} parent=35 // pred_check
          %p3329 = pneg %p3328
        $region46: #{lstm_qaac_mac_forward.2} parent=35 // pred_check_branch
          %3331 = sbr.rel (%p3329) target = $region48
        $region47: #{lstm_qaac_mac_forward.2} parent=35 // pred_region
          %v3334 = vunpack.c.l.s4 1966171168
          %v3335 = vunpack.c.0.s8 %v3334
          %v3336 = vlaneseq
          %v3337 = vshrl.u32 %v3336, 7
          %v3338 = vsub.s32 %v3335, %v3337
          %v3339 = vrot.slane %v1550, %v3338
          %v3340 = vcombine.high %v3339, %v3339
          %v3342 = vunpack.c.l.s4 1966171168
          %v3343 = vunpack.c.0.s8 %v3342
          %v3344 = vlaneseq
          %v3345 = vshrl.u32 %v3344, 7
          %v3346 = vsub.s32 %v3343, %v3345
          %v3347 = vrot.slane %v3339, %v3346
          %v3349 = vunpack.c.l.s4 1966171168
          %v3350 = vunpack.c.0.s8 %v3349
          %v3351 = vlaneseq
          %v3352 = vshrl.u32 %v3351, 7
          %v3353 = vsub.s32 %v3350, %v3352
          %v3354 = vrot.slane %v3340, %v3353
          %v3359 = vunpack.c.l.s4 1966171168
          %v3360 = vunpack.c.0.s8 %v3359
          %v3361 = vlaneseq
          %v3362 = vshrl.u32 %v3361, 7
          %v3363 = vsub.s32 %v3360, %v3362
          %v3364 = vrot.slane %v1805, %v3363
          %v3365 = vcombine.high %v3364, %v3364
          %v3367 = vunpack.c.l.s4 1966171168
          %v3368 = vunpack.c.0.s8 %v3367
          %v3369 = vlaneseq
          %v3370 = vshrl.u32 %v3369, 7
          %v3371 = vsub.s32 %v3368, %v3370
          %v3372 = vrot.slane %v3364, %v3371
          %v3374 = vunpack.c.l.s4 1966171168
          %v3375 = vunpack.c.0.s8 %v3374
          %v3376 = vlaneseq
          %v3377 = vshrl.u32 %v3376, 7
          %v3378 = vsub.s32 %v3375, %v3377
          %v3379 = vrot.slane %v3365, %v3378
          %v3380 = vcombine.high %v3372, %v3372
          %v3381 = vcombine.high %v3379, %v3379
          %v3383 = vcombine.high %v2063, %v2063
          %v3385 = vunpack.c.l.s4 1966171168
          %v3386 = vunpack.c.0.s8 %v3385
          %v3387 = vlaneseq
          %v3388 = vshrl.u32 %v3387, 7
          %v3389 = vsub.s32 %v3386, %v3388
          %v3390 = vrot.slane %v3383, %v3389
          %v3391 = vcombine.high %v3390, %v3390
          %v3393 = vunpack.c.l.s4 1966171168
          %v3394 = vunpack.c.0.s8 %v3393
          %v3395 = vlaneseq
          %v3396 = vshrl.u32 %v3395, 7
          %v3397 = vsub.s32 %v3394, %v3396
          %v3398 = vrot.slane %v3390, %v3397
          %v3400 = vunpack.c.l.s4 1966171168
          %v3401 = vunpack.c.0.s8 %v3400
          %v3402 = vlaneseq
          %v3403 = vshrl.u32 %v3402, 7
          %v3404 = vsub.s32 %v3401, %v3403
          %v3405 = vrot.slane %v3391, %v3404
          %v3407 = vcombine.high %v2309, %v2309
          %v3409 = vunpack.c.l.s4 1966171168
          %v3410 = vunpack.c.0.s8 %v3409
          %v3411 = vlaneseq
          %v3412 = vshrl.u32 %v3411, 7
          %v3413 = vsub.s32 %v3410, %v3412
          %v3414 = vrot.slane %v3407, %v3413
          %v3415 = vcombine.high %v3414, %v3414
          %v3417 = vunpack.c.l.s4 1966171168
          %v3418 = vunpack.c.0.s8 %v3417
          %v3419 = vlaneseq
          %v3420 = vshrl.u32 %v3419, 7
          %v3421 = vsub.s32 %v3418, %v3420
          %v3422 = vrot.slane %v3414, %v3421
          %v3424 = vunpack.c.l.s4 1966171168
          %v3425 = vunpack.c.0.s8 %v3424
          %v3426 = vlaneseq
          %v3427 = vshrl.u32 %v3426, 7
          %v3428 = vsub.s32 %v3425, %v3427
          %v3429 = vrot.slane %v3415, %v3428
          %v3430 = vcombine.high %v3422, %v3422
          %v3431 = vcombine.high %v3429, %v3429
          %v3434 = vunpack.c.l.s4 1966171168
          %v3435 = vunpack.c.0.s8 %v3434
          %v3436 = vlaneseq
          %v3437 = vshrl.u32 %v3436, 7
          %v3438 = vsub.s32 %v3435, %v3437
          %v3439 = vrot.slane %v2552, %v3438
          %v3440 = vcombine.high %v3439, %v3439
          %v3442 = vunpack.c.l.s4 1966171168
          %v3443 = vunpack.c.0.s8 %v3442
          %v3444 = vlaneseq
          %v3445 = vshrl.u32 %v3444, 7
          %v3446 = vsub.s32 %v3443, %v3445
          %v3447 = vrot.slane %v3439, %v3446
          %v3449 = vunpack.c.l.s4 1966171168
          %v3450 = vunpack.c.0.s8 %v3449
          %v3451 = vlaneseq
          %v3452 = vshrl.u32 %v3451, 7
          %v3453 = vsub.s32 %v3450, %v3452
          %v3454 = vrot.slane %v3440, %v3453
          %v3457 = vunpack.c.l.s4 1966171168
          %v3458 = vunpack.c.0.s8 %v3457
          %v3459 = vlaneseq
          %v3460 = vshrl.u32 %v3459, 7
          %v3461 = vsub.s32 %v3458, %v3460
          %v3462 = vrot.slane %v2807, %v3461
          %v3463 = vcombine.high %v3462, %v3462
          %v3465 = vunpack.c.l.s4 1966171168
          %v3466 = vunpack.c.0.s8 %v3465
          %v3467 = vlaneseq
          %v3468 = vshrl.u32 %v3467, 7
          %v3469 = vsub.s32 %v3466, %v3468
          %v3470 = vrot.slane %v3462, %v3469
          %v3472 = vunpack.c.l.s4 1966171168
          %v3473 = vunpack.c.0.s8 %v3472
          %v3474 = vlaneseq
          %v3475 = vshrl.u32 %v3474, 7
          %v3476 = vsub.s32 %v3473, %v3475
          %v3477 = vrot.slane %v3463, %v3476
          %v3478 = vcombine.high %v3470, %v3470
          %v3479 = vcombine.high %v3477, %v3477
          %v3481 = vcombine.high %v3065, %v3065
          %v3483 = vunpack.c.l.s4 1966171168
          %v3484 = vunpack.c.0.s8 %v3483
          %v3485 = vlaneseq
          %v3486 = vshrl.u32 %v3485, 7
          %v3487 = vsub.s32 %v3484, %v3486
          %v3488 = vrot.slane %v3481, %v3487
          %v3489 = vcombine.high %v3488, %v3488
          %v3491 = vunpack.c.l.s4 1966171168
          %v3492 = vunpack.c.0.s8 %v3491
          %v3493 = vlaneseq
          %v3494 = vshrl.u32 %v3493, 7
          %v3495 = vsub.s32 %v3492, %v3494
          %v3496 = vrot.slane %v3488, %v3495
          %v3498 = vunpack.c.l.s4 1966171168
          %v3499 = vunpack.c.0.s8 %v3498
          %v3500 = vlaneseq
          %v3501 = vshrl.u32 %v3500, 7
          %v3502 = vsub.s32 %v3499, %v3501
          %v3503 = vrot.slane %v3489, %v3502
          %v3504 = vcombine.high %v3311, %v3311
          %v3506 = vunpack.c.l.s4 1966171168
          %v3507 = vunpack.c.0.s8 %v3506
          %v3508 = vlaneseq
          %v3509 = vshrl.u32 %v3508, 7
          %v3510 = vsub.s32 %v3507, %v3509
          %v3511 = vrot.slane %v3504, %v3510
          %v3512 = vcombine.high %v3511, %v3511
          %v3514 = vunpack.c.l.s4 1966171168
          %v3515 = vunpack.c.0.s8 %v3514
          %v3516 = vlaneseq
          %v3517 = vshrl.u32 %v3516, 7
          %v3518 = vsub.s32 %v3515, %v3517
          %v3519 = vrot.slane %v3511, %v3518
          %v3521 = vunpack.c.l.s4 1966171168
          %v3522 = vunpack.c.0.s8 %v3521
          %v3523 = vlaneseq
          %v3524 = vshrl.u32 %v3523, 7
          %v3525 = vsub.s32 %v3522, %v3524
          %v3526 = vrot.slane %v3512, %v3525
          %v3527 = vcombine.high %v3519, %v3519
          %v3528 = vcombine.high %v3526, %v3526
          %v3529 = vlaneseq
          %v3530 = vshrl.u32 %v3529, 7
          %v3531 = vsub.s32 0, %v3530
          %v3532 = vrot.slane %v3380, %v3531
          %v3533 = vlaneseq
          %v3534 = vshrl.u32 %v3533, 7
          %v3535 = vsub.s32 0, %v3534
          %v3536 = vrot.slane %v3381, %v3535
          %v3539 = vlaneseq
          %v3540 = vshrl.u32 %v3539, 7
          %v3541 = vsub.s32 0, %v3540
          %v3542 = vrot.slane %v3398, %v3541
          %v3543 = vlaneseq
          %v3544 = vshrl.u32 %v3543, 7
          %v3545 = vsub.s32 0, %v3544
          %v3546 = vrot.slane %v3405, %v3545
          %v3549 = vlaneseq
          %v3550 = vshrl.u32 %v3549, 7
          %v3551 = vsub.s32 0, %v3550
          %v3552 = vrot.slane %v3430, %v3551
          %v3553 = vlaneseq
          %v3554 = vshrl.u32 %v3553, 7
          %v3555 = vsub.s32 0, %v3554
          %v3556 = vrot.slane %v3431, %v3555
          %v3559 = vlaneseq
          %v3560 = vshrl.u32 %v3559, 7
          %v3561 = vsub.s32 0, %v3560
          %v3562 = vrot.slane %v3447, %v3561
          %v3563 = vlaneseq
          %v3564 = vshrl.u32 %v3563, 7
          %v3565 = vsub.s32 0, %v3564
          %v3566 = vrot.slane %v3454, %v3565
          %v3569 = vlaneseq
          %v3570 = vshrl.u32 %v3569, 7
          %v3571 = vsub.s32 0, %v3570
          %v3572 = vrot.slane %v3478, %v3571
          %v3573 = vlaneseq
          %v3574 = vshrl.u32 %v3573, 7
          %v3575 = vsub.s32 0, %v3574
          %v3576 = vrot.slane %v3479, %v3575
          %v3579 = vlaneseq
          %v3580 = vshrl.u32 %v3579, 7
          %v3581 = vsub.s32 0, %v3580
          %v3582 = vrot.slane %v3496, %v3581
          %v3583 = vlaneseq
          %v3584 = vshrl.u32 %v3583, 7
          %v3585 = vsub.s32 0, %v3584
          %v3586 = vrot.slane %v3503, %v3585
          %v3589 = vlaneseq
          %v3590 = vshrl.u32 %v3589, 7
          %v3591 = vsub.s32 0, %v3590
          %v3592 = vrot.slane %v3527, %v3591
          %v3593 = vlaneseq
          %v3594 = vshrl.u32 %v3593, 7
          %v3595 = vsub.s32 0, %v3594
          %v3596 = vrot.slane %v3528, %v3595
          %vm3599 = vcmask 1040384
          %v3600 = vsel %vm3599, %v3347, %v3532
          %v3601 = vsel %vm3599, %v3354, %v3536
          %vm3602 = vcmask 1041408
          %v3603 = vsel %vm3602, %v3600, %v3542
          %v3604 = vsel %vm3602, %v3601, %v3546
          %vm3605 = vcmask 1042432
          %v3606 = vsel %vm3605, %v3603, %v3552
          %v3607 = vsel %vm3605, %v3604, %v3556
          %vm3608 = vcmask 1043456
          %v3609 = vsel %vm3608, %v3606, %v3562
          %v3610 = vsel %vm3608, %v3607, %v3566
          %vm3611 = vcmask 1044480
          %v3612 = vsel %vm3611, %v3609, %v3572
          %v3613 = vsel %vm3611, %v3610, %v3576
          %vm3614 = vcmask 1045504
          %v3615 = vsel %vm3614, %v3612, %v3582
          %v3616 = vsel %vm3614, %v3613, %v3586
          %vm3617 = vcmask 1046528
          %v3618 = vsel %vm3617, %v3615, %v3592
          %v3619 = vsel %vm3617, %v3616, %v3596
          %v3621 = vunpack.c.l.s4 1966171168
          %v3622 = vunpack.c.0.s8 %v3621
          %v3623 = vlaneseq
          %v3624 = vshrl.u32 %v3623, 7
          %v3625 = vsub.s32 %v3622, %v3624
          %v3626 = vrot.slane %v3313, %v3625
          %v3627 = vcombine.high %v3626, %v3626
          %v3629 = vunpack.c.l.s4 1966171168
          %v3630 = vunpack.c.0.s8 %v3629
          %v3631 = vlaneseq
          %v3632 = vshrl.u32 %v3631, 7
          %v3633 = vsub.s32 %v3630, %v3632
          %v3634 = vrot.slane %v3626, %v3633
          %v3636 = vunpack.c.l.s4 1966171168
          %v3637 = vunpack.c.0.s8 %v3636
          %v3638 = vlaneseq
          %v3639 = vshrl.u32 %v3638, 7
          %v3640 = vsub.s32 %v3637, %v3639
          %v3641 = vrot.slane %v3627, %v3640
          %v3646 = vunpack.c.l.s4 1966171168
          %v3647 = vunpack.c.0.s8 %v3646
          %v3648 = vlaneseq
          %v3649 = vshrl.u32 %v3648, 7
          %v3650 = vsub.s32 %v3647, %v3649
          %v3651 = vrot.slane %v3067, %v3650
          %v3652 = vcombine.high %v3651, %v3651
          %v3654 = vunpack.c.l.s4 1966171168
          %v3655 = vunpack.c.0.s8 %v3654
          %v3656 = vlaneseq
          %v3657 = vshrl.u32 %v3656, 7
          %v3658 = vsub.s32 %v3655, %v3657
          %v3659 = vrot.slane %v3651, %v3658
          %v3661 = vunpack.c.l.s4 1966171168
          %v3662 = vunpack.c.0.s8 %v3661
          %v3663 = vlaneseq
          %v3664 = vshrl.u32 %v3663, 7
          %v3665 = vsub.s32 %v3662, %v3664
          %v3666 = vrot.slane %v3652, %v3665
          %v3667 = vcombine.high %v3659, %v3659
          %v3668 = vcombine.high %v3666, %v3666
          %v3670 = vcombine.high %v2809, %v2809
          %v3672 = vunpack.c.l.s4 1966171168
          %v3673 = vunpack.c.0.s8 %v3672
          %v3674 = vlaneseq
          %v3675 = vshrl.u32 %v3674, 7
          %v3676 = vsub.s32 %v3673, %v3675
          %v3677 = vrot.slane %v3670, %v3676
          %v3678 = vcombine.high %v3677, %v3677
          %v3680 = vunpack.c.l.s4 1966171168
          %v3681 = vunpack.c.0.s8 %v3680
          %v3682 = vlaneseq
          %v3683 = vshrl.u32 %v3682, 7
          %v3684 = vsub.s32 %v3681, %v3683
          %v3685 = vrot.slane %v3677, %v3684
          %v3687 = vunpack.c.l.s4 1966171168
          %v3688 = vunpack.c.0.s8 %v3687
          %v3689 = vlaneseq
          %v3690 = vshrl.u32 %v3689, 7
          %v3691 = vsub.s32 %v3688, %v3690
          %v3692 = vrot.slane %v3678, %v3691
          %v3694 = vcombine.high %v2554, %v2554
          %v3696 = vunpack.c.l.s4 1966171168
          %v3697 = vunpack.c.0.s8 %v3696
          %v3698 = vlaneseq
          %v3699 = vshrl.u32 %v3698, 7
          %v3700 = vsub.s32 %v3697, %v3699
          %v3701 = vrot.slane %v3694, %v3700
          %v3702 = vcombine.high %v3701, %v3701
          %v3704 = vunpack.c.l.s4 1966171168
          %v3705 = vunpack.c.0.s8 %v3704
          %v3706 = vlaneseq
          %v3707 = vshrl.u32 %v3706, 7
          %v3708 = vsub.s32 %v3705, %v3707
          %v3709 = vrot.slane %v3701, %v3708
          %v3711 = vunpack.c.l.s4 1966171168
          %v3712 = vunpack.c.0.s8 %v3711
          %v3713 = vlaneseq
          %v3714 = vshrl.u32 %v3713, 7
          %v3715 = vsub.s32 %v3712, %v3714
          %v3716 = vrot.slane %v3702, %v3715
          %v3717 = vcombine.high %v3709, %v3709
          %v3718 = vcombine.high %v3716, %v3716
          %v3721 = vunpack.c.l.s4 1966171168
          %v3722 = vunpack.c.0.s8 %v3721
          %v3723 = vlaneseq
          %v3724 = vshrl.u32 %v3723, 7
          %v3725 = vsub.s32 %v3722, %v3724
          %v3726 = vrot.slane %v2311, %v3725
          %v3727 = vcombine.high %v3726, %v3726
          %v3729 = vunpack.c.l.s4 1966171168
          %v3730 = vunpack.c.0.s8 %v3729
          %v3731 = vlaneseq
          %v3732 = vshrl.u32 %v3731, 7
          %v3733 = vsub.s32 %v3730, %v3732
          %v3734 = vrot.slane %v3726, %v3733
          %v3736 = vunpack.c.l.s4 1966171168
          %v3737 = vunpack.c.0.s8 %v3736
          %v3738 = vlaneseq
          %v3739 = vshrl.u32 %v3738, 7
          %v3740 = vsub.s32 %v3737, %v3739
          %v3741 = vrot.slane %v3727, %v3740
          %v3744 = vunpack.c.l.s4 1966171168
          %v3745 = vunpack.c.0.s8 %v3744
          %v3746 = vlaneseq
          %v3747 = vshrl.u32 %v3746, 7
          %v3748 = vsub.s32 %v3745, %v3747
          %v3749 = vrot.slane %v2065, %v3748
          %v3750 = vcombine.high %v3749, %v3749
          %v3752 = vunpack.c.l.s4 1966171168
          %v3753 = vunpack.c.0.s8 %v3752
          %v3754 = vlaneseq
          %v3755 = vshrl.u32 %v3754, 7
          %v3756 = vsub.s32 %v3753, %v3755
          %v3757 = vrot.slane %v3749, %v3756
          %v3759 = vunpack.c.l.s4 1966171168
          %v3760 = vunpack.c.0.s8 %v3759
          %v3761 = vlaneseq
          %v3762 = vshrl.u32 %v3761, 7
          %v3763 = vsub.s32 %v3760, %v3762
          %v3764 = vrot.slane %v3750, %v3763
          %v3765 = vcombine.high %v3757, %v3757
          %v3766 = vcombine.high %v3764, %v3764
          %v3768 = vcombine.high %v1807, %v1807
          %v3770 = vunpack.c.l.s4 1966171168
          %v3771 = vunpack.c.0.s8 %v3770
          %v3772 = vlaneseq
          %v3773 = vshrl.u32 %v3772, 7
          %v3774 = vsub.s32 %v3771, %v3773
          %v3775 = vrot.slane %v3768, %v3774
          %v3776 = vcombine.high %v3775, %v3775
          %v3778 = vunpack.c.l.s4 1966171168
          %v3779 = vunpack.c.0.s8 %v3778
          %v3780 = vlaneseq
          %v3781 = vshrl.u32 %v3780, 7
          %v3782 = vsub.s32 %v3779, %v3781
          %v3783 = vrot.slane %v3775, %v3782
          %v3785 = vunpack.c.l.s4 1966171168
          %v3786 = vunpack.c.0.s8 %v3785
          %v3787 = vlaneseq
          %v3788 = vshrl.u32 %v3787, 7
          %v3789 = vsub.s32 %v3786, %v3788
          %v3790 = vrot.slane %v3776, %v3789
          %v3792 = vcombine.high %v1552, %v1552
          %v3794 = vunpack.c.l.s4 1966171168
          %v3795 = vunpack.c.0.s8 %v3794
          %v3796 = vlaneseq
          %v3797 = vshrl.u32 %v3796, 7
          %v3798 = vsub.s32 %v3795, %v3797
          %v3799 = vrot.slane %v3792, %v3798
          %v3800 = vcombine.high %v3799, %v3799
          %v3802 = vunpack.c.l.s4 1966171168
          %v3803 = vunpack.c.0.s8 %v3802
          %v3804 = vlaneseq
          %v3805 = vshrl.u32 %v3804, 7
          %v3806 = vsub.s32 %v3803, %v3805
          %v3807 = vrot.slane %v3799, %v3806
          %v3809 = vunpack.c.l.s4 1966171168
          %v3810 = vunpack.c.0.s8 %v3809
          %v3811 = vlaneseq
          %v3812 = vshrl.u32 %v3811, 7
          %v3813 = vsub.s32 %v3810, %v3812
          %v3814 = vrot.slane %v3800, %v3813
          %v3815 = vcombine.high %v3807, %v3807
          %v3816 = vcombine.high %v3814, %v3814
          %v3817 = vlaneseq
          %v3818 = vshrl.u32 %v3817, 7
          %v3819 = vsub.s32 0, %v3818
          %v3820 = vrot.slane %v3667, %v3819
          %v3821 = vlaneseq
          %v3822 = vshrl.u32 %v3821, 7
          %v3823 = vsub.s32 0, %v3822
          %v3824 = vrot.slane %v3668, %v3823
          %v3827 = vlaneseq
          %v3828 = vshrl.u32 %v3827, 7
          %v3829 = vsub.s32 0, %v3828
          %v3830 = vrot.slane %v3685, %v3829
          %v3831 = vlaneseq
          %v3832 = vshrl.u32 %v3831, 7
          %v3833 = vsub.s32 0, %v3832
          %v3834 = vrot.slane %v3692, %v3833
          %v3837 = vlaneseq
          %v3838 = vshrl.u32 %v3837, 7
          %v3839 = vsub.s32 0, %v3838
          %v3840 = vrot.slane %v3717, %v3839
          %v3841 = vlaneseq
          %v3842 = vshrl.u32 %v3841, 7
          %v3843 = vsub.s32 0, %v3842
          %v3844 = vrot.slane %v3718, %v3843
          %v3847 = vlaneseq
          %v3848 = vshrl.u32 %v3847, 7
          %v3849 = vsub.s32 0, %v3848
          %v3850 = vrot.slane %v3734, %v3849
          %v3851 = vlaneseq
          %v3852 = vshrl.u32 %v3851, 7
          %v3853 = vsub.s32 0, %v3852
          %v3854 = vrot.slane %v3741, %v3853
          %v3857 = vlaneseq
          %v3858 = vshrl.u32 %v3857, 7
          %v3859 = vsub.s32 0, %v3858
          %v3860 = vrot.slane %v3765, %v3859
          %v3861 = vlaneseq
          %v3862 = vshrl.u32 %v3861, 7
          %v3863 = vsub.s32 0, %v3862
          %v3864 = vrot.slane %v3766, %v3863
          %v3867 = vlaneseq
          %v3868 = vshrl.u32 %v3867, 7
          %v3869 = vsub.s32 0, %v3868
          %v3870 = vrot.slane %v3783, %v3869
          %v3871 = vlaneseq
          %v3872 = vshrl.u32 %v3871, 7
          %v3873 = vsub.s32 0, %v3872
          %v3874 = vrot.slane %v3790, %v3873
          %v3877 = vlaneseq
          %v3878 = vshrl.u32 %v3877, 7
          %v3879 = vsub.s32 0, %v3878
          %v3880 = vrot.slane %v3815, %v3879
          %v3881 = vlaneseq
          %v3882 = vshrl.u32 %v3881, 7
          %v3883 = vsub.s32 0, %v3882
          %v3884 = vrot.slane %v3816, %v3883
          %v3887 = vsel %vm3599, %v3634, %v3820
          %v3888 = vsel %vm3599, %v3641, %v3824
          %v3889 = vsel %vm3602, %v3887, %v3830
          %v3890 = vsel %vm3602, %v3888, %v3834
          %v3891 = vsel %vm3605, %v3889, %v3840
          %v3892 = vsel %vm3605, %v3890, %v3844
          %v3893 = vsel %vm3608, %v3891, %v3850
          %v3894 = vsel %vm3608, %v3892, %v3854
          %v3895 = vsel %vm3611, %v3893, %v3860
          %v3896 = vsel %vm3611, %v3894, %v3864
          %v3897 = vsel %vm3614, %v3895, %v3870
          %v3898 = vsel %vm3614, %v3896, %v3874
          %v3899 = vsel %vm3617, %v3897, %v3880
          %v3900 = vsel %vm3617, %v3898, %v3884
          %3901 = vst [vmem:[%s329] sm:$0xff] %v3618
          %3902 = vst [vmem:[%s329 + $0x8] sm:$0xff] %v3899
          %3903 = vst [vmem:[%s329 + $0x10] sm:$0xff] %v3619
          %3904 = vst [vmem:[%s329 + $0x18] sm:$0xff] %v3900
        $region48: #{lstm_qaac_mac_forward.2} parent=35 // pred_fallthru
          _
        %p3905 = scmp.lt.s32.totalorder %s23, 1
        %s3906 = scalar_select %p3905, %s23, 1
        %s3907 = smul.addr %s3906, 4
        %s3908 = smul.addr %s3907, 8
        %s3909 = scalar_lea.vmem %s4, %s3908
        %p3910 = scmp.lt.s32.totalorder %s23, 1
        %s3911 = scalar_select %p3910, %s23, 1
        %s3912 = smul.addr %s3911, 2
        %s3913 = smul.addr %s3912, 2
        %s3914 = scalar_lea.vmem %s5, %s3913
        // Predicated region
        $region49: #{lstm_qaac_mac_forward.2} parent=35 // pred_check
          %p3915 = pneg %p145
        $region50: #{lstm_qaac_mac_forward.2} parent=35 // pred_check_branch
          %3917 = sbr.rel (%p3915) target = $region52
        $region51: #{lstm_qaac_mac_forward.2} parent=35 // pred_region
          _
        $region52: #{lstm_qaac_mac_forward.2} parent=35 // pred_fallthru
          _
        // Predicated region
        $region53: #{lstm_qaac_mac_forward.2} parent=35 // pred_check
          %p3918 = pneg %p171
        $region54: #{lstm_qaac_mac_forward.2} parent=35 // pred_check_branch
          %3920 = sbr.rel (%p3918) target = $region56
        $region55: #{lstm_qaac_mac_forward.2} parent=35 // pred_region
          _
        $region56: #{lstm_qaac_mac_forward.2} parent=35 // pred_fallthru
          _
      $region36: #{lstm_qaac_mac_forward.2} parent=5 // pred_fallthru
        _
      %p3921 = scmp.le.s32.totalorder 2, %s18
      // Predicated region
      $region57: #{lstm_qaac_mac_forward.2} parent=5 // pred_check
        %p3922 = pneg %p3921
      $region58: #{lstm_qaac_mac_forward.2} parent=5 // pred_check_branch
        %3924 = sbr.rel (%p3922) target = $region60
      $region59: #{lstm_qaac_mac_forward.2} parent=5 // pred_region
        %s3925 = ssub.s32 %s18, 2
        // Predicated region
        $region61: #{lstm_qaac_mac_forward.2} parent=59 // pred_check
          %p3926 = pneg %p151
        $region62: #{lstm_qaac_mac_forward.2} parent=59 // pred_check_branch
          %3928 = sbr.rel (%p3926) target = $region64
        $region63: #{lstm_qaac_mac_forward.2} parent=59 // pred_region
          %p3929 = scmp.lt.s32.totalorder %s24, 1
          %s3930 = scalar_select %p3929, %s24, 1
          %s3931 = smul.addr %s3930, 4
          %s3932 = smul.addr %s3931, 8
          %s3933 = scalar_lea.vmem %s4, %s3932
        $region64: #{lstm_qaac_mac_forward.2} parent=59 // pred_fallthru
          _
        // Predicated region
        $region65: #{lstm_qaac_mac_forward.2} parent=59 // pred_check
          %p3934 = pneg %p177
        $region66: #{lstm_qaac_mac_forward.2} parent=59 // pred_check_branch
          %3936 = sbr.rel (%p3934) target = $region68
        $region67: #{lstm_qaac_mac_forward.2} parent=59 // pred_region
          %p3937 = scmp.lt.s32.totalorder %s24, 1
          %s3938 = scalar_select %p3937, %s24, 1
          %s3939 = smul.addr %s3938, 2
          %s3940 = smul.addr %s3939, 2
          %s3941 = scalar_lea.vmem %s5, %s3940
        $region68: #{lstm_qaac_mac_forward.2} parent=59 // pred_fallthru
          _
      $region60: #{lstm_qaac_mac_forward.2} parent=5 // pred_fallthru
        _
    $region6: #{lstm_qaac_mac_forward.2} parent=1 // loop_footer
      %s22 = sadd.s32 1, %s18
    $region7: #{lstm_qaac_mac_forward.2} parent=1 // loop_footer_branch
      %17 = sbr.rel target = $region3
    $region8: #{lstm_qaac_mac_forward.2} parent=1 // loop_exit
      _
    %3942 = vsyncpa [#allocation3], 1
    %s3943 = scalar_lea.sflag [#allocation3], 1
    %3944 = vsyncpa %s3943, 1
    %3945 = vsyncpa [#allocation5], 1
    %s3946 = scalar_lea.sflag [#allocation5], 1
    %3947 = vsyncpa %s3946, 1

// kernel: lstm_qaac_mac_forward.3
$region0: #{lstm_qaac_mac_forward.3}
  #allocation0 [shape = 'u32[]', space=smem, size = 0x4, offset = 0x4, fixed_abs, tag = 'smem constant byte address 0x4 - core index']
  #allocation1 [shape = 'u32[144,128]{1,0:T(1,128)}', space=vmem, size = 0x12000, scoped, tag = 'internal scratch']
  %s0 = inlined_call_operand.vmem [shape: f32[2,16,128], index: 0, kind: input, shape index: {}]
  %s1 = inlined_call_operand.vmem [shape: f32[2,2,8,256], index: 1, kind: input, shape index: {}]
  %s2 = inlined_call_operand.vmem [shape: f32[2,2,256], index: 2, kind: input, shape index: {}]
  %s3 = inlined_call_operand.vmem [shape: bf16[11,128,128], index: 3, kind: input, shape index: {}]
  %s4 = inlined_call_operand.vmem [shape: bf16[6,256,128], index: 4, kind: input, shape index: {}]
  %s5 = inlined_call_operand.vmem [shape: f32[16,128], index: 5, kind: input, shape index: {}]
  %s6 = inlined_call_operand.vmem [shape: f32[2,128], index: 6, kind: output, shape index: {}]
  %s7 = sld [smem:[#allocation0]]
  $region34: #{lstm_qaac_mac_forward.3} parent=0
    _
  %s9 = ssub.s32 1, %s7
  %s10 = scalar_select 0, %s9, %s7
  // Predicated region
  $region2: #{lstm_qaac_mac_forward.3} parent=0 // pred_check
    _
  $region3: #{lstm_qaac_mac_forward.3} parent=0 // pred_check_branch
    %12 = sbr.rel (0) target = $region5
  $region4: #{lstm_qaac_mac_forward.3} parent=0 // pred_region
    _
  $region5: #{lstm_qaac_mac_forward.3} parent=0 // pred_fallthru
    _
  // Predicated region
  $region6: #{lstm_qaac_mac_forward.3} parent=0 // pred_check
    _
  $region7: #{lstm_qaac_mac_forward.3} parent=0 // pred_check_branch
    %14 = sbr.rel (0) target = $region9
  $region8: #{lstm_qaac_mac_forward.3} parent=0 // pred_region
    _
  $region9: #{lstm_qaac_mac_forward.3} parent=0 // pred_fallthru
    _
  // Predicated region
  $region10: #{lstm_qaac_mac_forward.3} parent=0 // pred_check
    _
  $region11: #{lstm_qaac_mac_forward.3} parent=0 // pred_check_branch
    %16 = sbr.rel (0) target = $region13
  $region12: #{lstm_qaac_mac_forward.3} parent=0 // pred_region
    _
  $region13: #{lstm_qaac_mac_forward.3} parent=0 // pred_fallthru
    _
  // Predicated region
  $region14: #{lstm_qaac_mac_forward.3} parent=0 // pred_check
    _
  $region15: #{lstm_qaac_mac_forward.3} parent=0 // pred_check_branch
    %18 = sbr.rel (0) target = $region17
  $region16: #{lstm_qaac_mac_forward.3} parent=0 // pred_region
    _
  $region17: #{lstm_qaac_mac_forward.3} parent=0 // pred_fallthru
    _
  // Predicated region
  $region18: #{lstm_qaac_mac_forward.3} parent=0 // pred_check
    _
  $region19: #{lstm_qaac_mac_forward.3} parent=0 // pred_check_branch
    %20 = sbr.rel (0) target = $region21
  $region20: #{lstm_qaac_mac_forward.3} parent=0 // pred_region
    _
  $region21: #{lstm_qaac_mac_forward.3} parent=0 // pred_fallthru
    _
  // Predicated region
  $region22: #{lstm_qaac_mac_forward.3} parent=0 // pred_check
    _
  $region23: #{lstm_qaac_mac_forward.3} parent=0 // pred_check_branch
    %22 = sbr.rel (0) target = $region25
  $region24: #{lstm_qaac_mac_forward.3} parent=0 // pred_region
    _
  $region25: #{lstm_qaac_mac_forward.3} parent=0 // pred_fallthru
    _
  %v24 = vld [vmem:[%s0] sm:$0xff]
  %v25 = vld [vmem:[%s0 + $0x8] sm:$0xff]
  %v26 = vld [vmem:[%s0 + $0x10] sm:$0xff]
  %v27 = vld [vmem:[%s0 + $0x18] sm:$0xff]
  %v28 = vld [vmem:[%s1] sm:$0xff]
  %v29 = vld [vmem:[%s1 + $0x8] sm:$0xff]
  %v30 = vld [vmem:[%s1 + $0x10] sm:$0xff]
  %v31 = vld [vmem:[%s1 + $0x18] sm:$0xff]
  %v32 = vld [vmem:[%s2] sm:$0xf]
  %s33 = scalar_lea.vmem %s2, 4
  %v34 = vld [vmem:[%s33] sm:$0xf]
  %v35 = vld [vmem:[%s5] sm:$0xff]
  %v36 = vld [vmem:[%s5 + $0x8] sm:$0xff]
  %v37 = vld [vmem:[%s3] sm:$0xf]
  %v38 = vld [vmem:[%s3 + $0x4] sm:$0xf]
  %v39 = vld [vmem:[%s3 + $0x8] sm:$0xf]
  %v40 = vld [vmem:[%s3 + $0xc] sm:$0xf]
  %v41 = vld [vmem:[%s3 + $0x10] sm:$0xf]
  %v42 = vld [vmem:[%s3 + $0x14] sm:$0xf]
  %v43 = vld [vmem:[%s3 + $0x18] sm:$0xf]
  %v44 = vld [vmem:[%s3 + $0x1c] sm:$0xf]
  %v45 = vld [vmem:[%s3 + $0x20] sm:$0xf]
  %v46 = vld [vmem:[%s3 + $0x24] sm:$0xf]
  %v47 = vld [vmem:[%s3 + $0x28] sm:$0xf]
  %v48 = vld [vmem:[%s3 + $0x2c] sm:$0xf]
  %v49 = vld [vmem:[%s3 + $0x30] sm:$0xf]
  %v50 = vld [vmem:[%s3 + $0x34] sm:$0xf]
  %v51 = vld [vmem:[%s3 + $0x38] sm:$0xf]
  %v52 = vld [vmem:[%s3 + $0x3c] sm:$0xf]
  %v53 = vpack.c.bf16 %v25, %v24
  %v54 = vpack.c.bf16 %v27, %v26
  %v55 = vlaneseq
  %v56 = vshrl.u32 %v55, 7
  %v57 = vsub.s32 0, %v56
  %v58 = vrot.slane %v35, %v57
  %v75 = vunpack.c.l.b16 %v37
  %v76 = vunpack.c.l.b16 %v38
  %v77 = vunpack.c.l.b16 %v39
  %v78 = vunpack.c.l.b16 %v40
  %v79 = vunpack.c.l.b16 %v41
  %v80 = vunpack.c.l.b16 %v42
  %v81 = vunpack.c.l.b16 %v43
  %v82 = vunpack.c.l.b16 %v44
  %v83 = vunpack.c.l.b16 %v45
  %v84 = vunpack.c.l.b16 %v46
  %v85 = vunpack.c.l.b16 %v47
  %v86 = vunpack.c.l.b16 %v48
  %v87 = vunpack.c.l.b16 %v49
  %v88 = vunpack.c.l.b16 %v50
  %v89 = vunpack.c.l.b16 %v51
  %v90 = vunpack.c.l.b16 %v52
  %v91 = vpack.c.b16 %v76, %v75
  %v92 = vpack.c.b16 %v78, %v77
  %v93 = vpack.c.b16 %v80, %v79
  %v94 = vpack.c.b16 %v82, %v81
  %v95 = vpack.c.b16 %v84, %v83
  %v96 = vpack.c.b16 %v86, %v85
  %v97 = vpack.c.b16 %v88, %v87
  %v98 = vpack.c.b16 %v90, %v89
  %107 = vmatprep.subr.bf16.mxu0 0
  %108 = vmatpush1.bf16.msra.mxu0 %v91
  %109 = vmatprep.subr.bf16.mxu0 0
  %110 = vmatpush1.bf16.msra.mxu0 %v92
  %111 = vmatprep.subr.bf16.mxu0 0
  %112 = vmatpush1.bf16.msra.mxu0 %v93
  %113 = vmatprep.subr.bf16.mxu0 0
  %114 = vmatpush1.bf16.msra.mxu0 %v94
  %115 = vmatprep.subr.bf16.mxu0 0
  %116 = vmatpush1.bf16.msra.mxu0 %v95
  %117 = vmatprep.subr.bf16.mxu0 0
  %118 = vmatpush1.bf16.msra.mxu0 %v96
  %119 = vmatprep.subr.bf16.mxu0 0
  %120 = vmatpush1.bf16.msra.mxu0 %v97
  %121 = vmatprep.subr.bf16.mxu0 0
  %122 = vmatpush1.bf16.msra.mxu0 %v98
  %123 = vmatprep.subr.bf16.mxu0 0
  %124 = vmatpush1.bf16.msra.mxu0 0
  %125 = vmatprep.subr.bf16.mxu0 0
  %126 = vmatpush1.bf16.msra.mxu0 0
  %127 = vmatprep.subr.bf16.mxu0 0
  %128 = vmatpush1.bf16.msra.mxu0 0
  %129 = vmatprep.subr.bf16.mxu0 0
  %130 = vmatpush1.bf16.msra.mxu0 0
  %131 = vmatprep.subr.bf16.mxu0 0
  %132 = vmatpush1.bf16.msra.mxu0 0
  %133 = vmatprep.subr.bf16.mxu0 0
  %134 = vmatpush1.bf16.msra.mxu0 0
  %135 = vmatprep.subr.bf16.mxu0 0
  %136 = vmatpush1.bf16.msra.mxu0 0
  %137 = vmatprep.subr.bf16.mxu0 0
  %138 = vmatpush1.bf16.msra.mxu0 0
  %139 = vmatprep.mubr.bf16.mxu0 0
  %140 = vmatmul.mubr.bf16.gmra.mrb[0].mxu0 %v53
  %v141 = vpop.f32.mrb[0].mxu0
  %v142 = vadd.f32 %v58, %v141
  %v143 = vpop.f32.mrb[0].mxu0
  %v144 = vpop.f32.mrb[0].mxu0
  %v145 = vadd.f32 %v58, %v144
  %v146 = vpop.f32.mrb[0].mxu0
  %147 = vmatprep.mubr.bf16.mxu0 0
  %148 = vmatmul.mubr.bf16.gmra.mrb[0].mxu0 %v54
  %v149 = vpop.f32.mrb[0].mxu0
  %v150 = vadd.f32 %v58, %v149
  %v151 = vpop.f32.mrb[0].mxu0
  %v152 = vpop.f32.mrb[0].mxu0
  %v153 = vadd.f32 %v58, %v152
  %v154 = vpop.f32.mrb[0].mxu0
  %155 = vdwg.mxu0
  %vm156 = vcmp.gt.f32.partialorder %v142, 0.0
  %vm157 = vcmp.gt.f32.partialorder %v145, 0.0
  %vm158 = vcmp.gt.f32.partialorder %v150, 0.0
  %vm159 = vcmp.gt.f32.partialorder %v153, 0.0
  %v160 = vmin.f32 %v142, 0.0
  %v161 = vmin.f32 %v145, 0.0
  %v162 = vmin.f32 %v150, 0.0
  %v163 = vmin.f32 %v153, 0.0
  %v164 = vmul.f32 %v160, 1.442695
  %v165 = vpow.pop %v164
  %v166 = vmul.f32 %v161, 1.442695
  %v167 = vpow.pop %v166
  %v168 = vmul.f32 %v162, 1.442695
  %v169 = vpow.pop %v168
  %v170 = vmul.f32 %v163, 1.442695
  %v171 = vpow.pop %v170
  %v172 = vsub.f32 %v165, 1.0
  %v173 = vsub.f32 %v167, 1.0
  %v174 = vsub.f32 %v169, 1.0
  %v175 = vsub.f32 %v171, 1.0
  %v176 = vsel %vm156, %v142, %v172
  %v177 = vsel %vm157, %v145, %v173
  %v178 = vsel %vm158, %v150, %v174
  %v179 = vsel %vm159, %v153, %v175
  %s180 = scalar_lea.vmem %s3, 64
  %v181 = vld [vmem:[%s180] sm:$0xf]
  %v182 = vld [vmem:[%s180 + $0x4] sm:$0xf]
  %v183 = vld [vmem:[%s180 + $0x8] sm:$0xf]
  %v184 = vld [vmem:[%s180 + $0xc] sm:$0xf]
  %v185 = vld [vmem:[%s180 + $0x10] sm:$0xf]
  %v186 = vld [vmem:[%s180 + $0x14] sm:$0xf]
  %v187 = vld [vmem:[%s180 + $0x18] sm:$0xf]
  %v188 = vld [vmem:[%s180 + $0x1c] sm:$0xf]
  %v189 = vld [vmem:[%s180 + $0x20] sm:$0xf]
  %v190 = vld [vmem:[%s180 + $0x24] sm:$0xf]
  %v191 = vld [vmem:[%s180 + $0x28] sm:$0xf]
  %v192 = vld [vmem:[%s180 + $0x2c] sm:$0xf]
  %v193 = vld [vmem:[%s180 + $0x30] sm:$0xf]
  %v194 = vld [vmem:[%s180 + $0x34] sm:$0xf]
  %v195 = vld [vmem:[%s180 + $0x38] sm:$0xf]
  %v196 = vld [vmem:[%s180 + $0x3c] sm:$0xf]
  %v197 = vpack.c.bf16 %v177, %v176
  %v198 = vpack.c.bf16 %v179, %v178
  %v199 = vlaneseq
  %v200 = vshrl.u32 %v199, 7
  %v201 = vsub.s32 1, %v200
  %v202 = vrot.slane %v35, %v201
  %v219 = vunpack.c.l.b16 %v181
  %v220 = vunpack.c.l.b16 %v182
  %v221 = vunpack.c.l.b16 %v183
  %v222 = vunpack.c.l.b16 %v184
  %v223 = vunpack.c.l.b16 %v185
  %v224 = vunpack.c.l.b16 %v186
  %v225 = vunpack.c.l.b16 %v187
  %v226 = vunpack.c.l.b16 %v188
  %v227 = vunpack.c.l.b16 %v189
  %v228 = vunpack.c.l.b16 %v190
  %v229 = vunpack.c.l.b16 %v191
  %v230 = vunpack.c.l.b16 %v192
  %v231 = vunpack.c.l.b16 %v193
  %v232 = vunpack.c.l.b16 %v194
  %v233 = vunpack.c.l.b16 %v195
  %v234 = vunpack.c.l.b16 %v196
  %v235 = vpack.c.b16 %v220, %v219
  %v236 = vpack.c.b16 %v222, %v221
  %v237 = vpack.c.b16 %v224, %v223
  %v238 = vpack.c.b16 %v226, %v225
  %v239 = vpack.c.b16 %v228, %v227
  %v240 = vpack.c.b16 %v230, %v229
  %v241 = vpack.c.b16 %v232, %v231
  %v242 = vpack.c.b16 %v234, %v233
  %251 = vmatprep.subr.bf16.mxu0 0
  %252 = vmatpush1.bf16.msra.mxu0 %v235
  %253 = vmatprep.subr.bf16.mxu0 0
  %254 = vmatpush1.bf16.msra.mxu0 %v236
  %255 = vmatprep.subr.bf16.mxu0 0
  %256 = vmatpush1.bf16.msra.mxu0 %v237
  %257 = vmatprep.subr.bf16.mxu0 0
  %258 = vmatpush1.bf16.msra.mxu0 %v238
  %259 = vmatprep.subr.bf16.mxu0 0
  %260 = vmatpush1.bf16.msra.mxu0 %v239
  %261 = vmatprep.subr.bf16.mxu0 0
  %262 = vmatpush1.bf16.msra.mxu0 %v240
  %263 = vmatprep.subr.bf16.mxu0 0
  %264 = vmatpush1.bf16.msra.mxu0 %v241
  %265 = vmatprep.subr.bf16.mxu0 0
  %266 = vmatpush1.bf16.msra.mxu0 %v242
  %267 = vmatprep.subr.bf16.mxu0 0
  %268 = vmatpush1.bf16.msra.mxu0 0
  %269 = vmatprep.subr.bf16.mxu0 0
  %270 = vmatpush1.bf16.msra.mxu0 0
  %271 = vmatprep.subr.bf16.mxu0 0
  %272 = vmatpush1.bf16.msra.mxu0 0
  %273 = vmatprep.subr.bf16.mxu0 0
  %274 = vmatpush1.bf16.msra.mxu0 0
  %275 = vmatprep.subr.bf16.mxu0 0
  %276 = vmatpush1.bf16.msra.mxu0 0
  %277 = vmatprep.subr.bf16.mxu0 0
  %278 = vmatpush1.bf16.msra.mxu0 0
  %279 = vmatprep.subr.bf16.mxu0 0
  %280 = vmatpush1.bf16.msra.mxu0 0
  %281 = vmatprep.subr.bf16.mxu0 0
  %282 = vmatpush1.bf16.msra.mxu0 0
  %283 = vmatprep.mubr.bf16.mxu0 0
  %284 = vmatmul.mubr.bf16.gmra.mrb[0].mxu0 %v197
  %v285 = vpop.f32.mrb[0].mxu0
  %v286 = vadd.f32 %v202, %v285
  %v287 = vpop.f32.mrb[0].mxu0
  %v288 = vpop.f32.mrb[0].mxu0
  %v289 = vadd.f32 %v202, %v288
  %v290 = vpop.f32.mrb[0].mxu0
  %291 = vmatprep.mubr.bf16.mxu0 0
  %292 = vmatmul.mubr.bf16.gmra.mrb[0].mxu0 %v198
  %v293 = vpop.f32.mrb[0].mxu0
  %v294 = vadd.f32 %v202, %v293
  %v295 = vpop.f32.mrb[0].mxu0
  %v296 = vpop.f32.mrb[0].mxu0
  %v297 = vadd.f32 %v202, %v296
  %v298 = vpop.f32.mrb[0].mxu0
  %299 = vdwg.mxu0
  %vm300 = vcmp.gt.f32.partialorder %v286, 0.0
  %vm301 = vcmp.gt.f32.partialorder %v289, 0.0
  %vm302 = vcmp.gt.f32.partialorder %v294, 0.0
  %vm303 = vcmp.gt.f32.partialorder %v297, 0.0
  %v304 = vmin.f32 %v286, 0.0
  %v305 = vmin.f32 %v289, 0.0
  %v306 = vmin.f32 %v294, 0.0
  %v307 = vmin.f32 %v297, 0.0
  %v308 = vmul.f32 %v304, 1.442695
  %v309 = vpow.pop %v308
  %v310 = vmul.f32 %v305, 1.442695
  %v311 = vpow.pop %v310
  %v312 = vmul.f32 %v306, 1.442695
  %v313 = vpow.pop %v312
  %v314 = vmul.f32 %v307, 1.442695
  %v315 = vpow.pop %v314
  %v316 = vsub.f32 %v309, 1.0
  %v317 = vsub.f32 %v311, 1.0
  %v318 = vsub.f32 %v313, 1.0
  %v319 = vsub.f32 %v315, 1.0
  %v320 = vsel %vm300, %v286, %v316
  %v321 = vsel %vm301, %v289, %v317
  %v322 = vsel %vm302, %v294, %v318
  %v323 = vsel %vm303, %v297, %v319
  %v324 = vld [vmem:[%s4] sm:$0xf]
  %v325 = vld [vmem:[%s4 + $0x4] sm:$0xf]
  %v326 = vld [vmem:[%s4 + $0x8] sm:$0xf]
  %v327 = vld [vmem:[%s4 + $0xc] sm:$0xf]
  %v328 = vld [vmem:[%s4 + $0x10] sm:$0xf]
  %v329 = vld [vmem:[%s4 + $0x14] sm:$0xf]
  %v330 = vld [vmem:[%s4 + $0x18] sm:$0xf]
  %v331 = vld [vmem:[%s4 + $0x1c] sm:$0xf]
  %v332 = vld [vmem:[%s4 + $0x20] sm:$0xf]
  %v333 = vld [vmem:[%s4 + $0x24] sm:$0xf]
  %v334 = vld [vmem:[%s4 + $0x28] sm:$0xf]
  %v335 = vld [vmem:[%s4 + $0x2c] sm:$0xf]
  %v336 = vld [vmem:[%s4 + $0x30] sm:$0xf]
  %v337 = vld [vmem:[%s4 + $0x34] sm:$0xf]
  %v338 = vld [vmem:[%s4 + $0x38] sm:$0xf]
  %v339 = vld [vmem:[%s4 + $0x3c] sm:$0xf]
  %v340 = vld [vmem:[%s4 + $0x40] sm:$0xf]
  %v341 = vld [vmem:[%s4 + $0x44] sm:$0xf]
  %v342 = vld [vmem:[%s4 + $0x48] sm:$0xf]
  %v343 = vld [vmem:[%s4 + $0x4c] sm:$0xf]
  %v344 = vld [vmem:[%s4 + $0x50] sm:$0xf]
  %v345 = vld [vmem:[%s4 + $0x54] sm:$0xf]
  %v346 = vld [vmem:[%s4 + $0x58] sm:$0xf]
  %v347 = vld [vmem:[%s4 + $0x5c] sm:$0xf]
  %v348 = vld [vmem:[%s4 + $0x60] sm:$0xf]
  %v349 = vld [vmem:[%s4 + $0x64] sm:$0xf]
  %v350 = vld [vmem:[%s4 + $0x68] sm:$0xf]
  %v351 = vld [vmem:[%s4 + $0x6c] sm:$0xf]
  %v352 = vld [vmem:[%s4 + $0x70] sm:$0xf]
  %v353 = vld [vmem:[%s4 + $0x74] sm:$0xf]
  %v354 = vld [vmem:[%s4 + $0x78] sm:$0xf]
  %v355 = vld [vmem:[%s4 + $0x7c] sm:$0xf]
  %v356 = vpack.c.bf16 %v30, %v28
  %v357 = vpack.c.bf16 %v31, %v29
  %v358 = vlaneseq
  %v359 = vshrl.u32 %v358, 7
  %v360 = vsub.s32 2, %v359
  %v361 = vrot.slane %v35, %v360
  %v394 = vunpack.c.l.b16 %v324
  %v395 = vunpack.c.l.b16 %v325
  %v396 = vunpack.c.l.b16 %v326
  %v397 = vunpack.c.l.b16 %v327
  %v398 = vunpack.c.l.b16 %v328
  %v399 = vunpack.c.l.b16 %v329
  %v400 = vunpack.c.l.b16 %v330
  %v401 = vunpack.c.l.b16 %v331
  %v402 = vunpack.c.l.b16 %v332
  %v403 = vunpack.c.l.b16 %v333
  %v404 = vunpack.c.l.b16 %v334
  %v405 = vunpack.c.l.b16 %v335
  %v406 = vunpack.c.l.b16 %v336
  %v407 = vunpack.c.l.b16 %v337
  %v408 = vunpack.c.l.b16 %v338
  %v409 = vunpack.c.l.b16 %v339
  %v410 = vunpack.c.l.b16 %v340
  %v411 = vunpack.c.l.b16 %v341
  %v412 = vunpack.c.l.b16 %v342
  %v413 = vunpack.c.l.b16 %v343
  %v414 = vunpack.c.l.b16 %v344
  %v415 = vunpack.c.l.b16 %v345
  %v416 = vunpack.c.l.b16 %v346
  %v417 = vunpack.c.l.b16 %v347
  %v418 = vunpack.c.l.b16 %v348
  %v419 = vunpack.c.l.b16 %v349
  %v420 = vunpack.c.l.b16 %v350
  %v421 = vunpack.c.l.b16 %v351
  %v422 = vunpack.c.l.b16 %v352
  %v423 = vunpack.c.l.b16 %v353
  %v424 = vunpack.c.l.b16 %v354
  %v425 = vunpack.c.l.b16 %v355
  %v426 = vpack.c.b16 %v395, %v394
  %v427 = vpack.c.b16 %v397, %v396
  %v428 = vpack.c.b16 %v399, %v398
  %v429 = vpack.c.b16 %v401, %v400
  %v430 = vpack.c.b16 %v403, %v402
  %v431 = vpack.c.b16 %v405, %v404
  %v432 = vpack.c.b16 %v407, %v406
  %v433 = vpack.c.b16 %v409, %v408
  %v434 = vpack.c.b16 %v411, %v410
  %v435 = vpack.c.b16 %v413, %v412
  %v436 = vpack.c.b16 %v415, %v414
  %v437 = vpack.c.b16 %v417, %v416
  %v438 = vpack.c.b16 %v419, %v418
  %v439 = vpack.c.b16 %v421, %v420
  %v440 = vpack.c.b16 %v423, %v422
  %v441 = vpack.c.b16 %v425, %v424
  %458 = vmatprep.subr.bf16.mxu0 0
  %459 = vmatpush1.bf16.msra.mxu0 %v426
  %460 = vmatprep.subr.bf16.mxu0 0
  %461 = vmatpush1.bf16.msra.mxu0 %v427
  %462 = vmatprep.subr.bf16.mxu0 0
  %463 = vmatpush1.bf16.msra.mxu0 %v428
  %464 = vmatprep.subr.bf16.mxu0 0
  %465 = vmatpush1.bf16.msra.mxu0 %v429
  %466 = vmatprep.subr.bf16.mxu0 0
  %467 = vmatpush1.bf16.msra.mxu0 %v430
  %468 = vmatprep.subr.bf16.mxu0 0
  %469 = vmatpush1.bf16.msra.mxu0 %v431
  %470 = vmatprep.subr.bf16.mxu0 0
  %471 = vmatpush1.bf16.msra.mxu0 %v432
  %472 = vmatprep.subr.bf16.mxu0 0
  %473 = vmatpush1.bf16.msra.mxu0 %v433
  %474 = vmatprep.subr.bf16.mxu0 0
  %475 = vmatpush1.bf16.msra.mxu0 %v434
  %476 = vmatprep.subr.bf16.mxu0 0
  %477 = vmatpush1.bf16.msra.mxu0 %v435
  %478 = vmatprep.subr.bf16.mxu0 0
  %479 = vmatpush1.bf16.msra.mxu0 %v436
  %480 = vmatprep.subr.bf16.mxu0 0
  %481 = vmatpush1.bf16.msra.mxu0 %v437
  %482 = vmatprep.subr.bf16.mxu0 0
  %483 = vmatpush1.bf16.msra.mxu0 %v438
  %484 = vmatprep.subr.bf16.mxu0 0
  %485 = vmatpush1.bf16.msra.mxu0 %v439
  %486 = vmatprep.subr.bf16.mxu0 0
  %487 = vmatpush1.bf16.msra.mxu0 %v440
  %488 = vmatprep.subr.bf16.mxu0 0
  %489 = vmatpush1.bf16.msra.mxu0 %v441
  %490 = vmatprep.mubr.bf16.mxu0 %v357
  %491 = vmatmul.mubr.bf16.gmra.mrb[0].mxu0 %v356
  %v492 = vpop.f32.mrb[0].mxu0
  %v493 = vadd.f32 %v361, %v492
  %v494 = vpop.f32.mrb[0].mxu0
  %v495 = vpop.f32.mrb[0].mxu0
  %v496 = vadd.f32 %v361, %v495
  %v497 = vpop.f32.mrb[0].mxu0
  %498 = vdwg.mxu0
  %s499 = scalar_lea.vmem %s3, 384
  %v500 = vld [vmem:[%s499] sm:$0xf]
  %v501 = vld [vmem:[%s499 + $0x4] sm:$0xf]
  %v502 = vld [vmem:[%s499 + $0x8] sm:$0xf]
  %v503 = vld [vmem:[%s499 + $0xc] sm:$0xf]
  %v504 = vld [vmem:[%s499 + $0x10] sm:$0xf]
  %v505 = vld [vmem:[%s499 + $0x14] sm:$0xf]
  %v506 = vld [vmem:[%s499 + $0x18] sm:$0xf]
  %v507 = vld [vmem:[%s499 + $0x1c] sm:$0xf]
  %v508 = vld [vmem:[%s499 + $0x20] sm:$0xf]
  %v509 = vld [vmem:[%s499 + $0x24] sm:$0xf]
  %v510 = vld [vmem:[%s499 + $0x28] sm:$0xf]
  %v511 = vld [vmem:[%s499 + $0x2c] sm:$0xf]
  %v512 = vld [vmem:[%s499 + $0x30] sm:$0xf]
  %v513 = vld [vmem:[%s499 + $0x34] sm:$0xf]
  %v514 = vld [vmem:[%s499 + $0x38] sm:$0xf]
  %v515 = vld [vmem:[%s499 + $0x3c] sm:$0xf]
  %v516 = vpack.c.bf16 %v321, %v320
  %v517 = vpack.c.bf16 %v323, %v322
  %v534 = vunpack.c.l.b16 %v500
  %v535 = vunpack.c.l.b16 %v501
  %v536 = vunpack.c.l.b16 %v502
  %v537 = vunpack.c.l.b16 %v503
  %v538 = vunpack.c.l.b16 %v504
  %v539 = vunpack.c.l.b16 %v505
  %v540 = vunpack.c.l.b16 %v506
  %v541 = vunpack.c.l.b16 %v507
  %v542 = vunpack.c.l.b16 %v508
  %v543 = vunpack.c.l.b16 %v509
  %v544 = vunpack.c.l.b16 %v510
  %v545 = vunpack.c.l.b16 %v511
  %v546 = vunpack.c.l.b16 %v512
  %v547 = vunpack.c.l.b16 %v513
  %v548 = vunpack.c.l.b16 %v514
  %v549 = vunpack.c.l.b16 %v515
  %v550 = vpack.c.b16 %v535, %v534
  %v551 = vpack.c.b16 %v537, %v536
  %v552 = vpack.c.b16 %v539, %v538
  %v553 = vpack.c.b16 %v541, %v540
  %v554 = vpack.c.b16 %v543, %v542
  %v555 = vpack.c.b16 %v545, %v544
  %v556 = vpack.c.b16 %v547, %v546
  %v557 = vpack.c.b16 %v549, %v548
  %566 = vmatprep.subr.bf16.mxu0 0
  %567 = vmatpush1.bf16.msra.mxu0 %v550
  %568 = vmatprep.subr.bf16.mxu0 0
  %569 = vmatpush1.bf16.msra.mxu0 %v551
  %570 = vmatprep.subr.bf16.mxu0 0
  %571 = vmatpush1.bf16.msra.mxu0 %v552
  %572 = vmatprep.subr.bf16.mxu0 0
  %573 = vmatpush1.bf16.msra.mxu0 %v553
  %574 = vmatprep.subr.bf16.mxu0 0
  %575 = vmatpush1.bf16.msra.mxu0 %v554
  %576 = vmatprep.subr.bf16.mxu0 0
  %577 = vmatpush1.bf16.msra.mxu0 %v555
  %578 = vmatprep.subr.bf16.mxu0 0
  %579 = vmatpush1.bf16.msra.mxu0 %v556
  %580 = vmatprep.subr.bf16.mxu0 0
  %581 = vmatpush1.bf16.msra.mxu0 %v557
  %582 = vmatprep.subr.bf16.mxu0 0
  %583 = vmatpush1.bf16.msra.mxu0 0
  %584 = vmatprep.subr.bf16.mxu0 0
  %585 = vmatpush1.bf16.msra.mxu0 0
  %586 = vmatprep.subr.bf16.mxu0 0
  %587 = vmatpush1.bf16.msra.mxu0 0
  %588 = vmatprep.subr.bf16.mxu0 0
  %589 = vmatpush1.bf16.msra.mxu0 0
  %590 = vmatprep.subr.bf16.mxu0 0
  %591 = vmatpush1.bf16.msra.mxu0 0
  %592 = vmatprep.subr.bf16.mxu0 0
  %593 = vmatpush1.bf16.msra.mxu0 0
  %594 = vmatprep.subr.bf16.mxu0 0
  %595 = vmatpush1.bf16.msra.mxu0 0
  %596 = vmatprep.subr.bf16.mxu0 0
  %597 = vmatpush1.bf16.msra.mxu0 0
  %598 = vmatprep.mubr.bf16.mxu0 0
  %599 = vmatmul.mubr.bf16.gmra.mrb[0].mxu0 %v516
  %v600 = vpop.f32.mrb[0].mxu0
  %v601 = vadd.f32 0.0, %v600
  %v602 = vpop.f32.mrb[0].mxu0
  %v603 = vpop.f32.mrb[0].mxu0
  %v604 = vadd.f32 0.0, %v603
  %v605 = vpop.f32.mrb[0].mxu0
  %606 = vmatprep.mubr.bf16.mxu0 0
  %607 = vmatmul.mubr.bf16.gmra.mrb[0].mxu0 %v517
  %v608 = vpop.f32.mrb[0].mxu0
  %v609 = vadd.f32 0.0, %v608
  %v610 = vpop.f32.mrb[0].mxu0
  %v611 = vpop.f32.mrb[0].mxu0
  %v612 = vadd.f32 0.0, %v611
  %v613 = vpop.f32.mrb[0].mxu0
  %614 = vdwg.mxu0
  %v615 = vlaneseq
  %v616 = vshrl.u32 %v615, 7
  %v617 = vsub.s32 5, %v616
  %v618 = vrot.slane %v36, %v617
  %v619 = vlaneseq
  %v620 = vshrl.u32 %v619, 7
  %v621 = vsub.s32 4, %v620
  %v622 = vrot.slane %v36, %v621
  %s623 = scalar_lea.vmem %s4, 128
  %v624 = vld [vmem:[%s623] sm:$0xf]
  %v625 = vld [vmem:[%s623 + $0x4] sm:$0xf]
  %v626 = vld [vmem:[%s623 + $0x8] sm:$0xf]
  %v627 = vld [vmem:[%s623 + $0xc] sm:$0xf]
  %v628 = vld [vmem:[%s623 + $0x10] sm:$0xf]
  %v629 = vld [vmem:[%s623 + $0x14] sm:$0xf]
  %v630 = vld [vmem:[%s623 + $0x18] sm:$0xf]
  %v631 = vld [vmem:[%s623 + $0x1c] sm:$0xf]
  %v632 = vld [vmem:[%s623 + $0x20] sm:$0xf]
  %v633 = vld [vmem:[%s623 + $0x24] sm:$0xf]
  %v634 = vld [vmem:[%s623 + $0x28] sm:$0xf]
  %v635 = vld [vmem:[%s623 + $0x2c] sm:$0xf]
  %v636 = vld [vmem:[%s623 + $0x30] sm:$0xf]
  %v637 = vld [vmem:[%s623 + $0x34] sm:$0xf]
  %v638 = vld [vmem:[%s623 + $0x38] sm:$0xf]
  %v639 = vld [vmem:[%s623 + $0x3c] sm:$0xf]
  %v640 = vld [vmem:[%s623 + $0x40] sm:$0xf]
  %v641 = vld [vmem:[%s623 + $0x44] sm:$0xf]
  %v642 = vld [vmem:[%s623 + $0x48] sm:$0xf]
  %v643 = vld [vmem:[%s623 + $0x4c] sm:$0xf]
  %v644 = vld [vmem:[%s623 + $0x50] sm:$0xf]
  %v645 = vld [vmem:[%s623 + $0x54] sm:$0xf]
  %v646 = vld [vmem:[%s623 + $0x58] sm:$0xf]
  %v647 = vld [vmem:[%s623 + $0x5c] sm:$0xf]
  %v648 = vld [vmem:[%s623 + $0x60] sm:$0xf]
  %v649 = vld [vmem:[%s623 + $0x64] sm:$0xf]
  %v650 = vld [vmem:[%s623 + $0x68] sm:$0xf]
  %v651 = vld [vmem:[%s623 + $0x6c] sm:$0xf]
  %v652 = vld [vmem:[%s623 + $0x70] sm:$0xf]
  %v653 = vld [vmem:[%s623 + $0x74] sm:$0xf]
  %v654 = vld [vmem:[%s623 + $0x78] sm:$0xf]
  %v655 = vld [vmem:[%s623 + $0x7c] sm:$0xf]
  %v658 = vunpack.c.l.s4 1983009808
  %v659 = vunpack.c.0.s8 %v658
  %v660 = vlaneseq
  %v661 = vshrl.u32 %v660, 7
  %v662 = vsub.s32 %v659, %v661
  %v663 = vrot.slane %v32, %v662
  %v664 = vcombine.high %v663, %v663
  %v667 = vpack.c.bf16 %v663, %v663
  %v668 = vpack.c.bf16 %v664, %v664
  %v669 = vlaneseq
  %v670 = vshrl.u32 %v669, 7
  %v671 = vsub.s32 3, %v670
  %v672 = vrot.slane %v35, %v671
  %v705 = vunpack.c.l.b16 %v624
  %v706 = vunpack.c.l.b16 %v625
  %v707 = vunpack.c.l.b16 %v626
  %v708 = vunpack.c.l.b16 %v627
  %v709 = vunpack.c.l.b16 %v628
  %v710 = vunpack.c.l.b16 %v629
  %v711 = vunpack.c.l.b16 %v630
  %v712 = vunpack.c.l.b16 %v631
  %v713 = vunpack.c.l.b16 %v632
  %v714 = vunpack.c.l.b16 %v633
  %v715 = vunpack.c.l.b16 %v634
  %v716 = vunpack.c.l.b16 %v635
  %v717 = vunpack.c.l.b16 %v636
  %v718 = vunpack.c.l.b16 %v637
  %v719 = vunpack.c.l.b16 %v638
  %v720 = vunpack.c.l.b16 %v639
  %v721 = vunpack.c.l.b16 %v640
  %v722 = vunpack.c.l.b16 %v641
  %v723 = vunpack.c.l.b16 %v642
  %v724 = vunpack.c.l.b16 %v643
  %v725 = vunpack.c.l.b16 %v644
  %v726 = vunpack.c.l.b16 %v645
  %v727 = vunpack.c.l.b16 %v646
  %v728 = vunpack.c.l.b16 %v647
  %v729 = vunpack.c.l.b16 %v648
  %v730 = vunpack.c.l.b16 %v649
  %v731 = vunpack.c.l.b16 %v650
  %v732 = vunpack.c.l.b16 %v651
  %v733 = vunpack.c.l.b16 %v652
  %v734 = vunpack.c.l.b16 %v653
  %v735 = vunpack.c.l.b16 %v654
  %v736 = vunpack.c.l.b16 %v655
  %v737 = vpack.c.b16 %v706, %v705
  %v738 = vpack.c.b16 %v708, %v707
  %v739 = vpack.c.b16 %v710, %v709
  %v740 = vpack.c.b16 %v712, %v711
  %v741 = vpack.c.b16 %v714, %v713
  %v742 = vpack.c.b16 %v716, %v715
  %v743 = vpack.c.b16 %v718, %v717
  %v744 = vpack.c.b16 %v720, %v719
  %v745 = vpack.c.b16 %v722, %v721
  %v746 = vpack.c.b16 %v724, %v723
  %v747 = vpack.c.b16 %v726, %v725
  %v748 = vpack.c.b16 %v728, %v727
  %v749 = vpack.c.b16 %v730, %v729
  %v750 = vpack.c.b16 %v732, %v731
  %v751 = vpack.c.b16 %v734, %v733
  %v752 = vpack.c.b16 %v736, %v735
  %769 = vmatprep.subr.bf16.mxu0 0
  %770 = vmatpush1.bf16.msra.mxu0 %v737
  %771 = vmatprep.subr.bf16.mxu0 0
  %772 = vmatpush1.bf16.msra.mxu0 %v738
  %773 = vmatprep.subr.bf16.mxu0 0
  %774 = vmatpush1.bf16.msra.mxu0 %v739
  %775 = vmatprep.subr.bf16.mxu0 0
  %776 = vmatpush1.bf16.msra.mxu0 %v740
  %777 = vmatprep.subr.bf16.mxu0 0
  %778 = vmatpush1.bf16.msra.mxu0 %v741
  %779 = vmatprep.subr.bf16.mxu0 0
  %780 = vmatpush1.bf16.msra.mxu0 %v742
  %781 = vmatprep.subr.bf16.mxu0 0
  %782 = vmatpush1.bf16.msra.mxu0 %v743
  %783 = vmatprep.subr.bf16.mxu0 0
  %784 = vmatpush1.bf16.msra.mxu0 %v744
  %785 = vmatprep.subr.bf16.mxu0 0
  %786 = vmatpush1.bf16.msra.mxu0 %v745
  %787 = vmatprep.subr.bf16.mxu0 0
  %788 = vmatpush1.bf16.msra.mxu0 %v746
  %789 = vmatprep.subr.bf16.mxu0 0
  %790 = vmatpush1.bf16.msra.mxu0 %v747
  %791 = vmatprep.subr.bf16.mxu0 0
  %792 = vmatpush1.bf16.msra.mxu0 %v748
  %793 = vmatprep.subr.bf16.mxu0 0
  %794 = vmatpush1.bf16.msra.mxu0 %v749
  %795 = vmatprep.subr.bf16.mxu0 0
  %796 = vmatpush1.bf16.msra.mxu0 %v750
  %797 = vmatprep.subr.bf16.mxu0 0
  %798 = vmatpush1.bf16.msra.mxu0 %v751
  %799 = vmatprep.subr.bf16.mxu0 0
  %800 = vmatpush1.bf16.msra.mxu0 %v752
  %801 = vmatprep.mubr.bf16.mxu0 %v668
  %802 = vmatmul.mubr.bf16.gmra.mrb[0].mxu0 %v667
  %v803 = vpop.f32.mrb[0].mxu0
  %v804 = vadd.f32 %v672, %v803
  %v805 = vpop.f32.mrb[0].mxu0
  %v806 = vpop.f32.mrb[0].mxu0
  %v807 = vpop.f32.mrb[0].mxu0
  %808 = vdwg.mxu0
  %s809 = scalar_lea.vmem %s3, 128
  %v810 = vld [vmem:[%s809] sm:$0xf]
  %v811 = vld [vmem:[%s809 + $0x4] sm:$0xf]
  %v812 = vld [vmem:[%s809 + $0x8] sm:$0xf]
  %v813 = vld [vmem:[%s809 + $0xc] sm:$0xf]
  %v814 = vld [vmem:[%s809 + $0x10] sm:$0xf]
  %v815 = vld [vmem:[%s809 + $0x14] sm:$0xf]
  %v816 = vld [vmem:[%s809 + $0x18] sm:$0xf]
  %v817 = vld [vmem:[%s809 + $0x1c] sm:$0xf]
  %v818 = vld [vmem:[%s809 + $0x20] sm:$0xf]
  %v819 = vld [vmem:[%s809 + $0x24] sm:$0xf]
  %v820 = vld [vmem:[%s809 + $0x28] sm:$0xf]
  %v821 = vld [vmem:[%s809 + $0x2c] sm:$0xf]
  %v822 = vld [vmem:[%s809 + $0x30] sm:$0xf]
  %v823 = vld [vmem:[%s809 + $0x34] sm:$0xf]
  %v824 = vld [vmem:[%s809 + $0x38] sm:$0xf]
  %v825 = vld [vmem:[%s809 + $0x3c] sm:$0xf]
  %v826 = vpack.c.bf16 %v618, %v618
  %s827 = scalar_lea.vmem %s3, 192
  %v828 = vld [vmem:[%s827] sm:$0xf]
  %v829 = vld [vmem:[%s827 + $0x4] sm:$0xf]
  %v830 = vld [vmem:[%s827 + $0x8] sm:$0xf]
  %v831 = vld [vmem:[%s827 + $0xc] sm:$0xf]
  %v832 = vld [vmem:[%s827 + $0x10] sm:$0xf]
  %v833 = vld [vmem:[%s827 + $0x14] sm:$0xf]
  %v834 = vld [vmem:[%s827 + $0x18] sm:$0xf]
  %v835 = vld [vmem:[%s827 + $0x1c] sm:$0xf]
  %v836 = vld [vmem:[%s827 + $0x20] sm:$0xf]
  %v837 = vld [vmem:[%s827 + $0x24] sm:$0xf]
  %v838 = vld [vmem:[%s827 + $0x28] sm:$0xf]
  %v839 = vld [vmem:[%s827 + $0x2c] sm:$0xf]
  %v840 = vld [vmem:[%s827 + $0x30] sm:$0xf]
  %v841 = vld [vmem:[%s827 + $0x34] sm:$0xf]
  %v842 = vld [vmem:[%s827 + $0x38] sm:$0xf]
  %v843 = vld [vmem:[%s827 + $0x3c] sm:$0xf]
  %v844 = vpack.c.bf16 %v804, %v804
  %v861 = vunpack.c.l.b16 %v828
  %v862 = vunpack.c.l.b16 %v829
  %v863 = vunpack.c.l.b16 %v830
  %v864 = vunpack.c.l.b16 %v831
  %v865 = vunpack.c.l.b16 %v832
  %v866 = vunpack.c.l.b16 %v833
  %v867 = vunpack.c.l.b16 %v834
  %v868 = vunpack.c.l.b16 %v835
  %v869 = vunpack.c.l.b16 %v836
  %v870 = vunpack.c.l.b16 %v837
  %v871 = vunpack.c.l.b16 %v838
  %v872 = vunpack.c.l.b16 %v839
  %v873 = vunpack.c.l.b16 %v840
  %v874 = vunpack.c.l.b16 %v841
  %v875 = vunpack.c.l.b16 %v842
  %v876 = vunpack.c.l.b16 %v843
  %v877 = vpack.c.b16 %v862, %v861
  %v878 = vpack.c.b16 %v864, %v863
  %v879 = vpack.c.b16 %v866, %v865
  %v880 = vpack.c.b16 %v868, %v867
  %v881 = vpack.c.b16 %v870, %v869
  %v882 = vpack.c.b16 %v872, %v871
  %v883 = vpack.c.b16 %v874, %v873
  %v884 = vpack.c.b16 %v876, %v875
  %893 = vmatprep.subr.bf16.mxu0 0
  %894 = vmatpush1.bf16.msra.mxu0 %v877
  %895 = vmatprep.subr.bf16.mxu0 0
  %896 = vmatpush1.bf16.msra.mxu0 %v878
  %897 = vmatprep.subr.bf16.mxu0 0
  %898 = vmatpush1.bf16.msra.mxu0 %v879
  %899 = vmatprep.subr.bf16.mxu0 0
  %900 = vmatpush1.bf16.msra.mxu0 %v880
  %901 = vmatprep.subr.bf16.mxu0 0
  %902 = vmatpush1.bf16.msra.mxu0 %v881
  %903 = vmatprep.subr.bf16.mxu0 0
  %904 = vmatpush1.bf16.msra.mxu0 %v882
  %905 = vmatprep.subr.bf16.mxu0 0
  %906 = vmatpush1.bf16.msra.mxu0 %v883
  %907 = vmatprep.subr.bf16.mxu0 0
  %908 = vmatpush1.bf16.msra.mxu0 %v884
  %909 = vmatprep.subr.bf16.mxu0 0
  %910 = vmatpush1.bf16.msra.mxu0 0
  %911 = vmatprep.subr.bf16.mxu0 0
  %912 = vmatpush1.bf16.msra.mxu0 0
  %913 = vmatprep.subr.bf16.mxu0 0
  %914 = vmatpush1.bf16.msra.mxu0 0
  %915 = vmatprep.subr.bf16.mxu0 0
  %916 = vmatpush1.bf16.msra.mxu0 0
  %917 = vmatprep.subr.bf16.mxu0 0
  %918 = vmatpush1.bf16.msra.mxu0 0
  %919 = vmatprep.subr.bf16.mxu0 0
  %920 = vmatpush1.bf16.msra.mxu0 0
  %921 = vmatprep.subr.bf16.mxu0 0
  %922 = vmatpush1.bf16.msra.mxu0 0
  %923 = vmatprep.subr.bf16.mxu0 0
  %924 = vmatpush1.bf16.msra.mxu0 0
  %925 = vmatprep.mubr.bf16.mxu0 0
  %926 = vmatmul.mubr.bf16.gmra.mrb[0].mxu0 %v844
  %v927 = vpop.f32.mrb[0].mxu0
  %v928 = vadd.f32 0.0, %v927
  %v929 = vpop.f32.mrb[0].mxu0
  %v930 = vpop.f32.mrb[0].mxu0
  %v931 = vpop.f32.mrb[0].mxu0
  %932 = vdwg.mxu0
  %v949 = vunpack.c.l.b16 %v810
  %v950 = vunpack.c.l.b16 %v811
  %v951 = vunpack.c.l.b16 %v812
  %v952 = vunpack.c.l.b16 %v813
  %v953 = vunpack.c.l.b16 %v814
  %v954 = vunpack.c.l.b16 %v815
  %v955 = vunpack.c.l.b16 %v816
  %v956 = vunpack.c.l.b16 %v817
  %v957 = vunpack.c.l.b16 %v818
  %v958 = vunpack.c.l.b16 %v819
  %v959 = vunpack.c.l.b16 %v820
  %v960 = vunpack.c.l.b16 %v821
  %v961 = vunpack.c.l.b16 %v822
  %v962 = vunpack.c.l.b16 %v823
  %v963 = vunpack.c.l.b16 %v824
  %v964 = vunpack.c.l.b16 %v825
  %v965 = vpack.c.b16 %v950, %v949
  %v966 = vpack.c.b16 %v952, %v951
  %v967 = vpack.c.b16 %v954, %v953
  %v968 = vpack.c.b16 %v956, %v955
  %v969 = vpack.c.b16 %v958, %v957
  %v970 = vpack.c.b16 %v960, %v959
  %v971 = vpack.c.b16 %v962, %v961
  %v972 = vpack.c.b16 %v964, %v963
  %981 = vmatprep.subr.bf16.mxu0 0
  %982 = vmatpush1.bf16.msra.mxu0 %v965
  %983 = vmatprep.subr.bf16.mxu0 0
  %984 = vmatpush1.bf16.msra.mxu0 %v966
  %985 = vmatprep.subr.bf16.mxu0 0
  %986 = vmatpush1.bf16.msra.mxu0 %v967
  %987 = vmatprep.subr.bf16.mxu0 0
  %988 = vmatpush1.bf16.msra.mxu0 %v968
  %989 = vmatprep.subr.bf16.mxu0 0
  %990 = vmatpush1.bf16.msra.mxu0 %v969
  %991 = vmatprep.subr.bf16.mxu0 0
  %992 = vmatpush1.bf16.msra.mxu0 %v970
  %993 = vmatprep.subr.bf16.mxu0 0
  %994 = vmatpush1.bf16.msra.mxu0 %v971
  %995 = vmatprep.subr.bf16.mxu0 0
  %996 = vmatpush1.bf16.msra.mxu0 %v972
  %997 = vmatprep.subr.bf16.mxu0 0
  %998 = vmatpush1.bf16.msra.mxu0 0
  %999 = vmatprep.subr.bf16.mxu0 0
  %1000 = vmatpush1.bf16.msra.mxu0 0
  %1001 = vmatprep.subr.bf16.mxu0 0
  %1002 = vmatpush1.bf16.msra.mxu0 0
  %1003 = vmatprep.subr.bf16.mxu0 0
  %1004 = vmatpush1.bf16.msra.mxu0 0
  %1005 = vmatprep.subr.bf16.mxu0 0
  %1006 = vmatpush1.bf16.msra.mxu0 0
  %1007 = vmatprep.subr.bf16.mxu0 0
  %1008 = vmatpush1.bf16.msra.mxu0 0
  %1009 = vmatprep.subr.bf16.mxu0 0
  %1010 = vmatpush1.bf16.msra.mxu0 0
  %1011 = vmatprep.subr.bf16.mxu0 0
  %1012 = vmatpush1.bf16.msra.mxu0 0
  %1013 = vmatprep.mubr.bf16.mxu0 0
  %1014 = vmatmul.mubr.bf16.gmra.mrb[0].mxu0 %v826
  %v1015 = vpop.f32.mrb[0].mxu0
  %v1016 = vadd.f32 %v928, %v1015
  %v1017 = vpop.f32.mrb[0].mxu0
  %v1018 = vpop.f32.mrb[0].mxu0
  %v1019 = vpop.f32.mrb[0].mxu0
  %1020 = vdwg.mxu0
  %v1021 = vlaneseq
  %v1022 = vshrl.u32 %v1021, 7
  %v1023 = vsub.s32 6, %v1022
  %v1024 = vrot.slane %v35, %v1023
  %v1025 = vadd.f32 %v1016, %v1024
  %v1026 = vlaneseq
  %v1027 = vshrl.u32 %v1026, 7
  %v1028 = vsub.s32 6, %v1027
  %v1029 = vrot.slane %v36, %v1028
  %v1030 = vmul.f32 %v1025, %v1029
  %v1033 = vunpack.c.l.s4 1966171168
  %v1034 = vunpack.c.0.s8 %v1033
  %v1035 = vlaneseq
  %v1036 = vshrl.u32 %v1035, 7
  %v1037 = vsub.s32 %v1034, %v1036
  %v1038 = vrot.slane %v1030, %v1037
  %v1039 = vcombine.high %v1038, %v1038
  %v1041 = vunpack.c.l.s4 1966171168
  %v1042 = vunpack.c.0.s8 %v1041
  %v1043 = vlaneseq
  %v1044 = vshrl.u32 %v1043, 7
  %v1045 = vsub.s32 %v1042, %v1044
  %v1046 = vrot.slane %v1038, %v1045
  %v1048 = vunpack.c.l.s4 1966171168
  %v1049 = vunpack.c.0.s8 %v1048
  %v1050 = vlaneseq
  %v1051 = vshrl.u32 %v1050, 7
  %v1052 = vsub.s32 %v1049, %v1051
  %v1053 = vrot.slane %v1039, %v1052
  %v1054 = vlaneseq
  %v1055 = vshrl.u32 %v1054, 7
  %v1056 = vsub.s32 0, %v1055
  %v1057 = vrot.slane %v1046, %v1056
  %v1058 = vlaneseq
  %v1059 = vshrl.u32 %v1058, 7
  %v1060 = vsub.s32 0, %v1059
  %v1061 = vrot.slane %v1053, %v1060
  %v1064 = vmul.f32 %v1057, %v493
  %v1065 = vmul.f32 %v1061, %v496
  %1066 = vadd.xlane.f32.xlu0 %v1064
  %v1067 = vpop.xlane.xlu0 %1066
  %1068 = vadd.xlane.f32.xlu0 %v1065
  %v1069 = vpop.xlane.xlu0 %1068
  %v1072 = vlaneseq
  %v1073 = vand.u32 %v1072, 127
  %v1074 = vlaneseq
  %v1075 = vshrl.u32 %v1074, 7
  %v1076 = vsub.s32 %v1073, %v1075
  %v1077 = vrot.slane %v1067, %v1076
  %v1078 = vlaneseq
  %v1079 = vshrl.u32 %v1078, 7
  %v1080 = vsub.s32 %v1073, %v1079
  %v1081 = vrot.slane %v1069, %v1080
  %vm1082 = vcmask 1041409
  %v1083 = vsel %vm1082, %v1081, %v1077
  %vm1085 = vcmask 58368
  %v1086 = vsel %vm1085, %v1083, -inf
  %1087 = vmax.xlane.f32.xlu0 %v1086
  %v1088 = vpop.xlane.xlu0 %1087
  %v1090 = vlaneseq
  %v1091 = vshrl.u32 %v1090, 7
  %v1092 = vsub.s32 0, %v1091
  %v1093 = vrot.slane %v1088, %v1092
  %v1094 = vlaneseq
  %v1095 = vshrl.u32 %v1094, 7
  %v1096 = vsub.s32 1, %v1095
  %v1097 = vrot.slane %v1088, %v1096
  %v1100 = vsub.f32 %v1067, %v1093
  %v1101 = vsub.f32 %v1069, %v1097
  %v1102 = vmul.f32 %v1100, 1.442695
  %v1103 = vpow.pop %v1102
  %v1104 = vmul.f32 %v1101, 1.442695
  %v1105 = vpow.pop %v1104
  %1108 = vset.pattern.permute.xlu0 0
  %1109 = vperm.xlu0 %1108, %v1103
  %v1110 = vpop.permute.xlu0 %1109
  %1111 = vset.pattern.permute.xlu0 0
  %1112 = vperm.xlu0 %1111, %v1105
  %v1113 = vpop.permute.xlu0 %1112
  %v1114 = vlaneseq
  %v1115 = vshrl.u32 %v1114, 7
  %v1116 = vsub.s32 %v1073, %v1115
  %v1117 = vrot.slane %v1110, %v1116
  %v1118 = vlaneseq
  %v1119 = vshrl.u32 %v1118, 7
  %v1120 = vsub.s32 %v1073, %v1119
  %v1121 = vrot.slane %v1113, %v1120
  %v1122 = vsel %vm1082, %v1121, %v1117
  %v1124 = vsel %vm1085, %v1122, 0.0
  %1125 = vadd.xlane.f32.xlu0 %v1124
  %v1126 = vpop.xlane.xlu0 %1125
  %v1128 = vlaneseq
  %v1129 = vshrl.u32 %v1128, 7
  %v1130 = vsub.s32 0, %v1129
  %v1131 = vrot.slane %v1126, %v1130
  %v1132 = vlaneseq
  %v1133 = vshrl.u32 %v1132, 7
  %v1134 = vsub.s32 1, %v1133
  %v1135 = vrot.slane %v1126, %v1134
  %v1138 = vrcp.pop %v1131
  %v1139 = vmul.f32 %v1103, %v1138
  %v1140 = vrcp.pop %v1135
  %v1141 = vmul.f32 %v1105, %v1140
  %1143 = vset.pattern.permute.xlu0 0
  %1144 = vperm.xlu0 %1143, %v1139
  %v1145 = vpop.permute.xlu0 %1144
  %1148 = vset.pattern.permute.xlu0 0
  %1149 = vperm.xlu0 %1148, %v1141
  %v1150 = vpop.permute.xlu0 %1149
  %v1152 = vmul.f32 %v1145, %v493
  %v1153 = vmul.f32 %v1150, %v496
  %v1154 = vrot.slane %v1152, 4
  %v1155 = vadd.f32 %v1152, %v1154
  %v1156 = vrot.slane %v1155, 2
  %v1157 = vadd.f32 %v1155, %v1156
  %v1158 = vrot.slane %v1157, 1
  %v1159 = vadd.f32 %v1157, %v1158
  %v1160 = vrot.slane %v1153, 4
  %v1161 = vadd.f32 %v1153, %v1160
  %v1162 = vrot.slane %v1161, 2
  %v1163 = vadd.f32 %v1161, %v1162
  %v1164 = vrot.slane %v1163, 1
  %v1165 = vadd.f32 %v1163, %v1164
  %s1166 = scalar_lea.vmem %s3, 256
  %v1167 = vld [vmem:[%s1166] sm:$0xf]
  %v1168 = vld [vmem:[%s1166 + $0x4] sm:$0xf]
  %v1169 = vld [vmem:[%s1166 + $0x8] sm:$0xf]
  %v1170 = vld [vmem:[%s1166 + $0xc] sm:$0xf]
  %v1171 = vld [vmem:[%s1166 + $0x10] sm:$0xf]
  %v1172 = vld [vmem:[%s1166 + $0x14] sm:$0xf]
  %v1173 = vld [vmem:[%s1166 + $0x18] sm:$0xf]
  %v1174 = vld [vmem:[%s1166 + $0x1c] sm:$0xf]
  %v1175 = vld [vmem:[%s1166 + $0x20] sm:$0xf]
  %v1176 = vld [vmem:[%s1166 + $0x24] sm:$0xf]
  %v1177 = vld [vmem:[%s1166 + $0x28] sm:$0xf]
  %v1178 = vld [vmem:[%s1166 + $0x2c] sm:$0xf]
  %v1179 = vld [vmem:[%s1166 + $0x30] sm:$0xf]
  %v1180 = vld [vmem:[%s1166 + $0x34] sm:$0xf]
  %v1181 = vld [vmem:[%s1166 + $0x38] sm:$0xf]
  %v1182 = vld [vmem:[%s1166 + $0x3c] sm:$0xf]
  %v1183 = vpack.c.bf16 %v622, %v622
  %v1184 = vlaneseq
  %v1185 = vshrl.u32 %v1184, 7
  %v1186 = vsub.s32 7, %v1185
  %v1187 = vrot.slane %v35, %v1186
  %v1204 = vunpack.c.l.b16 %v1167
  %v1205 = vunpack.c.l.b16 %v1168
  %v1206 = vunpack.c.l.b16 %v1169
  %v1207 = vunpack.c.l.b16 %v1170
  %v1208 = vunpack.c.l.b16 %v1171
  %v1209 = vunpack.c.l.b16 %v1172
  %v1210 = vunpack.c.l.b16 %v1173
  %v1211 = vunpack.c.l.b16 %v1174
  %v1212 = vunpack.c.l.b16 %v1175
  %v1213 = vunpack.c.l.b16 %v1176
  %v1214 = vunpack.c.l.b16 %v1177
  %v1215 = vunpack.c.l.b16 %v1178
  %v1216 = vunpack.c.l.b16 %v1179
  %v1217 = vunpack.c.l.b16 %v1180
  %v1218 = vunpack.c.l.b16 %v1181
  %v1219 = vunpack.c.l.b16 %v1182
  %v1220 = vpack.c.b16 %v1205, %v1204
  %v1221 = vpack.c.b16 %v1207, %v1206
  %v1222 = vpack.c.b16 %v1209, %v1208
  %v1223 = vpack.c.b16 %v1211, %v1210
  %v1224 = vpack.c.b16 %v1213, %v1212
  %v1225 = vpack.c.b16 %v1215, %v1214
  %v1226 = vpack.c.b16 %v1217, %v1216
  %v1227 = vpack.c.b16 %v1219, %v1218
  %1236 = vmatprep.subr.bf16.mxu0 0
  %1237 = vmatpush1.bf16.msra.mxu0 %v1220
  %1238 = vmatprep.subr.bf16.mxu0 0
  %1239 = vmatpush1.bf16.msra.mxu0 %v1221
  %1240 = vmatprep.subr.bf16.mxu0 0
  %1241 = vmatpush1.bf16.msra.mxu0 %v1222
  %1242 = vmatprep.subr.bf16.mxu0 0
  %1243 = vmatpush1.bf16.msra.mxu0 %v1223
  %1244 = vmatprep.subr.bf16.mxu0 0
  %1245 = vmatpush1.bf16.msra.mxu0 %v1224
  %1246 = vmatprep.subr.bf16.mxu0 0
  %1247 = vmatpush1.bf16.msra.mxu0 %v1225
  %1248 = vmatprep.subr.bf16.mxu0 0
  %1249 = vmatpush1.bf16.msra.mxu0 %v1226
  %1250 = vmatprep.subr.bf16.mxu0 0
  %1251 = vmatpush1.bf16.msra.mxu0 %v1227
  %1252 = vmatprep.subr.bf16.mxu0 0
  %1253 = vmatpush1.bf16.msra.mxu0 0
  %1254 = vmatprep.subr.bf16.mxu0 0
  %1255 = vmatpush1.bf16.msra.mxu0 0
  %1256 = vmatprep.subr.bf16.mxu0 0
  %1257 = vmatpush1.bf16.msra.mxu0 0
  %1258 = vmatprep.subr.bf16.mxu0 0
  %1259 = vmatpush1.bf16.msra.mxu0 0
  %1260 = vmatprep.subr.bf16.mxu0 0
  %1261 = vmatpush1.bf16.msra.mxu0 0
  %1262 = vmatprep.subr.bf16.mxu0 0
  %1263 = vmatpush1.bf16.msra.mxu0 0
  %1264 = vmatprep.subr.bf16.mxu0 0
  %1265 = vmatpush1.bf16.msra.mxu0 0
  %1266 = vmatprep.subr.bf16.mxu0 0
  %1267 = vmatpush1.bf16.msra.mxu0 0
  %1268 = vmatprep.mubr.bf16.mxu0 0
  %1269 = vmatmul.mubr.bf16.gmra.mrb[0].mxu0 %v1183
  %v1270 = vpop.f32.mrb[0].mxu0
  %v1271 = vadd.f32 %v1187, %v1270
  %v1272 = vpop.f32.mrb[0].mxu0
  %v1273 = vpop.f32.mrb[0].mxu0
  %v1274 = vpop.f32.mrb[0].mxu0
  %1275 = vdwg.mxu0
  %v1278 = vunpack.c.l.s4 1966171168
  %v1279 = vunpack.c.0.s8 %v1278
  %v1280 = vlaneseq
  %v1281 = vshrl.u32 %v1280, 7
  %v1282 = vsub.s32 %v1279, %v1281
  %v1283 = vrot.slane %v1271, %v1282
  %v1284 = vcombine.high %v1283, %v1283
  %v1286 = vunpack.c.l.s4 1966171168
  %v1287 = vunpack.c.0.s8 %v1286
  %v1288 = vlaneseq
  %v1289 = vshrl.u32 %v1288, 7
  %v1290 = vsub.s32 %v1287, %v1289
  %v1291 = vrot.slane %v1283, %v1290
  %v1293 = vunpack.c.l.s4 1966171168
  %v1294 = vunpack.c.0.s8 %v1293
  %v1295 = vlaneseq
  %v1296 = vshrl.u32 %v1295, 7
  %v1297 = vsub.s32 %v1294, %v1296
  %v1298 = vrot.slane %v1284, %v1297
  %v1299 = vlaneseq
  %v1300 = vshrl.u32 %v1299, 7
  %v1301 = vsub.s32 0, %v1300
  %v1302 = vrot.slane %v1291, %v1301
  %v1303 = vlaneseq
  %v1304 = vshrl.u32 %v1303, 7
  %v1305 = vsub.s32 0, %v1304
  %v1306 = vrot.slane %v1298, %v1305
  %v1309 = vmul.f32 %v1302, %v320
  %v1310 = vmul.f32 %v1302, %v321
  %v1311 = vmul.f32 %v1306, %v322
  %v1312 = vmul.f32 %v1306, %v323
  %s1313 = scalar_lea.vmem %s3, 320
  %v1314 = vld [vmem:[%s1313] sm:$0xf]
  %v1315 = vld [vmem:[%s1313 + $0x4] sm:$0xf]
  %v1316 = vld [vmem:[%s1313 + $0x8] sm:$0xf]
  %v1317 = vld [vmem:[%s1313 + $0xc] sm:$0xf]
  %v1318 = vld [vmem:[%s1313 + $0x10] sm:$0xf]
  %v1319 = vld [vmem:[%s1313 + $0x14] sm:$0xf]
  %v1320 = vld [vmem:[%s1313 + $0x18] sm:$0xf]
  %v1321 = vld [vmem:[%s1313 + $0x1c] sm:$0xf]
  %v1322 = vld [vmem:[%s1313 + $0x20] sm:$0xf]
  %v1323 = vld [vmem:[%s1313 + $0x24] sm:$0xf]
  %v1324 = vld [vmem:[%s1313 + $0x28] sm:$0xf]
  %v1325 = vld [vmem:[%s1313 + $0x2c] sm:$0xf]
  %v1326 = vld [vmem:[%s1313 + $0x30] sm:$0xf]
  %v1327 = vld [vmem:[%s1313 + $0x34] sm:$0xf]
  %v1328 = vld [vmem:[%s1313 + $0x38] sm:$0xf]
  %v1329 = vld [vmem:[%s1313 + $0x3c] sm:$0xf]
  %v1330 = vpack.c.bf16 %v1310, %v1309
  %v1331 = vpack.c.bf16 %v1312, %v1311
  %v1348 = vunpack.c.l.b16 %v1314
  %v1349 = vunpack.c.l.b16 %v1315
  %v1350 = vunpack.c.l.b16 %v1316
  %v1351 = vunpack.c.l.b16 %v1317
  %v1352 = vunpack.c.l.b16 %v1318
  %v1353 = vunpack.c.l.b16 %v1319
  %v1354 = vunpack.c.l.b16 %v1320
  %v1355 = vunpack.c.l.b16 %v1321
  %v1356 = vunpack.c.l.b16 %v1322
  %v1357 = vunpack.c.l.b16 %v1323
  %v1358 = vunpack.c.l.b16 %v1324
  %v1359 = vunpack.c.l.b16 %v1325
  %v1360 = vunpack.c.l.b16 %v1326
  %v1361 = vunpack.c.l.b16 %v1327
  %v1362 = vunpack.c.l.b16 %v1328
  %v1363 = vunpack.c.l.b16 %v1329
  %v1364 = vpack.c.b16 %v1349, %v1348
  %v1365 = vpack.c.b16 %v1351, %v1350
  %v1366 = vpack.c.b16 %v1353, %v1352
  %v1367 = vpack.c.b16 %v1355, %v1354
  %v1368 = vpack.c.b16 %v1357, %v1356
  %v1369 = vpack.c.b16 %v1359, %v1358
  %v1370 = vpack.c.b16 %v1361, %v1360
  %v1371 = vpack.c.b16 %v1363, %v1362
  %1380 = vmatprep.subr.bf16.mxu0 0
  %1381 = vmatpush1.bf16.msra.mxu0 %v1364
  %1382 = vmatprep.subr.bf16.mxu0 0
  %1383 = vmatpush1.bf16.msra.mxu0 %v1365
  %1384 = vmatprep.subr.bf16.mxu0 0
  %1385 = vmatpush1.bf16.msra.mxu0 %v1366
  %1386 = vmatprep.subr.bf16.mxu0 0
  %1387 = vmatpush1.bf16.msra.mxu0 %v1367
  %1388 = vmatprep.subr.bf16.mxu0 0
  %1389 = vmatpush1.bf16.msra.mxu0 %v1368
  %1390 = vmatprep.subr.bf16.mxu0 0
  %1391 = vmatpush1.bf16.msra.mxu0 %v1369
  %1392 = vmatprep.subr.bf16.mxu0 0
  %1393 = vmatpush1.bf16.msra.mxu0 %v1370
  %1394 = vmatprep.subr.bf16.mxu0 0
  %1395 = vmatpush1.bf16.msra.mxu0 %v1371
  %1396 = vmatprep.subr.bf16.mxu0 0
  %1397 = vmatpush1.bf16.msra.mxu0 0
  %1398 = vmatprep.subr.bf16.mxu0 0
  %1399 = vmatpush1.bf16.msra.mxu0 0
  %1400 = vmatprep.subr.bf16.mxu0 0
  %1401 = vmatpush1.bf16.msra.mxu0 0
  %1402 = vmatprep.subr.bf16.mxu0 0
  %1403 = vmatpush1.bf16.msra.mxu0 0
  %1404 = vmatprep.subr.bf16.mxu0 0
  %1405 = vmatpush1.bf16.msra.mxu0 0
  %1406 = vmatprep.subr.bf16.mxu0 0
  %1407 = vmatpush1.bf16.msra.mxu0 0
  %1408 = vmatprep.subr.bf16.mxu0 0
  %1409 = vmatpush1.bf16.msra.mxu0 0
  %1410 = vmatprep.subr.bf16.mxu0 0
  %1411 = vmatpush1.bf16.msra.mxu0 0
  %1412 = vmatprep.mubr.bf16.mxu0 0
  %1413 = vmatmul.mubr.bf16.gmra.mrb[0].mxu0 %v1330
  %v1414 = vpop.f32.mrb[0].mxu0
  %v1415 = vadd.f32 0.0, %v1414
  %v1416 = vpop.f32.mrb[0].mxu0
  %v1417 = vpop.f32.mrb[0].mxu0
  %v1418 = vadd.f32 0.0, %v1417
  %v1419 = vpop.f32.mrb[0].mxu0
  %1420 = vmatprep.mubr.bf16.mxu0 0
  %1421 = vmatmul.mubr.bf16.gmra.mrb[0].mxu0 %v1331
  %v1422 = vpop.f32.mrb[0].mxu0
  %v1423 = vadd.f32 0.0, %v1422
  %v1424 = vpop.f32.mrb[0].mxu0
  %v1425 = vpop.f32.mrb[0].mxu0
  %v1426 = vadd.f32 0.0, %v1425
  %v1427 = vpop.f32.mrb[0].mxu0
  %1428 = vdwg.mxu0
  %v1429 = vadd.f32 %v1415, %v601
  %v1430 = vadd.f32 %v1418, %v604
  %v1431 = vadd.f32 %v1423, %v609
  %v1432 = vadd.f32 %v1426, %v612
  %v1433 = vlaneseq
  %v1434 = vshrl.u32 %v1433, 7
  %v1435 = vsub.s32 0, %v1434
  %v1436 = vrot.slane %v36, %v1435
  %v1437 = vadd.f32 %v1429, %v1436
  %v1438 = vadd.f32 %v1430, %v1436
  %v1439 = vadd.f32 %v1431, %v1436
  %v1440 = vadd.f32 %v1432, %v1436
  %v1441 = vlaneseq
  %v1442 = vshrl.u32 %v1441, 7
  %v1443 = vsub.s32 7, %v1442
  %v1444 = vrot.slane %v36, %v1443
  %v1445 = vmul.f32 %v1159, %v1444
  %v1446 = vmul.f32 %v1165, %v1444
  %v1447 = vlaneseq
  %v1448 = vshrl.u32 %v1447, 7
  %v1449 = vsub.s32 0, %v1448
  %v1450 = vrot.slane %v1445, %v1449
  %v1451 = vlaneseq
  %v1452 = vshrl.u32 %v1451, 7
  %v1453 = vsub.s32 0, %v1452
  %v1454 = vrot.slane %v1446, %v1453
  %v1455 = vmul.f32 %v1437, %v1450
  %v1456 = vmul.f32 %v1438, %v1450
  %v1457 = vmul.f32 %v1439, %v1454
  %v1458 = vmul.f32 %v1440, %v1454
  %1459 = vadd.xlane.f32.xlu0 %v1455
  %v1460 = vpop.xlane.xlu0 %1459
  %1461 = vadd.xlane.f32.xlu0 %v1456
  %v1462 = vpop.xlane.xlu0 %1461
  %1463 = vadd.xlane.f32.xlu0 %v1457
  %v1464 = vpop.xlane.xlu0 %1463
  %1465 = vadd.xlane.f32.xlu0 %v1458
  %v1466 = vpop.xlane.xlu0 %1465
  %v1471 = vlaneseq
  %v1472 = vshrl.u32 %v1471, 7
  %v1473 = vsub.s32 %v1073, %v1472
  %v1474 = vrot.slane %v1460, %v1473
  %v1475 = vadd.s32 %v1073, 4294967288
  %v1476 = vlaneseq
  %v1477 = vshrl.u32 %v1476, 7
  %v1478 = vsub.s32 %v1475, %v1477
  %v1479 = vrot.slane %v1462, %v1478
  %vm1480 = vcmask 130112
  %v1481 = vsel %vm1480, %v1479, %v1474
  %v1482 = vlaneseq
  %v1483 = vshrl.u32 %v1482, 7
  %v1484 = vsub.s32 %v1073, %v1483
  %v1485 = vrot.slane %v1464, %v1484
  %v1486 = vlaneseq
  %v1487 = vshrl.u32 %v1486, 7
  %v1488 = vsub.s32 %v1475, %v1487
  %v1489 = vrot.slane %v1466, %v1488
  %v1490 = vsel %vm1480, %v1489, %v1485
  %v1491 = vsel %vm1082, %v1490, %v1481
  %vm1493 = vcmask 123904
  %v1494 = vsel %vm1493, %v1491, -inf
  %1495 = vmax.xlane.f32.xlu0 %v1494
  %v1496 = vpop.xlane.xlu0 %1495
  %v1498 = vlaneseq
  %v1499 = vshrl.u32 %v1498, 7
  %v1500 = vsub.s32 0, %v1499
  %v1501 = vrot.slane %v1496, %v1500
  %v1502 = vlaneseq
  %v1503 = vshrl.u32 %v1502, 7
  %v1504 = vsub.s32 1, %v1503
  %v1505 = vrot.slane %v1496, %v1504
  %v1508 = vsub.f32 %v1460, %v1501
  %v1509 = vsub.f32 %v1462, %v1501
  %v1510 = vsub.f32 %v1464, %v1505
  %v1511 = vsub.f32 %v1466, %v1505
  %v1512 = vmul.f32 %v1508, 1.442695
  %v1513 = vpow.pop %v1512
  %v1514 = vmul.f32 %v1509, 1.442695
  %v1515 = vpow.pop %v1514
  %v1516 = vmul.f32 %v1510, 1.442695
  %v1517 = vpow.pop %v1516
  %v1518 = vmul.f32 %v1511, 1.442695
  %v1519 = vpow.pop %v1518
  %1524 = vset.pattern.permute.xlu0 0
  %1525 = vperm.xlu0 %1524, %v1513
  %v1526 = vpop.permute.xlu0 %1525
  %1527 = vset.pattern.permute.xlu0 0
  %1528 = vperm.xlu0 %1527, %v1515
  %v1529 = vpop.permute.xlu0 %1528
  %1530 = vset.pattern.permute.xlu0 0
  %1531 = vperm.xlu0 %1530, %v1517
  %v1532 = vpop.permute.xlu0 %1531
  %1533 = vset.pattern.permute.xlu0 0
  %1534 = vperm.xlu0 %1533, %v1519
  %v1535 = vpop.permute.xlu0 %1534
  %v1536 = vlaneseq
  %v1537 = vshrl.u32 %v1536, 7
  %v1538 = vsub.s32 %v1073, %v1537
  %v1539 = vrot.slane %v1526, %v1538
  %v1540 = vlaneseq
  %v1541 = vshrl.u32 %v1540, 7
  %v1542 = vsub.s32 %v1475, %v1541
  %v1543 = vrot.slane %v1529, %v1542
  %v1544 = vsel %vm1480, %v1543, %v1539
  %v1545 = vlaneseq
  %v1546 = vshrl.u32 %v1545, 7
  %v1547 = vsub.s32 %v1073, %v1546
  %v1548 = vrot.slane %v1532, %v1547
  %v1549 = vlaneseq
  %v1550 = vshrl.u32 %v1549, 7
  %v1551 = vsub.s32 %v1475, %v1550
  %v1552 = vrot.slane %v1535, %v1551
  %v1553 = vsel %vm1480, %v1552, %v1548
  %v1554 = vsel %vm1082, %v1553, %v1544
  %v1556 = vsel %vm1493, %v1554, 0.0
  %1557 = vadd.xlane.f32.xlu0 %v1556
  %v1558 = vpop.xlane.xlu0 %1557
  %v1560 = vlaneseq
  %v1561 = vshrl.u32 %v1560, 7
  %v1562 = vsub.s32 0, %v1561
  %v1563 = vrot.slane %v1558, %v1562
  %v1564 = vlaneseq
  %v1565 = vshrl.u32 %v1564, 7
  %v1566 = vsub.s32 1, %v1565
  %v1567 = vrot.slane %v1558, %v1566
  %v1570 = vrcp.pop %v1563
  %v1571 = vmul.f32 %v1513, %v1570
  %v1572 = vmul.f32 %v1515, %v1570
  %v1573 = vrcp.pop %v1567
  %v1574 = vmul.f32 %v1517, %v1573
  %v1575 = vmul.f32 %v1519, %v1573
  %1577 = vset.pattern.permute.xlu0 0
  %1578 = vperm.xlu0 %1577, %v1571
  %v1579 = vpop.permute.xlu0 %1578
  %1582 = vset.pattern.permute.xlu0 0
  %1583 = vperm.xlu0 %1582, %v1572
  %v1584 = vpop.permute.xlu0 %1583
  %1587 = vset.pattern.permute.xlu0 0
  %1588 = vperm.xlu0 %1587, %v1574
  %v1589 = vpop.permute.xlu0 %1588
  %1592 = vset.pattern.permute.xlu0 0
  %1593 = vperm.xlu0 %1592, %v1575
  %v1594 = vpop.permute.xlu0 %1593
  %v1596 = vmul.f32 %v1579, %v320
  %v1597 = vmul.f32 %v1584, %v321
  %v1598 = vmul.f32 %v1589, %v322
  %v1599 = vmul.f32 %v1594, %v323
  %v1600 = vadd.f32 %v1596, %v1597
  %v1601 = vrot.slane %v1600, 4
  %v1602 = vadd.f32 %v1600, %v1601
  %v1603 = vrot.slane %v1602, 2
  %v1604 = vadd.f32 %v1602, %v1603
  %v1605 = vrot.slane %v1604, 1
  %v1606 = vadd.f32 %v1604, %v1605
  %v1607 = vadd.f32 %v1598, %v1599
  %v1608 = vrot.slane %v1607, 4
  %v1609 = vadd.f32 %v1607, %v1608
  %v1610 = vrot.slane %v1609, 2
  %v1611 = vadd.f32 %v1609, %v1610
  %v1612 = vrot.slane %v1611, 1
  %v1613 = vadd.f32 %v1611, %v1612
  %s1614 = scalar_lea.vmem %s3, 448
  %v1615 = vld [vmem:[%s1614] sm:$0xf]
  %v1616 = vld [vmem:[%s1614 + $0x4] sm:$0xf]
  %v1617 = vld [vmem:[%s1614 + $0x8] sm:$0xf]
  %v1618 = vld [vmem:[%s1614 + $0xc] sm:$0xf]
  %v1619 = vld [vmem:[%s1614 + $0x10] sm:$0xf]
  %v1620 = vld [vmem:[%s1614 + $0x14] sm:$0xf]
  %v1621 = vld [vmem:[%s1614 + $0x18] sm:$0xf]
  %v1622 = vld [vmem:[%s1614 + $0x1c] sm:$0xf]
  %v1623 = vld [vmem:[%s1614 + $0x20] sm:$0xf]
  %v1624 = vld [vmem:[%s1614 + $0x24] sm:$0xf]
  %v1625 = vld [vmem:[%s1614 + $0x28] sm:$0xf]
  %v1626 = vld [vmem:[%s1614 + $0x2c] sm:$0xf]
  %v1627 = vld [vmem:[%s1614 + $0x30] sm:$0xf]
  %v1628 = vld [vmem:[%s1614 + $0x34] sm:$0xf]
  %v1629 = vld [vmem:[%s1614 + $0x38] sm:$0xf]
  %v1630 = vld [vmem:[%s1614 + $0x3c] sm:$0xf]
  %v1631 = vpack.c.bf16 %v1606, %v1606
  %v1632 = vpack.c.bf16 %v1613, %v1613
  %s1633 = scalar_lea.vmem %s3, 512
  %v1634 = vld [vmem:[%s1633] sm:$0xf]
  %v1635 = vld [vmem:[%s1633 + $0x4] sm:$0xf]
  %v1636 = vld [vmem:[%s1633 + $0x8] sm:$0xf]
  %v1637 = vld [vmem:[%s1633 + $0xc] sm:$0xf]
  %v1638 = vld [vmem:[%s1633 + $0x10] sm:$0xf]
  %v1639 = vld [vmem:[%s1633 + $0x14] sm:$0xf]
  %v1640 = vld [vmem:[%s1633 + $0x18] sm:$0xf]
  %v1641 = vld [vmem:[%s1633 + $0x1c] sm:$0xf]
  %v1642 = vld [vmem:[%s1633 + $0x20] sm:$0xf]
  %v1643 = vld [vmem:[%s1633 + $0x24] sm:$0xf]
  %v1644 = vld [vmem:[%s1633 + $0x28] sm:$0xf]
  %v1645 = vld [vmem:[%s1633 + $0x2c] sm:$0xf]
  %v1646 = vld [vmem:[%s1633 + $0x30] sm:$0xf]
  %v1647 = vld [vmem:[%s1633 + $0x34] sm:$0xf]
  %v1648 = vld [vmem:[%s1633 + $0x38] sm:$0xf]
  %v1649 = vld [vmem:[%s1633 + $0x3c] sm:$0xf]
  %v1666 = vunpack.c.l.b16 %v1634
  %v1667 = vunpack.c.l.b16 %v1635
  %v1668 = vunpack.c.l.b16 %v1636
  %v1669 = vunpack.c.l.b16 %v1637
  %v1670 = vunpack.c.l.b16 %v1638
  %v1671 = vunpack.c.l.b16 %v1639
  %v1672 = vunpack.c.l.b16 %v1640
  %v1673 = vunpack.c.l.b16 %v1641
  %v1674 = vunpack.c.l.b16 %v1642
  %v1675 = vunpack.c.l.b16 %v1643
  %v1676 = vunpack.c.l.b16 %v1644
  %v1677 = vunpack.c.l.b16 %v1645
  %v1678 = vunpack.c.l.b16 %v1646
  %v1679 = vunpack.c.l.b16 %v1647
  %v1680 = vunpack.c.l.b16 %v1648
  %v1681 = vunpack.c.l.b16 %v1649
  %v1682 = vpack.c.b16 %v1667, %v1666
  %v1683 = vpack.c.b16 %v1669, %v1668
  %v1684 = vpack.c.b16 %v1671, %v1670
  %v1685 = vpack.c.b16 %v1673, %v1672
  %v1686 = vpack.c.b16 %v1675, %v1674
  %v1687 = vpack.c.b16 %v1677, %v1676
  %v1688 = vpack.c.b16 %v1679, %v1678
  %v1689 = vpack.c.b16 %v1681, %v1680
  %1698 = vmatprep.subr.bf16.mxu0 0
  %1699 = vmatpush1.bf16.msra.mxu0 %v1682
  %1700 = vmatprep.subr.bf16.mxu0 0
  %1701 = vmatpush1.bf16.msra.mxu0 %v1683
  %1702 = vmatprep.subr.bf16.mxu0 0
  %1703 = vmatpush1.bf16.msra.mxu0 %v1684
  %1704 = vmatprep.subr.bf16.mxu0 0
  %1705 = vmatpush1.bf16.msra.mxu0 %v1685
  %1706 = vmatprep.subr.bf16.mxu0 0
  %1707 = vmatpush1.bf16.msra.mxu0 %v1686
  %1708 = vmatprep.subr.bf16.mxu0 0
  %1709 = vmatpush1.bf16.msra.mxu0 %v1687
  %1710 = vmatprep.subr.bf16.mxu0 0
  %1711 = vmatpush1.bf16.msra.mxu0 %v1688
  %1712 = vmatprep.subr.bf16.mxu0 0
  %1713 = vmatpush1.bf16.msra.mxu0 %v1689
  %1714 = vmatprep.subr.bf16.mxu0 0
  %1715 = vmatpush1.bf16.msra.mxu0 0
  %1716 = vmatprep.subr.bf16.mxu0 0
  %1717 = vmatpush1.bf16.msra.mxu0 0
  %1718 = vmatprep.subr.bf16.mxu0 0
  %1719 = vmatpush1.bf16.msra.mxu0 0
  %1720 = vmatprep.subr.bf16.mxu0 0
  %1721 = vmatpush1.bf16.msra.mxu0 0
  %1722 = vmatprep.subr.bf16.mxu0 0
  %1723 = vmatpush1.bf16.msra.mxu0 0
  %1724 = vmatprep.subr.bf16.mxu0 0
  %1725 = vmatpush1.bf16.msra.mxu0 0
  %1726 = vmatprep.subr.bf16.mxu0 0
  %1727 = vmatpush1.bf16.msra.mxu0 0
  %1728 = vmatprep.subr.bf16.mxu0 0
  %1729 = vmatpush1.bf16.msra.mxu0 0
  %1730 = vmatprep.mubr.bf16.mxu0 0
  %1731 = vmatmul.mubr.bf16.gmra.mrb[0].mxu0 %v1183
  %v1732 = vpop.f32.mrb[0].mxu0
  %v1733 = vadd.f32 0.0, %v1732
  %v1734 = vpop.f32.mrb[0].mxu0
  %v1735 = vpop.f32.mrb[0].mxu0
  %v1736 = vpop.f32.mrb[0].mxu0
  %1737 = vdwg.mxu0
  %v1740 = vunpack.c.l.b16 %v1631
  %v1741 = vunpack.c.l.b16 %v1632
  %v1742 = vsel %vm1082, %v1741, %v1740
  %v1743 = vpack.c.b16 %v1742, %v1742
  %v1761 = vunpack.c.l.b16 %v1615
  %v1762 = vunpack.c.l.b16 %v1616
  %v1763 = vunpack.c.l.b16 %v1617
  %v1764 = vunpack.c.l.b16 %v1618
  %v1765 = vunpack.c.l.b16 %v1619
  %v1766 = vunpack.c.l.b16 %v1620
  %v1767 = vunpack.c.l.b16 %v1621
  %v1768 = vunpack.c.l.b16 %v1622
  %v1769 = vunpack.c.l.b16 %v1623
  %v1770 = vunpack.c.l.b16 %v1624
  %v1771 = vunpack.c.l.b16 %v1625
  %v1772 = vunpack.c.l.b16 %v1626
  %v1773 = vunpack.c.l.b16 %v1627
  %v1774 = vunpack.c.l.b16 %v1628
  %v1775 = vunpack.c.l.b16 %v1629
  %v1776 = vunpack.c.l.b16 %v1630
  %v1777 = vpack.c.b16 %v1762, %v1761
  %v1778 = vpack.c.b16 %v1764, %v1763
  %v1779 = vpack.c.b16 %v1766, %v1765
  %v1780 = vpack.c.b16 %v1768, %v1767
  %v1781 = vpack.c.b16 %v1770, %v1769
  %v1782 = vpack.c.b16 %v1772, %v1771
  %v1783 = vpack.c.b16 %v1774, %v1773
  %v1784 = vpack.c.b16 %v1776, %v1775
  %1793 = vmatprep.subr.bf16.mxu0 0
  %1794 = vmatpush1.bf16.msra.mxu0 %v1777
  %1795 = vmatprep.subr.bf16.mxu0 0
  %1796 = vmatpush1.bf16.msra.mxu0 %v1778
  %1797 = vmatprep.subr.bf16.mxu0 0
  %1798 = vmatpush1.bf16.msra.mxu0 %v1779
  %1799 = vmatprep.subr.bf16.mxu0 0
  %1800 = vmatpush1.bf16.msra.mxu0 %v1780
  %1801 = vmatprep.subr.bf16.mxu0 0
  %1802 = vmatpush1.bf16.msra.mxu0 %v1781
  %1803 = vmatprep.subr.bf16.mxu0 0
  %1804 = vmatpush1.bf16.msra.mxu0 %v1782
  %1805 = vmatprep.subr.bf16.mxu0 0
  %1806 = vmatpush1.bf16.msra.mxu0 %v1783
  %1807 = vmatprep.subr.bf16.mxu0 0
  %1808 = vmatpush1.bf16.msra.mxu0 %v1784
  %1809 = vmatprep.subr.bf16.mxu0 0
  %1810 = vmatpush1.bf16.msra.mxu0 0
  %1811 = vmatprep.subr.bf16.mxu0 0
  %1812 = vmatpush1.bf16.msra.mxu0 0
  %1813 = vmatprep.subr.bf16.mxu0 0
  %1814 = vmatpush1.bf16.msra.mxu0 0
  %1815 = vmatprep.subr.bf16.mxu0 0
  %1816 = vmatpush1.bf16.msra.mxu0 0
  %1817 = vmatprep.subr.bf16.mxu0 0
  %1818 = vmatpush1.bf16.msra.mxu0 0
  %1819 = vmatprep.subr.bf16.mxu0 0
  %1820 = vmatpush1.bf16.msra.mxu0 0
  %1821 = vmatprep.subr.bf16.mxu0 0
  %1822 = vmatpush1.bf16.msra.mxu0 0
  %1823 = vmatprep.subr.bf16.mxu0 0
  %1824 = vmatpush1.bf16.msra.mxu0 0
  %1825 = vmatprep.mubr.bf16.mxu0 0
  %1826 = vmatmul.mubr.bf16.gmra.mrb[0].mxu0 %v1743
  %v1827 = vpop.f32.mrb[0].mxu0
  %v1828 = vadd.f32 %v1733, %v1827
  %v1829 = vpop.f32.mrb[0].mxu0
  %v1830 = vpop.f32.mrb[0].mxu0
  %v1831 = vpop.f32.mrb[0].mxu0
  %1832 = vdwg.mxu0
  %v1833 = vlaneseq
  %v1834 = vshrl.u32 %v1833, 7
  %v1835 = vsub.s32 1, %v1834
  %v1836 = vrot.slane %v36, %v1835
  %v1837 = vadd.f32 %v1828, %v1836
  %s1838 = scalar_lea.vmem %s4, 256
  %v1839 = vld [vmem:[%s1838] sm:$0xf]
  %v1840 = vld [vmem:[%s1838 + $0x4] sm:$0xf]
  %v1841 = vld [vmem:[%s1838 + $0x8] sm:$0xf]
  %v1842 = vld [vmem:[%s1838 + $0xc] sm:$0xf]
  %v1843 = vld [vmem:[%s1838 + $0x10] sm:$0xf]
  %v1844 = vld [vmem:[%s1838 + $0x14] sm:$0xf]
  %v1845 = vld [vmem:[%s1838 + $0x18] sm:$0xf]
  %v1846 = vld [vmem:[%s1838 + $0x1c] sm:$0xf]
  %v1847 = vld [vmem:[%s1838 + $0x20] sm:$0xf]
  %v1848 = vld [vmem:[%s1838 + $0x24] sm:$0xf]
  %v1849 = vld [vmem:[%s1838 + $0x28] sm:$0xf]
  %v1850 = vld [vmem:[%s1838 + $0x2c] sm:$0xf]
  %v1851 = vld [vmem:[%s1838 + $0x30] sm:$0xf]
  %v1852 = vld [vmem:[%s1838 + $0x34] sm:$0xf]
  %v1853 = vld [vmem:[%s1838 + $0x38] sm:$0xf]
  %v1854 = vld [vmem:[%s1838 + $0x3c] sm:$0xf]
  %v1855 = vld [vmem:[%s1838 + $0x40] sm:$0xf]
  %v1856 = vld [vmem:[%s1838 + $0x44] sm:$0xf]
  %v1857 = vld [vmem:[%s1838 + $0x48] sm:$0xf]
  %v1858 = vld [vmem:[%s1838 + $0x4c] sm:$0xf]
  %v1859 = vld [vmem:[%s1838 + $0x50] sm:$0xf]
  %v1860 = vld [vmem:[%s1838 + $0x54] sm:$0xf]
  %v1861 = vld [vmem:[%s1838 + $0x58] sm:$0xf]
  %v1862 = vld [vmem:[%s1838 + $0x5c] sm:$0xf]
  %v1863 = vld [vmem:[%s1838 + $0x60] sm:$0xf]
  %v1864 = vld [vmem:[%s1838 + $0x64] sm:$0xf]
  %v1865 = vld [vmem:[%s1838 + $0x68] sm:$0xf]
  %v1866 = vld [vmem:[%s1838 + $0x6c] sm:$0xf]
  %v1867 = vld [vmem:[%s1838 + $0x70] sm:$0xf]
  %v1868 = vld [vmem:[%s1838 + $0x74] sm:$0xf]
  %v1869 = vld [vmem:[%s1838 + $0x78] sm:$0xf]
  %v1870 = vld [vmem:[%s1838 + $0x7c] sm:$0xf]
  %v1871 = vlaneseq
  %v1872 = vshrl.u32 %v1871, 7
  %v1873 = vsub.s32 4, %v1872
  %v1874 = vrot.slane %v35, %v1873
  %v1907 = vunpack.c.l.b16 %v1839
  %v1908 = vunpack.c.l.b16 %v1840
  %v1909 = vunpack.c.l.b16 %v1841
  %v1910 = vunpack.c.l.b16 %v1842
  %v1911 = vunpack.c.l.b16 %v1843
  %v1912 = vunpack.c.l.b16 %v1844
  %v1913 = vunpack.c.l.b16 %v1845
  %v1914 = vunpack.c.l.b16 %v1846
  %v1915 = vunpack.c.l.b16 %v1847
  %v1916 = vunpack.c.l.b16 %v1848
  %v1917 = vunpack.c.l.b16 %v1849
  %v1918 = vunpack.c.l.b16 %v1850
  %v1919 = vunpack.c.l.b16 %v1851
  %v1920 = vunpack.c.l.b16 %v1852
  %v1921 = vunpack.c.l.b16 %v1853
  %v1922 = vunpack.c.l.b16 %v1854
  %v1923 = vunpack.c.l.b16 %v1855
  %v1924 = vunpack.c.l.b16 %v1856
  %v1925 = vunpack.c.l.b16 %v1857
  %v1926 = vunpack.c.l.b16 %v1858
  %v1927 = vunpack.c.l.b16 %v1859
  %v1928 = vunpack.c.l.b16 %v1860
  %v1929 = vunpack.c.l.b16 %v1861
  %v1930 = vunpack.c.l.b16 %v1862
  %v1931 = vunpack.c.l.b16 %v1863
  %v1932 = vunpack.c.l.b16 %v1864
  %v1933 = vunpack.c.l.b16 %v1865
  %v1934 = vunpack.c.l.b16 %v1866
  %v1935 = vunpack.c.l.b16 %v1867
  %v1936 = vunpack.c.l.b16 %v1868
  %v1937 = vunpack.c.l.b16 %v1869
  %v1938 = vunpack.c.l.b16 %v1870
  %v1939 = vpack.c.b16 %v1908, %v1907
  %v1940 = vpack.c.b16 %v1910, %v1909
  %v1941 = vpack.c.b16 %v1912, %v1911
  %v1942 = vpack.c.b16 %v1914, %v1913
  %v1943 = vpack.c.b16 %v1916, %v1915
  %v1944 = vpack.c.b16 %v1918, %v1917
  %v1945 = vpack.c.b16 %v1920, %v1919
  %v1946 = vpack.c.b16 %v1922, %v1921
  %v1947 = vpack.c.b16 %v1924, %v1923
  %v1948 = vpack.c.b16 %v1926, %v1925
  %v1949 = vpack.c.b16 %v1928, %v1927
  %v1950 = vpack.c.b16 %v1930, %v1929
  %v1951 = vpack.c.b16 %v1932, %v1931
  %v1952 = vpack.c.b16 %v1934, %v1933
  %v1953 = vpack.c.b16 %v1936, %v1935
  %v1954 = vpack.c.b16 %v1938, %v1937
  %1971 = vmatprep.subr.bf16.mxu0 0
  %1972 = vmatpush1.bf16.msra.mxu0 %v1939
  %1973 = vmatprep.subr.bf16.mxu0 0
  %1974 = vmatpush1.bf16.msra.mxu0 %v1940
  %1975 = vmatprep.subr.bf16.mxu0 0
  %1976 = vmatpush1.bf16.msra.mxu0 %v1941
  %1977 = vmatprep.subr.bf16.mxu0 0
  %1978 = vmatpush1.bf16.msra.mxu0 %v1942
  %1979 = vmatprep.subr.bf16.mxu0 0
  %1980 = vmatpush1.bf16.msra.mxu0 %v1943
  %1981 = vmatprep.subr.bf16.mxu0 0
  %1982 = vmatpush1.bf16.msra.mxu0 %v1944
  %1983 = vmatprep.subr.bf16.mxu0 0
  %1984 = vmatpush1.bf16.msra.mxu0 %v1945
  %1985 = vmatprep.subr.bf16.mxu0 0
  %1986 = vmatpush1.bf16.msra.mxu0 %v1946
  %1987 = vmatprep.subr.bf16.mxu0 0
  %1988 = vmatpush1.bf16.msra.mxu0 %v1947
  %1989 = vmatprep.subr.bf16.mxu0 0
  %1990 = vmatpush1.bf16.msra.mxu0 %v1948
  %1991 = vmatprep.subr.bf16.mxu0 0
  %1992 = vmatpush1.bf16.msra.mxu0 %v1949
  %1993 = vmatprep.subr.bf16.mxu0 0
  %1994 = vmatpush1.bf16.msra.mxu0 %v1950
  %1995 = vmatprep.subr.bf16.mxu0 0
  %1996 = vmatpush1.bf16.msra.mxu0 %v1951
  %1997 = vmatprep.subr.bf16.mxu0 0
  %1998 = vmatpush1.bf16.msra.mxu0 %v1952
  %1999 = vmatprep.subr.bf16.mxu0 0
  %2000 = vmatpush1.bf16.msra.mxu0 %v1953
  %2001 = vmatprep.subr.bf16.mxu0 0
  %2002 = vmatpush1.bf16.msra.mxu0 %v1954
  %2003 = vmatprep.mubr.bf16.mxu0 %v668
  %2004 = vmatmul.mubr.bf16.gmra.mrb[0].mxu0 %v667
  %v2005 = vpop.f32.mrb[0].mxu0
  %v2006 = vadd.f32 %v1874, %v2005
  %v2007 = vpop.f32.mrb[0].mxu0
  %v2008 = vpop.f32.mrb[0].mxu0
  %v2009 = vpop.f32.mrb[0].mxu0
  %2010 = vdwg.mxu0
  %v2011 = vpack.c.bf16 %v1159, %v1159
  %v2012 = vpack.c.bf16 %v1165, %v1165
  %v2013 = vpack.c.bf16 %v2006, %v2006
  %2014 = vmatprep.subr.bf16.mxu0 0
  %2015 = vmatpush1.bf16.msra.mxu0 %v877
  %2016 = vmatprep.subr.bf16.mxu0 0
  %2017 = vmatpush1.bf16.msra.mxu0 %v878
  %2018 = vmatprep.subr.bf16.mxu0 0
  %2019 = vmatpush1.bf16.msra.mxu0 %v879
  %2020 = vmatprep.subr.bf16.mxu0 0
  %2021 = vmatpush1.bf16.msra.mxu0 %v880
  %2022 = vmatprep.subr.bf16.mxu0 0
  %2023 = vmatpush1.bf16.msra.mxu0 %v881
  %2024 = vmatprep.subr.bf16.mxu0 0
  %2025 = vmatpush1.bf16.msra.mxu0 %v882
  %2026 = vmatprep.subr.bf16.mxu0 0
  %2027 = vmatpush1.bf16.msra.mxu0 %v883
  %2028 = vmatprep.subr.bf16.mxu0 0
  %2029 = vmatpush1.bf16.msra.mxu0 %v884
  %2030 = vmatprep.subr.bf16.mxu0 0
  %2031 = vmatpush1.bf16.msra.mxu0 0
  %2032 = vmatprep.subr.bf16.mxu0 0
  %2033 = vmatpush1.bf16.msra.mxu0 0
  %2034 = vmatprep.subr.bf16.mxu0 0
  %2035 = vmatpush1.bf16.msra.mxu0 0
  %2036 = vmatprep.subr.bf16.mxu0 0
  %2037 = vmatpush1.bf16.msra.mxu0 0
  %2038 = vmatprep.subr.bf16.mxu0 0
  %2039 = vmatpush1.bf16.msra.mxu0 0
  %2040 = vmatprep.subr.bf16.mxu0 0
  %2041 = vmatpush1.bf16.msra.mxu0 0
  %2042 = vmatprep.subr.bf16.mxu0 0
  %2043 = vmatpush1.bf16.msra.mxu0 0
  %2044 = vmatprep.subr.bf16.mxu0 0
  %2045 = vmatpush1.bf16.msra.mxu0 0
  %2046 = vmatprep.mubr.bf16.mxu0 0
  %2047 = vmatmul.mubr.bf16.gmra.mrb[0].mxu0 %v2013
  %v2048 = vpop.f32.mrb[0].mxu0
  %v2049 = vadd.f32 0.0, %v2048
  %v2050 = vpop.f32.mrb[0].mxu0
  %v2051 = vpop.f32.mrb[0].mxu0
  %v2052 = vpop.f32.mrb[0].mxu0
  %2053 = vdwg.mxu0
  %v2056 = vunpack.c.l.b16 %v2011
  %v2057 = vunpack.c.l.b16 %v2012
  %v2058 = vsel %vm1082, %v2057, %v2056
  %v2059 = vpack.c.b16 %v2058, %v2058
  %2061 = vmatprep.subr.bf16.mxu0 0
  %2062 = vmatpush1.bf16.msra.mxu0 %v965
  %2063 = vmatprep.subr.bf16.mxu0 0
  %2064 = vmatpush1.bf16.msra.mxu0 %v966
  %2065 = vmatprep.subr.bf16.mxu0 0
  %2066 = vmatpush1.bf16.msra.mxu0 %v967
  %2067 = vmatprep.subr.bf16.mxu0 0
  %2068 = vmatpush1.bf16.msra.mxu0 %v968
  %2069 = vmatprep.subr.bf16.mxu0 0
  %2070 = vmatpush1.bf16.msra.mxu0 %v969
  %2071 = vmatprep.subr.bf16.mxu0 0
  %2072 = vmatpush1.bf16.msra.mxu0 %v970
  %2073 = vmatprep.subr.bf16.mxu0 0
  %2074 = vmatpush1.bf16.msra.mxu0 %v971
  %2075 = vmatprep.subr.bf16.mxu0 0
  %2076 = vmatpush1.bf16.msra.mxu0 %v972
  %2077 = vmatprep.subr.bf16.mxu0 0
  %2078 = vmatpush1.bf16.msra.mxu0 0
  %2079 = vmatprep.subr.bf16.mxu0 0
  %2080 = vmatpush1.bf16.msra.mxu0 0
  %2081 = vmatprep.subr.bf16.mxu0 0
  %2082 = vmatpush1.bf16.msra.mxu0 0
  %2083 = vmatprep.subr.bf16.mxu0 0
  %2084 = vmatpush1.bf16.msra.mxu0 0
  %2085 = vmatprep.subr.bf16.mxu0 0
  %2086 = vmatpush1.bf16.msra.mxu0 0
  %2087 = vmatprep.subr.bf16.mxu0 0
  %2088 = vmatpush1.bf16.msra.mxu0 0
  %2089 = vmatprep.subr.bf16.mxu0 0
  %2090 = vmatpush1.bf16.msra.mxu0 0
  %2091 = vmatprep.subr.bf16.mxu0 0
  %2092 = vmatpush1.bf16.msra.mxu0 0
  %2093 = vmatprep.mubr.bf16.mxu0 0
  %2094 = vmatmul.mubr.bf16.gmra.mrb[0].mxu0 %v2059
  %v2095 = vpop.f32.mrb[0].mxu0
  %v2096 = vadd.f32 %v2049, %v2095
  %v2097 = vpop.f32.mrb[0].mxu0
  %v2098 = vpop.f32.mrb[0].mxu0
  %v2099 = vpop.f32.mrb[0].mxu0
  %2100 = vdwg.mxu0
  %v2101 = vadd.f32 %v2096, %v1024
  %v2102 = vmul.f32 %v2101, %v1029
  %v2105 = vunpack.c.l.s4 1966171168
  %v2106 = vunpack.c.0.s8 %v2105
  %v2107 = vlaneseq
  %v2108 = vshrl.u32 %v2107, 7
  %v2109 = vsub.s32 %v2106, %v2108
  %v2110 = vrot.slane %v2102, %v2109
  %v2111 = vcombine.high %v2110, %v2110
  %v2113 = vunpack.c.l.s4 1966171168
  %v2114 = vunpack.c.0.s8 %v2113
  %v2115 = vlaneseq
  %v2116 = vshrl.u32 %v2115, 7
  %v2117 = vsub.s32 %v2114, %v2116
  %v2118 = vrot.slane %v2110, %v2117
  %v2120 = vunpack.c.l.s4 1966171168
  %v2121 = vunpack.c.0.s8 %v2120
  %v2122 = vlaneseq
  %v2123 = vshrl.u32 %v2122, 7
  %v2124 = vsub.s32 %v2121, %v2123
  %v2125 = vrot.slane %v2111, %v2124
  %v2126 = vlaneseq
  %v2127 = vshrl.u32 %v2126, 7
  %v2128 = vsub.s32 0, %v2127
  %v2129 = vrot.slane %v2118, %v2128
  %v2130 = vlaneseq
  %v2131 = vshrl.u32 %v2130, 7
  %v2132 = vsub.s32 0, %v2131
  %v2133 = vrot.slane %v2125, %v2132
  %v2136 = vmul.f32 %v2129, %v493
  %v2137 = vmul.f32 %v2133, %v496
  %2138 = vadd.xlane.f32.xlu0 %v2136
  %v2139 = vpop.xlane.xlu0 %2138
  %2140 = vadd.xlane.f32.xlu0 %v2137
  %v2141 = vpop.xlane.xlu0 %2140
  %v2144 = vlaneseq
  %v2145 = vshrl.u32 %v2144, 7
  %v2146 = vsub.s32 %v1073, %v2145
  %v2147 = vrot.slane %v2139, %v2146
  %v2148 = vlaneseq
  %v2149 = vshrl.u32 %v2148, 7
  %v2150 = vsub.s32 %v1073, %v2149
  %v2151 = vrot.slane %v2141, %v2150
  %v2152 = vsel %vm1082, %v2151, %v2147
  %v2154 = vsel %vm1085, %v2152, -inf
  %2155 = vmax.xlane.f32.xlu0 %v2154
  %v2156 = vpop.xlane.xlu0 %2155
  %v2158 = vlaneseq
  %v2159 = vshrl.u32 %v2158, 7
  %v2160 = vsub.s32 0, %v2159
  %v2161 = vrot.slane %v2156, %v2160
  %v2162 = vlaneseq
  %v2163 = vshrl.u32 %v2162, 7
  %v2164 = vsub.s32 1, %v2163
  %v2165 = vrot.slane %v2156, %v2164
  %v2168 = vsub.f32 %v2139, %v2161
  %v2169 = vsub.f32 %v2141, %v2165
  %v2170 = vmul.f32 %v2168, 1.442695
  %v2171 = vpow.pop %v2170
  %v2172 = vmul.f32 %v2169, 1.442695
  %v2173 = vpow.pop %v2172
  %2176 = vset.pattern.permute.xlu0 0
  %2177 = vperm.xlu0 %2176, %v2171
  %v2178 = vpop.permute.xlu0 %2177
  %2179 = vset.pattern.permute.xlu0 0
  %2180 = vperm.xlu0 %2179, %v2173
  %v2181 = vpop.permute.xlu0 %2180
  %v2182 = vlaneseq
  %v2183 = vshrl.u32 %v2182, 7
  %v2184 = vsub.s32 %v1073, %v2183
  %v2185 = vrot.slane %v2178, %v2184
  %v2186 = vlaneseq
  %v2187 = vshrl.u32 %v2186, 7
  %v2188 = vsub.s32 %v1073, %v2187
  %v2189 = vrot.slane %v2181, %v2188
  %v2190 = vsel %vm1082, %v2189, %v2185
  %v2192 = vsel %vm1085, %v2190, 0.0
  %2193 = vadd.xlane.f32.xlu0 %v2192
  %v2194 = vpop.xlane.xlu0 %2193
  %v2196 = vlaneseq
  %v2197 = vshrl.u32 %v2196, 7
  %v2198 = vsub.s32 0, %v2197
  %v2199 = vrot.slane %v2194, %v2198
  %v2200 = vlaneseq
  %v2201 = vshrl.u32 %v2200, 7
  %v2202 = vsub.s32 1, %v2201
  %v2203 = vrot.slane %v2194, %v2202
  %v2206 = vrcp.pop %v2199
  %v2207 = vmul.f32 %v2171, %v2206
  %v2208 = vrcp.pop %v2203
  %v2209 = vmul.f32 %v2173, %v2208
  %2211 = vset.pattern.permute.xlu0 0
  %2212 = vperm.xlu0 %2211, %v2207
  %v2213 = vpop.permute.xlu0 %2212
  %2216 = vset.pattern.permute.xlu0 0
  %2217 = vperm.xlu0 %2216, %v2209
  %v2218 = vpop.permute.xlu0 %2217
  %v2220 = vmul.f32 %v2213, %v493
  %v2221 = vmul.f32 %v2218, %v496
  %v2222 = vrot.slane %v2220, 4
  %v2223 = vadd.f32 %v2220, %v2222
  %v2224 = vrot.slane %v2223, 2
  %v2225 = vadd.f32 %v2223, %v2224
  %v2226 = vrot.slane %v2225, 1
  %v2227 = vadd.f32 %v2225, %v2226
  %v2228 = vrot.slane %v2221, 4
  %v2229 = vadd.f32 %v2221, %v2228
  %v2230 = vrot.slane %v2229, 2
  %v2231 = vadd.f32 %v2229, %v2230
  %v2232 = vrot.slane %v2231, 1
  %v2233 = vadd.f32 %v2231, %v2232
  %v2234 = vpack.c.bf16 %v1837, %v1837
  %2235 = vmatprep.subr.bf16.mxu0 0
  %2236 = vmatpush1.bf16.msra.mxu0 %v1220
  %2237 = vmatprep.subr.bf16.mxu0 0
  %2238 = vmatpush1.bf16.msra.mxu0 %v1221
  %2239 = vmatprep.subr.bf16.mxu0 0
  %2240 = vmatpush1.bf16.msra.mxu0 %v1222
  %2241 = vmatprep.subr.bf16.mxu0 0
  %2242 = vmatpush1.bf16.msra.mxu0 %v1223
  %2243 = vmatprep.subr.bf16.mxu0 0
  %2244 = vmatpush1.bf16.msra.mxu0 %v1224
  %2245 = vmatprep.subr.bf16.mxu0 0
  %2246 = vmatpush1.bf16.msra.mxu0 %v1225
  %2247 = vmatprep.subr.bf16.mxu0 0
  %2248 = vmatpush1.bf16.msra.mxu0 %v1226
  %2249 = vmatprep.subr.bf16.mxu0 0
  %2250 = vmatpush1.bf16.msra.mxu0 %v1227
  %2251 = vmatprep.subr.bf16.mxu0 0
  %2252 = vmatpush1.bf16.msra.mxu0 0
  %2253 = vmatprep.subr.bf16.mxu0 0
  %2254 = vmatpush1.bf16.msra.mxu0 0
  %2255 = vmatprep.subr.bf16.mxu0 0
  %2256 = vmatpush1.bf16.msra.mxu0 0
  %2257 = vmatprep.subr.bf16.mxu0 0
  %2258 = vmatpush1.bf16.msra.mxu0 0
  %2259 = vmatprep.subr.bf16.mxu0 0
  %2260 = vmatpush1.bf16.msra.mxu0 0
  %2261 = vmatprep.subr.bf16.mxu0 0
  %2262 = vmatpush1.bf16.msra.mxu0 0
  %2263 = vmatprep.subr.bf16.mxu0 0
  %2264 = vmatpush1.bf16.msra.mxu0 0
  %2265 = vmatprep.subr.bf16.mxu0 0
  %2266 = vmatpush1.bf16.msra.mxu0 0
  %2267 = vmatprep.mubr.bf16.mxu0 0
  %2268 = vmatmul.mubr.bf16.gmra.mrb[0].mxu0 %v2234
  %v2269 = vpop.f32.mrb[0].mxu0
  %v2270 = vadd.f32 %v1187, %v2269
  %v2271 = vpop.f32.mrb[0].mxu0
  %v2272 = vpop.f32.mrb[0].mxu0
  %v2273 = vpop.f32.mrb[0].mxu0
  %2274 = vdwg.mxu0
  %v2277 = vunpack.c.l.s4 1966171168
  %v2278 = vunpack.c.0.s8 %v2277
  %v2279 = vlaneseq
  %v2280 = vshrl.u32 %v2279, 7
  %v2281 = vsub.s32 %v2278, %v2280
  %v2282 = vrot.slane %v2270, %v2281
  %v2283 = vcombine.high %v2282, %v2282
  %v2285 = vunpack.c.l.s4 1966171168
  %v2286 = vunpack.c.0.s8 %v2285
  %v2287 = vlaneseq
  %v2288 = vshrl.u32 %v2287, 7
  %v2289 = vsub.s32 %v2286, %v2288
  %v2290 = vrot.slane %v2282, %v2289
  %v2292 = vunpack.c.l.s4 1966171168
  %v2293 = vunpack.c.0.s8 %v2292
  %v2294 = vlaneseq
  %v2295 = vshrl.u32 %v2294, 7
  %v2296 = vsub.s32 %v2293, %v2295
  %v2297 = vrot.slane %v2283, %v2296
  %v2298 = vlaneseq
  %v2299 = vshrl.u32 %v2298, 7
  %v2300 = vsub.s32 0, %v2299
  %v2301 = vrot.slane %v2290, %v2300
  %v2302 = vlaneseq
  %v2303 = vshrl.u32 %v2302, 7
  %v2304 = vsub.s32 0, %v2303
  %v2305 = vrot.slane %v2297, %v2304
  %v2308 = vmul.f32 %v2301, %v320
  %v2309 = vmul.f32 %v2301, %v321
  %v2310 = vmul.f32 %v2305, %v322
  %v2311 = vmul.f32 %v2305, %v323
  %v2312 = vpack.c.bf16 %v2309, %v2308
  %v2313 = vpack.c.bf16 %v2311, %v2310
  %2314 = vmatprep.subr.bf16.mxu0 0
  %2315 = vmatpush1.bf16.msra.mxu0 %v1364
  %2316 = vmatprep.subr.bf16.mxu0 0
  %2317 = vmatpush1.bf16.msra.mxu0 %v1365
  %2318 = vmatprep.subr.bf16.mxu0 0
  %2319 = vmatpush1.bf16.msra.mxu0 %v1366
  %2320 = vmatprep.subr.bf16.mxu0 0
  %2321 = vmatpush1.bf16.msra.mxu0 %v1367
  %2322 = vmatprep.subr.bf16.mxu0 0
  %2323 = vmatpush1.bf16.msra.mxu0 %v1368
  %2324 = vmatprep.subr.bf16.mxu0 0
  %2325 = vmatpush1.bf16.msra.mxu0 %v1369
  %2326 = vmatprep.subr.bf16.mxu0 0
  %2327 = vmatpush1.bf16.msra.mxu0 %v1370
  %2328 = vmatprep.subr.bf16.mxu0 0
  %2329 = vmatpush1.bf16.msra.mxu0 %v1371
  %2330 = vmatprep.subr.bf16.mxu0 0
  %2331 = vmatpush1.bf16.msra.mxu0 0
  %2332 = vmatprep.subr.bf16.mxu0 0
  %2333 = vmatpush1.bf16.msra.mxu0 0
  %2334 = vmatprep.subr.bf16.mxu0 0
  %2335 = vmatpush1.bf16.msra.mxu0 0
  %2336 = vmatprep.subr.bf16.mxu0 0
  %2337 = vmatpush1.bf16.msra.mxu0 0
  %2338 = vmatprep.subr.bf16.mxu0 0
  %2339 = vmatpush1.bf16.msra.mxu0 0
  %2340 = vmatprep.subr.bf16.mxu0 0
  %2341 = vmatpush1.bf16.msra.mxu0 0
  %2342 = vmatprep.subr.bf16.mxu0 0
  %2343 = vmatpush1.bf16.msra.mxu0 0
  %2344 = vmatprep.subr.bf16.mxu0 0
  %2345 = vmatpush1.bf16.msra.mxu0 0
  %2346 = vmatprep.mubr.bf16.mxu0 0
  %2347 = vmatmul.mubr.bf16.gmra.mrb[0].mxu0 %v2312
  %v2348 = vpop.f32.mrb[0].mxu0
  %v2349 = vadd.f32 0.0, %v2348
  %v2350 = vpop.f32.mrb[0].mxu0
  %v2351 = vpop.f32.mrb[0].mxu0
  %v2352 = vadd.f32 0.0, %v2351
  %v2353 = vpop.f32.mrb[0].mxu0
  %2354 = vmatprep.mubr.bf16.mxu0 0
  %2355 = vmatmul.mubr.bf16.gmra.mrb[0].mxu0 %v2313
  %v2356 = vpop.f32.mrb[0].mxu0
  %v2357 = vadd.f32 0.0, %v2356
  %v2358 = vpop.f32.mrb[0].mxu0
  %v2359 = vpop.f32.mrb[0].mxu0
  %v2360 = vadd.f32 0.0, %v2359
  %v2361 = vpop.f32.mrb[0].mxu0
  %2362 = vdwg.mxu0
  %v2363 = vadd.f32 %v2349, %v601
  %v2364 = vadd.f32 %v2352, %v604
  %v2365 = vadd.f32 %v2357, %v609
  %v2366 = vadd.f32 %v2360, %v612
  %v2367 = vadd.f32 %v2363, %v1436
  %v2368 = vadd.f32 %v2364, %v1436
  %v2369 = vadd.f32 %v2365, %v1436
  %v2370 = vadd.f32 %v2366, %v1436
  %v2371 = vmul.f32 %v2227, %v1444
  %v2372 = vmul.f32 %v2233, %v1444
  %v2373 = vlaneseq
  %v2374 = vshrl.u32 %v2373, 7
  %v2375 = vsub.s32 0, %v2374
  %v2376 = vrot.slane %v2371, %v2375
  %v2377 = vlaneseq
  %v2378 = vshrl.u32 %v2377, 7
  %v2379 = vsub.s32 0, %v2378
  %v2380 = vrot.slane %v2372, %v2379
  %v2381 = vmul.f32 %v2367, %v2376
  %v2382 = vmul.f32 %v2368, %v2376
  %v2383 = vmul.f32 %v2369, %v2380
  %v2384 = vmul.f32 %v2370, %v2380
  %2385 = vadd.xlane.f32.xlu0 %v2381
  %v2386 = vpop.xlane.xlu0 %2385
  %2387 = vadd.xlane.f32.xlu0 %v2382
  %v2388 = vpop.xlane.xlu0 %2387
  %2389 = vadd.xlane.f32.xlu0 %v2383
  %v2390 = vpop.xlane.xlu0 %2389
  %2391 = vadd.xlane.f32.xlu0 %v2384
  %v2392 = vpop.xlane.xlu0 %2391
  %v2397 = vlaneseq
  %v2398 = vshrl.u32 %v2397, 7
  %v2399 = vsub.s32 %v1073, %v2398
  %v2400 = vrot.slane %v2386, %v2399
  %v2401 = vlaneseq
  %v2402 = vshrl.u32 %v2401, 7
  %v2403 = vsub.s32 %v1475, %v2402
  %v2404 = vrot.slane %v2388, %v2403
  %v2405 = vsel %vm1480, %v2404, %v2400
  %v2406 = vlaneseq
  %v2407 = vshrl.u32 %v2406, 7
  %v2408 = vsub.s32 %v1073, %v2407
  %v2409 = vrot.slane %v2390, %v2408
  %v2410 = vlaneseq
  %v2411 = vshrl.u32 %v2410, 7
  %v2412 = vsub.s32 %v1475, %v2411
  %v2413 = vrot.slane %v2392, %v2412
  %v2414 = vsel %vm1480, %v2413, %v2409
  %v2415 = vsel %vm1082, %v2414, %v2405
  %v2417 = vsel %vm1493, %v2415, -inf
  %2418 = vmax.xlane.f32.xlu0 %v2417
  %v2419 = vpop.xlane.xlu0 %2418
  %v2421 = vlaneseq
  %v2422 = vshrl.u32 %v2421, 7
  %v2423 = vsub.s32 0, %v2422
  %v2424 = vrot.slane %v2419, %v2423
  %v2425 = vlaneseq
  %v2426 = vshrl.u32 %v2425, 7
  %v2427 = vsub.s32 1, %v2426
  %v2428 = vrot.slane %v2419, %v2427
  %v2431 = vsub.f32 %v2386, %v2424
  %v2432 = vsub.f32 %v2388, %v2424
  %v2433 = vsub.f32 %v2390, %v2428
  %v2434 = vsub.f32 %v2392, %v2428
  %v2435 = vmul.f32 %v2431, 1.442695
  %v2436 = vpow.pop %v2435
  %v2437 = vmul.f32 %v2432, 1.442695
  %v2438 = vpow.pop %v2437
  %v2439 = vmul.f32 %v2433, 1.442695
  %v2440 = vpow.pop %v2439
  %v2441 = vmul.f32 %v2434, 1.442695
  %v2442 = vpow.pop %v2441
  %2447 = vset.pattern.permute.xlu0 0
  %2448 = vperm.xlu0 %2447, %v2436
  %v2449 = vpop.permute.xlu0 %2448
  %2450 = vset.pattern.permute.xlu0 0
  %2451 = vperm.xlu0 %2450, %v2438
  %v2452 = vpop.permute.xlu0 %2451
  %2453 = vset.pattern.permute.xlu0 0
  %2454 = vperm.xlu0 %2453, %v2440
  %v2455 = vpop.permute.xlu0 %2454
  %2456 = vset.pattern.permute.xlu0 0
  %2457 = vperm.xlu0 %2456, %v2442
  %v2458 = vpop.permute.xlu0 %2457
  %v2459 = vlaneseq
  %v2460 = vshrl.u32 %v2459, 7
  %v2461 = vsub.s32 %v1073, %v2460
  %v2462 = vrot.slane %v2449, %v2461
  %v2463 = vlaneseq
  %v2464 = vshrl.u32 %v2463, 7
  %v2465 = vsub.s32 %v1475, %v2464
  %v2466 = vrot.slane %v2452, %v2465
  %v2467 = vsel %vm1480, %v2466, %v2462
  %v2468 = vlaneseq
  %v2469 = vshrl.u32 %v2468, 7
  %v2470 = vsub.s32 %v1073, %v2469
  %v2471 = vrot.slane %v2455, %v2470
  %v2472 = vlaneseq
  %v2473 = vshrl.u32 %v2472, 7
  %v2474 = vsub.s32 %v1475, %v2473
  %v2475 = vrot.slane %v2458, %v2474
  %v2476 = vsel %vm1480, %v2475, %v2471
  %v2477 = vsel %vm1082, %v2476, %v2467
  %v2479 = vsel %vm1493, %v2477, 0.0
  %2480 = vadd.xlane.f32.xlu0 %v2479
  %v2481 = vpop.xlane.xlu0 %2480
  %v2483 = vlaneseq
  %v2484 = vshrl.u32 %v2483, 7
  %v2485 = vsub.s32 0, %v2484
  %v2486 = vrot.slane %v2481, %v2485
  %v2487 = vlaneseq
  %v2488 = vshrl.u32 %v2487, 7
  %v2489 = vsub.s32 1, %v2488
  %v2490 = vrot.slane %v2481, %v2489
  %v2493 = vrcp.pop %v2486
  %v2494 = vmul.f32 %v2436, %v2493
  %v2495 = vmul.f32 %v2438, %v2493
  %v2496 = vrcp.pop %v2490
  %v2497 = vmul.f32 %v2440, %v2496
  %v2498 = vmul.f32 %v2442, %v2496
  %2500 = vset.pattern.permute.xlu0 0
  %2501 = vperm.xlu0 %2500, %v2494
  %v2502 = vpop.permute.xlu0 %2501
  %2505 = vset.pattern.permute.xlu0 0
  %2506 = vperm.xlu0 %2505, %v2495
  %v2507 = vpop.permute.xlu0 %2506
  %2510 = vset.pattern.permute.xlu0 0
  %2511 = vperm.xlu0 %2510, %v2497
  %v2512 = vpop.permute.xlu0 %2511
  %2515 = vset.pattern.permute.xlu0 0
  %2516 = vperm.xlu0 %2515, %v2498
  %v2517 = vpop.permute.xlu0 %2516
  %v2519 = vmul.f32 %v2502, %v320
  %v2520 = vmul.f32 %v2507, %v321
  %v2521 = vmul.f32 %v2512, %v322
  %v2522 = vmul.f32 %v2517, %v323
  %v2523 = vadd.f32 %v2519, %v2520
  %v2524 = vrot.slane %v2523, 4
  %v2525 = vadd.f32 %v2523, %v2524
  %v2526 = vrot.slane %v2525, 2
  %v2527 = vadd.f32 %v2525, %v2526
  %v2528 = vrot.slane %v2527, 1
  %v2529 = vadd.f32 %v2527, %v2528
  %v2530 = vadd.f32 %v2521, %v2522
  %v2531 = vrot.slane %v2530, 4
  %v2532 = vadd.f32 %v2530, %v2531
  %v2533 = vrot.slane %v2532, 2
  %v2534 = vadd.f32 %v2532, %v2533
  %v2535 = vrot.slane %v2534, 1
  %v2536 = vadd.f32 %v2534, %v2535
  %v2537 = vpack.c.bf16 %v2529, %v2529
  %v2538 = vpack.c.bf16 %v2536, %v2536
  %2539 = vmatprep.subr.bf16.mxu0 0
  %2540 = vmatpush1.bf16.msra.mxu0 %v1682
  %2541 = vmatprep.subr.bf16.mxu0 0
  %2542 = vmatpush1.bf16.msra.mxu0 %v1683
  %2543 = vmatprep.subr.bf16.mxu0 0
  %2544 = vmatpush1.bf16.msra.mxu0 %v1684
  %2545 = vmatprep.subr.bf16.mxu0 0
  %2546 = vmatpush1.bf16.msra.mxu0 %v1685
  %2547 = vmatprep.subr.bf16.mxu0 0
  %2548 = vmatpush1.bf16.msra.mxu0 %v1686
  %2549 = vmatprep.subr.bf16.mxu0 0
  %2550 = vmatpush1.bf16.msra.mxu0 %v1687
  %2551 = vmatprep.subr.bf16.mxu0 0
  %2552 = vmatpush1.bf16.msra.mxu0 %v1688
  %2553 = vmatprep.subr.bf16.mxu0 0
  %2554 = vmatpush1.bf16.msra.mxu0 %v1689
  %2555 = vmatprep.subr.bf16.mxu0 0
  %2556 = vmatpush1.bf16.msra.mxu0 0
  %2557 = vmatprep.subr.bf16.mxu0 0
  %2558 = vmatpush1.bf16.msra.mxu0 0
  %2559 = vmatprep.subr.bf16.mxu0 0
  %2560 = vmatpush1.bf16.msra.mxu0 0
  %2561 = vmatprep.subr.bf16.mxu0 0
  %2562 = vmatpush1.bf16.msra.mxu0 0
  %2563 = vmatprep.subr.bf16.mxu0 0
  %2564 = vmatpush1.bf16.msra.mxu0 0
  %2565 = vmatprep.subr.bf16.mxu0 0
  %2566 = vmatpush1.bf16.msra.mxu0 0
  %2567 = vmatprep.subr.bf16.mxu0 0
  %2568 = vmatpush1.bf16.msra.mxu0 0
  %2569 = vmatprep.subr.bf16.mxu0 0
  %2570 = vmatpush1.bf16.msra.mxu0 0
  %2571 = vmatprep.mubr.bf16.mxu0 0
  %2572 = vmatmul.mubr.bf16.gmra.mrb[0].mxu0 %v2234
  %v2573 = vpop.f32.mrb[0].mxu0
  %v2574 = vadd.f32 0.0, %v2573
  %v2575 = vpop.f32.mrb[0].mxu0
  %v2576 = vpop.f32.mrb[0].mxu0
  %v2577 = vpop.f32.mrb[0].mxu0
  %2578 = vdwg.mxu0
  %v2581 = vunpack.c.l.b16 %v2537
  %v2582 = vunpack.c.l.b16 %v2538
  %v2583 = vsel %vm1082, %v2582, %v2581
  %v2584 = vpack.c.b16 %v2583, %v2583
  %2586 = vmatprep.subr.bf16.mxu0 0
  %2587 = vmatpush1.bf16.msra.mxu0 %v1777
  %2588 = vmatprep.subr.bf16.mxu0 0
  %2589 = vmatpush1.bf16.msra.mxu0 %v1778
  %2590 = vmatprep.subr.bf16.mxu0 0
  %2591 = vmatpush1.bf16.msra.mxu0 %v1779
  %2592 = vmatprep.subr.bf16.mxu0 0
  %2593 = vmatpush1.bf16.msra.mxu0 %v1780
  %2594 = vmatprep.subr.bf16.mxu0 0
  %2595 = vmatpush1.bf16.msra.mxu0 %v1781
  %2596 = vmatprep.subr.bf16.mxu0 0
  %2597 = vmatpush1.bf16.msra.mxu0 %v1782
  %2598 = vmatprep.subr.bf16.mxu0 0
  %2599 = vmatpush1.bf16.msra.mxu0 %v1783
  %2600 = vmatprep.subr.bf16.mxu0 0
  %2601 = vmatpush1.bf16.msra.mxu0 %v1784
  %2602 = vmatprep.subr.bf16.mxu0 0
  %2603 = vmatpush1.bf16.msra.mxu0 0
  %2604 = vmatprep.subr.bf16.mxu0 0
  %2605 = vmatpush1.bf16.msra.mxu0 0
  %2606 = vmatprep.subr.bf16.mxu0 0
  %2607 = vmatpush1.bf16.msra.mxu0 0
  %2608 = vmatprep.subr.bf16.mxu0 0
  %2609 = vmatpush1.bf16.msra.mxu0 0
  %2610 = vmatprep.subr.bf16.mxu0 0
  %2611 = vmatpush1.bf16.msra.mxu0 0
  %2612 = vmatprep.subr.bf16.mxu0 0
  %2613 = vmatpush1.bf16.msra.mxu0 0
  %2614 = vmatprep.subr.bf16.mxu0 0
  %2615 = vmatpush1.bf16.msra.mxu0 0
  %2616 = vmatprep.subr.bf16.mxu0 0
  %2617 = vmatpush1.bf16.msra.mxu0 0
  %2618 = vmatprep.mubr.bf16.mxu0 0
  %2619 = vmatmul.mubr.bf16.gmra.mrb[0].mxu0 %v2584
  %v2620 = vpop.f32.mrb[0].mxu0
  %v2621 = vadd.f32 %v2574, %v2620
  %v2622 = vpop.f32.mrb[0].mxu0
  %v2623 = vpop.f32.mrb[0].mxu0
  %v2624 = vpop.f32.mrb[0].mxu0
  %2625 = vdwg.mxu0
  %v2626 = vadd.f32 %v2621, %v1836
  %s2627 = scalar_lea.vmem %s4, 384
  %v2628 = vld [vmem:[%s2627] sm:$0xf]
  %v2629 = vld [vmem:[%s2627 + $0x4] sm:$0xf]
  %v2630 = vld [vmem:[%s2627 + $0x8] sm:$0xf]
  %v2631 = vld [vmem:[%s2627 + $0xc] sm:$0xf]
  %v2632 = vld [vmem:[%s2627 + $0x10] sm:$0xf]
  %v2633 = vld [vmem:[%s2627 + $0x14] sm:$0xf]
  %v2634 = vld [vmem:[%s2627 + $0x18] sm:$0xf]
  %v2635 = vld [vmem:[%s2627 + $0x1c] sm:$0xf]
  %v2636 = vld [vmem:[%s2627 + $0x20] sm:$0xf]
  %v2637 = vld [vmem:[%s2627 + $0x24] sm:$0xf]
  %v2638 = vld [vmem:[%s2627 + $0x28] sm:$0xf]
  %v2639 = vld [vmem:[%s2627 + $0x2c] sm:$0xf]
  %v2640 = vld [vmem:[%s2627 + $0x30] sm:$0xf]
  %v2641 = vld [vmem:[%s2627 + $0x34] sm:$0xf]
  %v2642 = vld [vmem:[%s2627 + $0x38] sm:$0xf]
  %v2643 = vld [vmem:[%s2627 + $0x3c] sm:$0xf]
  %v2644 = vld [vmem:[%s2627 + $0x40] sm:$0xf]
  %v2645 = vld [vmem:[%s2627 + $0x44] sm:$0xf]
  %v2646 = vld [vmem:[%s2627 + $0x48] sm:$0xf]
  %v2647 = vld [vmem:[%s2627 + $0x4c] sm:$0xf]
  %v2648 = vld [vmem:[%s2627 + $0x50] sm:$0xf]
  %v2649 = vld [vmem:[%s2627 + $0x54] sm:$0xf]
  %v2650 = vld [vmem:[%s2627 + $0x58] sm:$0xf]
  %v2651 = vld [vmem:[%s2627 + $0x5c] sm:$0xf]
  %v2652 = vld [vmem:[%s2627 + $0x60] sm:$0xf]
  %v2653 = vld [vmem:[%s2627 + $0x64] sm:$0xf]
  %v2654 = vld [vmem:[%s2627 + $0x68] sm:$0xf]
  %v2655 = vld [vmem:[%s2627 + $0x6c] sm:$0xf]
  %v2656 = vld [vmem:[%s2627 + $0x70] sm:$0xf]
  %v2657 = vld [vmem:[%s2627 + $0x74] sm:$0xf]
  %v2658 = vld [vmem:[%s2627 + $0x78] sm:$0xf]
  %v2659 = vld [vmem:[%s2627 + $0x7c] sm:$0xf]
  %v2660 = vlaneseq
  %v2661 = vshrl.u32 %v2660, 7
  %v2662 = vsub.s32 5, %v2661
  %v2663 = vrot.slane %v35, %v2662
  %v2696 = vunpack.c.l.b16 %v2628
  %v2697 = vunpack.c.l.b16 %v2629
  %v2698 = vunpack.c.l.b16 %v2630
  %v2699 = vunpack.c.l.b16 %v2631
  %v2700 = vunpack.c.l.b16 %v2632
  %v2701 = vunpack.c.l.b16 %v2633
  %v2702 = vunpack.c.l.b16 %v2634
  %v2703 = vunpack.c.l.b16 %v2635
  %v2704 = vunpack.c.l.b16 %v2636
  %v2705 = vunpack.c.l.b16 %v2637
  %v2706 = vunpack.c.l.b16 %v2638
  %v2707 = vunpack.c.l.b16 %v2639
  %v2708 = vunpack.c.l.b16 %v2640
  %v2709 = vunpack.c.l.b16 %v2641
  %v2710 = vunpack.c.l.b16 %v2642
  %v2711 = vunpack.c.l.b16 %v2643
  %v2712 = vunpack.c.l.b16 %v2644
  %v2713 = vunpack.c.l.b16 %v2645
  %v2714 = vunpack.c.l.b16 %v2646
  %v2715 = vunpack.c.l.b16 %v2647
  %v2716 = vunpack.c.l.b16 %v2648
  %v2717 = vunpack.c.l.b16 %v2649
  %v2718 = vunpack.c.l.b16 %v2650
  %v2719 = vunpack.c.l.b16 %v2651
  %v2720 = vunpack.c.l.b16 %v2652
  %v2721 = vunpack.c.l.b16 %v2653
  %v2722 = vunpack.c.l.b16 %v2654
  %v2723 = vunpack.c.l.b16 %v2655
  %v2724 = vunpack.c.l.b16 %v2656
  %v2725 = vunpack.c.l.b16 %v2657
  %v2726 = vunpack.c.l.b16 %v2658
  %v2727 = vunpack.c.l.b16 %v2659
  %v2728 = vpack.c.b16 %v2697, %v2696
  %v2729 = vpack.c.b16 %v2699, %v2698
  %v2730 = vpack.c.b16 %v2701, %v2700
  %v2731 = vpack.c.b16 %v2703, %v2702
  %v2732 = vpack.c.b16 %v2705, %v2704
  %v2733 = vpack.c.b16 %v2707, %v2706
  %v2734 = vpack.c.b16 %v2709, %v2708
  %v2735 = vpack.c.b16 %v2711, %v2710
  %v2736 = vpack.c.b16 %v2713, %v2712
  %v2737 = vpack.c.b16 %v2715, %v2714
  %v2738 = vpack.c.b16 %v2717, %v2716
  %v2739 = vpack.c.b16 %v2719, %v2718
  %v2740 = vpack.c.b16 %v2721, %v2720
  %v2741 = vpack.c.b16 %v2723, %v2722
  %v2742 = vpack.c.b16 %v2725, %v2724
  %v2743 = vpack.c.b16 %v2727, %v2726
  %2760 = vmatprep.subr.bf16.mxu0 0
  %2761 = vmatpush1.bf16.msra.mxu0 %v2728
  %2762 = vmatprep.subr.bf16.mxu0 0
  %2763 = vmatpush1.bf16.msra.mxu0 %v2729
  %2764 = vmatprep.subr.bf16.mxu0 0
  %2765 = vmatpush1.bf16.msra.mxu0 %v2730
  %2766 = vmatprep.subr.bf16.mxu0 0
  %2767 = vmatpush1.bf16.msra.mxu0 %v2731
  %2768 = vmatprep.subr.bf16.mxu0 0
  %2769 = vmatpush1.bf16.msra.mxu0 %v2732
  %2770 = vmatprep.subr.bf16.mxu0 0
  %2771 = vmatpush1.bf16.msra.mxu0 %v2733
  %2772 = vmatprep.subr.bf16.mxu0 0
  %2773 = vmatpush1.bf16.msra.mxu0 %v2734
  %2774 = vmatprep.subr.bf16.mxu0 0
  %2775 = vmatpush1.bf16.msra.mxu0 %v2735
  %2776 = vmatprep.subr.bf16.mxu0 0
  %2777 = vmatpush1.bf16.msra.mxu0 %v2736
  %2778 = vmatprep.subr.bf16.mxu0 0
  %2779 = vmatpush1.bf16.msra.mxu0 %v2737
  %2780 = vmatprep.subr.bf16.mxu0 0
  %2781 = vmatpush1.bf16.msra.mxu0 %v2738
  %2782 = vmatprep.subr.bf16.mxu0 0
  %2783 = vmatpush1.bf16.msra.mxu0 %v2739
  %2784 = vmatprep.subr.bf16.mxu0 0
  %2785 = vmatpush1.bf16.msra.mxu0 %v2740
  %2786 = vmatprep.subr.bf16.mxu0 0
  %2787 = vmatpush1.bf16.msra.mxu0 %v2741
  %2788 = vmatprep.subr.bf16.mxu0 0
  %2789 = vmatpush1.bf16.msra.mxu0 %v2742
  %2790 = vmatprep.subr.bf16.mxu0 0
  %2791 = vmatpush1.bf16.msra.mxu0 %v2743
  %2792 = vmatprep.mubr.bf16.mxu0 %v668
  %2793 = vmatmul.mubr.bf16.gmra.mrb[0].mxu0 %v667
  %v2794 = vpop.f32.mrb[0].mxu0
  %v2795 = vadd.f32 %v2663, %v2794
  %v2796 = vpop.f32.mrb[0].mxu0
  %v2797 = vpop.f32.mrb[0].mxu0
  %v2798 = vpop.f32.mrb[0].mxu0
  %2799 = vdwg.mxu0
  %v2800 = vpack.c.bf16 %v2227, %v2227
  %v2801 = vpack.c.bf16 %v2233, %v2233
  %v2802 = vpack.c.bf16 %v2795, %v2795
  %2803 = vmatprep.subr.bf16.mxu0 0
  %2804 = vmatpush1.bf16.msra.mxu0 %v877
  %2805 = vmatprep.subr.bf16.mxu0 0
  %2806 = vmatpush1.bf16.msra.mxu0 %v878
  %2807 = vmatprep.subr.bf16.mxu0 0
  %2808 = vmatpush1.bf16.msra.mxu0 %v879
  %2809 = vmatprep.subr.bf16.mxu0 0
  %2810 = vmatpush1.bf16.msra.mxu0 %v880
  %2811 = vmatprep.subr.bf16.mxu0 0
  %2812 = vmatpush1.bf16.msra.mxu0 %v881
  %2813 = vmatprep.subr.bf16.mxu0 0
  %2814 = vmatpush1.bf16.msra.mxu0 %v882
  %2815 = vmatprep.subr.bf16.mxu0 0
  %2816 = vmatpush1.bf16.msra.mxu0 %v883
  %2817 = vmatprep.subr.bf16.mxu0 0
  %2818 = vmatpush1.bf16.msra.mxu0 %v884
  %2819 = vmatprep.subr.bf16.mxu0 0
  %2820 = vmatpush1.bf16.msra.mxu0 0
  %2821 = vmatprep.subr.bf16.mxu0 0
  %2822 = vmatpush1.bf16.msra.mxu0 0
  %2823 = vmatprep.subr.bf16.mxu0 0
  %2824 = vmatpush1.bf16.msra.mxu0 0
  %2825 = vmatprep.subr.bf16.mxu0 0
  %2826 = vmatpush1.bf16.msra.mxu0 0
  %2827 = vmatprep.subr.bf16.mxu0 0
  %2828 = vmatpush1.bf16.msra.mxu0 0
  %2829 = vmatprep.subr.bf16.mxu0 0
  %2830 = vmatpush1.bf16.msra.mxu0 0
  %2831 = vmatprep.subr.bf16.mxu0 0
  %2832 = vmatpush1.bf16.msra.mxu0 0
  %2833 = vmatprep.subr.bf16.mxu0 0
  %2834 = vmatpush1.bf16.msra.mxu0 0
  %2835 = vmatprep.mubr.bf16.mxu0 0
  %2836 = vmatmul.mubr.bf16.gmra.mrb[0].mxu0 %v2802
  %v2837 = vpop.f32.mrb[0].mxu0
  %v2838 = vadd.f32 0.0, %v2837
  %v2839 = vpop.f32.mrb[0].mxu0
  %v2840 = vpop.f32.mrb[0].mxu0
  %v2841 = vpop.f32.mrb[0].mxu0
  %2842 = vdwg.mxu0
  %v2845 = vunpack.c.l.b16 %v2800
  %v2846 = vunpack.c.l.b16 %v2801
  %v2847 = vsel %vm1082, %v2846, %v2845
  %v2848 = vpack.c.b16 %v2847, %v2847
  %2850 = vmatprep.subr.bf16.mxu0 0
  %2851 = vmatpush1.bf16.msra.mxu0 %v965
  %2852 = vmatprep.subr.bf16.mxu0 0
  %2853 = vmatpush1.bf16.msra.mxu0 %v966
  %2854 = vmatprep.subr.bf16.mxu0 0
  %2855 = vmatpush1.bf16.msra.mxu0 %v967
  %2856 = vmatprep.subr.bf16.mxu0 0
  %2857 = vmatpush1.bf16.msra.mxu0 %v968
  %2858 = vmatprep.subr.bf16.mxu0 0
  %2859 = vmatpush1.bf16.msra.mxu0 %v969
  %2860 = vmatprep.subr.bf16.mxu0 0
  %2861 = vmatpush1.bf16.msra.mxu0 %v970
  %2862 = vmatprep.subr.bf16.mxu0 0
  %2863 = vmatpush1.bf16.msra.mxu0 %v971
  %2864 = vmatprep.subr.bf16.mxu0 0
  %2865 = vmatpush1.bf16.msra.mxu0 %v972
  %2866 = vmatprep.subr.bf16.mxu0 0
  %2867 = vmatpush1.bf16.msra.mxu0 0
  %2868 = vmatprep.subr.bf16.mxu0 0
  %2869 = vmatpush1.bf16.msra.mxu0 0
  %2870 = vmatprep.subr.bf16.mxu0 0
  %2871 = vmatpush1.bf16.msra.mxu0 0
  %2872 = vmatprep.subr.bf16.mxu0 0
  %2873 = vmatpush1.bf16.msra.mxu0 0
  %2874 = vmatprep.subr.bf16.mxu0 0
  %2875 = vmatpush1.bf16.msra.mxu0 0
  %2876 = vmatprep.subr.bf16.mxu0 0
  %2877 = vmatpush1.bf16.msra.mxu0 0
  %2878 = vmatprep.subr.bf16.mxu0 0
  %2879 = vmatpush1.bf16.msra.mxu0 0
  %2880 = vmatprep.subr.bf16.mxu0 0
  %2881 = vmatpush1.bf16.msra.mxu0 0
  %2882 = vmatprep.mubr.bf16.mxu0 0
  %2883 = vmatmul.mubr.bf16.gmra.mrb[0].mxu0 %v2848
  %v2884 = vpop.f32.mrb[0].mxu0
  %v2885 = vadd.f32 %v2838, %v2884
  %v2886 = vpop.f32.mrb[0].mxu0
  %v2887 = vpop.f32.mrb[0].mxu0
  %v2888 = vpop.f32.mrb[0].mxu0
  %2889 = vdwg.mxu0
  %v2890 = vadd.f32 %v2885, %v1024
  %v2891 = vmul.f32 %v2890, %v1029
  %v2894 = vunpack.c.l.s4 1966171168
  %v2895 = vunpack.c.0.s8 %v2894
  %v2896 = vlaneseq
  %v2897 = vshrl.u32 %v2896, 7
  %v2898 = vsub.s32 %v2895, %v2897
  %v2899 = vrot.slane %v2891, %v2898
  %v2900 = vcombine.high %v2899, %v2899
  %v2902 = vunpack.c.l.s4 1966171168
  %v2903 = vunpack.c.0.s8 %v2902
  %v2904 = vlaneseq
  %v2905 = vshrl.u32 %v2904, 7
  %v2906 = vsub.s32 %v2903, %v2905
  %v2907 = vrot.slane %v2899, %v2906
  %v2909 = vunpack.c.l.s4 1966171168
  %v2910 = vunpack.c.0.s8 %v2909
  %v2911 = vlaneseq
  %v2912 = vshrl.u32 %v2911, 7
  %v2913 = vsub.s32 %v2910, %v2912
  %v2914 = vrot.slane %v2900, %v2913
  %v2915 = vlaneseq
  %v2916 = vshrl.u32 %v2915, 7
  %v2917 = vsub.s32 0, %v2916
  %v2918 = vrot.slane %v2907, %v2917
  %v2919 = vlaneseq
  %v2920 = vshrl.u32 %v2919, 7
  %v2921 = vsub.s32 0, %v2920
  %v2922 = vrot.slane %v2914, %v2921
  %v2925 = vmul.f32 %v2918, %v493
  %v2926 = vmul.f32 %v2922, %v496
  %2927 = vadd.xlane.f32.xlu0 %v2925
  %v2928 = vpop.xlane.xlu0 %2927
  %2929 = vadd.xlane.f32.xlu0 %v2926
  %v2930 = vpop.xlane.xlu0 %2929
  %v2933 = vlaneseq
  %v2934 = vshrl.u32 %v2933, 7
  %v2935 = vsub.s32 %v1073, %v2934
  %v2936 = vrot.slane %v2928, %v2935
  %v2937 = vlaneseq
  %v2938 = vshrl.u32 %v2937, 7
  %v2939 = vsub.s32 %v1073, %v2938
  %v2940 = vrot.slane %v2930, %v2939
  %v2941 = vsel %vm1082, %v2940, %v2936
  %v2943 = vsel %vm1085, %v2941, -inf
  %2944 = vmax.xlane.f32.xlu0 %v2943
  %v2945 = vpop.xlane.xlu0 %2944
  %v2947 = vlaneseq
  %v2948 = vshrl.u32 %v2947, 7
  %v2949 = vsub.s32 0, %v2948
  %v2950 = vrot.slane %v2945, %v2949
  %v2951 = vlaneseq
  %v2952 = vshrl.u32 %v2951, 7
  %v2953 = vsub.s32 1, %v2952
  %v2954 = vrot.slane %v2945, %v2953
  %v2957 = vsub.f32 %v2928, %v2950
  %v2958 = vsub.f32 %v2930, %v2954
  %v2959 = vmul.f32 %v2957, 1.442695
  %v2960 = vpow.pop %v2959
  %v2961 = vmul.f32 %v2958, 1.442695
  %v2962 = vpow.pop %v2961
  %2965 = vset.pattern.permute.xlu0 0
  %2966 = vperm.xlu0 %2965, %v2960
  %v2967 = vpop.permute.xlu0 %2966
  %2968 = vset.pattern.permute.xlu0 0
  %2969 = vperm.xlu0 %2968, %v2962
  %v2970 = vpop.permute.xlu0 %2969
  %v2971 = vlaneseq
  %v2972 = vshrl.u32 %v2971, 7
  %v2973 = vsub.s32 %v1073, %v2972
  %v2974 = vrot.slane %v2967, %v2973
  %v2975 = vlaneseq
  %v2976 = vshrl.u32 %v2975, 7
  %v2977 = vsub.s32 %v1073, %v2976
  %v2978 = vrot.slane %v2970, %v2977
  %v2979 = vsel %vm1082, %v2978, %v2974
  %v2981 = vsel %vm1085, %v2979, 0.0
  %2982 = vadd.xlane.f32.xlu0 %v2981
  %v2983 = vpop.xlane.xlu0 %2982
  %v2985 = vlaneseq
  %v2986 = vshrl.u32 %v2985, 7
  %v2987 = vsub.s32 0, %v2986
  %v2988 = vrot.slane %v2983, %v2987
  %v2989 = vlaneseq
  %v2990 = vshrl.u32 %v2989, 7
  %v2991 = vsub.s32 1, %v2990
  %v2992 = vrot.slane %v2983, %v2991
  %v2995 = vrcp.pop %v2988
  %v2996 = vmul.f32 %v2960, %v2995
  %v2997 = vrcp.pop %v2992
  %v2998 = vmul.f32 %v2962, %v2997
  %3000 = vset.pattern.permute.xlu0 0
  %3001 = vperm.xlu0 %3000, %v2996
  %v3002 = vpop.permute.xlu0 %3001
  %3005 = vset.pattern.permute.xlu0 0
  %3006 = vperm.xlu0 %3005, %v2998
  %v3007 = vpop.permute.xlu0 %3006
  %v3009 = vmul.f32 %v3002, %v493
  %v3010 = vmul.f32 %v3007, %v496
  %v3011 = vrot.slane %v3009, 4
  %v3012 = vadd.f32 %v3009, %v3011
  %v3013 = vrot.slane %v3012, 2
  %v3014 = vadd.f32 %v3012, %v3013
  %v3015 = vrot.slane %v3014, 1
  %v3016 = vadd.f32 %v3014, %v3015
  %v3017 = vrot.slane %v3010, 4
  %v3018 = vadd.f32 %v3010, %v3017
  %v3019 = vrot.slane %v3018, 2
  %v3020 = vadd.f32 %v3018, %v3019
  %v3021 = vrot.slane %v3020, 1
  %v3022 = vadd.f32 %v3020, %v3021
  %v3023 = vpack.c.bf16 %v2626, %v2626
  %3024 = vmatprep.subr.bf16.mxu0 0
  %3025 = vmatpush1.bf16.msra.mxu0 %v1220
  %3026 = vmatprep.subr.bf16.mxu0 0
  %3027 = vmatpush1.bf16.msra.mxu0 %v1221
  %3028 = vmatprep.subr.bf16.mxu0 0
  %3029 = vmatpush1.bf16.msra.mxu0 %v1222
  %3030 = vmatprep.subr.bf16.mxu0 0
  %3031 = vmatpush1.bf16.msra.mxu0 %v1223
  %3032 = vmatprep.subr.bf16.mxu0 0
  %3033 = vmatpush1.bf16.msra.mxu0 %v1224
  %3034 = vmatprep.subr.bf16.mxu0 0
  %3035 = vmatpush1.bf16.msra.mxu0 %v1225
  %3036 = vmatprep.subr.bf16.mxu0 0
  %3037 = vmatpush1.bf16.msra.mxu0 %v1226
  %3038 = vmatprep.subr.bf16.mxu0 0
  %3039 = vmatpush1.bf16.msra.mxu0 %v1227
  %3040 = vmatprep.subr.bf16.mxu0 0
  %3041 = vmatpush1.bf16.msra.mxu0 0
  %3042 = vmatprep.subr.bf16.mxu0 0
  %3043 = vmatpush1.bf16.msra.mxu0 0
  %3044 = vmatprep.subr.bf16.mxu0 0
  %3045 = vmatpush1.bf16.msra.mxu0 0
  %3046 = vmatprep.subr.bf16.mxu0 0
  %3047 = vmatpush1.bf16.msra.mxu0 0
  %3048 = vmatprep.subr.bf16.mxu0 0
  %3049 = vmatpush1.bf16.msra.mxu0 0
  %3050 = vmatprep.subr.bf16.mxu0 0
  %3051 = vmatpush1.bf16.msra.mxu0 0
  %3052 = vmatprep.subr.bf16.mxu0 0
  %3053 = vmatpush1.bf16.msra.mxu0 0
  %3054 = vmatprep.subr.bf16.mxu0 0
  %3055 = vmatpush1.bf16.msra.mxu0 0
  %3056 = vmatprep.mubr.bf16.mxu0 0
  %3057 = vmatmul.mubr.bf16.gmra.mrb[0].mxu0 %v3023
  %v3058 = vpop.f32.mrb[0].mxu0
  %v3059 = vadd.f32 %v1187, %v3058
  %v3060 = vpop.f32.mrb[0].mxu0
  %v3061 = vpop.f32.mrb[0].mxu0
  %v3062 = vpop.f32.mrb[0].mxu0
  %3063 = vdwg.mxu0
  %v3066 = vunpack.c.l.s4 1966171168
  %v3067 = vunpack.c.0.s8 %v3066
  %v3068 = vlaneseq
  %v3069 = vshrl.u32 %v3068, 7
  %v3070 = vsub.s32 %v3067, %v3069
  %v3071 = vrot.slane %v3059, %v3070
  %v3072 = vcombine.high %v3071, %v3071
  %v3074 = vunpack.c.l.s4 1966171168
  %v3075 = vunpack.c.0.s8 %v3074
  %v3076 = vlaneseq
  %v3077 = vshrl.u32 %v3076, 7
  %v3078 = vsub.s32 %v3075, %v3077
  %v3079 = vrot.slane %v3071, %v3078
  %v3081 = vunpack.c.l.s4 1966171168
  %v3082 = vunpack.c.0.s8 %v3081
  %v3083 = vlaneseq
  %v3084 = vshrl.u32 %v3083, 7
  %v3085 = vsub.s32 %v3082, %v3084
  %v3086 = vrot.slane %v3072, %v3085
  %v3087 = vlaneseq
  %v3088 = vshrl.u32 %v3087, 7
  %v3089 = vsub.s32 0, %v3088
  %v3090 = vrot.slane %v3079, %v3089
  %v3091 = vlaneseq
  %v3092 = vshrl.u32 %v3091, 7
  %v3093 = vsub.s32 0, %v3092
  %v3094 = vrot.slane %v3086, %v3093
  %v3097 = vmul.f32 %v3090, %v320
  %v3098 = vmul.f32 %v3090, %v321
  %v3099 = vmul.f32 %v3094, %v322
  %v3100 = vmul.f32 %v3094, %v323
  %v3101 = vpack.c.bf16 %v3098, %v3097
  %v3102 = vpack.c.bf16 %v3100, %v3099
  %3103 = vmatprep.subr.bf16.mxu0 0
  %3104 = vmatpush1.bf16.msra.mxu0 %v1364
  %3105 = vmatprep.subr.bf16.mxu0 0
  %3106 = vmatpush1.bf16.msra.mxu0 %v1365
  %3107 = vmatprep.subr.bf16.mxu0 0
  %3108 = vmatpush1.bf16.msra.mxu0 %v1366
  %3109 = vmatprep.subr.bf16.mxu0 0
  %3110 = vmatpush1.bf16.msra.mxu0 %v1367
  %3111 = vmatprep.subr.bf16.mxu0 0
  %3112 = vmatpush1.bf16.msra.mxu0 %v1368
  %3113 = vmatprep.subr.bf16.mxu0 0
  %3114 = vmatpush1.bf16.msra.mxu0 %v1369
  %3115 = vmatprep.subr.bf16.mxu0 0
  %3116 = vmatpush1.bf16.msra.mxu0 %v1370
  %3117 = vmatprep.subr.bf16.mxu0 0
  %3118 = vmatpush1.bf16.msra.mxu0 %v1371
  %3119 = vmatprep.subr.bf16.mxu0 0
  %3120 = vmatpush1.bf16.msra.mxu0 0
  %3121 = vmatprep.subr.bf16.mxu0 0
  %3122 = vmatpush1.bf16.msra.mxu0 0
  %3123 = vmatprep.subr.bf16.mxu0 0
  %3124 = vmatpush1.bf16.msra.mxu0 0
  %3125 = vmatprep.subr.bf16.mxu0 0
  %3126 = vmatpush1.bf16.msra.mxu0 0
  %3127 = vmatprep.subr.bf16.mxu0 0
  %3128 = vmatpush1.bf16.msra.mxu0 0
  %3129 = vmatprep.subr.bf16.mxu0 0
  %3130 = vmatpush1.bf16.msra.mxu0 0
  %3131 = vmatprep.subr.bf16.mxu0 0
  %3132 = vmatpush1.bf16.msra.mxu0 0
  %3133 = vmatprep.subr.bf16.mxu0 0
  %3134 = vmatpush1.bf16.msra.mxu0 0
  %3135 = vmatprep.mubr.bf16.mxu0 0
  %3136 = vmatmul.mubr.bf16.gmra.mrb[0].mxu0 %v3101
  %v3137 = vpop.f32.mrb[0].mxu0
  %v3138 = vadd.f32 0.0, %v3137
  %v3139 = vpop.f32.mrb[0].mxu0
  %v3140 = vpop.f32.mrb[0].mxu0
  %v3141 = vadd.f32 0.0, %v3140
  %v3142 = vpop.f32.mrb[0].mxu0
  %3143 = vmatprep.mubr.bf16.mxu0 0
  %3144 = vmatmul.mubr.bf16.gmra.mrb[0].mxu0 %v3102
  %v3145 = vpop.f32.mrb[0].mxu0
  %v3146 = vadd.f32 0.0, %v3145
  %v3147 = vpop.f32.mrb[0].mxu0
  %v3148 = vpop.f32.mrb[0].mxu0
  %v3149 = vadd.f32 0.0, %v3148
  %v3150 = vpop.f32.mrb[0].mxu0
  %3151 = vdwg.mxu0
  %v3152 = vadd.f32 %v3138, %v601
  %v3153 = vadd.f32 %v3141, %v604
  %v3154 = vadd.f32 %v3146, %v609
  %v3155 = vadd.f32 %v3149, %v612
  %v3156 = vadd.f32 %v3152, %v1436
  %v3157 = vadd.f32 %v3153, %v1436
  %v3158 = vadd.f32 %v3154, %v1436
  %v3159 = vadd.f32 %v3155, %v1436
  %v3160 = vmul.f32 %v3016, %v1444
  %v3161 = vmul.f32 %v3022, %v1444
  %v3162 = vlaneseq
  %v3163 = vshrl.u32 %v3162, 7
  %v3164 = vsub.s32 0, %v3163
  %v3165 = vrot.slane %v3160, %v3164
  %v3166 = vlaneseq
  %v3167 = vshrl.u32 %v3166, 7
  %v3168 = vsub.s32 0, %v3167
  %v3169 = vrot.slane %v3161, %v3168
  %v3170 = vmul.f32 %v3156, %v3165
  %v3171 = vmul.f32 %v3157, %v3165
  %v3172 = vmul.f32 %v3158, %v3169
  %v3173 = vmul.f32 %v3159, %v3169
  %3174 = vadd.xlane.f32.xlu0 %v3170
  %v3175 = vpop.xlane.xlu0 %3174
  %3176 = vadd.xlane.f32.xlu0 %v3171
  %v3177 = vpop.xlane.xlu0 %3176
  %3178 = vadd.xlane.f32.xlu0 %v3172
  %v3179 = vpop.xlane.xlu0 %3178
  %3180 = vadd.xlane.f32.xlu0 %v3173
  %v3181 = vpop.xlane.xlu0 %3180
  %v3186 = vlaneseq
  %v3187 = vshrl.u32 %v3186, 7
  %v3188 = vsub.s32 %v1073, %v3187
  %v3189 = vrot.slane %v3175, %v3188
  %v3190 = vlaneseq
  %v3191 = vshrl.u32 %v3190, 7
  %v3192 = vsub.s32 %v1475, %v3191
  %v3193 = vrot.slane %v3177, %v3192
  %v3194 = vsel %vm1480, %v3193, %v3189
  %v3195 = vlaneseq
  %v3196 = vshrl.u32 %v3195, 7
  %v3197 = vsub.s32 %v1073, %v3196
  %v3198 = vrot.slane %v3179, %v3197
  %v3199 = vlaneseq
  %v3200 = vshrl.u32 %v3199, 7
  %v3201 = vsub.s32 %v1475, %v3200
  %v3202 = vrot.slane %v3181, %v3201
  %v3203 = vsel %vm1480, %v3202, %v3198
  %v3204 = vsel %vm1082, %v3203, %v3194
  %v3206 = vsel %vm1493, %v3204, -inf
  %3207 = vmax.xlane.f32.xlu0 %v3206
  %v3208 = vpop.xlane.xlu0 %3207
  %v3210 = vlaneseq
  %v3211 = vshrl.u32 %v3210, 7
  %v3212 = vsub.s32 0, %v3211
  %v3213 = vrot.slane %v3208, %v3212
  %v3214 = vlaneseq
  %v3215 = vshrl.u32 %v3214, 7
  %v3216 = vsub.s32 1, %v3215
  %v3217 = vrot.slane %v3208, %v3216
  %v3220 = vsub.f32 %v3175, %v3213
  %v3221 = vsub.f32 %v3177, %v3213
  %v3222 = vsub.f32 %v3179, %v3217
  %v3223 = vsub.f32 %v3181, %v3217
  %v3224 = vmul.f32 %v3220, 1.442695
  %v3225 = vpow.pop %v3224
  %v3226 = vmul.f32 %v3221, 1.442695
  %v3227 = vpow.pop %v3226
  %v3228 = vmul.f32 %v3222, 1.442695
  %v3229 = vpow.pop %v3228
  %v3230 = vmul.f32 %v3223, 1.442695
  %v3231 = vpow.pop %v3230
  %3236 = vset.pattern.permute.xlu0 0
  %3237 = vperm.xlu0 %3236, %v3225
  %v3238 = vpop.permute.xlu0 %3237
  %3239 = vset.pattern.permute.xlu0 0
  %3240 = vperm.xlu0 %3239, %v3227
  %v3241 = vpop.permute.xlu0 %3240
  %3242 = vset.pattern.permute.xlu0 0
  %3243 = vperm.xlu0 %3242, %v3229
  %v3244 = vpop.permute.xlu0 %3243
  %3245 = vset.pattern.permute.xlu0 0
  %3246 = vperm.xlu0 %3245, %v3231
  %v3247 = vpop.permute.xlu0 %3246
  %v3248 = vlaneseq
  %v3249 = vshrl.u32 %v3248, 7
  %v3250 = vsub.s32 %v1073, %v3249
  %v3251 = vrot.slane %v3238, %v3250
  %v3252 = vlaneseq
  %v3253 = vshrl.u32 %v3252, 7
  %v3254 = vsub.s32 %v1475, %v3253
  %v3255 = vrot.slane %v3241, %v3254
  %v3256 = vsel %vm1480, %v3255, %v3251
  %v3257 = vlaneseq
  %v3258 = vshrl.u32 %v3257, 7
  %v3259 = vsub.s32 %v1073, %v3258
  %v3260 = vrot.slane %v3244, %v3259
  %v3261 = vlaneseq
  %v3262 = vshrl.u32 %v3261, 7
  %v3263 = vsub.s32 %v1475, %v3262
  %v3264 = vrot.slane %v3247, %v3263
  %v3265 = vsel %vm1480, %v3264, %v3260
  %v3266 = vsel %vm1082, %v3265, %v3256
  %v3268 = vsel %vm1493, %v3266, 0.0
  %3269 = vadd.xlane.f32.xlu0 %v3268
  %v3270 = vpop.xlane.xlu0 %3269
  %v3272 = vlaneseq
  %v3273 = vshrl.u32 %v3272, 7
  %v3274 = vsub.s32 0, %v3273
  %v3275 = vrot.slane %v3270, %v3274
  %v3276 = vlaneseq
  %v3277 = vshrl.u32 %v3276, 7
  %v3278 = vsub.s32 1, %v3277
  %v3279 = vrot.slane %v3270, %v3278
  %v3282 = vrcp.pop %v3275
  %v3283 = vmul.f32 %v3225, %v3282
  %v3284 = vmul.f32 %v3227, %v3282
  %v3285 = vrcp.pop %v3279
  %v3286 = vmul.f32 %v3229, %v3285
  %v3287 = vmul.f32 %v3231, %v3285
  %3289 = vset.pattern.permute.xlu0 0
  %3290 = vperm.xlu0 %3289, %v3283
  %v3291 = vpop.permute.xlu0 %3290
  %3294 = vset.pattern.permute.xlu0 0
  %3295 = vperm.xlu0 %3294, %v3284
  %v3296 = vpop.permute.xlu0 %3295
  %3299 = vset.pattern.permute.xlu0 0
  %3300 = vperm.xlu0 %3299, %v3286
  %v3301 = vpop.permute.xlu0 %3300
  %3304 = vset.pattern.permute.xlu0 0
  %3305 = vperm.xlu0 %3304, %v3287
  %v3306 = vpop.permute.xlu0 %3305
  %v3308 = vmul.f32 %v3291, %v320
  %v3309 = vmul.f32 %v3296, %v321
  %v3310 = vmul.f32 %v3301, %v322
  %v3311 = vmul.f32 %v3306, %v323
  %v3312 = vadd.f32 %v3308, %v3309
  %v3313 = vrot.slane %v3312, 4
  %v3314 = vadd.f32 %v3312, %v3313
  %v3315 = vrot.slane %v3314, 2
  %v3316 = vadd.f32 %v3314, %v3315
  %v3317 = vrot.slane %v3316, 1
  %v3318 = vadd.f32 %v3316, %v3317
  %v3319 = vadd.f32 %v3310, %v3311
  %v3320 = vrot.slane %v3319, 4
  %v3321 = vadd.f32 %v3319, %v3320
  %v3322 = vrot.slane %v3321, 2
  %v3323 = vadd.f32 %v3321, %v3322
  %v3324 = vrot.slane %v3323, 1
  %v3325 = vadd.f32 %v3323, %v3324
  %v3326 = vpack.c.bf16 %v3318, %v3318
  %v3327 = vpack.c.bf16 %v3325, %v3325
  %3328 = vmatprep.subr.bf16.mxu0 0
  %3329 = vmatpush1.bf16.msra.mxu0 %v1682
  %3330 = vmatprep.subr.bf16.mxu0 0
  %3331 = vmatpush1.bf16.msra.mxu0 %v1683
  %3332 = vmatprep.subr.bf16.mxu0 0
  %3333 = vmatpush1.bf16.msra.mxu0 %v1684
  %3334 = vmatprep.subr.bf16.mxu0 0
  %3335 = vmatpush1.bf16.msra.mxu0 %v1685
  %3336 = vmatprep.subr.bf16.mxu0 0
  %3337 = vmatpush1.bf16.msra.mxu0 %v1686
  %3338 = vmatprep.subr.bf16.mxu0 0
  %3339 = vmatpush1.bf16.msra.mxu0 %v1687
  %3340 = vmatprep.subr.bf16.mxu0 0
  %3341 = vmatpush1.bf16.msra.mxu0 %v1688
  %3342 = vmatprep.subr.bf16.mxu0 0
  %3343 = vmatpush1.bf16.msra.mxu0 %v1689
  %3344 = vmatprep.subr.bf16.mxu0 0
  %3345 = vmatpush1.bf16.msra.mxu0 0
  %3346 = vmatprep.subr.bf16.mxu0 0
  %3347 = vmatpush1.bf16.msra.mxu0 0
  %3348 = vmatprep.subr.bf16.mxu0 0
  %3349 = vmatpush1.bf16.msra.mxu0 0
  %3350 = vmatprep.subr.bf16.mxu0 0
  %3351 = vmatpush1.bf16.msra.mxu0 0
  %3352 = vmatprep.subr.bf16.mxu0 0
  %3353 = vmatpush1.bf16.msra.mxu0 0
  %3354 = vmatprep.subr.bf16.mxu0 0
  %3355 = vmatpush1.bf16.msra.mxu0 0
  %3356 = vmatprep.subr.bf16.mxu0 0
  %3357 = vmatpush1.bf16.msra.mxu0 0
  %3358 = vmatprep.subr.bf16.mxu0 0
  %3359 = vmatpush1.bf16.msra.mxu0 0
  %3360 = vmatprep.mubr.bf16.mxu0 0
  %3361 = vmatmul.mubr.bf16.gmra.mrb[0].mxu0 %v3023
  %v3362 = vpop.f32.mrb[0].mxu0
  %v3363 = vadd.f32 0.0, %v3362
  %v3364 = vpop.f32.mrb[0].mxu0
  %v3365 = vpop.f32.mrb[0].mxu0
  %v3366 = vpop.f32.mrb[0].mxu0
  %3367 = vdwg.mxu0
  %v3370 = vunpack.c.l.b16 %v3326
  %v3371 = vunpack.c.l.b16 %v3327
  %v3372 = vsel %vm1082, %v3371, %v3370
  %v3373 = vpack.c.b16 %v3372, %v3372
  %3375 = vmatprep.subr.bf16.mxu0 0
  %3376 = vmatpush1.bf16.msra.mxu0 %v1777
  %3377 = vmatprep.subr.bf16.mxu0 0
  %3378 = vmatpush1.bf16.msra.mxu0 %v1778
  %3379 = vmatprep.subr.bf16.mxu0 0
  %3380 = vmatpush1.bf16.msra.mxu0 %v1779
  %3381 = vmatprep.subr.bf16.mxu0 0
  %3382 = vmatpush1.bf16.msra.mxu0 %v1780
  %3383 = vmatprep.subr.bf16.mxu0 0
  %3384 = vmatpush1.bf16.msra.mxu0 %v1781
  %3385 = vmatprep.subr.bf16.mxu0 0
  %3386 = vmatpush1.bf16.msra.mxu0 %v1782
  %3387 = vmatprep.subr.bf16.mxu0 0
  %3388 = vmatpush1.bf16.msra.mxu0 %v1783
  %3389 = vmatprep.subr.bf16.mxu0 0
  %3390 = vmatpush1.bf16.msra.mxu0 %v1784
  %3391 = vmatprep.subr.bf16.mxu0 0
  %3392 = vmatpush1.bf16.msra.mxu0 0
  %3393 = vmatprep.subr.bf16.mxu0 0
  %3394 = vmatpush1.bf16.msra.mxu0 0
  %3395 = vmatprep.subr.bf16.mxu0 0
  %3396 = vmatpush1.bf16.msra.mxu0 0
  %3397 = vmatprep.subr.bf16.mxu0 0
  %3398 = vmatpush1.bf16.msra.mxu0 0
  %3399 = vmatprep.subr.bf16.mxu0 0
  %3400 = vmatpush1.bf16.msra.mxu0 0
  %3401 = vmatprep.subr.bf16.mxu0 0
  %3402 = vmatpush1.bf16.msra.mxu0 0
  %3403 = vmatprep.subr.bf16.mxu0 0
  %3404 = vmatpush1.bf16.msra.mxu0 0
  %3405 = vmatprep.subr.bf16.mxu0 0
  %3406 = vmatpush1.bf16.msra.mxu0 0
  %3407 = vmatprep.mubr.bf16.mxu0 0
  %3408 = vmatmul.mubr.bf16.gmra.mrb[0].mxu0 %v3373
  %v3409 = vpop.f32.mrb[0].mxu0
  %v3410 = vadd.f32 %v3363, %v3409
  %v3411 = vpop.f32.mrb[0].mxu0
  %v3412 = vpop.f32.mrb[0].mxu0
  %v3413 = vpop.f32.mrb[0].mxu0
  %3414 = vdwg.mxu0
  %v3415 = vadd.f32 %v3410, %v1836
  %s3416 = scalar_lea.vmem %s3, 576
  %v3417 = vld [vmem:[%s3416] sm:$0xf]
  %v3418 = vld [vmem:[%s3416 + $0x4] sm:$0xf]
  %v3419 = vld [vmem:[%s3416 + $0x8] sm:$0xf]
  %v3420 = vld [vmem:[%s3416 + $0xc] sm:$0xf]
  %v3421 = vld [vmem:[%s3416 + $0x10] sm:$0xf]
  %v3422 = vld [vmem:[%s3416 + $0x14] sm:$0xf]
  %v3423 = vld [vmem:[%s3416 + $0x18] sm:$0xf]
  %v3424 = vld [vmem:[%s3416 + $0x1c] sm:$0xf]
  %v3425 = vld [vmem:[%s3416 + $0x20] sm:$0xf]
  %v3426 = vld [vmem:[%s3416 + $0x24] sm:$0xf]
  %v3427 = vld [vmem:[%s3416 + $0x28] sm:$0xf]
  %v3428 = vld [vmem:[%s3416 + $0x2c] sm:$0xf]
  %v3429 = vld [vmem:[%s3416 + $0x30] sm:$0xf]
  %v3430 = vld [vmem:[%s3416 + $0x34] sm:$0xf]
  %v3431 = vld [vmem:[%s3416 + $0x38] sm:$0xf]
  %v3432 = vld [vmem:[%s3416 + $0x3c] sm:$0xf]
  %v3433 = vpack.c.bf16 %v3415, %v3415
  %s3434 = scalar_lea.vmem %s4, 512
  %v3435 = vld [vmem:[%s3434] sm:$0xf]
  %v3436 = vld [vmem:[%s3434 + $0x4] sm:$0xf]
  %v3437 = vld [vmem:[%s3434 + $0x8] sm:$0xf]
  %v3438 = vld [vmem:[%s3434 + $0xc] sm:$0xf]
  %v3439 = vld [vmem:[%s3434 + $0x10] sm:$0xf]
  %v3440 = vld [vmem:[%s3434 + $0x14] sm:$0xf]
  %v3441 = vld [vmem:[%s3434 + $0x18] sm:$0xf]
  %v3442 = vld [vmem:[%s3434 + $0x1c] sm:$0xf]
  %v3443 = vld [vmem:[%s3434 + $0x20] sm:$0xf]
  %v3444 = vld [vmem:[%s3434 + $0x24] sm:$0xf]
  %v3445 = vld [vmem:[%s3434 + $0x28] sm:$0xf]
  %v3446 = vld [vmem:[%s3434 + $0x2c] sm:$0xf]
  %v3447 = vld [vmem:[%s3434 + $0x30] sm:$0xf]
  %v3448 = vld [vmem:[%s3434 + $0x34] sm:$0xf]
  %v3449 = vld [vmem:[%s3434 + $0x38] sm:$0xf]
  %v3450 = vld [vmem:[%s3434 + $0x3c] sm:$0xf]
  %v3451 = vld [vmem:[%s3434 + $0x40] sm:$0xf]
  %v3452 = vld [vmem:[%s3434 + $0x44] sm:$0xf]
  %v3453 = vld [vmem:[%s3434 + $0x48] sm:$0xf]
  %v3454 = vld [vmem:[%s3434 + $0x4c] sm:$0xf]
  %v3455 = vld [vmem:[%s3434 + $0x50] sm:$0xf]
  %v3456 = vld [vmem:[%s3434 + $0x54] sm:$0xf]
  %v3457 = vld [vmem:[%s3434 + $0x58] sm:$0xf]
  %v3458 = vld [vmem:[%s3434 + $0x5c] sm:$0xf]
  %v3459 = vld [vmem:[%s3434 + $0x60] sm:$0xf]
  %v3460 = vld [vmem:[%s3434 + $0x64] sm:$0xf]
  %v3461 = vld [vmem:[%s3434 + $0x68] sm:$0xf]
  %v3462 = vld [vmem:[%s3434 + $0x6c] sm:$0xf]
  %v3463 = vld [vmem:[%s3434 + $0x70] sm:$0xf]
  %v3464 = vld [vmem:[%s3434 + $0x74] sm:$0xf]
  %v3465 = vld [vmem:[%s3434 + $0x78] sm:$0xf]
  %v3466 = vld [vmem:[%s3434 + $0x7c] sm:$0xf]
  %v3499 = vunpack.c.l.b16 %v3435
  %v3500 = vunpack.c.l.b16 %v3436
  %v3501 = vunpack.c.l.b16 %v3437
  %v3502 = vunpack.c.l.b16 %v3438
  %v3503 = vunpack.c.l.b16 %v3439
  %v3504 = vunpack.c.l.b16 %v3440
  %v3505 = vunpack.c.l.b16 %v3441
  %v3506 = vunpack.c.l.b16 %v3442
  %v3507 = vunpack.c.l.b16 %v3443
  %v3508 = vunpack.c.l.b16 %v3444
  %v3509 = vunpack.c.l.b16 %v3445
  %v3510 = vunpack.c.l.b16 %v3446
  %v3511 = vunpack.c.l.b16 %v3447
  %v3512 = vunpack.c.l.b16 %v3448
  %v3513 = vunpack.c.l.b16 %v3449
  %v3514 = vunpack.c.l.b16 %v3450
  %v3515 = vunpack.c.l.b16 %v3451
  %v3516 = vunpack.c.l.b16 %v3452
  %v3517 = vunpack.c.l.b16 %v3453
  %v3518 = vunpack.c.l.b16 %v3454
  %v3519 = vunpack.c.l.b16 %v3455
  %v3520 = vunpack.c.l.b16 %v3456
  %v3521 = vunpack.c.l.b16 %v3457
  %v3522 = vunpack.c.l.b16 %v3458
  %v3523 = vunpack.c.l.b16 %v3459
  %v3524 = vunpack.c.l.b16 %v3460
  %v3525 = vunpack.c.l.b16 %v3461
  %v3526 = vunpack.c.l.b16 %v3462
  %v3527 = vunpack.c.l.b16 %v3463
  %v3528 = vunpack.c.l.b16 %v3464
  %v3529 = vunpack.c.l.b16 %v3465
  %v3530 = vunpack.c.l.b16 %v3466
  %v3531 = vpack.c.b16 %v3500, %v3499
  %v3532 = vpack.c.b16 %v3502, %v3501
  %v3533 = vpack.c.b16 %v3504, %v3503
  %v3534 = vpack.c.b16 %v3506, %v3505
  %v3535 = vpack.c.b16 %v3508, %v3507
  %v3536 = vpack.c.b16 %v3510, %v3509
  %v3537 = vpack.c.b16 %v3512, %v3511
  %v3538 = vpack.c.b16 %v3514, %v3513
  %v3539 = vpack.c.b16 %v3516, %v3515
  %v3540 = vpack.c.b16 %v3518, %v3517
  %v3541 = vpack.c.b16 %v3520, %v3519
  %v3542 = vpack.c.b16 %v3522, %v3521
  %v3543 = vpack.c.b16 %v3524, %v3523
  %v3544 = vpack.c.b16 %v3526, %v3525
  %v3545 = vpack.c.b16 %v3528, %v3527
  %v3546 = vpack.c.b16 %v3530, %v3529
  %3563 = vmatprep.subr.bf16.mxu0 0
  %3564 = vmatpush1.bf16.msra.mxu0 %v3531
  %3565 = vmatprep.subr.bf16.mxu0 0
  %3566 = vmatpush1.bf16.msra.mxu0 %v3532
  %3567 = vmatprep.subr.bf16.mxu0 0
  %3568 = vmatpush1.bf16.msra.mxu0 %v3533
  %3569 = vmatprep.subr.bf16.mxu0 0
  %3570 = vmatpush1.bf16.msra.mxu0 %v3534
  %3571 = vmatprep.subr.bf16.mxu0 0
  %3572 = vmatpush1.bf16.msra.mxu0 %v3535
  %3573 = vmatprep.subr.bf16.mxu0 0
  %3574 = vmatpush1.bf16.msra.mxu0 %v3536
  %3575 = vmatprep.subr.bf16.mxu0 0
  %3576 = vmatpush1.bf16.msra.mxu0 %v3537
  %3577 = vmatprep.subr.bf16.mxu0 0
  %3578 = vmatpush1.bf16.msra.mxu0 %v3538
  %3579 = vmatprep.subr.bf16.mxu0 0
  %3580 = vmatpush1.bf16.msra.mxu0 %v3539
  %3581 = vmatprep.subr.bf16.mxu0 0
  %3582 = vmatpush1.bf16.msra.mxu0 %v3540
  %3583 = vmatprep.subr.bf16.mxu0 0
  %3584 = vmatpush1.bf16.msra.mxu0 %v3541
  %3585 = vmatprep.subr.bf16.mxu0 0
  %3586 = vmatpush1.bf16.msra.mxu0 %v3542
  %3587 = vmatprep.subr.bf16.mxu0 0
  %3588 = vmatpush1.bf16.msra.mxu0 %v3543
  %3589 = vmatprep.subr.bf16.mxu0 0
  %3590 = vmatpush1.bf16.msra.mxu0 %v3544
  %3591 = vmatprep.subr.bf16.mxu0 0
  %3592 = vmatpush1.bf16.msra.mxu0 %v3545
  %3593 = vmatprep.subr.bf16.mxu0 0
  %3594 = vmatpush1.bf16.msra.mxu0 %v3546
  %3595 = vmatprep.mubr.bf16.mxu0 %v668
  %3596 = vmatmul.mubr.bf16.gmra.mrb[0].mxu0 %v667
  %v3597 = vpop.f32.mrb[0].mxu0
  %v3598 = vadd.f32 0.0, %v3597
  %v3599 = vpop.f32.mrb[0].mxu0
  %v3600 = vpop.f32.mrb[0].mxu0
  %v3601 = vpop.f32.mrb[0].mxu0
  %3602 = vdwg.mxu0
  %v3619 = vunpack.c.l.b16 %v3417
  %v3620 = vunpack.c.l.b16 %v3418
  %v3621 = vunpack.c.l.b16 %v3419
  %v3622 = vunpack.c.l.b16 %v3420
  %v3623 = vunpack.c.l.b16 %v3421
  %v3624 = vunpack.c.l.b16 %v3422
  %v3625 = vunpack.c.l.b16 %v3423
  %v3626 = vunpack.c.l.b16 %v3424
  %v3627 = vunpack.c.l.b16 %v3425
  %v3628 = vunpack.c.l.b16 %v3426
  %v3629 = vunpack.c.l.b16 %v3427
  %v3630 = vunpack.c.l.b16 %v3428
  %v3631 = vunpack.c.l.b16 %v3429
  %v3632 = vunpack.c.l.b16 %v3430
  %v3633 = vunpack.c.l.b16 %v3431
  %v3634 = vunpack.c.l.b16 %v3432
  %v3635 = vpack.c.b16 %v3620, %v3619
  %v3636 = vpack.c.b16 %v3622, %v3621
  %v3637 = vpack.c.b16 %v3624, %v3623
  %v3638 = vpack.c.b16 %v3626, %v3625
  %v3639 = vpack.c.b16 %v3628, %v3627
  %v3640 = vpack.c.b16 %v3630, %v3629
  %v3641 = vpack.c.b16 %v3632, %v3631
  %v3642 = vpack.c.b16 %v3634, %v3633
  %3651 = vmatprep.subr.bf16.mxu0 0
  %3652 = vmatpush1.bf16.msra.mxu0 %v3635
  %3653 = vmatprep.subr.bf16.mxu0 0
  %3654 = vmatpush1.bf16.msra.mxu0 %v3636
  %3655 = vmatprep.subr.bf16.mxu0 0
  %3656 = vmatpush1.bf16.msra.mxu0 %v3637
  %3657 = vmatprep.subr.bf16.mxu0 0
  %3658 = vmatpush1.bf16.msra.mxu0 %v3638
  %3659 = vmatprep.subr.bf16.mxu0 0
  %3660 = vmatpush1.bf16.msra.mxu0 %v3639
  %3661 = vmatprep.subr.bf16.mxu0 0
  %3662 = vmatpush1.bf16.msra.mxu0 %v3640
  %3663 = vmatprep.subr.bf16.mxu0 0
  %3664 = vmatpush1.bf16.msra.mxu0 %v3641
  %3665 = vmatprep.subr.bf16.mxu0 0
  %3666 = vmatpush1.bf16.msra.mxu0 %v3642
  %3667 = vmatprep.subr.bf16.mxu0 0
  %3668 = vmatpush1.bf16.msra.mxu0 0
  %3669 = vmatprep.subr.bf16.mxu0 0
  %3670 = vmatpush1.bf16.msra.mxu0 0
  %3671 = vmatprep.subr.bf16.mxu0 0
  %3672 = vmatpush1.bf16.msra.mxu0 0
  %3673 = vmatprep.subr.bf16.mxu0 0
  %3674 = vmatpush1.bf16.msra.mxu0 0
  %3675 = vmatprep.subr.bf16.mxu0 0
  %3676 = vmatpush1.bf16.msra.mxu0 0
  %3677 = vmatprep.subr.bf16.mxu0 0
  %3678 = vmatpush1.bf16.msra.mxu0 0
  %3679 = vmatprep.subr.bf16.mxu0 0
  %3680 = vmatpush1.bf16.msra.mxu0 0
  %3681 = vmatprep.subr.bf16.mxu0 0
  %3682 = vmatpush1.bf16.msra.mxu0 0
  %3683 = vmatprep.mubr.bf16.mxu0 0
  %3684 = vmatmul.mubr.bf16.gmra.mrb[0].mxu0 %v3433
  %v3685 = vpop.f32.mrb[0].mxu0
  %v3686 = vadd.f32 %v3598, %v3685
  %v3687 = vpop.f32.mrb[0].mxu0
  %v3688 = vpop.f32.mrb[0].mxu0
  %v3689 = vpop.f32.mrb[0].mxu0
  %3690 = vdwg.mxu0
  %s3691 = scalar_lea.vmem %s4, 640
  %v3692 = vld [vmem:[%s3691] sm:$0xf]
  %v3693 = vld [vmem:[%s3691 + $0x4] sm:$0xf]
  %v3694 = vld [vmem:[%s3691 + $0x8] sm:$0xf]
  %v3695 = vld [vmem:[%s3691 + $0xc] sm:$0xf]
  %v3696 = vld [vmem:[%s3691 + $0x10] sm:$0xf]
  %v3697 = vld [vmem:[%s3691 + $0x14] sm:$0xf]
  %v3698 = vld [vmem:[%s3691 + $0x18] sm:$0xf]
  %v3699 = vld [vmem:[%s3691 + $0x1c] sm:$0xf]
  %v3700 = vld [vmem:[%s3691 + $0x20] sm:$0xf]
  %v3701 = vld [vmem:[%s3691 + $0x24] sm:$0xf]
  %v3702 = vld [vmem:[%s3691 + $0x28] sm:$0xf]
  %v3703 = vld [vmem:[%s3691 + $0x2c] sm:$0xf]
  %v3704 = vld [vmem:[%s3691 + $0x30] sm:$0xf]
  %v3705 = vld [vmem:[%s3691 + $0x34] sm:$0xf]
  %v3706 = vld [vmem:[%s3691 + $0x38] sm:$0xf]
  %v3707 = vld [vmem:[%s3691 + $0x3c] sm:$0xf]
  %v3708 = vld [vmem:[%s3691 + $0x40] sm:$0xf]
  %v3709 = vld [vmem:[%s3691 + $0x44] sm:$0xf]
  %v3710 = vld [vmem:[%s3691 + $0x48] sm:$0xf]
  %v3711 = vld [vmem:[%s3691 + $0x4c] sm:$0xf]
  %v3712 = vld [vmem:[%s3691 + $0x50] sm:$0xf]
  %v3713 = vld [vmem:[%s3691 + $0x54] sm:$0xf]
  %v3714 = vld [vmem:[%s3691 + $0x58] sm:$0xf]
  %v3715 = vld [vmem:[%s3691 + $0x5c] sm:$0xf]
  %v3716 = vld [vmem:[%s3691 + $0x60] sm:$0xf]
  %v3717 = vld [vmem:[%s3691 + $0x64] sm:$0xf]
  %v3718 = vld [vmem:[%s3691 + $0x68] sm:$0xf]
  %v3719 = vld [vmem:[%s3691 + $0x6c] sm:$0xf]
  %v3720 = vld [vmem:[%s3691 + $0x70] sm:$0xf]
  %v3721 = vld [vmem:[%s3691 + $0x74] sm:$0xf]
  %v3722 = vld [vmem:[%s3691 + $0x78] sm:$0xf]
  %v3723 = vld [vmem:[%s3691 + $0x7c] sm:$0xf]
  %v3726 = vunpack.c.l.s4 1983009808
  %v3727 = vunpack.c.0.s8 %v3726
  %v3728 = vlaneseq
  %v3729 = vshrl.u32 %v3728, 7
  %v3730 = vsub.s32 %v3727, %v3729
  %v3731 = vrot.slane %v34, %v3730
  %v3732 = vcombine.high %v3731, %v3731
  %v3735 = vpack.c.bf16 %v3731, %v3731
  %v3736 = vpack.c.bf16 %v3732, %v3732
  %v3769 = vunpack.c.l.b16 %v3692
  %v3770 = vunpack.c.l.b16 %v3693
  %v3771 = vunpack.c.l.b16 %v3694
  %v3772 = vunpack.c.l.b16 %v3695
  %v3773 = vunpack.c.l.b16 %v3696
  %v3774 = vunpack.c.l.b16 %v3697
  %v3775 = vunpack.c.l.b16 %v3698
  %v3776 = vunpack.c.l.b16 %v3699
  %v3777 = vunpack.c.l.b16 %v3700
  %v3778 = vunpack.c.l.b16 %v3701
  %v3779 = vunpack.c.l.b16 %v3702
  %v3780 = vunpack.c.l.b16 %v3703
  %v3781 = vunpack.c.l.b16 %v3704
  %v3782 = vunpack.c.l.b16 %v3705
  %v3783 = vunpack.c.l.b16 %v3706
  %v3784 = vunpack.c.l.b16 %v3707
  %v3785 = vunpack.c.l.b16 %v3708
  %v3786 = vunpack.c.l.b16 %v3709
  %v3787 = vunpack.c.l.b16 %v3710
  %v3788 = vunpack.c.l.b16 %v3711
  %v3789 = vunpack.c.l.b16 %v3712
  %v3790 = vunpack.c.l.b16 %v3713
  %v3791 = vunpack.c.l.b16 %v3714
  %v3792 = vunpack.c.l.b16 %v3715
  %v3793 = vunpack.c.l.b16 %v3716
  %v3794 = vunpack.c.l.b16 %v3717
  %v3795 = vunpack.c.l.b16 %v3718
  %v3796 = vunpack.c.l.b16 %v3719
  %v3797 = vunpack.c.l.b16 %v3720
  %v3798 = vunpack.c.l.b16 %v3721
  %v3799 = vunpack.c.l.b16 %v3722
  %v3800 = vunpack.c.l.b16 %v3723
  %v3801 = vpack.c.b16 %v3770, %v3769
  %v3802 = vpack.c.b16 %v3772, %v3771
  %v3803 = vpack.c.b16 %v3774, %v3773
  %v3804 = vpack.c.b16 %v3776, %v3775
  %v3805 = vpack.c.b16 %v3778, %v3777
  %v3806 = vpack.c.b16 %v3780, %v3779
  %v3807 = vpack.c.b16 %v3782, %v3781
  %v3808 = vpack.c.b16 %v3784, %v3783
  %v3809 = vpack.c.b16 %v3786, %v3785
  %v3810 = vpack.c.b16 %v3788, %v3787
  %v3811 = vpack.c.b16 %v3790, %v3789
  %v3812 = vpack.c.b16 %v3792, %v3791
  %v3813 = vpack.c.b16 %v3794, %v3793
  %v3814 = vpack.c.b16 %v3796, %v3795
  %v3815 = vpack.c.b16 %v3798, %v3797
  %v3816 = vpack.c.b16 %v3800, %v3799
  %3833 = vmatprep.subr.bf16.mxu0 0
  %3834 = vmatpush1.bf16.msra.mxu0 %v3801
  %3835 = vmatprep.subr.bf16.mxu0 0
  %3836 = vmatpush1.bf16.msra.mxu0 %v3802
  %3837 = vmatprep.subr.bf16.mxu0 0
  %3838 = vmatpush1.bf16.msra.mxu0 %v3803
  %3839 = vmatprep.subr.bf16.mxu0 0
  %3840 = vmatpush1.bf16.msra.mxu0 %v3804
  %3841 = vmatprep.subr.bf16.mxu0 0
  %3842 = vmatpush1.bf16.msra.mxu0 %v3805
  %3843 = vmatprep.subr.bf16.mxu0 0
  %3844 = vmatpush1.bf16.msra.mxu0 %v3806
  %3845 = vmatprep.subr.bf16.mxu0 0
  %3846 = vmatpush1.bf16.msra.mxu0 %v3807
  %3847 = vmatprep.subr.bf16.mxu0 0
  %3848 = vmatpush1.bf16.msra.mxu0 %v3808
  %3849 = vmatprep.subr.bf16.mxu0 0
  %3850 = vmatpush1.bf16.msra.mxu0 %v3809
  %3851 = vmatprep.subr.bf16.mxu0 0
  %3852 = vmatpush1.bf16.msra.mxu0 %v3810
  %3853 = vmatprep.subr.bf16.mxu0 0
  %3854 = vmatpush1.bf16.msra.mxu0 %v3811
  %3855 = vmatprep.subr.bf16.mxu0 0
  %3856 = vmatpush1.bf16.msra.mxu0 %v3812
  %3857 = vmatprep.subr.bf16.mxu0 0
  %3858 = vmatpush1.bf16.msra.mxu0 %v3813
  %3859 = vmatprep.subr.bf16.mxu0 0
  %3860 = vmatpush1.bf16.msra.mxu0 %v3814
  %3861 = vmatprep.subr.bf16.mxu0 0
  %3862 = vmatpush1.bf16.msra.mxu0 %v3815
  %3863 = vmatprep.subr.bf16.mxu0 0
  %3864 = vmatpush1.bf16.msra.mxu0 %v3816
  %3865 = vmatprep.mubr.bf16.mxu0 %v3736
  %3866 = vmatmul.mubr.bf16.gmra.mrb[0].mxu0 %v3735
  %v3867 = vpop.f32.mrb[0].mxu0
  %v3868 = vadd.f32 0.0, %v3867
  %v3869 = vpop.f32.mrb[0].mxu0
  %v3870 = vpop.f32.mrb[0].mxu0
  %v3871 = vpop.f32.mrb[0].mxu0
  %3872 = vdwg.mxu0
  %v3873 = vadd.f32 %v3686, %v3868
  %v3874 = vlaneseq
  %v3875 = vshrl.u32 %v3874, 7
  %v3876 = vsub.s32 2, %v3875
  %v3877 = vrot.slane %v36, %v3876
  %v3878 = vadd.f32 %v3873, %v3877
  %vm3879 = vcmp.gt.f32.partialorder %v3878, 0.0
  %v3880 = vmin.f32 %v3878, 0.0
  %v3881 = vmul.f32 %v3880, 1.442695
  %v3882 = vpow.pop %v3881
  %v3883 = vsub.f32 %v3882, 1.0
  %v3884 = vsel %vm3879, %v3878, %v3883
  %s3885 = scalar_lea.vmem %s3, 640
  %v3886 = vld [vmem:[%s3885] sm:$0xf]
  %v3887 = vld [vmem:[%s3885 + $0x4] sm:$0xf]
  %v3888 = vld [vmem:[%s3885 + $0x8] sm:$0xf]
  %v3889 = vld [vmem:[%s3885 + $0xc] sm:$0xf]
  %v3890 = vld [vmem:[%s3885 + $0x10] sm:$0xf]
  %v3891 = vld [vmem:[%s3885 + $0x14] sm:$0xf]
  %v3892 = vld [vmem:[%s3885 + $0x18] sm:$0xf]
  %v3893 = vld [vmem:[%s3885 + $0x1c] sm:$0xf]
  %v3894 = vld [vmem:[%s3885 + $0x20] sm:$0xf]
  %v3895 = vld [vmem:[%s3885 + $0x24] sm:$0xf]
  %v3896 = vld [vmem:[%s3885 + $0x28] sm:$0xf]
  %v3897 = vld [vmem:[%s3885 + $0x2c] sm:$0xf]
  %v3898 = vld [vmem:[%s3885 + $0x30] sm:$0xf]
  %v3899 = vld [vmem:[%s3885 + $0x34] sm:$0xf]
  %v3900 = vld [vmem:[%s3885 + $0x38] sm:$0xf]
  %v3901 = vld [vmem:[%s3885 + $0x3c] sm:$0xf]
  %v3902 = vpack.c.bf16 %v3884, %v3884
  %v3903 = vlaneseq
  %v3904 = vshrl.u32 %v3903, 7
  %v3905 = vsub.s32 3, %v3904
  %v3906 = vrot.slane %v36, %v3905
  %v3923 = vunpack.c.l.b16 %v3886
  %v3924 = vunpack.c.l.b16 %v3887
  %v3925 = vunpack.c.l.b16 %v3888
  %v3926 = vunpack.c.l.b16 %v3889
  %v3927 = vunpack.c.l.b16 %v3890
  %v3928 = vunpack.c.l.b16 %v3891
  %v3929 = vunpack.c.l.b16 %v3892
  %v3930 = vunpack.c.l.b16 %v3893
  %v3931 = vunpack.c.l.b16 %v3894
  %v3932 = vunpack.c.l.b16 %v3895
  %v3933 = vunpack.c.l.b16 %v3896
  %v3934 = vunpack.c.l.b16 %v3897
  %v3935 = vunpack.c.l.b16 %v3898
  %v3936 = vunpack.c.l.b16 %v3899
  %v3937 = vunpack.c.l.b16 %v3900
  %v3938 = vunpack.c.l.b16 %v3901
  %v3939 = vpack.c.b16 %v3924, %v3923
  %v3940 = vpack.c.b16 %v3926, %v3925
  %v3941 = vpack.c.b16 %v3928, %v3927
  %v3942 = vpack.c.b16 %v3930, %v3929
  %v3943 = vpack.c.b16 %v3932, %v3931
  %v3944 = vpack.c.b16 %v3934, %v3933
  %v3945 = vpack.c.b16 %v3936, %v3935
  %v3946 = vpack.c.b16 %v3938, %v3937
  %3955 = vmatprep.subr.bf16.mxu0 0
  %3956 = vmatpush1.bf16.msra.mxu0 %v3939
  %3957 = vmatprep.subr.bf16.mxu0 0
  %3958 = vmatpush1.bf16.msra.mxu0 %v3940
  %3959 = vmatprep.subr.bf16.mxu0 0
  %3960 = vmatpush1.bf16.msra.mxu0 %v3941
  %3961 = vmatprep.subr.bf16.mxu0 0
  %3962 = vmatpush1.bf16.msra.mxu0 %v3942
  %3963 = vmatprep.subr.bf16.mxu0 0
  %3964 = vmatpush1.bf16.msra.mxu0 %v3943
  %3965 = vmatprep.subr.bf16.mxu0 0
  %3966 = vmatpush1.bf16.msra.mxu0 %v3944
  %3967 = vmatprep.subr.bf16.mxu0 0
  %3968 = vmatpush1.bf16.msra.mxu0 %v3945
  %3969 = vmatprep.subr.bf16.mxu0 0
  %3970 = vmatpush1.bf16.msra.mxu0 %v3946
  %3971 = vmatprep.subr.bf16.mxu0 0
  %3972 = vmatpush1.bf16.msra.mxu0 0
  %3973 = vmatprep.subr.bf16.mxu0 0
  %3974 = vmatpush1.bf16.msra.mxu0 0
  %3975 = vmatprep.subr.bf16.mxu0 0
  %3976 = vmatpush1.bf16.msra.mxu0 0
  %3977 = vmatprep.subr.bf16.mxu0 0
  %3978 = vmatpush1.bf16.msra.mxu0 0
  %3979 = vmatprep.subr.bf16.mxu0 0
  %3980 = vmatpush1.bf16.msra.mxu0 0
  %3981 = vmatprep.subr.bf16.mxu0 0
  %3982 = vmatpush1.bf16.msra.mxu0 0
  %3983 = vmatprep.subr.bf16.mxu0 0
  %3984 = vmatpush1.bf16.msra.mxu0 0
  %3985 = vmatprep.subr.bf16.mxu0 0
  %3986 = vmatpush1.bf16.msra.mxu0 0
  %3987 = vmatprep.mubr.bf16.mxu0 0
  %3988 = vmatmul.mubr.bf16.gmra.mrb[0].mxu0 %v3902
  %v3989 = vpop.f32.mrb[0].mxu0
  %v3990 = vadd.f32 %v3906, %v3989
  %v3991 = vpop.f32.mrb[0].mxu0
  %v3992 = vpop.f32.mrb[0].mxu0
  %v3993 = vpop.f32.mrb[0].mxu0
  %3994 = vdwg.mxu0
  %3995 = vst [vmem:[%s6] sm:$0x3] %v3990
  // Predicated region
  $region26: #{lstm_qaac_mac_forward.3} parent=0 // pred_check
    _
  $region27: #{lstm_qaac_mac_forward.3} parent=0 // pred_check_branch
    %3997 = sbr.rel (0) target = $region29
  $region28: #{lstm_qaac_mac_forward.3} parent=0 // pred_region
    _
  $region29: #{lstm_qaac_mac_forward.3} parent=0 // pred_fallthru
    _
  // Predicated region
  $region30: #{lstm_qaac_mac_forward.3} parent=0 // pred_check
    _
  $region31: #{lstm_qaac_mac_forward.3} parent=0 // pred_check_branch
    %3999 = sbr.rel (0) target = $region33
  $region32: #{lstm_qaac_mac_forward.3} parent=0 // pred_region
    _
  $region33: #{lstm_qaac_mac_forward.3} parent=0 // pred_fallthru
    _

</llo_original>
